<compile_context>
chip_gen: v6e
topology: v6e:2x2x1
jax: 0.10.0
libtpu: 0.0.40
codegen_flags: <defaults>
</compile_context>

<pallas_src>
import jax
import jax.numpy as jnp
from jax.experimental import pallas as pl
from jax.experimental.pallas import tpu as pltpu


NUM_CLASSES = 8            # cfg.DATASET.NUM_CLASSES
NUM_ANCHORS = 4            # anchors per spatial location (both sources)
BACKBONE_CHANNELS = (32, 64)
HEAD_CH = NUM_ANCHORS * (4 + NUM_CLASSES)   # 48 = 16 (loc) + 32 (conf), fused
HEAD_CH_PAD = 128                           # lane-dense output channel padding


def _zero_border(buf_ref):
    """Zero only the 1-wide border of a (h+2, w+2, c) pad buffer."""
    hp, wp, c = buf_ref.shape
    buf_ref[0:1] = jnp.zeros((1, wp, c), jnp.float32)
    buf_ref[hp - 1:hp] = jnp.zeros((1, wp, c), jnp.float32)
    buf_ref[:, 0:1] = jnp.zeros((hp, 1, c), jnp.float32)
    buf_ref[:, wp - 1:wp] = jnp.zeros((hp, 1, c), jnp.float32)


def _conv3x3(src_pad_ref, w_ref, b_ref, h, w, relu):
    """3x3 conv, stride 1, pad 1, on a zero-border VMEM ref.

    src_pad_ref: (h+2, w+2, Cin) VMEM scratch (border rows/cols are zero)
    w_ref:       (3, 3, Cin, Cout)
    b_ref:       (1, Cout)
    returns:     (h*w, Cout) float32
    """
    cin = src_pad_ref.shape[-1]
    acc = None
    for kh in range(3):
        for kw in range(3):
            # Collapse of (h, w, cin) -> (h*w, cin): w is a multiple of 8, so
            # this is a layout-preserving leading-dim merge (no relayout).
            patch = src_pad_ref[kh:kh + h, kw:kw + w, :].reshape(h * w, cin)
            t = jnp.dot(patch, w_ref[kh, kw],
                        preferred_element_type=jnp.float32)
            acc = t if acc is None else acc + t
    acc = acc + b_ref[0]
    if relu:
        acc = jnp.maximum(acc, 0.0)
    return acc


def _ssd_fused_kernel(x_ref, wbb1_ref, bbb1_ref, wbb2_ref, bbb2_ref,
                      wh0_ref, bh0_ref, wh1_ref, bh1_ref,
                      out0_ref, out1_ref,
                      x_pad, s1_pad, down_pad, s2_pad):
    # Static shapes (trace time).
    BB, H, W, _ = x_ref.shape
    H2, W2 = H // 2, W // 2
    C1 = wbb1_ref.shape[-1]
    C2 = wbb2_ref.shape[-1]

    # Zero only the borders (they act as the conv zero-pad).  The interiors are
    # fully overwritten for every batch element below.  Per-step (not b==0) so
    # it is safe under any grid scheduling / core sharding.
    _zero_border(x_pad)
    _zero_border(s1_pad)
    _zero_border(down_pad)
    _zero_border(s2_pad)

    # Static unrolled loop over the BB batch elements of this grid step.
    for bb in range(BB):
        # Stage this element into the padded input scratch (all channels,
        # input is already zero-padded on the channel axis in the wrapper).
        x_pad[1:1 + H, 1:1 + W, :] = x_ref[bb]

        # --- backbone conv1 + ReLU -> source feature map s1 (H, W, C1) ---
        s1 = _conv3x3(x_pad, wbb1_ref, bbb1_ref, H, W, relu=True)   # (H*W, C1)
        s1_pad[1:1 + H, 1:1 + W, :] = s1.reshape(H, W, C1)

        # --- 2x spatial downsample: plain strided pick of even rows/cols ---
        # (interior rows/cols of s1_pad start at offset 1)
        down = s1_pad[pl.ds(1, H2, stride=2), pl.ds(1, W2, stride=2), :]
        down_pad[1:1 + H2, 1:1 + W2, :] = down                       # (H2,W2,C1)

        # --- backbone conv2 + ReLU -> source feature map s2 (H2, W2, C2) ---
        s2 = _conv3x3(down_pad, wbb2_ref, bbb2_ref, H2, W2, relu=True)
        s2_pad[1:1 + H2, 1:1 + W2, :] = s2.reshape(H2, W2, C2)

        # --- fused loc+conf heads (Cout padded to 128 -> unmasked stores) ---
        h0 = _conv3x3(s1_pad, wh0_ref, bh0_ref, H, W, relu=False)    # (H*W, 128)
        out0_ref[bb] = h0.astype(out0_ref.dtype)

        h1 = _conv3x3(s2_pad, wh1_ref, bh1_ref, H2, W2, relu=False)  # (H2*W2,128)
        out1_ref[bb] = h1.astype(out1_ref.dtype)


def _pick_bb(batch):
    """Batch elements per grid step: amortize per-step overhead but keep the
    grid length >= 2 when possible (v7x megacore sharding)."""
    for bb in (4, 2, 1):
        if batch % bb == 0 and batch // bb >= 2:
            return bb
    for bb in (4, 2, 1):
        if batch % bb == 0:
            return bb
    return 1


def _ssd_pallas(x_nhwc, w_bb1, b_bb1, w_bb2, b_bb2, w_h0, b_h0, w_h1, b_h1):
    """Single fused pallas_call over the batch axis."""
    B, H, W, Cp = x_nhwc.shape
    H2, W2 = H // 2, W // 2
    C1 = w_bb1.shape[-1]
    C2 = w_bb2.shape[-1]
    CHP = w_h0.shape[-1]
    BB = _pick_bb(B)

    out0, out1 = pl.pallas_call(
        _ssd_fused_kernel,
        out_shape=(jax.ShapeDtypeStruct((B, H * W, CHP), jnp.float32),
                   jax.ShapeDtypeStruct((B, H2 * W2, CHP), jnp.float32)),
        grid=(B // BB,),
        in_specs=[
            pl.BlockSpec((BB, H, W, Cp), lambda b: (b, 0, 0, 0)),
            # Weights / biases: constant index maps -> stay resident in VMEM.
            pl.BlockSpec(w_bb1.shape, lambda b: (0, 0, 0, 0)),
            pl.BlockSpec(b_bb1.shape, lambda b: (0, 0)),
            pl.BlockSpec(w_bb2.shape, lambda b: (0, 0, 0, 0)),
            pl.BlockSpec(b_bb2.shape, lambda b: (0, 0)),
            pl.BlockSpec(w_h0.shape, lambda b: (0, 0, 0, 0)),
            pl.BlockSpec(b_h0.shape, lambda b: (0, 0)),
            pl.BlockSpec(w_h1.shape, lambda b: (0, 0, 0, 0)),
            pl.BlockSpec(b_h1.shape, lambda b: (0, 0)),
        ],
        out_specs=(
            pl.BlockSpec((BB, H * W, CHP), lambda b: (b, 0, 0)),
            pl.BlockSpec((BB, H2 * W2, CHP), lambda b: (b, 0, 0)),
        ),
        scratch_shapes=[
            pltpu.VMEM((H + 2, W + 2, Cp), jnp.float32),    # padded input
            pltpu.VMEM((H + 2, W + 2, C1), jnp.float32),    # padded s1
            pltpu.VMEM((H2 + 2, W2 + 2, C1), jnp.float32),  # padded downsample
            pltpu.VMEM((H2 + 2, W2 + 2, C2), jnp.float32),  # padded s2
        ],
        compiler_params=pltpu.CompilerParams(
            dimension_semantics=("parallel",)),
    )(x_nhwc, w_bb1, b_bb1, w_bb2, b_bb2, w_h0, b_h0, w_h1, b_h1)
    return out0, out1


# ----------------------------------------------------------------------------
# SSD model (synthetic backbone + heads, deterministic init)
# ----------------------------------------------------------------------------
def init_params(key, in_channels):
    def conv_init(k, cin, cout):
        kw_, kb_ = jax.random.split(k)
        w = jax.random.normal(kw_, (3, 3, cin, cout), jnp.float32) * 0.05
        b = jax.random.normal(kb_, (cout,), jnp.float32) * 0.05
        return w, b

    keys = jax.random.split(key, 6)
    c1, c2 = BACKBONE_CHANNELS
    params = {
        "bb1": conv_init(keys[0], in_channels, c1),
        "bb2": conv_init(keys[1], c1, c2),
        "loc0": conv_init(keys[2], c1, NUM_ANCHORS * 4),
        "loc1": conv_init(keys[3], c2, NUM_ANCHORS * 4),
        "conf0": conv_init(keys[4], c1, NUM_ANCHORS * NUM_CLASSES),
        "conf1": conv_init(keys[5], c2, NUM_ANCHORS * NUM_CLASSES),
    }
    return params


def _fuse_and_pad_head(wl, bl, wc, bc):
    """Fuse loc+conf on the Cout axis (16+32=48) and zero-pad Cout to 128."""
    w = jnp.concatenate([wl, wc], axis=-1)
    b = jnp.concatenate([bl, bc], axis=-1)
    pad = HEAD_CH_PAD - w.shape[-1]
    w = jnp.pad(w, ((0, 0), (0, 0), (0, 0), (0, pad)))
    b = jnp.pad(b, ((0, pad),))
    return w, b.reshape(1, -1)


def ssd_forward(params, x_nchw):
    """Equivalent of SSD.forward.  Input is NCHW (PyTorch convention)."""
    B, C, H, W = x_nchw.shape
    assert H % 2 == 0 and W % 2 == 0
    x = jnp.transpose(x_nchw, (0, 2, 3, 1))                     # -> NHWC

    # First-layer channel padding (input + weight rows) to a multiple of 8.
    cin_pad = max(8, -(-C // 8) * 8)
    if cin_pad != C:
        x = jnp.pad(x, ((0, 0), (0, 0), (0, 0), (0, cin_pad - C)))
    w_bb1, b_bb1 = params["bb1"]
    w_bb1 = jnp.pad(w_bb1, ((0, 0), (0, 0), (0, cin_pad - C), (0, 0)))
    w_bb2, b_bb2 = params["bb2"]

    # Fused, lane-dense (Cout=128) head weights.
    w_h0, b_h0 = _fuse_and_pad_head(params["loc0"][0], params["loc0"][1],
                                    params["conf0"][0], params["conf0"][1])
    w_h1, b_h1 = _fuse_and_pad_head(params["loc1"][0], params["loc1"][1],
                                    params["conf1"][0], params["conf1"][1])

    out0, out1 = _ssd_pallas(
        x, w_bb1, b_bb1.reshape(1, -1), w_bb2, b_bb2.reshape(1, -1),
        w_h0, b_h0, w_h1, b_h1)

    # out{0,1}: NHWC head maps flattened to (B, H*W, 128); channels [0:16] are
    # the loc head, [16:48] the conf head, [48:128] zero padding — slice before
    # the split so the flat prior ordering matches the reference
    # permute(0, 2, 3, 1).contiguous() + view(B, -1).
    nl = NUM_ANCHORS * 4
    loc = jnp.concatenate([out0[..., :nl].reshape(B, -1),
                           out1[..., :nl].reshape(B, -1)], axis=1)
    conf = jnp.concatenate([out0[..., nl:HEAD_CH].reshape(B, -1),
                            out1[..., nl:HEAD_CH].reshape(B, -1)], axis=1)
    return loc.reshape(B, -1, 4), conf.reshape(B, -1, NUM_CLASSES)


if __name__ == "__main__":
    key = jax.random.PRNGKey(0)
    k_param, k_input = jax.random.split(key)

    B, C, H, W = 2, 4, 16, 16
    x = jax.random.normal(k_input, (B, C, H, W), jnp.float32)
    params = init_params(k_param, C)

    fwd = jax.jit(ssd_forward)
    loc, conf = fwd(params, x)
    loc = jax.block_until_ready(loc)
    conf = jax.block_until_ready(conf)

    n_priors = H * W * NUM_ANCHORS + (H // 2) * (W // 2) * NUM_ANCHORS
    assert loc.shape == (B, n_priors, 4), loc.shape
    assert conf.shape == (B, n_priors, NUM_CLASSES), conf.shape
    assert jnp.all(jnp.isfinite(loc)) and jnp.all(jnp.isfinite(conf))

    print("KERNEL_OK")
</pallas_src>

<mosaic_0001>
module attributes {stable_mosaic.version = 11 : i64} {
  func.func @_ssd_fused_kernel(%arg0: i32, %arg1: memref<1x16x16x8xf32, #tpu.memory_space<vmem>>, %arg2: memref<3x3x8x32xf32, #tpu.memory_space<vmem>>, %arg3: memref<1x32xf32, #tpu.memory_space<vmem>>, %arg4: memref<3x3x32x64xf32, #tpu.memory_space<vmem>>, %arg5: memref<1x64xf32, #tpu.memory_space<vmem>>, %arg6: memref<3x3x32x128xf32, #tpu.memory_space<vmem>>, %arg7: memref<1x128xf32, #tpu.memory_space<vmem>>, %arg8: memref<3x3x64x128xf32, #tpu.memory_space<vmem>>, %arg9: memref<1x128xf32, #tpu.memory_space<vmem>>, %arg10: memref<1x256x128xf32, #tpu.memory_space<vmem>>, %arg11: memref<1x64x128xf32, #tpu.memory_space<vmem>>, %arg12: memref<18x18x8xf32, #tpu.memory_space<vmem>>, %arg13: memref<18x18x32xf32, #tpu.memory_space<vmem>>, %arg14: memref<10x10x32xf32, #tpu.memory_space<vmem>>, %arg15: memref<10x10x64xf32, #tpu.memory_space<vmem>>) attributes {dimension_semantics = [#tpu.dimension_semantics<parallel>], iteration_bounds = array<i64: 2>, scalar_prefetch = 0 : i64, scratch_operands = 4 : i64, tpu.core_type = #tpu.core_type<tc>, window_params = [{transform_indices = @transform_0, window_bounds = array<i64: 1, 16, 16, 8>}, {pipeline_mode = #tpu.pipeline_mode<synchronous>, transform_indices = @transform_1, window_bounds = array<i64: 3, 3, 8, 32>}, {pipeline_mode = #tpu.pipeline_mode<synchronous>, transform_indices = @transform_2, window_bounds = array<i64: 1, 32>}, {pipeline_mode = #tpu.pipeline_mode<synchronous>, transform_indices = @transform_3, window_bounds = array<i64: 3, 3, 32, 64>}, {pipeline_mode = #tpu.pipeline_mode<synchronous>, transform_indices = @transform_4, window_bounds = array<i64: 1, 64>}, {pipeline_mode = #tpu.pipeline_mode<synchronous>, transform_indices = @transform_5, window_bounds = array<i64: 3, 3, 32, 128>}, {pipeline_mode = #tpu.pipeline_mode<synchronous>, transform_indices = @transform_6, window_bounds = array<i64: 1, 128>}, {pipeline_mode = #tpu.pipeline_mode<synchronous>, transform_indices = @transform_7, window_bounds = array<i64: 3, 3, 64, 128>}, {pipeline_mode = #tpu.pipeline_mode<synchronous>, transform_indices = @transform_8, window_bounds = array<i64: 1, 128>}, {transform_indices = @transform_9, window_bounds = array<i64: 1, 256, 128>}, {transform_indices = @transform_10, window_bounds = array<i64: 1, 64, 128>}]} {
    %cst = arith.constant 0.000000e+00 : f32
    %0 = vector.broadcast %cst : f32 to vector<1x18x8xf32>
    %c0 = arith.constant 0 : index
    %c0_0 = arith.constant 0 : index
    %c0_1 = arith.constant 0 : index
    %1 = vector.load %arg12[%c0, %c0_0, %c0_1] : memref<18x18x8xf32, #tpu.memory_space<vmem>>, vector<1x18x8xf32>
    tpu.vector_store %arg12[%c0, %c0_0, %c0_1], %0 {strides = array<i32>} : memref<18x18x8xf32, #tpu.memory_space<vmem>>, vector<1x18x8xf32>,
    %cst_2 = arith.constant 0.000000e+00 : f32
    %2 = vector.broadcast %cst_2 : f32 to vector<1x18x8xf32>
    %c17 = arith.constant 17 : index
    %c0_3 = arith.constant 0 : index
    %c0_4 = arith.constant 0 : index
    %3 = vector.load %arg12[%c17, %c0_3, %c0_4] : memref<18x18x8xf32, #tpu.memory_space<vmem>>, vector<1x18x8xf32>
    tpu.vector_store %arg12[%c17, %c0_3, %c0_4], %2 {strides = array<i32>} : memref<18x18x8xf32, #tpu.memory_space<vmem>>, vector<1x18x8xf32>,
    %cst_5 = arith.constant 0.000000e+00 : f32
    %4 = vector.broadcast %cst_5 : f32 to vector<18x1x8xf32>
    %c0_6 = arith.constant 0 : index
    %c0_7 = arith.constant 0 : index
    %c0_8 = arith.constant 0 : index
    %5 = vector.load %arg12[%c0_6, %c0_7, %c0_8] : memref<18x18x8xf32, #tpu.memory_space<vmem>>, vector<18x1x8xf32>
    tpu.vector_store %arg12[%c0_6, %c0_7, %c0_8], %4 {strides = array<i32>} : memref<18x18x8xf32, #tpu.memory_space<vmem>>, vector<18x1x8xf32>,
    %cst_9 = arith.constant 0.000000e+00 : f32
    %6 = vector.broadcast %cst_9 : f32 to vector<18x1x8xf32>
    %c0_10 = arith.constant 0 : index
    %c17_11 = arith.constant 17 : index
    %c0_12 = arith.constant 0 : index
    %7 = vector.load %arg12[%c0_10, %c17_11, %c0_12] : memref<18x18x8xf32, #tpu.memory_space<vmem>>, vector<18x1x8xf32>
    tpu.vector_store %arg12[%c0_10, %c17_11, %c0_12], %6 {strides = array<i32>} : memref<18x18x8xf32, #tpu.memory_space<vmem>>, vector<18x1x8xf32>,
    %cst_13 = arith.constant 0.000000e+00 : f32
    %8 = vector.broadcast %cst_13 : f32 to vector<1x18x32xf32>
    %c0_14 = arith.constant 0 : index
    %c0_15 = arith.constant 0 : index
    %c0_16 = arith.constant 0 : index
    %9 = vector.load %arg13[%c0_14, %c0_15, %c0_16] : memref<18x18x32xf32, #tpu.memory_space<vmem>>, vector<1x18x32xf32>
    tpu.vector_store %arg13[%c0_14, %c0_15, %c0_16], %8 {strides = array<i32>} : memref<18x18x32xf32, #tpu.memory_space<vmem>>, vector<1x18x32xf32>,
    %cst_17 = arith.constant 0.000000e+00 : f32
    %10 = vector.broadcast %cst_17 : f32 to vector<1x18x32xf32>
    %c17_18 = arith.constant 17 : index
    %c0_19 = arith.constant 0 : index
    %c0_20 = arith.constant 0 : index
    %11 = vector.load %arg13[%c17_18, %c0_19, %c0_20] : memref<18x18x32xf32, #tpu.memory_space<vmem>>, vector<1x18x32xf32>
    tpu.vector_store %arg13[%c17_18, %c0_19, %c0_20], %10 {strides = array<i32>} : memref<18x18x32xf32, #tpu.memory_space<vmem>>, vector<1x18x32xf32>,
    %cst_21 = arith.constant 0.000000e+00 : f32
    %12 = vector.broadcast %cst_21 : f32 to vector<18x1x32xf32>
    %c0_22 = arith.constant 0 : index
    %c0_23 = arith.constant 0 : index
    %c0_24 = arith.constant 0 : index
    %13 = vector.load %arg13[%c0_22, %c0_23, %c0_24] : memref<18x18x32xf32, #tpu.memory_space<vmem>>, vector<18x1x32xf32>
    tpu.vector_store %arg13[%c0_22, %c0_23, %c0_24], %12 {strides = array<i32>} : memref<18x18x32xf32, #tpu.memory_space<vmem>>, vector<18x1x32xf32>,
    %cst_25 = arith.constant 0.000000e+00 : f32
    %14 = vector.broadcast %cst_25 : f32 to vector<18x1x32xf32>
    %c0_26 = arith.constant 0 : index
    %c17_27 = arith.constant 17 : index
    %c0_28 = arith.constant 0 : index
    %15 = vector.load %arg13[%c0_26, %c17_27, %c0_28] : memref<18x18x32xf32, #tpu.memory_space<vmem>>, vector<18x1x32xf32>
    tpu.vector_store %arg13[%c0_26, %c17_27, %c0_28], %14 {strides = array<i32>} : memref<18x18x32xf32, #tpu.memory_space<vmem>>, vector<18x1x32xf32>,
    %cst_29 = arith.constant 0.000000e+00 : f32
    %16 = vector.broadcast %cst_29 : f32 to vector<1x10x32xf32>
    %c0_30 = arith.constant 0 : index
    %c0_31 = arith.constant 0 : index
    %c0_32 = arith.constant 0 : index
    %17 = vector.load %arg14[%c0_30, %c0_31, %c0_32] : memref<10x10x32xf32, #tpu.memory_space<vmem>>, vector<1x10x32xf32>
    tpu.vector_store %arg14[%c0_30, %c0_31, %c0_32], %16 {strides = array<i32>} : memref<10x10x32xf32, #tpu.memory_space<vmem>>, vector<1x10x32xf32>,
    %cst_33 = arith.constant 0.000000e+00 : f32
    %18 = vector.broadcast %cst_33 : f32 to vector<1x10x32xf32>
    %c9 = arith.constant 9 : index
    %c0_34 = arith.constant 0 : index
    %c0_35 = arith.constant 0 : index
    %19 = vector.load %arg14[%c9, %c0_34, %c0_35] : memref<10x10x32xf32, #tpu.memory_space<vmem>>, vector<1x10x32xf32>
    tpu.vector_store %arg14[%c9, %c0_34, %c0_35], %18 {strides = array<i32>} : memref<10x10x32xf32, #tpu.memory_space<vmem>>, vector<1x10x32xf32>,
    %cst_36 = arith.constant 0.000000e+00 : f32
    %20 = vector.broadcast %cst_36 : f32 to vector<10x1x32xf32>
    %c0_37 = arith.constant 0 : index
    %c0_38 = arith.constant 0 : index
    %c0_39 = arith.constant 0 : index
    %21 = vector.load %arg14[%c0_37, %c0_38, %c0_39] : memref<10x10x32xf32, #tpu.memory_space<vmem>>, vector<10x1x32xf32>
    tpu.vector_store %arg14[%c0_37, %c0_38, %c0_39], %20 {strides = array<i32>} : memref<10x10x32xf32, #tpu.memory_space<vmem>>, vector<10x1x32xf32>,
    %cst_40 = arith.constant 0.000000e+00 : f32
    %22 = vector.broadcast %cst_40 : f32 to vector<10x1x32xf32>
    %c0_41 = arith.constant 0 : index
    %c9_42 = arith.constant 9 : index
    %c0_43 = arith.constant 0 : index
    %23 = vector.load %arg14[%c0_41, %c9_42, %c0_43] : memref<10x10x32xf32, #tpu.memory_space<vmem>>, vector<10x1x32xf32>
    tpu.vector_store %arg14[%c0_41, %c9_42, %c0_43], %22 {strides = array<i32>} : memref<10x10x32xf32, #tpu.memory_space<vmem>>, vector<10x1x32xf32>,
    %cst_44 = arith.constant 0.000000e+00 : f32
    %24 = vector.broadcast %cst_44 : f32 to vector<1x10x64xf32>
    %c0_45 = arith.constant 0 : index
    %c0_46 = arith.constant 0 : index
    %c0_47 = arith.constant 0 : index
    %25 = vector.load %arg15[%c0_45, %c0_46, %c0_47] : memref<10x10x64xf32, #tpu.memory_space<vmem>>, vector<1x10x64xf32>
    tpu.vector_store %arg15[%c0_45, %c0_46, %c0_47], %24 {strides = array<i32>} : memref<10x10x64xf32, #tpu.memory_space<vmem>>, vector<1x10x64xf32>,
    %cst_48 = arith.constant 0.000000e+00 : f32
    %26 = vector.broadcast %cst_48 : f32 to vector<1x10x64xf32>
    %c9_49 = arith.constant 9 : index
    %c0_50 = arith.constant 0 : index
    %c0_51 = arith.constant 0 : index
    %27 = vector.load %arg15[%c9_49, %c0_50, %c0_51] : memref<10x10x64xf32, #tpu.memory_space<vmem>>, vector<1x10x64xf32>
    tpu.vector_store %arg15[%c9_49, %c0_50, %c0_51], %26 {strides = array<i32>} : memref<10x10x64xf32, #tpu.memory_space<vmem>>, vector<1x10x64xf32>,
    %cst_52 = arith.constant 0.000000e+00 : f32
    %28 = vector.broadcast %cst_52 : f32 to vector<10x1x64xf32>
    %c0_53 = arith.constant 0 : index
    %c0_54 = arith.constant 0 : index
    %c0_55 = arith.constant 0 : index
    %29 = vector.load %arg15[%c0_53, %c0_54, %c0_55] : memref<10x10x64xf32, #tpu.memory_space<vmem>>, vector<10x1x64xf32>
    tpu.vector_store %arg15[%c0_53, %c0_54, %c0_55], %28 {strides = array<i32>} : memref<10x10x64xf32, #tpu.memory_space<vmem>>, vector<10x1x64xf32>,
    %cst_56 = arith.constant 0.000000e+00 : f32
    %30 = vector.broadcast %cst_56 : f32 to vector<10x1x64xf32>
    %c0_57 = arith.constant 0 : index
    %c9_58 = arith.constant 9 : index
    %c0_59 = arith.constant 0 : index
    %31 = vector.load %arg15[%c0_57, %c9_58, %c0_59] : memref<10x10x64xf32, #tpu.memory_space<vmem>>, vector<10x1x64xf32>
    tpu.vector_store %arg15[%c0_57, %c9_58, %c0_59], %30 {strides = array<i32>} : memref<10x10x64xf32, #tpu.memory_space<vmem>>, vector<10x1x64xf32>,
    %c0_60 = arith.constant 0 : index
    %c0_61 = arith.constant 0 : index
    %c0_62 = arith.constant 0 : index
    %c0_63 = arith.constant 0 : index
    %32 = vector.load %arg1[%c0_60, %c0_61, %c0_62, %c0_63] : memref<1x16x16x8xf32, #tpu.memory_space<vmem>>, vector<1x16x16x8xf32>
    %33 = vector.shape_cast %32 : vector<1x16x16x8xf32> to vector<16x16x8xf32>
    %c1 = arith.constant 1 : index
    %c1_64 = arith.constant 1 : index
    %c0_65 = arith.constant 0 : index
    %34 = vector.load %arg12[%c1, %c1_64, %c0_65] : memref<18x18x8xf32, #tpu.memory_space<vmem>>, vector<16x16x8xf32>
    tpu.vector_store %arg12[%c1, %c1_64, %c0_65], %33 {strides = array<i32>} : memref<18x18x8xf32, #tpu.memory_space<vmem>>, vector<16x16x8xf32>,
    %c0_66 = arith.constant 0 : index
    %c0_67 = arith.constant 0 : index
    %c0_68 = arith.constant 0 : index
    %35 = vector.load %arg12[%c0_66, %c0_67, %c0_68] : memref<18x18x8xf32, #tpu.memory_space<vmem>>, vector<16x16x8xf32>
    %36 = vector.shape_cast %35 : vector<16x16x8xf32> to vector<256x8xf32>
    %c0_69 = arith.constant 0 : index
    %c0_70 = arith.constant 0 : index
    %c0_71 = arith.constant 0 : index
    %c0_72 = arith.constant 0 : index
    %37 = vector.load %arg2[%c0_69, %c0_70, %c0_71, %c0_72] : memref<3x3x8x32xf32, #tpu.memory_space<vmem>>, vector<1x1x8x32xf32>
    %38 = vector.shape_cast %37 : vector<1x1x8x32xf32> to vector<8x32xf32>
    %cst_73 = arith.constant dense<0.000000e+00> : vector<256x32xf32>
    %39 = tpu.matmul %36, %38, %cst_73 {dimension_numbers = #tpu.dot_dimension_numbers<[1], [0], [0], [1], [0, 0, 1, 1], [], []>} : vector<256x8xf32>, vector<8x32xf32>, vector<256x32xf32> -> vector<256x32xf32>
    %c0_74 = arith.constant 0 : index
    %c1_75 = arith.constant 1 : index
    %c0_76 = arith.constant 0 : index
    %40 = vector.load %arg12[%c0_74, %c1_75, %c0_76] : memref<18x18x8xf32, #tpu.memory_space<vmem>>, vector<16x16x8xf32>
    %41 = vector.shape_cast %40 : vector<16x16x8xf32> to vector<256x8xf32>
    %c0_77 = arith.constant 0 : index
    %c1_78 = arith.constant 1 : index
    %c0_79 = arith.constant 0 : index
    %c0_80 = arith.constant 0 : index
    %42 = vector.load %arg2[%c0_77, %c1_78, %c0_79, %c0_80] : memref<3x3x8x32xf32, #tpu.memory_space<vmem>>, vector<1x1x8x32xf32>
    %43 = vector.shape_cast %42 : vector<1x1x8x32xf32> to vector<8x32xf32>
    %cst_81 = arith.constant dense<0.000000e+00> : vector<256x32xf32>
    %44 = tpu.matmul %41, %43, %cst_81 {dimension_numbers = #tpu.dot_dimension_numbers<[1], [0], [0], [1], [0, 0, 1, 1], [], []>} : vector<256x8xf32>, vector<8x32xf32>, vector<256x32xf32> -> vector<256x32xf32>
    %45 = arith.addf %39, %44 : vector<256x32xf32>
    %c0_82 = arith.constant 0 : index
    %c2 = arith.constant 2 : index
    %c0_83 = arith.constant 0 : index
    %46 = vector.load %arg12[%c0_82, %c2, %c0_83] : memref<18x18x8xf32, #tpu.memory_space<vmem>>, vector<16x16x8xf32>
    %47 = vector.shape_cast %46 : vector<16x16x8xf32> to vector<256x8xf32>
    %c0_84 = arith.constant 0 : index
    %c2_85 = arith.constant 2 : index
    %c0_86 = arith.constant 0 : index
    %c0_87 = arith.constant 0 : index
    %48 = vector.load %arg2[%c0_84, %c2_85, %c0_86, %c0_87] : memref<3x3x8x32xf32, #tpu.memory_space<vmem>>, vector<1x1x8x32xf32>
    %49 = vector.shape_cast %48 : vector<1x1x8x32xf32> to vector<8x32xf32>
    %cst_88 = arith.constant dense<0.000000e+00> : vector<256x32xf32>
    %50 = tpu.matmul %47, %49, %cst_88 {dimension_numbers = #tpu.dot_dimension_numbers<[1], [0], [0], [1], [0, 0, 1, 1], [], []>} : vector<256x8xf32>, vector<8x32xf32>, vector<256x32xf32> -> vector<256x32xf32>
    %51 = arith.addf %45, %50 : vector<256x32xf32>
    %c1_89 = arith.constant 1 : index
    %c0_90 = arith.constant 0 : index
    %c0_91 = arith.constant 0 : index
    %52 = vector.load %arg12[%c1_89, %c0_90, %c0_91] : memref<18x18x8xf32, #tpu.memory_space<vmem>>, vector<16x16x8xf32>
    %53 = vector.shape_cast %52 : vector<16x16x8xf32> to vector<256x8xf32>
    %c1_92 = arith.constant 1 : index
    %c0_93 = arith.constant 0 : index
    %c0_94 = arith.constant 0 : index
    %c0_95 = arith.constant 0 : index
    %54 = vector.load %arg2[%c1_92, %c0_93, %c0_94, %c0_95] : memref<3x3x8x32xf32, #tpu.memory_space<vmem>>, vector<1x1x8x32xf32>
    %55 = vector.shape_cast %54 : vector<1x1x8x32xf32> to vector<8x32xf32>
    %cst_96 = arith.constant dense<0.000000e+00> : vector<256x32xf32>
    %56 = tpu.matmul %53, %55, %cst_96 {dimension_numbers = #tpu.dot_dimension_numbers<[1], [0], [0], [1], [0, 0, 1, 1], [], []>} : vector<256x8xf32>, vector<8x32xf32>, vector<256x32xf32> -> vector<256x32xf32>
    %57 = arith.addf %51, %56 : vector<256x32xf32>
    %c1_97 = arith.constant 1 : index
    %c1_98 = arith.constant 1 : index
    %c0_99 = arith.constant 0 : index
    %58 = vector.load %arg12[%c1_97, %c1_98, %c0_99] : memref<18x18x8xf32, #tpu.memory_space<vmem>>, vector<16x16x8xf32>
    %59 = vector.shape_cast %58 : vector<16x16x8xf32> to vector<256x8xf32>
    %c1_100 = arith.constant 1 : index
    %c1_101 = arith.constant 1 : index
    %c0_102 = arith.constant 0 : index
    %c0_103 = arith.constant 0 : index
    %60 = vector.load %arg2[%c1_100, %c1_101, %c0_102, %c0_103] : memref<3x3x8x32xf32, #tpu.memory_space<vmem>>, vector<1x1x8x32xf32>
    %61 = vector.shape_cast %60 : vector<1x1x8x32xf32> to vector<8x32xf32>
    %cst_104 = arith.constant dense<0.000000e+00> : vector<256x32xf32>
    %62 = tpu.matmul %59, %61, %cst_104 {dimension_numbers = #tpu.dot_dimension_numbers<[1], [0], [0], [1], [0, 0, 1, 1], [], []>} : vector<256x8xf32>, vector<8x32xf32>, vector<256x32xf32> -> vector<256x32xf32>
    %63 = arith.addf %57, %62 : vector<256x32xf32>
    %c1_105 = arith.constant 1 : index
    %c2_106 = arith.constant 2 : index
    %c0_107 = arith.constant 0 : index
    %64 = vector.load %arg12[%c1_105, %c2_106, %c0_107] : memref<18x18x8xf32, #tpu.memory_space<vmem>>, vector<16x16x8xf32>
    %65 = vector.shape_cast %64 : vector<16x16x8xf32> to vector<256x8xf32>
    %c1_108 = arith.constant 1 : index
    %c2_109 = arith.constant 2 : index
    %c0_110 = arith.constant 0 : index
    %c0_111 = arith.constant 0 : index
    %66 = vector.load %arg2[%c1_108, %c2_109, %c0_110, %c0_111] : memref<3x3x8x32xf32, #tpu.memory_space<vmem>>, vector<1x1x8x32xf32>
    %67 = vector.shape_cast %66 : vector<1x1x8x32xf32> to vector<8x32xf32>
    %cst_112 = arith.constant dense<0.000000e+00> : vector<256x32xf32>
    %68 = tpu.matmul %65, %67, %cst_112 {dimension_numbers = #tpu.dot_dimension_numbers<[1], [0], [0], [1], [0, 0, 1, 1], [], []>} : vector<256x8xf32>, vector<8x32xf32>, vector<256x32xf32> -> vector<256x32xf32>
    %69 = arith.addf %63, %68 : vector<256x32xf32>
    %c2_113 = arith.constant 2 : index
    %c0_114 = arith.constant 0 : index
    %c0_115 = arith.constant 0 : index
    %70 = vector.load %arg12[%c2_113, %c0_114, %c0_115] : memref<18x18x8xf32, #tpu.memory_space<vmem>>, vector<16x16x8xf32>
    %71 = vector.shape_cast %70 : vector<16x16x8xf32> to vector<256x8xf32>
    %c2_116 = arith.constant 2 : index
    %c0_117 = arith.constant 0 : index
    %c0_118 = arith.constant 0 : index
    %c0_119 = arith.constant 0 : index
    %72 = vector.load %arg2[%c2_116, %c0_117, %c0_118, %c0_119] : memref<3x3x8x32xf32, #tpu.memory_space<vmem>>, vector<1x1x8x32xf32>
    %73 = vector.shape_cast %72 : vector<1x1x8x32xf32> to vector<8x32xf32>
    %cst_120 = arith.constant dense<0.000000e+00> : vector<256x32xf32>
    %74 = tpu.matmul %71, %73, %cst_120 {dimension_numbers = #tpu.dot_dimension_numbers<[1], [0], [0], [1], [0, 0, 1, 1], [], []>} : vector<256x8xf32>, vector<8x32xf32>, vector<256x32xf32> -> vector<256x32xf32>
    %75 = arith.addf %69, %74 : vector<256x32xf32>
    %c2_121 = arith.constant 2 : index
    %c1_122 = arith.constant 1 : index
    %c0_123 = arith.constant 0 : index
    %76 = vector.load %arg12[%c2_121, %c1_122, %c0_123] : memref<18x18x8xf32, #tpu.memory_space<vmem>>, vector<16x16x8xf32>
    %77 = vector.shape_cast %76 : vector<16x16x8xf32> to vector<256x8xf32>
    %c2_124 = arith.constant 2 : index
    %c1_125 = arith.constant 1 : index
    %c0_126 = arith.constant 0 : index
    %c0_127 = arith.constant 0 : index
    %78 = vector.load %arg2[%c2_124, %c1_125, %c0_126, %c0_127] : memref<3x3x8x32xf32, #tpu.memory_space<vmem>>, vector<1x1x8x32xf32>
    %79 = vector.shape_cast %78 : vector<1x1x8x32xf32> to vector<8x32xf32>
    %cst_128 = arith.constant dense<0.000000e+00> : vector<256x32xf32>
    %80 = tpu.matmul %77, %79, %cst_128 {dimension_numbers = #tpu.dot_dimension_numbers<[1], [0], [0], [1], [0, 0, 1, 1], [], []>} : vector<256x8xf32>, vector<8x32xf32>, vector<256x32xf32> -> vector<256x32xf32>
    %81 = arith.addf %75, %80 : vector<256x32xf32>
    %c2_129 = arith.constant 2 : index
    %c2_130 = arith.constant 2 : index
    %c0_131 = arith.constant 0 : index
    %82 = vector.load %arg12[%c2_129, %c2_130, %c0_131] : memref<18x18x8xf32, #tpu.memory_space<vmem>>, vector<16x16x8xf32>
    %83 = vector.shape_cast %82 : vector<16x16x8xf32> to vector<256x8xf32>
    %c2_132 = arith.constant 2 : index
    %c2_133 = arith.constant 2 : index
    %c0_134 = arith.constant 0 : index
    %c0_135 = arith.constant 0 : index
    %84 = vector.load %arg2[%c2_132, %c2_133, %c0_134, %c0_135] : memref<3x3x8x32xf32, #tpu.memory_space<vmem>>, vector<1x1x8x32xf32>
    %85 = vector.shape_cast %84 : vector<1x1x8x32xf32> to vector<8x32xf32>
    %cst_136 = arith.constant dense<0.000000e+00> : vector<256x32xf32>
    %86 = tpu.matmul %83, %85, %cst_136 {dimension_numbers = #tpu.dot_dimension_numbers<[1], [0], [0], [1], [0, 0, 1, 1], [], []>} : vector<256x8xf32>, vector<8x32xf32>, vector<256x32xf32> -> vector<256x32xf32>
    %87 = arith.addf %81, %86 : vector<256x32xf32>
    %c0_137 = arith.constant 0 : index
    %c0_138 = arith.constant 0 : index
    %88 = vector.load %arg3[%c0_137, %c0_138] : memref<1x32xf32, #tpu.memory_space<vmem>>, vector<1x32xf32>
    %89 = vector.shape_cast %88 : vector<1x32xf32> to vector<32xf32>
    %90 = vector.shape_cast %89 : vector<32xf32> to vector<1x32xf32>
    %91 = vector.broadcast %90 : vector<1x32xf32> to vector<256x32xf32>
    %92 = arith.addf %87, %91 : vector<256x32xf32>
    %cst_139 = arith.constant 0.000000e+00 : f32
    %93 = vector.broadcast %cst_139 : f32 to vector<256x32xf32>
    %94 = arith.maximumf %92, %93 : vector<256x32xf32>
    %95 = vector.shape_cast %94 : vector<256x32xf32> to vector<16x16x32xf32>
    %c1_140 = arith.constant 1 : index
    %c1_141 = arith.constant 1 : index
    %c0_142 = arith.constant 0 : index
    %96 = vector.load %arg13[%c1_140, %c1_141, %c0_142] : memref<18x18x32xf32, #tpu.memory_space<vmem>>, vector<16x16x32xf32>
    tpu.vector_store %arg13[%c1_140, %c1_141, %c0_142], %95 {strides = array<i32>} : memref<18x18x32xf32, #tpu.memory_space<vmem>>, vector<16x16x32xf32>,
    %c1_143 = arith.constant 1 : index
    %c1_144 = arith.constant 1 : index
    %c0_145 = arith.constant 0 : index
    %97 = tpu.strided_load %arg13[%c1_143, %c1_144, %c0_145] {strides = array<i32: 2, 2, 1>} : memref<18x18x32xf32, #tpu.memory_space<vmem>>, vector<8x8x32xf32>
    %c1_146 = arith.constant 1 : index
    %c1_147 = arith.constant 1 : index
    %c0_148 = arith.constant 0 : index
    %98 = vector.load %arg14[%c1_146, %c1_147, %c0_148] : memref<10x10x32xf32, #tpu.memory_space<vmem>>, vector<8x8x32xf32>
    tpu.vector_store %arg14[%c1_146, %c1_147, %c0_148], %97 {strides = array<i32>} : memref<10x10x32xf32, #tpu.memory_space<vmem>>, vector<8x8x32xf32>,
    %c0_149 = arith.constant 0 : index
    %c0_150 = arith.constant 0 : index
    %c0_151 = arith.constant 0 : index
    %99 = vector.load %arg14[%c0_149, %c0_150, %c0_151] : memref<10x10x32xf32, #tpu.memory_space<vmem>>, vector<8x8x32xf32>
    %100 = vector.shape_cast %99 : vector<8x8x32xf32> to vector<64x32xf32>
    %c0_152 = arith.constant 0 : index
    %c0_153 = arith.constant 0 : index
    %c0_154 = arith.constant 0 : index
    %c0_155 = arith.constant 0 : index
    %101 = vector.load %arg4[%c0_152, %c0_153, %c0_154, %c0_155] : memref<3x3x32x64xf32, #tpu.memory_space<vmem>>, vector<1x1x32x64xf32>
    %102 = vector.shape_cast %101 : vector<1x1x32x64xf32> to vector<32x64xf32>
    %cst_156 = arith.constant dense<0.000000e+00> : vector<64x64xf32>
    %103 = tpu.matmul %100, %102, %cst_156 {dimension_numbers = #tpu.dot_dimension_numbers<[1], [0], [0], [1], [0, 0, 1, 1], [], []>} : vector<64x32xf32>, vector<32x64xf32>, vector<64x64xf32> -> vector<64x64xf32>
    %c0_157 = arith.constant 0 : index
    %c1_158 = arith.constant 1 : index
    %c0_159 = arith.constant 0 : index
    %104 = vector.load %arg14[%c0_157, %c1_158, %c0_159] : memref<10x10x32xf32, #tpu.memory_space<vmem>>, vector<8x8x32xf32>
    %105 = vector.shape_cast %104 : vector<8x8x32xf32> to vector<64x32xf32>
    %c0_160 = arith.constant 0 : index
    %c1_161 = arith.constant 1 : index
    %c0_162 = arith.constant 0 : index
    %c0_163 = arith.constant 0 : index
    %106 = vector.load %arg4[%c0_160, %c1_161, %c0_162, %c0_163] : memref<3x3x32x64xf32, #tpu.memory_space<vmem>>, vector<1x1x32x64xf32>
    %107 = vector.shape_cast %106 : vector<1x1x32x64xf32> to vector<32x64xf32>
    %cst_164 = arith.constant dense<0.000000e+00> : vector<64x64xf32>
    %108 = tpu.matmul %105, %107, %cst_164 {dimension_numbers = #tpu.dot_dimension_numbers<[1], [0], [0], [1], [0, 0, 1, 1], [], []>} : vector<64x32xf32>, vector<32x64xf32>, vector<64x64xf32> -> vector<64x64xf32>
    %109 = arith.addf %103, %108 : vector<64x64xf32>
    %c0_165 = arith.constant 0 : index
    %c2_166 = arith.constant 2 : index
    %c0_167 = arith.constant 0 : index
    %110 = vector.load %arg14[%c0_165, %c2_166, %c0_167] : memref<10x10x32xf32, #tpu.memory_space<vmem>>, vector<8x8x32xf32>
    %111 = vector.shape_cast %110 : vector<8x8x32xf32> to vector<64x32xf32>
    %c0_168 = arith.constant 0 : index
    %c2_169 = arith.constant 2 : index
    %c0_170 = arith.constant 0 : index
    %c0_171 = arith.constant 0 : index
    %112 = vector.load %arg4[%c0_168, %c2_169, %c0_170, %c0_171] : memref<3x3x32x64xf32, #tpu.memory_space<vmem>>, vector<1x1x32x64xf32>
    %113 = vector.shape_cast %112 : vector<1x1x32x64xf32> to vector<32x64xf32>
    %cst_172 = arith.constant dense<0.000000e+00> : vector<64x64xf32>
    %114 = tpu.matmul %111, %113, %cst_172 {dimension_numbers = #tpu.dot_dimension_numbers<[1], [0], [0], [1], [0, 0, 1, 1], [], []>} : vector<64x32xf32>, vector<32x64xf32>, vector<64x64xf32> -> vector<64x64xf32>
    %115 = arith.addf %109, %114 : vector<64x64xf32>
    %c1_173 = arith.constant 1 : index
    %c0_174 = arith.constant 0 : index
    %c0_175 = arith.constant 0 : index
    %116 = vector.load %arg14[%c1_173, %c0_174, %c0_175] : memref<10x10x32xf32, #tpu.memory_space<vmem>>, vector<8x8x32xf32>
    %117 = vector.shape_cast %116 : vector<8x8x32xf32> to vector<64x32xf32>
    %c1_176 = arith.constant 1 : index
    %c0_177 = arith.constant 0 : index
    %c0_178 = arith.constant 0 : index
    %c0_179 = arith.constant 0 : index
    %118 = vector.load %arg4[%c1_176, %c0_177, %c0_178, %c0_179] : memref<3x3x32x64xf32, #tpu.memory_space<vmem>>, vector<1x1x32x64xf32>
    %119 = vector.shape_cast %118 : vector<1x1x32x64xf32> to vector<32x64xf32>
    %cst_180 = arith.constant dense<0.000000e+00> : vector<64x64xf32>
    %120 = tpu.matmul %117, %119, %cst_180 {dimension_numbers = #tpu.dot_dimension_numbers<[1], [0], [0], [1], [0, 0, 1, 1], [], []>} : vector<64x32xf32>, vector<32x64xf32>, vector<64x64xf32> -> vector<64x64xf32>
    %121 = arith.addf %115, %120 : vector<64x64xf32>
    %c1_181 = arith.constant 1 : index
    %c1_182 = arith.constant 1 : index
    %c0_183 = arith.constant 0 : index
    %122 = vector.load %arg14[%c1_181, %c1_182, %c0_183] : memref<10x10x32xf32, #tpu.memory_space<vmem>>, vector<8x8x32xf32>
    %123 = vector.shape_cast %122 : vector<8x8x32xf32> to vector<64x32xf32>
    %c1_184 = arith.constant 1 : index
    %c1_185 = arith.constant 1 : index
    %c0_186 = arith.constant 0 : index
    %c0_187 = arith.constant 0 : index
    %124 = vector.load %arg4[%c1_184, %c1_185, %c0_186, %c0_187] : memref<3x3x32x64xf32, #tpu.memory_space<vmem>>, vector<1x1x32x64xf32>
    %125 = vector.shape_cast %124 : vector<1x1x32x64xf32> to vector<32x64xf32>
    %cst_188 = arith.constant dense<0.000000e+00> : vector<64x64xf32>
    %126 = tpu.matmul %123, %125, %cst_188 {dimension_numbers = #tpu.dot_dimension_numbers<[1], [0], [0], [1], [0, 0, 1, 1], [], []>} : vector<64x32xf32>, vector<32x64xf32>, vector<64x64xf32> -> vector<64x64xf32>
    %127 = arith.addf %121, %126 : vector<64x64xf32>
    %c1_189 = arith.constant 1 : index
    %c2_190 = arith.constant 2 : index
    %c0_191 = arith.constant 0 : index
    %128 = vector.load %arg14[%c1_189, %c2_190, %c0_191] : memref<10x10x32xf32, #tpu.memory_space<vmem>>, vector<8x8x32xf32>
    %129 = vector.shape_cast %128 : vector<8x8x32xf32> to vector<64x32xf32>
    %c1_192 = arith.constant 1 : index
    %c2_193 = arith.constant 2 : index
    %c0_194 = arith.constant 0 : index
    %c0_195 = arith.constant 0 : index
    %130 = vector.load %arg4[%c1_192, %c2_193, %c0_194, %c0_195] : memref<3x3x32x64xf32, #tpu.memory_space<vmem>>, vector<1x1x32x64xf32>
    %131 = vector.shape_cast %130 : vector<1x1x32x64xf32> to vector<32x64xf32>
    %cst_196 = arith.constant dense<0.000000e+00> : vector<64x64xf32>
    %132 = tpu.matmul %129, %131, %cst_196 {dimension_numbers = #tpu.dot_dimension_numbers<[1], [0], [0], [1], [0, 0, 1, 1], [], []>} : vector<64x32xf32>, vector<32x64xf32>, vector<64x64xf32> -> vector<64x64xf32>
    %133 = arith.addf %127, %132 : vector<64x64xf32>
    %c2_197 = arith.constant 2 : index
    %c0_198 = arith.constant 0 : index
    %c0_199 = arith.constant 0 : index
    %134 = vector.load %arg14[%c2_197, %c0_198, %c0_199] : memref<10x10x32xf32, #tpu.memory_space<vmem>>, vector<8x8x32xf32>
    %135 = vector.shape_cast %134 : vector<8x8x32xf32> to vector<64x32xf32>
    %c2_200 = arith.constant 2 : index
    %c0_201 = arith.constant 0 : index
    %c0_202 = arith.constant 0 : index
    %c0_203 = arith.constant 0 : index
    %136 = vector.load %arg4[%c2_200, %c0_201, %c0_202, %c0_203] : memref<3x3x32x64xf32, #tpu.memory_space<vmem>>, vector<1x1x32x64xf32>
    %137 = vector.shape_cast %136 : vector<1x1x32x64xf32> to vector<32x64xf32>
    %cst_204 = arith.constant dense<0.000000e+00> : vector<64x64xf32>
    %138 = tpu.matmul %135, %137, %cst_204 {dimension_numbers = #tpu.dot_dimension_numbers<[1], [0], [0], [1], [0, 0, 1, 1], [], []>} : vector<64x32xf32>, vector<32x64xf32>, vector<64x64xf32> -> vector<64x64xf32>
    %139 = arith.addf %133, %138 : vector<64x64xf32>
    %c2_205 = arith.constant 2 : index
    %c1_206 = arith.constant 1 : index
    %c0_207 = arith.constant 0 : index
    %140 = vector.load %arg14[%c2_205, %c1_206, %c0_207] : memref<10x10x32xf32, #tpu.memory_space<vmem>>, vector<8x8x32xf32>
    %141 = vector.shape_cast %140 : vector<8x8x32xf32> to vector<64x32xf32>
    %c2_208 = arith.constant 2 : index
    %c1_209 = arith.constant 1 : index
    %c0_210 = arith.constant 0 : index
    %c0_211 = arith.constant 0 : index
    %142 = vector.load %arg4[%c2_208, %c1_209, %c0_210, %c0_211] : memref<3x3x32x64xf32, #tpu.memory_space<vmem>>, vector<1x1x32x64xf32>
    %143 = vector.shape_cast %142 : vector<1x1x32x64xf32> to vector<32x64xf32>
    %cst_212 = arith.constant dense<0.000000e+00> : vector<64x64xf32>
    %144 = tpu.matmul %141, %143, %cst_212 {dimension_numbers = #tpu.dot_dimension_numbers<[1], [0], [0], [1], [0, 0, 1, 1], [], []>} : vector<64x32xf32>, vector<32x64xf32>, vector<64x64xf32> -> vector<64x64xf32>
    %145 = arith.addf %139, %144 : vector<64x64xf32>
    %c2_213 = arith.constant 2 : index
    %c2_214 = arith.constant 2 : index
    %c0_215 = arith.constant 0 : index
    %146 = vector.load %arg14[%c2_213, %c2_214, %c0_215] : memref<10x10x32xf32, #tpu.memory_space<vmem>>, vector<8x8x32xf32>
    %147 = vector.shape_cast %146 : vector<8x8x32xf32> to vector<64x32xf32>
    %c2_216 = arith.constant 2 : index
    %c2_217 = arith.constant 2 : index
    %c0_218 = arith.constant 0 : index
    %c0_219 = arith.constant 0 : index
    %148 = vector.load %arg4[%c2_216, %c2_217, %c0_218, %c0_219] : memref<3x3x32x64xf32, #tpu.memory_space<vmem>>, vector<1x1x32x64xf32>
    %149 = vector.shape_cast %148 : vector<1x1x32x64xf32> to vector<32x64xf32>
    %cst_220 = arith.constant dense<0.000000e+00> : vector<64x64xf32>
    %150 = tpu.matmul %147, %149, %cst_220 {dimension_numbers = #tpu.dot_dimension_numbers<[1], [0], [0], [1], [0, 0, 1, 1], [], []>} : vector<64x32xf32>, vector<32x64xf32>, vector<64x64xf32> -> vector<64x64xf32>
    %151 = arith.addf %145, %150 : vector<64x64xf32>
    %c0_221 = arith.constant 0 : index
    %c0_222 = arith.constant 0 : index
    %152 = vector.load %arg5[%c0_221, %c0_222] : memref<1x64xf32, #tpu.memory_space<vmem>>, vector<1x64xf32>
    %153 = vector.shape_cast %152 : vector<1x64xf32> to vector<64xf32>
    %154 = vector.shape_cast %153 : vector<64xf32> to vector<1x64xf32>
    %155 = vector.broadcast %154 : vector<1x64xf32> to vector<64x64xf32>
    %156 = arith.addf %151, %155 : vector<64x64xf32>
    %cst_223 = arith.constant 0.000000e+00 : f32
    %157 = vector.broadcast %cst_223 : f32 to vector<64x64xf32>
    %158 = arith.maximumf %156, %157 : vector<64x64xf32>
    %159 = vector.shape_cast %158 : vector<64x64xf32> to vector<8x8x64xf32>
    %c1_224 = arith.constant 1 : index
    %c1_225 = arith.constant 1 : index
    %c0_226 = arith.constant 0 : index
    %160 = vector.load %arg15[%c1_224, %c1_225, %c0_226] : memref<10x10x64xf32, #tpu.memory_space<vmem>>, vector<8x8x64xf32>
    tpu.vector_store %arg15[%c1_224, %c1_225, %c0_226], %159 {strides = array<i32>} : memref<10x10x64xf32, #tpu.memory_space<vmem>>, vector<8x8x64xf32>,
    %c0_227 = arith.constant 0 : index
    %c0_228 = arith.constant 0 : index
    %c0_229 = arith.constant 0 : index
    %161 = vector.load %arg13[%c0_227, %c0_228, %c0_229] : memref<18x18x32xf32, #tpu.memory_space<vmem>>, vector<16x16x32xf32>
    %162 = vector.shape_cast %161 : vector<16x16x32xf32> to vector<256x32xf32>
    %c0_230 = arith.constant 0 : index
    %c0_231 = arith.constant 0 : index
    %c0_232 = arith.constant 0 : index
    %c0_233 = arith.constant 0 : index
    %163 = vector.load %arg6[%c0_230, %c0_231, %c0_232, %c0_233] : memref<3x3x32x128xf32, #tpu.memory_space<vmem>>, vector<1x1x32x128xf32>
    %164 = vector.shape_cast %163 : vector<1x1x32x128xf32> to vector<32x128xf32>
    %cst_234 = arith.constant dense<0.000000e+00> : vector<256x128xf32>
    %165 = tpu.matmul %162, %164, %cst_234 {dimension_numbers = #tpu.dot_dimension_numbers<[1], [0], [0], [1], [0, 0, 1, 1], [], []>} : vector<256x32xf32>, vector<32x128xf32>, vector<256x128xf32> -> vector<256x128xf32>
    %c0_235 = arith.constant 0 : index
    %c1_236 = arith.constant 1 : index
    %c0_237 = arith.constant 0 : index
    %166 = vector.load %arg13[%c0_235, %c1_236, %c0_237] : memref<18x18x32xf32, #tpu.memory_space<vmem>>, vector<16x16x32xf32>
    %167 = vector.shape_cast %166 : vector<16x16x32xf32> to vector<256x32xf32>
    %c0_238 = arith.constant 0 : index
    %c1_239 = arith.constant 1 : index
    %c0_240 = arith.constant 0 : index
    %c0_241 = arith.constant 0 : index
    %168 = vector.load %arg6[%c0_238, %c1_239, %c0_240, %c0_241] : memref<3x3x32x128xf32, #tpu.memory_space<vmem>>, vector<1x1x32x128xf32>
    %169 = vector.shape_cast %168 : vector<1x1x32x128xf32> to vector<32x128xf32>
    %cst_242 = arith.constant dense<0.000000e+00> : vector<256x128xf32>
    %170 = tpu.matmul %167, %169, %cst_242 {dimension_numbers = #tpu.dot_dimension_numbers<[1], [0], [0], [1], [0, 0, 1, 1], [], []>} : vector<256x32xf32>, vector<32x128xf32>, vector<256x128xf32> -> vector<256x128xf32>
    %171 = arith.addf %165, %170 : vector<256x128xf32>
    %c0_243 = arith.constant 0 : index
    %c2_244 = arith.constant 2 : index
    %c0_245 = arith.constant 0 : index
    %172 = vector.load %arg13[%c0_243, %c2_244, %c0_245] : memref<18x18x32xf32, #tpu.memory_space<vmem>>, vector<16x16x32xf32>
    %173 = vector.shape_cast %172 : vector<16x16x32xf32> to vector<256x32xf32>
    %c0_246 = arith.constant 0 : index
    %c2_247 = arith.constant 2 : index
    %c0_248 = arith.constant 0 : index
    %c0_249 = arith.constant 0 : index
    %174 = vector.load %arg6[%c0_246, %c2_247, %c0_248, %c0_249] : memref<3x3x32x128xf32, #tpu.memory_space<vmem>>, vector<1x1x32x128xf32>
    %175 = vector.shape_cast %174 : vector<1x1x32x128xf32> to vector<32x128xf32>
    %cst_250 = arith.constant dense<0.000000e+00> : vector<256x128xf32>
    %176 = tpu.matmul %173, %175, %cst_250 {dimension_numbers = #tpu.dot_dimension_numbers<[1], [0], [0], [1], [0, 0, 1, 1], [], []>} : vector<256x32xf32>, vector<32x128xf32>, vector<256x128xf32> -> vector<256x128xf32>
    %177 = arith.addf %171, %176 : vector<256x128xf32>
    %c1_251 = arith.constant 1 : index
    %c0_252 = arith.constant 0 : index
    %c0_253 = arith.constant 0 : index
    %178 = vector.load %arg13[%c1_251, %c0_252, %c0_253] : memref<18x18x32xf32, #tpu.memory_space<vmem>>, vector<16x16x32xf32>
    %179 = vector.shape_cast %178 : vector<16x16x32xf32> to vector<256x32xf32>
    %c1_254 = arith.constant 1 : index
    %c0_255 = arith.constant 0 : index
    %c0_256 = arith.constant 0 : index
    %c0_257 = arith.constant 0 : index
    %180 = vector.load %arg6[%c1_254, %c0_255, %c0_256, %c0_257] : memref<3x3x32x128xf32, #tpu.memory_space<vmem>>, vector<1x1x32x128xf32>
    %181 = vector.shape_cast %180 : vector<1x1x32x128xf32> to vector<32x128xf32>
    %cst_258 = arith.constant dense<0.000000e+00> : vector<256x128xf32>
    %182 = tpu.matmul %179, %181, %cst_258 {dimension_numbers = #tpu.dot_dimension_numbers<[1], [0], [0], [1], [0, 0, 1, 1], [], []>} : vector<256x32xf32>, vector<32x128xf32>, vector<256x128xf32> -> vector<256x128xf32>
    %183 = arith.addf %177, %182 : vector<256x128xf32>
    %c1_259 = arith.constant 1 : index
    %c1_260 = arith.constant 1 : index
    %c0_261 = arith.constant 0 : index
    %184 = vector.load %arg13[%c1_259, %c1_260, %c0_261] : memref<18x18x32xf32, #tpu.memory_space<vmem>>, vector<16x16x32xf32>
    %185 = vector.shape_cast %184 : vector<16x16x32xf32> to vector<256x32xf32>
    %c1_262 = arith.constant 1 : index
    %c1_263 = arith.constant 1 : index
    %c0_264 = arith.constant 0 : index
    %c0_265 = arith.constant 0 : index
    %186 = vector.load %arg6[%c1_262, %c1_263, %c0_264, %c0_265] : memref<3x3x32x128xf32, #tpu.memory_space<vmem>>, vector<1x1x32x128xf32>
    %187 = vector.shape_cast %186 : vector<1x1x32x128xf32> to vector<32x128xf32>
    %cst_266 = arith.constant dense<0.000000e+00> : vector<256x128xf32>
    %188 = tpu.matmul %185, %187, %cst_266 {dimension_numbers = #tpu.dot_dimension_numbers<[1], [0], [0], [1], [0, 0, 1, 1], [], []>} : vector<256x32xf32>, vector<32x128xf32>, vector<256x128xf32> -> vector<256x128xf32>
    %189 = arith.addf %183, %188 : vector<256x128xf32>
    %c1_267 = arith.constant 1 : index
    %c2_268 = arith.constant 2 : index
    %c0_269 = arith.constant 0 : index
    %190 = vector.load %arg13[%c1_267, %c2_268, %c0_269] : memref<18x18x32xf32, #tpu.memory_space<vmem>>, vector<16x16x32xf32>
    %191 = vector.shape_cast %190 : vector<16x16x32xf32> to vector<256x32xf32>
    %c1_270 = arith.constant 1 : index
    %c2_271 = arith.constant 2 : index
    %c0_272 = arith.constant 0 : index
    %c0_273 = arith.constant 0 : index
    %192 = vector.load %arg6[%c1_270, %c2_271, %c0_272, %c0_273] : memref<3x3x32x128xf32, #tpu.memory_space<vmem>>, vector<1x1x32x128xf32>
    %193 = vector.shape_cast %192 : vector<1x1x32x128xf32> to vector<32x128xf32>
    %cst_274 = arith.constant dense<0.000000e+00> : vector<256x128xf32>
    %194 = tpu.matmul %191, %193, %cst_274 {dimension_numbers = #tpu.dot_dimension_numbers<[1], [0], [0], [1], [0, 0, 1, 1], [], []>} : vector<256x32xf32>, vector<32x128xf32>, vector<256x128xf32> -> vector<256x128xf32>
    %195 = arith.addf %189, %194 : vector<256x128xf32>
    %c2_275 = arith.constant 2 : index
    %c0_276 = arith.constant 0 : index
    %c0_277 = arith.constant 0 : index
    %196 = vector.load %arg13[%c2_275, %c0_276, %c0_277] : memref<18x18x32xf32, #tpu.memory_space<vmem>>, vector<16x16x32xf32>
    %197 = vector.shape_cast %196 : vector<16x16x32xf32> to vector<256x32xf32>
    %c2_278 = arith.constant 2 : index
    %c0_279 = arith.constant 0 : index
    %c0_280 = arith.constant 0 : index
    %c0_281 = arith.constant 0 : index
    %198 = vector.load %arg6[%c2_278, %c0_279, %c0_280, %c0_281] : memref<3x3x32x128xf32, #tpu.memory_space<vmem>>, vector<1x1x32x128xf32>
    %199 = vector.shape_cast %198 : vector<1x1x32x128xf32> to vector<32x128xf32>
    %cst_282 = arith.constant dense<0.000000e+00> : vector<256x128xf32>
    %200 = tpu.matmul %197, %199, %cst_282 {dimension_numbers = #tpu.dot_dimension_numbers<[1], [0], [0], [1], [0, 0, 1, 1], [], []>} : vector<256x32xf32>, vector<32x128xf32>, vector<256x128xf32> -> vector<256x128xf32>
    %201 = arith.addf %195, %200 : vector<256x128xf32>
    %c2_283 = arith.constant 2 : index
    %c1_284 = arith.constant 1 : index
    %c0_285 = arith.constant 0 : index
    %202 = vector.load %arg13[%c2_283, %c1_284, %c0_285] : memref<18x18x32xf32, #tpu.memory_space<vmem>>, vector<16x16x32xf32>
    %203 = vector.shape_cast %202 : vector<16x16x32xf32> to vector<256x32xf32>
    %c2_286 = arith.constant 2 : index
    %c1_287 = arith.constant 1 : index
    %c0_288 = arith.constant 0 : index
    %c0_289 = arith.constant 0 : index
    %204 = vector.load %arg6[%c2_286, %c1_287, %c0_288, %c0_289] : memref<3x3x32x128xf32, #tpu.memory_space<vmem>>, vector<1x1x32x128xf32>
    %205 = vector.shape_cast %204 : vector<1x1x32x128xf32> to vector<32x128xf32>
    %cst_290 = arith.constant dense<0.000000e+00> : vector<256x128xf32>
    %206 = tpu.matmul %203, %205, %cst_290 {dimension_numbers = #tpu.dot_dimension_numbers<[1], [0], [0], [1], [0, 0, 1, 1], [], []>} : vector<256x32xf32>, vector<32x128xf32>, vector<256x128xf32> -> vector<256x128xf32>
    %207 = arith.addf %201, %206 : vector<256x128xf32>
    %c2_291 = arith.constant 2 : index
    %c2_292 = arith.constant 2 : index
    %c0_293 = arith.constant 0 : index
    %208 = vector.load %arg13[%c2_291, %c2_292, %c0_293] : memref<18x18x32xf32, #tpu.memory_space<vmem>>, vector<16x16x32xf32>
    %209 = vector.shape_cast %208 : vector<16x16x32xf32> to vector<256x32xf32>
    %c2_294 = arith.constant 2 : index
    %c2_295 = arith.constant 2 : index
    %c0_296 = arith.constant 0 : index
    %c0_297 = arith.constant 0 : index
    %210 = vector.load %arg6[%c2_294, %c2_295, %c0_296, %c0_297] : memref<3x3x32x128xf32, #tpu.memory_space<vmem>>, vector<1x1x32x128xf32>
    %211 = vector.shape_cast %210 : vector<1x1x32x128xf32> to vector<32x128xf32>
    %cst_298 = arith.constant dense<0.000000e+00> : vector<256x128xf32>
    %212 = tpu.matmul %209, %211, %cst_298 {dimension_numbers = #tpu.dot_dimension_numbers<[1], [0], [0], [1], [0, 0, 1, 1], [], []>} : vector<256x32xf32>, vector<32x128xf32>, vector<256x128xf32> -> vector<256x128xf32>
    %213 = arith.addf %207, %212 : vector<256x128xf32>
    %c0_299 = arith.constant 0 : index
    %c0_300 = arith.constant 0 : index
    %214 = vector.load %arg7[%c0_299, %c0_300] : memref<1x128xf32, #tpu.memory_space<vmem>>, vector<1x128xf32>
    %215 = vector.shape_cast %214 : vector<1x128xf32> to vector<128xf32>
    %216 = vector.shape_cast %215 : vector<128xf32> to vector<1x128xf32>
    %217 = vector.broadcast %216 : vector<1x128xf32> to vector<256x128xf32>
    %218 = arith.addf %213, %217 : vector<256x128xf32>
    %c0_301 = arith.constant 0 : index
    %c0_302 = arith.constant 0 : index
    %c0_303 = arith.constant 0 : index
    %219 = vector.load %arg10[%c0_301, %c0_302, %c0_303] : memref<1x256x128xf32, #tpu.memory_space<vmem>>, vector<1x256x128xf32>
    %220 = vector.shape_cast %219 : vector<1x256x128xf32> to vector<256x128xf32>
    %221 = vector.shape_cast %218 : vector<256x128xf32> to vector<1x256x128xf32>
    tpu.vector_store %arg10[%c0_301, %c0_302, %c0_303], %221 {strides = array<i32>} : memref<1x256x128xf32, #tpu.memory_space<vmem>>, vector<1x256x128xf32>,
    %c0_304 = arith.constant 0 : index
    %c0_305 = arith.constant 0 : index
    %c0_306 = arith.constant 0 : index
    %222 = vector.load %arg15[%c0_304, %c0_305, %c0_306] : memref<10x10x64xf32, #tpu.memory_space<vmem>>, vector<8x8x64xf32>
    %223 = vector.shape_cast %222 : vector<8x8x64xf32> to vector<64x64xf32>
    %c0_307 = arith.constant 0 : index
    %c0_308 = arith.constant 0 : index
    %c0_309 = arith.constant 0 : index
    %c0_310 = arith.constant 0 : index
    %224 = vector.load %arg8[%c0_307, %c0_308, %c0_309, %c0_310] : memref<3x3x64x128xf32, #tpu.memory_space<vmem>>, vector<1x1x64x128xf32>
    %225 = vector.shape_cast %224 : vector<1x1x64x128xf32> to vector<64x128xf32>
    %cst_311 = arith.constant dense<0.000000e+00> : vector<64x128xf32>
    %226 = tpu.matmul %223, %225, %cst_311 {dimension_numbers = #tpu.dot_dimension_numbers<[1], [0], [0], [1], [0, 0, 1, 1], [], []>} : vector<64x64xf32>, vector<64x128xf32>, vector<64x128xf32> -> vector<64x128xf32>
    %c0_312 = arith.constant 0 : index
    %c1_313 = arith.constant 1 : index
    %c0_314 = arith.constant 0 : index
    %227 = vector.load %arg15[%c0_312, %c1_313, %c0_314] : memref<10x10x64xf32, #tpu.memory_space<vmem>>, vector<8x8x64xf32>
    %228 = vector.shape_cast %227 : vector<8x8x64xf32> to vector<64x64xf32>
    %c0_315 = arith.constant 0 : index
    %c1_316 = arith.constant 1 : index
    %c0_317 = arith.constant 0 : index
    %c0_318 = arith.constant 0 : index
    %229 = vector.load %arg8[%c0_315, %c1_316, %c0_317, %c0_318] : memref<3x3x64x128xf32, #tpu.memory_space<vmem>>, vector<1x1x64x128xf32>
    %230 = vector.shape_cast %229 : vector<1x1x64x128xf32> to vector<64x128xf32>
    %cst_319 = arith.constant dense<0.000000e+00> : vector<64x128xf32>
    %231 = tpu.matmul %228, %230, %cst_319 {dimension_numbers = #tpu.dot_dimension_numbers<[1], [0], [0], [1], [0, 0, 1, 1], [], []>} : vector<64x64xf32>, vector<64x128xf32>, vector<64x128xf32> -> vector<64x128xf32>
    %232 = arith.addf %226, %231 : vector<64x128xf32>
    %c0_320 = arith.constant 0 : index
    %c2_321 = arith.constant 2 : index
    %c0_322 = arith.constant 0 : index
    %233 = vector.load %arg15[%c0_320, %c2_321, %c0_322] : memref<10x10x64xf32, #tpu.memory_space<vmem>>, vector<8x8x64xf32>
    %234 = vector.shape_cast %233 : vector<8x8x64xf32> to vector<64x64xf32>
    %c0_323 = arith.constant 0 : index
    %c2_324 = arith.constant 2 : index
    %c0_325 = arith.constant 0 : index
    %c0_326 = arith.constant 0 : index
    %235 = vector.load %arg8[%c0_323, %c2_324, %c0_325, %c0_326] : memref<3x3x64x128xf32, #tpu.memory_space<vmem>>, vector<1x1x64x128xf32>
    %236 = vector.shape_cast %235 : vector<1x1x64x128xf32> to vector<64x128xf32>
    %cst_327 = arith.constant dense<0.000000e+00> : vector<64x128xf32>
    %237 = tpu.matmul %234, %236, %cst_327 {dimension_numbers = #tpu.dot_dimension_numbers<[1], [0], [0], [1], [0, 0, 1, 1], [], []>} : vector<64x64xf32>, vector<64x128xf32>, vector<64x128xf32> -> vector<64x128xf32>
    %238 = arith.addf %232, %237 : vector<64x128xf32>
    %c1_328 = arith.constant 1 : index
    %c0_329 = arith.constant 0 : index
    %c0_330 = arith.constant 0 : index
    %239 = vector.load %arg15[%c1_328, %c0_329, %c0_330] : memref<10x10x64xf32, #tpu.memory_space<vmem>>, vector<8x8x64xf32>
    %240 = vector.shape_cast %239 : vector<8x8x64xf32> to vector<64x64xf32>
    %c1_331 = arith.constant 1 : index
    %c0_332 = arith.constant 0 : index
    %c0_333 = arith.constant 0 : index
    %c0_334 = arith.constant 0 : index
    %241 = vector.load %arg8[%c1_331, %c0_332, %c0_333, %c0_334] : memref<3x3x64x128xf32, #tpu.memory_space<vmem>>, vector<1x1x64x128xf32>
    %242 = vector.shape_cast %241 : vector<1x1x64x128xf32> to vector<64x128xf32>
    %cst_335 = arith.constant dense<0.000000e+00> : vector<64x128xf32>
    %243 = tpu.matmul %240, %242, %cst_335 {dimension_numbers = #tpu.dot_dimension_numbers<[1], [0], [0], [1], [0, 0, 1, 1], [], []>} : vector<64x64xf32>, vector<64x128xf32>, vector<64x128xf32> -> vector<64x128xf32>
    %244 = arith.addf %238, %243 : vector<64x128xf32>
    %c1_336 = arith.constant 1 : index
    %c1_337 = arith.constant 1 : index
    %c0_338 = arith.constant 0 : index
    %245 = vector.load %arg15[%c1_336, %c1_337, %c0_338] : memref<10x10x64xf32, #tpu.memory_space<vmem>>, vector<8x8x64xf32>
    %246 = vector.shape_cast %245 : vector<8x8x64xf32> to vector<64x64xf32>
    %c1_339 = arith.constant 1 : index
    %c1_340 = arith.constant 1 : index
    %c0_341 = arith.constant 0 : index
    %c0_342 = arith.constant 0 : index
    %247 = vector.load %arg8[%c1_339, %c1_340, %c0_341, %c0_342] : memref<3x3x64x128xf32, #tpu.memory_space<vmem>>, vector<1x1x64x128xf32>
    %248 = vector.shape_cast %247 : vector<1x1x64x128xf32> to vector<64x128xf32>
    %cst_343 = arith.constant dense<0.000000e+00> : vector<64x128xf32>
    %249 = tpu.matmul %246, %248, %cst_343 {dimension_numbers = #tpu.dot_dimension_numbers<[1], [0], [0], [1], [0, 0, 1, 1], [], []>} : vector<64x64xf32>, vector<64x128xf32>, vector<64x128xf32> -> vector<64x128xf32>
    %250 = arith.addf %244, %249 : vector<64x128xf32>
    %c1_344 = arith.constant 1 : index
    %c2_345 = arith.constant 2 : index
    %c0_346 = arith.constant 0 : index
    %251 = vector.load %arg15[%c1_344, %c2_345, %c0_346] : memref<10x10x64xf32, #tpu.memory_space<vmem>>, vector<8x8x64xf32>
    %252 = vector.shape_cast %251 : vector<8x8x64xf32> to vector<64x64xf32>
    %c1_347 = arith.constant 1 : index
    %c2_348 = arith.constant 2 : index
    %c0_349 = arith.constant 0 : index
    %c0_350 = arith.constant 0 : index
    %253 = vector.load %arg8[%c1_347, %c2_348, %c0_349, %c0_350] : memref<3x3x64x128xf32, #tpu.memory_space<vmem>>, vector<1x1x64x128xf32>
    %254 = vector.shape_cast %253 : vector<1x1x64x128xf32> to vector<64x128xf32>
    %cst_351 = arith.constant dense<0.000000e+00> : vector<64x128xf32>
    %255 = tpu.matmul %252, %254, %cst_351 {dimension_numbers = #tpu.dot_dimension_numbers<[1], [0], [0], [1], [0, 0, 1, 1], [], []>} : vector<64x64xf32>, vector<64x128xf32>, vector<64x128xf32> -> vector<64x128xf32>
    %256 = arith.addf %250, %255 : vector<64x128xf32>
    %c2_352 = arith.constant 2 : index
    %c0_353 = arith.constant 0 : index
    %c0_354 = arith.constant 0 : index
    %257 = vector.load %arg15[%c2_352, %c0_353, %c0_354] : memref<10x10x64xf32, #tpu.memory_space<vmem>>, vector<8x8x64xf32>
    %258 = vector.shape_cast %257 : vector<8x8x64xf32> to vector<64x64xf32>
    %c2_355 = arith.constant 2 : index
    %c0_356 = arith.constant 0 : index
    %c0_357 = arith.constant 0 : index
    %c0_358 = arith.constant 0 : index
    %259 = vector.load %arg8[%c2_355, %c0_356, %c0_357, %c0_358] : memref<3x3x64x128xf32, #tpu.memory_space<vmem>>, vector<1x1x64x128xf32>
    %260 = vector.shape_cast %259 : vector<1x1x64x128xf32> to vector<64x128xf32>
    %cst_359 = arith.constant dense<0.000000e+00> : vector<64x128xf32>
    %261 = tpu.matmul %258, %260, %cst_359 {dimension_numbers = #tpu.dot_dimension_numbers<[1], [0], [0], [1], [0, 0, 1, 1], [], []>} : vector<64x64xf32>, vector<64x128xf32>, vector<64x128xf32> -> vector<64x128xf32>
    %262 = arith.addf %256, %261 : vector<64x128xf32>
    %c2_360 = arith.constant 2 : index
    %c1_361 = arith.constant 1 : index
    %c0_362 = arith.constant 0 : index
    %263 = vector.load %arg15[%c2_360, %c1_361, %c0_362] : memref<10x10x64xf32, #tpu.memory_space<vmem>>, vector<8x8x64xf32>
    %264 = vector.shape_cast %263 : vector<8x8x64xf32> to vector<64x64xf32>
    %c2_363 = arith.constant 2 : index
    %c1_364 = arith.constant 1 : index
    %c0_365 = arith.constant 0 : index
    %c0_366 = arith.constant 0 : index
    %265 = vector.load %arg8[%c2_363, %c1_364, %c0_365, %c0_366] : memref<3x3x64x128xf32, #tpu.memory_space<vmem>>, vector<1x1x64x128xf32>
    %266 = vector.shape_cast %265 : vector<1x1x64x128xf32> to vector<64x128xf32>
    %cst_367 = arith.constant dense<0.000000e+00> : vector<64x128xf32>
    %267 = tpu.matmul %264, %266, %cst_367 {dimension_numbers = #tpu.dot_dimension_numbers<[1], [0], [0], [1], [0, 0, 1, 1], [], []>} : vector<64x64xf32>, vector<64x128xf32>, vector<64x128xf32> -> vector<64x128xf32>
    %268 = arith.addf %262, %267 : vector<64x128xf32>
    %c2_368 = arith.constant 2 : index
    %c2_369 = arith.constant 2 : index
    %c0_370 = arith.constant 0 : index
    %269 = vector.load %arg15[%c2_368, %c2_369, %c0_370] : memref<10x10x64xf32, #tpu.memory_space<vmem>>, vector<8x8x64xf32>
    %270 = vector.shape_cast %269 : vector<8x8x64xf32> to vector<64x64xf32>
    %c2_371 = arith.constant 2 : index
    %c2_372 = arith.constant 2 : index
    %c0_373 = arith.constant 0 : index
    %c0_374 = arith.constant 0 : index
    %271 = vector.load %arg8[%c2_371, %c2_372, %c0_373, %c0_374] : memref<3x3x64x128xf32, #tpu.memory_space<vmem>>, vector<1x1x64x128xf32>
    %272 = vector.shape_cast %271 : vector<1x1x64x128xf32> to vector<64x128xf32>
    %cst_375 = arith.constant dense<0.000000e+00> : vector<64x128xf32>
    %273 = tpu.matmul %270, %272, %cst_375 {dimension_numbers = #tpu.dot_dimension_numbers<[1], [0], [0], [1], [0, 0, 1, 1], [], []>} : vector<64x64xf32>, vector<64x128xf32>, vector<64x128xf32> -> vector<64x128xf32>
    %274 = arith.addf %268, %273 : vector<64x128xf32>
    %c0_376 = arith.constant 0 : index
    %c0_377 = arith.constant 0 : index
    %275 = vector.load %arg9[%c0_376, %c0_377] : memref<1x128xf32, #tpu.memory_space<vmem>>, vector<1x128xf32>
    %276 = vector.shape_cast %275 : vector<1x128xf32> to vector<128xf32>
    %277 = vector.shape_cast %276 : vector<128xf32> to vector<1x128xf32>
    %278 = vector.broadcast %277 : vector<1x128xf32> to vector<64x128xf32>
    %279 = arith.addf %274, %278 : vector<64x128xf32>
    %c0_378 = arith.constant 0 : index
    %c0_379 = arith.constant 0 : index
    %c0_380 = arith.constant 0 : index
    %280 = vector.load %arg11[%c0_378, %c0_379, %c0_380] : memref<1x64x128xf32, #tpu.memory_space<vmem>>, vector<1x64x128xf32>
    %281 = vector.shape_cast %280 : vector<1x64x128xf32> to vector<64x128xf32>
    %282 = vector.shape_cast %279 : vector<64x128xf32> to vector<1x64x128xf32>
    tpu.vector_store %arg11[%c0_378, %c0_379, %c0_380], %282 {strides = array<i32>} : memref<1x64x128xf32, #tpu.memory_space<vmem>>, vector<1x64x128xf32>,
    return
  }
  func.func @transform_0(%arg0: i32) -> (i32, i32, i32, i32) {
    %c0_i32 = arith.constant 0 : i32
    %c0_i32_0 = arith.constant 0 : i32
    %c0_i32_1 = arith.constant 0 : i32
    %c0_i32_2 = arith.constant 0 : i32
    return %arg0, %c0_i32, %c0_i32_0, %c0_i32_1 : i32, i32, i32, i32
  }
  func.func @transform_1(%arg0: i32) -> (i32, i32, i32, i32) {
    %c0_i32 = arith.constant 0 : i32
    %c0_i32_0 = arith.constant 0 : i32
    %c0_i32_1 = arith.constant 0 : i32
    %c0_i32_2 = arith.constant 0 : i32
    %c0_i32_3 = arith.constant 0 : i32
    return %c0_i32, %c0_i32_0, %c0_i32_1, %c0_i32_2 : i32, i32, i32, i32
  }
  func.func @transform_2(%arg0: i32) -> (i32, i32) {
    %c0_i32 = arith.constant 0 : i32
    %c0_i32_0 = arith.constant 0 : i32
    %c0_i32_1 = arith.constant 0 : i32
    return %c0_i32, %c0_i32_0 : i32, i32
  }
  func.func @transform_3(%arg0: i32) -> (i32, i32, i32, i32) {
    %c0_i32 = arith.constant 0 : i32
    %c0_i32_0 = arith.constant 0 : i32
    %c0_i32_1 = arith.constant 0 : i32
    %c0_i32_2 = arith.constant 0 : i32
    %c0_i32_3 = arith.constant 0 : i32
    return %c0_i32, %c0_i32_0, %c0_i32_1, %c0_i32_2 : i32, i32, i32, i32
  }
  func.func @transform_4(%arg0: i32) -> (i32, i32) {
    %c0_i32 = arith.constant 0 : i32
    %c0_i32_0 = arith.constant 0 : i32
    %c0_i32_1 = arith.constant 0 : i32
    return %c0_i32, %c0_i32_0 : i32, i32
  }
  func.func @transform_5(%arg0: i32) -> (i32, i32, i32, i32) {
    %c0_i32 = arith.constant 0 : i32
    %c0_i32_0 = arith.constant 0 : i32
    %c0_i32_1 = arith.constant 0 : i32
    %c0_i32_2 = arith.constant 0 : i32
    %c0_i32_3 = arith.constant 0 : i32
    return %c0_i32, %c0_i32_0, %c0_i32_1, %c0_i32_2 : i32, i32, i32, i32
  }
  func.func @transform_6(%arg0: i32) -> (i32, i32) {
    %c0_i32 = arith.constant 0 : i32
    %c0_i32_0 = arith.constant 0 : i32
    %c0_i32_1 = arith.constant 0 : i32
    return %c0_i32, %c0_i32_0 : i32, i32
  }
  func.func @transform_7(%arg0: i32) -> (i32, i32, i32, i32) {
    %c0_i32 = arith.constant 0 : i32
    %c0_i32_0 = arith.constant 0 : i32
    %c0_i32_1 = arith.constant 0 : i32
    %c0_i32_2 = arith.constant 0 : i32
    %c0_i32_3 = arith.constant 0 : i32
    return %c0_i32, %c0_i32_0, %c0_i32_1, %c0_i32_2 : i32, i32, i32, i32
  }
  func.func @transform_8(%arg0: i32) -> (i32, i32) {
    %c0_i32 = arith.constant 0 : i32
    %c0_i32_0 = arith.constant 0 : i32
    %c0_i32_1 = arith.constant 0 : i32
    return %c0_i32, %c0_i32_0 : i32, i32
  }
  func.func @transform_9(%arg0: i32) -> (i32, i32, i32) {
    %c0_i32 = arith.constant 0 : i32
    %c0_i32_0 = arith.constant 0 : i32
    %c0_i32_1 = arith.constant 0 : i32
    return %arg0, %c0_i32, %c0_i32_0 : i32, i32, i32
  }
  func.func @transform_10(%arg0: i32) -> (i32, i32, i32) {
    %c0_i32 = arith.constant 0 : i32
    %c0_i32_0 = arith.constant 0 : i32
    %c0_i32_1 = arith.constant 0 : i32
    return %arg0, %c0_i32, %c0_i32_0 : i32, i32, i32
  }
}

</mosaic_0001>

<llo_original>
// kernel: ssd_forward.1
$region0: #{ssd_forward.1}
  #allocation0 [shape = 'u32[]', space=smem, size = 0x4, offset = 0x4, fixed_abs, tag = 'smem constant byte address 0x4 - core index']
  #allocation1 [shape = 'u32[144,128]{1,0:T(1,128)}', space=vmem, size = 0x12000, scoped, tag = 'internal scratch']
  #allocation2 [shape = 'f32[18,18,8]{2,1,0:T(8,128)}', space=vmem, size = 0x36000, scoped, tag = 'scratch operand']
  #allocation3 [shape = 'f32[18,18,32]{2,1,0:T(8,128)}', space=vmem, size = 0x36000, scoped, tag = 'scratch operand']
  #allocation4 [shape = 'f32[10,10,32]{2,1,0:T(8,128)}', space=vmem, size = 0x14000, scoped, tag = 'scratch operand']
  #allocation5 [shape = 'f32[10,10,64]{2,1,0:T(8,128)}', space=vmem, size = 0x14000, scoped, tag = 'scratch operand']
  %s0 = inlined_call_operand.vmem [shape: f32[2,16,16,8], index: 0, kind: input, shape index: {}]
  %s1 = inlined_call_operand.vmem [shape: f32[3,3,8,32], index: 1, kind: input, shape index: {}]
  %s2 = inlined_call_operand.vmem [shape: f32[1,32], index: 2, kind: input, shape index: {}]
  %s3 = inlined_call_operand.vmem [shape: f32[3,3,32,64], index: 3, kind: input, shape index: {}]
  %s4 = inlined_call_operand.vmem [shape: f32[1,64], index: 4, kind: input, shape index: {}]
  %s5 = inlined_call_operand.vmem [shape: f32[3,3,32,128], index: 5, kind: input, shape index: {}]
  %s6 = inlined_call_operand.vmem [shape: f32[1,128], index: 6, kind: input, shape index: {}]
  %s7 = inlined_call_operand.vmem [shape: f32[3,3,64,128], index: 7, kind: input, shape index: {}]
  %s8 = inlined_call_operand.vmem [shape: f32[1,128], index: 8, kind: input, shape index: {}]
  %s9 = inlined_call_operand.vmem [shape: f32[2,256,128], index: 9, kind: output, shape index: {0}]
  %s10 = inlined_call_operand.vmem [shape: f32[2,64,128], index: 10, kind: output, shape index: {1}]
  %11 = xla_tuple %s9, %s10
  %s12 = sld [smem:[#allocation0]]
  $region77: #{ssd_forward.1} parent=0
    _
  %s14 = ssub.s32 1, %s12
  %s15 = scalar_select 0, %s14, %s12
  loop: start=0, step=1, limit=4
  $region2: #{ssd_forward.1} parent=0 // loop_pre_header
    _
  $region3: #{ssd_forward.1} parent=0 // loop_header
    %s17 = sphi 0, %s21
    %p18 = scmp.ge.s32.totalorder %s17, 4
    %s27 = sphi 0, %s29
    %s30 = sphi 0, %s27
    %s31 = sphi 0, %s30
    %s47 = sphi 0, %s31
    %s51 = sphi 0, %s51
    %s53 = sphi 0, %s51
    %s54 = sphi 0, %s53
    %s68 = sphi 0, %s54
    %s72 = sphi 0, %s72
    %s74 = sphi 0, %s72
    %s75 = sphi 0, %s74
    %s89 = sphi 0, %s75
    %s93 = sphi 0, %s93
    %s95 = sphi 0, %s93
    %s96 = sphi 0, %s95
    %s110 = sphi 0, %s96
    %s114 = sphi 0, %s114
    %s116 = sphi 0, %s114
    %s117 = sphi 0, %s116
    %s131 = sphi 0, %s117
    %s135 = sphi 0, %s135
    %s137 = sphi 0, %s135
    %s138 = sphi 0, %s137
    %s152 = sphi 0, %s138
    %s156 = sphi 0, %s156
    %s158 = sphi 0, %s156
    %s159 = sphi 0, %s158
    %s173 = sphi 0, %s159
    %s177 = sphi 0, %s177
    %s179 = sphi 0, %s177
    %s180 = sphi 0, %s179
    %s194 = sphi 0, %s180
    %s198 = sphi 0, %s198
    %s200 = sphi 0, %s198
    %s201 = sphi 0, %s200
    %s215 = sphi 0, %s201
    %s221 = sphi 0, %s223
    %s224 = sphi 0, %s221
    %s225 = sphi 0, %s224
    %s241 = sphi 0, %s225
    %s247 = sphi 0, %s249
    %s250 = sphi 0, %s247
    %s251 = sphi 0, %s250
    %s267 = sphi 0, %s251
  $region4: #{ssd_forward.1} parent=0 // loop_header_branch
    %20 = sbr.rel (%p18) target = $region8
  $region5: #{ssd_forward.1} parent=0 // loop_body
    %s22 = ssub.s32 %s17, 1
    %s23 = ssub.s32 %s17, 2
    %s24 = sadd.s32 %s17, 1
    %s25 = ssub.s32 %s17, %s24
    %p26 = scmp.eq.s32.totalorder %s25, 0
    %s28 = sadd.s32 %s27, 1
    %s29 = scalar_select %p26, %s27, %s28
    %p32 = pneg %p26
    %p33 = scmp.eq.s32.totalorder %s17, 1
    %p34 = por %p32, %p33
    %p35 = scmp.ne.s32.totalorder %s27, %s30
    %p36 = scmp.eq.s32.totalorder %s17, 0
    %p37 = por %p35, %p36
    %p38 = scmp.ne.s32.totalorder %s27, %s30
    %p39 = scmp.eq.s32.totalorder %s22, 1
    %p40 = por %p38, %p39
    %p41 = scmp.ne.s32.totalorder %s30, %s31
    %p42 = scmp.eq.s32.totalorder %s22, 0
    %p43 = por %p41, %p42
    %p44 = scmp.ne.s32.totalorder %s30, %s31
    %p45 = scmp.eq.s32.totalorder %s23, 1
    %p46 = por %p44, %p45
    %p48 = scmp.ne.s32.totalorder %s31, %s47
    %p49 = scmp.eq.s32.totalorder %s23, 0
    %p50 = por %p48, %p49
    %s52 = sadd.s32 %s51, 1
    %p55 = scmp.eq.s32.totalorder %s17, 1
    %p56 = scmp.ne.s32.totalorder %s51, %s53
    %p57 = scmp.eq.s32.totalorder %s17, 0
    %p58 = por %p56, %p57
    %p59 = scmp.ne.s32.totalorder %s51, %s53
    %p60 = scmp.eq.s32.totalorder %s22, 1
    %p61 = por %p59, %p60
    %p62 = scmp.ne.s32.totalorder %s53, %s54
    %p63 = scmp.eq.s32.totalorder %s22, 0
    %p64 = por %p62, %p63
    %p65 = scmp.ne.s32.totalorder %s53, %s54
    %p66 = scmp.eq.s32.totalorder %s23, 1
    %p67 = por %p65, %p66
    %p69 = scmp.ne.s32.totalorder %s54, %s68
    %p70 = scmp.eq.s32.totalorder %s23, 0
    %p71 = por %p69, %p70
    %s73 = sadd.s32 %s72, 1
    %p76 = scmp.eq.s32.totalorder %s17, 1
    %p77 = scmp.ne.s32.totalorder %s72, %s74
    %p78 = scmp.eq.s32.totalorder %s17, 0
    %p79 = por %p77, %p78
    %p80 = scmp.ne.s32.totalorder %s72, %s74
    %p81 = scmp.eq.s32.totalorder %s22, 1
    %p82 = por %p80, %p81
    %p83 = scmp.ne.s32.totalorder %s74, %s75
    %p84 = scmp.eq.s32.totalorder %s22, 0
    %p85 = por %p83, %p84
    %p86 = scmp.ne.s32.totalorder %s74, %s75
    %p87 = scmp.eq.s32.totalorder %s23, 1
    %p88 = por %p86, %p87
    %p90 = scmp.ne.s32.totalorder %s75, %s89
    %p91 = scmp.eq.s32.totalorder %s23, 0
    %p92 = por %p90, %p91
    %s94 = sadd.s32 %s93, 1
    %p97 = scmp.eq.s32.totalorder %s17, 1
    %p98 = scmp.ne.s32.totalorder %s93, %s95
    %p99 = scmp.eq.s32.totalorder %s17, 0
    %p100 = por %p98, %p99
    %p101 = scmp.ne.s32.totalorder %s93, %s95
    %p102 = scmp.eq.s32.totalorder %s22, 1
    %p103 = por %p101, %p102
    %p104 = scmp.ne.s32.totalorder %s95, %s96
    %p105 = scmp.eq.s32.totalorder %s22, 0
    %p106 = por %p104, %p105
    %p107 = scmp.ne.s32.totalorder %s95, %s96
    %p108 = scmp.eq.s32.totalorder %s23, 1
    %p109 = por %p107, %p108
    %p111 = scmp.ne.s32.totalorder %s96, %s110
    %p112 = scmp.eq.s32.totalorder %s23, 0
    %p113 = por %p111, %p112
    %s115 = sadd.s32 %s114, 1
    %p118 = scmp.eq.s32.totalorder %s17, 1
    %p119 = scmp.ne.s32.totalorder %s114, %s116
    %p120 = scmp.eq.s32.totalorder %s17, 0
    %p121 = por %p119, %p120
    %p122 = scmp.ne.s32.totalorder %s114, %s116
    %p123 = scmp.eq.s32.totalorder %s22, 1
    %p124 = por %p122, %p123
    %p125 = scmp.ne.s32.totalorder %s116, %s117
    %p126 = scmp.eq.s32.totalorder %s22, 0
    %p127 = por %p125, %p126
    %p128 = scmp.ne.s32.totalorder %s116, %s117
    %p129 = scmp.eq.s32.totalorder %s23, 1
    %p130 = por %p128, %p129
    %p132 = scmp.ne.s32.totalorder %s117, %s131
    %p133 = scmp.eq.s32.totalorder %s23, 0
    %p134 = por %p132, %p133
    %s136 = sadd.s32 %s135, 1
    %p139 = scmp.eq.s32.totalorder %s17, 1
    %p140 = scmp.ne.s32.totalorder %s135, %s137
    %p141 = scmp.eq.s32.totalorder %s17, 0
    %p142 = por %p140, %p141
    %p143 = scmp.ne.s32.totalorder %s135, %s137
    %p144 = scmp.eq.s32.totalorder %s22, 1
    %p145 = por %p143, %p144
    %p146 = scmp.ne.s32.totalorder %s137, %s138
    %p147 = scmp.eq.s32.totalorder %s22, 0
    %p148 = por %p146, %p147
    %p149 = scmp.ne.s32.totalorder %s137, %s138
    %p150 = scmp.eq.s32.totalorder %s23, 1
    %p151 = por %p149, %p150
    %p153 = scmp.ne.s32.totalorder %s138, %s152
    %p154 = scmp.eq.s32.totalorder %s23, 0
    %p155 = por %p153, %p154
    %s157 = sadd.s32 %s156, 1
    %p160 = scmp.eq.s32.totalorder %s17, 1
    %p161 = scmp.ne.s32.totalorder %s156, %s158
    %p162 = scmp.eq.s32.totalorder %s17, 0
    %p163 = por %p161, %p162
    %p164 = scmp.ne.s32.totalorder %s156, %s158
    %p165 = scmp.eq.s32.totalorder %s22, 1
    %p166 = por %p164, %p165
    %p167 = scmp.ne.s32.totalorder %s158, %s159
    %p168 = scmp.eq.s32.totalorder %s22, 0
    %p169 = por %p167, %p168
    %p170 = scmp.ne.s32.totalorder %s158, %s159
    %p171 = scmp.eq.s32.totalorder %s23, 1
    %p172 = por %p170, %p171
    %p174 = scmp.ne.s32.totalorder %s159, %s173
    %p175 = scmp.eq.s32.totalorder %s23, 0
    %p176 = por %p174, %p175
    %s178 = sadd.s32 %s177, 1
    %p181 = scmp.eq.s32.totalorder %s17, 1
    %p182 = scmp.ne.s32.totalorder %s177, %s179
    %p183 = scmp.eq.s32.totalorder %s17, 0
    %p184 = por %p182, %p183
    %p185 = scmp.ne.s32.totalorder %s177, %s179
    %p186 = scmp.eq.s32.totalorder %s22, 1
    %p187 = por %p185, %p186
    %p188 = scmp.ne.s32.totalorder %s179, %s180
    %p189 = scmp.eq.s32.totalorder %s22, 0
    %p190 = por %p188, %p189
    %p191 = scmp.ne.s32.totalorder %s179, %s180
    %p192 = scmp.eq.s32.totalorder %s23, 1
    %p193 = por %p191, %p192
    %p195 = scmp.ne.s32.totalorder %s180, %s194
    %p196 = scmp.eq.s32.totalorder %s23, 0
    %p197 = por %p195, %p196
    %s199 = sadd.s32 %s198, 1
    %p202 = scmp.eq.s32.totalorder %s17, 1
    %p203 = scmp.ne.s32.totalorder %s198, %s200
    %p204 = scmp.eq.s32.totalorder %s17, 0
    %p205 = por %p203, %p204
    %p206 = scmp.ne.s32.totalorder %s198, %s200
    %p207 = scmp.eq.s32.totalorder %s22, 1
    %p208 = por %p206, %p207
    %p209 = scmp.ne.s32.totalorder %s200, %s201
    %p210 = scmp.eq.s32.totalorder %s22, 0
    %p211 = por %p209, %p210
    %p212 = scmp.ne.s32.totalorder %s200, %s201
    %p213 = scmp.eq.s32.totalorder %s23, 1
    %p214 = por %p212, %p213
    %p216 = scmp.ne.s32.totalorder %s201, %s215
    %p217 = scmp.eq.s32.totalorder %s23, 0
    %p218 = por %p216, %p217
    %s219 = ssub.s32 %s17, %s24
    %p220 = scmp.eq.s32.totalorder %s219, 0
    %s222 = sadd.s32 %s221, 1
    %s223 = scalar_select %p220, %s221, %s222
    %p226 = pneg %p220
    %p227 = scmp.eq.s32.totalorder %s17, 1
    %p228 = por %p226, %p227
    %p229 = scmp.ne.s32.totalorder %s221, %s224
    %p230 = scmp.eq.s32.totalorder %s17, 0
    %p231 = por %p229, %p230
    %p232 = scmp.ne.s32.totalorder %s221, %s224
    %p233 = scmp.eq.s32.totalorder %s22, 1
    %p234 = por %p232, %p233
    %p235 = scmp.ne.s32.totalorder %s224, %s225
    %p236 = scmp.eq.s32.totalorder %s22, 0
    %p237 = por %p235, %p236
    %p238 = scmp.ne.s32.totalorder %s224, %s225
    %p239 = scmp.eq.s32.totalorder %s23, 1
    %p240 = por %p238, %p239
    %p242 = scmp.ne.s32.totalorder %s225, %s241
    %p243 = scmp.eq.s32.totalorder %s23, 0
    %p244 = por %p242, %p243
    %s245 = ssub.s32 %s17, %s24
    %p246 = scmp.eq.s32.totalorder %s245, 0
    %s248 = sadd.s32 %s247, 1
    %s249 = scalar_select %p246, %s247, %s248
    %p252 = pneg %p246
    %p253 = scmp.eq.s32.totalorder %s17, 1
    %p254 = por %p252, %p253
    %p255 = scmp.ne.s32.totalorder %s247, %s250
    %p256 = scmp.eq.s32.totalorder %s17, 0
    %p257 = por %p255, %p256
    %p258 = scmp.ne.s32.totalorder %s247, %s250
    %p259 = scmp.eq.s32.totalorder %s22, 1
    %p260 = por %p258, %p259
    %p261 = scmp.ne.s32.totalorder %s250, %s251
    %p262 = scmp.eq.s32.totalorder %s22, 0
    %p263 = por %p261, %p262
    %p264 = scmp.ne.s32.totalorder %s250, %s251
    %p265 = scmp.eq.s32.totalorder %s23, 1
    %p266 = por %p264, %p265
    %p268 = scmp.ne.s32.totalorder %s251, %s267
    %p269 = scmp.eq.s32.totalorder %s23, 0
    %p270 = por %p268, %p269
    %p271 = scmp.le.s32.totalorder 1, %s17
    %p272 = scmp.lt.s32.totalorder %s17, 3
    %p273 = pnand %p271, %p272
    %p274 = pneg %p273
    // Predicated region
    $region9: #{ssd_forward.1} parent=5 // pred_check
      _
    $region10: #{ssd_forward.1} parent=5 // pred_check_branch
      %276 = sbr.rel (%p273) target = $region12
    $region11: #{ssd_forward.1} parent=5 // pred_region
      %s277 = ssub.s32 %s17, 1
      // Predicated region
      $region13: #{ssd_forward.1} parent=11 // pred_check
        %p278 = pneg %p64
      $region14: #{ssd_forward.1} parent=11 // pred_check_branch
        %280 = sbr.rel (%p278) target = $region16
      $region15: #{ssd_forward.1} parent=11 // pred_region
        _
      $region16: #{ssd_forward.1} parent=11 // pred_fallthru
        _
      // Predicated region
      $region17: #{ssd_forward.1} parent=11 // pred_check
        %p281 = pneg %p85
      $region18: #{ssd_forward.1} parent=11 // pred_check_branch
        %283 = sbr.rel (%p281) target = $region20
      $region19: #{ssd_forward.1} parent=11 // pred_region
        _
      $region20: #{ssd_forward.1} parent=11 // pred_fallthru
        _
      // Predicated region
      $region21: #{ssd_forward.1} parent=11 // pred_check
        %p284 = pneg %p106
      $region22: #{ssd_forward.1} parent=11 // pred_check_branch
        %286 = sbr.rel (%p284) target = $region24
      $region23: #{ssd_forward.1} parent=11 // pred_region
        _
      $region24: #{ssd_forward.1} parent=11 // pred_fallthru
        _
      // Predicated region
      $region25: #{ssd_forward.1} parent=11 // pred_check
        %p287 = pneg %p127
      $region26: #{ssd_forward.1} parent=11 // pred_check_branch
        %289 = sbr.rel (%p287) target = $region28
      $region27: #{ssd_forward.1} parent=11 // pred_region
        _
      $region28: #{ssd_forward.1} parent=11 // pred_fallthru
        _
      // Predicated region
      $region29: #{ssd_forward.1} parent=11 // pred_check
        %p290 = pneg %p148
      $region30: #{ssd_forward.1} parent=11 // pred_check_branch
        %292 = sbr.rel (%p290) target = $region32
      $region31: #{ssd_forward.1} parent=11 // pred_region
        _
      $region32: #{ssd_forward.1} parent=11 // pred_fallthru
        _
      // Predicated region
      $region33: #{ssd_forward.1} parent=11 // pred_check
        %p293 = pneg %p169
      $region34: #{ssd_forward.1} parent=11 // pred_check_branch
        %295 = sbr.rel (%p293) target = $region36
      $region35: #{ssd_forward.1} parent=11 // pred_region
        _
      $region36: #{ssd_forward.1} parent=11 // pred_fallthru
        _
      // Predicated region
      $region37: #{ssd_forward.1} parent=11 // pred_check
        %p296 = pneg %p190
      $region38: #{ssd_forward.1} parent=11 // pred_check_branch
        %298 = sbr.rel (%p296) target = $region40
      $region39: #{ssd_forward.1} parent=11 // pred_region
        _
      $region40: #{ssd_forward.1} parent=11 // pred_fallthru
        _
      // Predicated region
      $region41: #{ssd_forward.1} parent=11 // pred_check
        %p299 = pneg %p211
      $region42: #{ssd_forward.1} parent=11 // pred_check_branch
        %301 = sbr.rel (%p299) target = $region44
      $region43: #{ssd_forward.1} parent=11 // pred_region
        _
      $region44: #{ssd_forward.1} parent=11 // pred_fallthru
        _
    $region12: #{ssd_forward.1} parent=5 // pred_fallthru
      _
    %p302 = scmp.lt.s32.totalorder %s17, 2
    // Predicated region
    $region45: #{ssd_forward.1} parent=5 // pred_check
      %p303 = pneg %p302
    $region46: #{ssd_forward.1} parent=5 // pred_check_branch
      %305 = sbr.rel (%p303) target = $region48
    $region47: #{ssd_forward.1} parent=5 // pred_region
      // Predicated region
      $region49: #{ssd_forward.1} parent=47 // pred_check
        %p306 = pneg %p37
      $region50: #{ssd_forward.1} parent=47 // pred_check_branch
        %308 = sbr.rel (%p306) target = $region52
      $region51: #{ssd_forward.1} parent=47 // pred_region
        %p309 = scmp.lt.s32.totalorder %s17, 1
        %s310 = scalar_select %p309, %s17, 1
        %s311 = smul.addr %s310, 32
        %s312 = smul.addr %s311, 8
        %s313 = scalar_lea.vmem %s0, %s312
      $region52: #{ssd_forward.1} parent=47 // pred_fallthru
        _
    $region48: #{ssd_forward.1} parent=5 // pred_fallthru
      _
    %p314 = scmp.le.s32.totalorder 1, %s17
    %p315 = scmp.lt.s32.totalorder %s17, 3
    %p316 = pnand %p314, %p315
    %p317 = pneg %p316
    // Predicated region
    $region53: #{ssd_forward.1} parent=5 // pred_check
      _
    $region54: #{ssd_forward.1} parent=5 // pred_check_branch
      %319 = sbr.rel (%p316) target = $region56
    $region55: #{ssd_forward.1} parent=5 // pred_region
      %s320 = ssub.s32 %s17, 1
      %p321 = scmp.lt.s32.totalorder %s22, 1
      %s322 = scalar_select %p321, %s22, 1
      %s323 = smul.addr %s322, 32
      %s324 = smul.addr %s323, 8
      %s325 = scalar_lea.vmem %s0, %s324
      %p326 = pneg %p43
      %p327 = pneg %p40
      %p328 = pneg %p64
      %p329 = pneg %p61
      %p330 = pneg %p85
      %p331 = pneg %p82
      %p332 = pneg %p106
      %p333 = pneg %p103
      %p334 = pneg %p127
      %p335 = pneg %p124
      %p336 = pneg %p148
      %p337 = pneg %p145
      %p338 = pneg %p169
      %p339 = pneg %p166
      %p340 = pneg %p190
      %p341 = pneg %p187
      %p342 = pneg %p211
      %p343 = pneg %p208
      %p344 = pneg %p237
      %p345 = pneg %p234
      %p346 = scmp.lt.s32.totalorder %s22, 1
      %s347 = scalar_select %p346, %s22, 1
      %s348 = smul.addr %s347, 32
      %s349 = smul.addr %s348, 8
      %s350 = scalar_lea.vmem %s9, %s349
      %p351 = pneg %p263
      %p352 = pneg %p260
      %p353 = scmp.lt.s32.totalorder %s22, 1
      %s354 = scalar_select %p353, %s22, 1
      %s355 = smul.addr %s354, 8
      %s356 = smul.addr %s355, 8
      %s357 = scalar_lea.vmem %s10, %s356
      %p358 = scmp.lt.s32.totalorder %s22, 1
      %s359 = scalar_select %p358, %s22, 1
      %s360 = smul.addr %s359, 32
      %s361 = smul.addr %s360, 8
      %s362 = scalar_lea.vmem %s0, %s361
      %p363 = scmp.lt.s32.totalorder %s22, 1
      %s364 = scalar_select %p363, %s22, 1
      %s365 = smul.addr %s364, 32
      %s366 = smul.addr %s365, 8
      %s367 = scalar_lea.vmem %s9, %s366
      %p368 = scmp.lt.s32.totalorder %s22, 1
      %s369 = scalar_select %p368, %s22, 1
      %s370 = smul.addr %s369, 8
      %s371 = smul.addr %s370, 8
      %s372 = scalar_lea.vmem %s10, %s371
      %vm373 = vcmask 64512
      %374 = vst.msk [vmem:[#allocation2] sm:$0xff] %vm373, 0.0
      %375 = vst.msk [vmem:[#allocation2 + $0x8] sm:$0xff] %vm373, 0.0
      %vm376 = vcmask 58368
      %377 = vst.msk [vmem:[#allocation2 + $0x10] sm:$0x3] %vm376, 0.0
      %s378 = scalar_lea.vmem [#allocation2], 408
      %379 = vst.msk [vmem:[%s378] sm:$0xff] %vm373, 0.0
      %380 = vst.msk [vmem:[%s378 + $0x8] sm:$0xff] %vm373, 0.0
      %381 = vst.msk [vmem:[%s378 + $0x10] sm:$0x3] %vm376, 0.0
      %vm382 = vcmask 57344
      %383 = vst.msk [vmem:[#allocation2] sm:$0x1] %vm382, 0.0
      %384 = vst.msk [vmem:[#allocation2 + $0x18] sm:$0x1] %vm382, 0.0
      %385 = vst.msk [vmem:[#allocation2 + $0x30] sm:$0x1] %vm382, 0.0
      %386 = vst.msk [vmem:[#allocation2 + $0x48] sm:$0x1] %vm382, 0.0
      %387 = vst.msk [vmem:[#allocation2 + $0x60] sm:$0x1] %vm382, 0.0
      %388 = vst.msk [vmem:[#allocation2 + $0x78] sm:$0x1] %vm382, 0.0
      %389 = vst.msk [vmem:[#allocation2 + $0x90] sm:$0x1] %vm382, 0.0
      %390 = vst.msk [vmem:[#allocation2 + $0xa8] sm:$0x1] %vm382, 0.0
      %391 = vst.msk [vmem:[#allocation2 + $0xc0] sm:$0x1] %vm382, 0.0
      %392 = vst.msk [vmem:[#allocation2 + $0xd8] sm:$0x1] %vm382, 0.0
      %393 = vst.msk [vmem:[#allocation2 + $0xf0] sm:$0x1] %vm382, 0.0
      %394 = vst.msk [vmem:[#allocation2 + $0x108] sm:$0x1] %vm382, 0.0
      %395 = vst.msk [vmem:[#allocation2 + $0x120] sm:$0x1] %vm382, 0.0
      %396 = vst.msk [vmem:[#allocation2 + $0x138] sm:$0x1] %vm382, 0.0
      %397 = vst.msk [vmem:[#allocation2 + $0x150] sm:$0x1] %vm382, 0.0
      %398 = vst.msk [vmem:[#allocation2 + $0x168] sm:$0x1] %vm382, 0.0
      %399 = vst.msk [vmem:[#allocation2 + $0x180] sm:$0x1] %vm382, 0.0
      %400 = vst.msk [vmem:[#allocation2 + $0x198] sm:$0x1] %vm382, 0.0
      %401 = vst.msk [vmem:[#allocation2 + $0x11] sm:$0x1] %vm382, 0.0
      %402 = vst.msk [vmem:[#allocation2 + $0x29] sm:$0x1] %vm382, 0.0
      %403 = vst.msk [vmem:[#allocation2 + $0x41] sm:$0x1] %vm382, 0.0
      %404 = vst.msk [vmem:[#allocation2 + $0x59] sm:$0x1] %vm382, 0.0
      %405 = vst.msk [vmem:[#allocation2 + $0x71] sm:$0x1] %vm382, 0.0
      %406 = vst.msk [vmem:[#allocation2 + $0x89] sm:$0x1] %vm382, 0.0
      %407 = vst.msk [vmem:[#allocation2 + $0xa1] sm:$0x1] %vm382, 0.0
      %408 = vst.msk [vmem:[#allocation2 + $0xb9] sm:$0x1] %vm382, 0.0
      %409 = vst.msk [vmem:[#allocation2 + $0xd1] sm:$0x1] %vm382, 0.0
      %410 = vst.msk [vmem:[#allocation2 + $0xe9] sm:$0x1] %vm382, 0.0
      %411 = vst.msk [vmem:[#allocation2 + $0x101] sm:$0x1] %vm382, 0.0
      %412 = vst.msk [vmem:[#allocation2 + $0x119] sm:$0x1] %vm382, 0.0
      %413 = vst.msk [vmem:[#allocation2 + $0x131] sm:$0x1] %vm382, 0.0
      %414 = vst.msk [vmem:[#allocation2 + $0x149] sm:$0x1] %vm382, 0.0
      %415 = vst.msk [vmem:[#allocation2 + $0x161] sm:$0x1] %vm382, 0.0
      %416 = vst.msk [vmem:[#allocation2 + $0x179] sm:$0x1] %vm382, 0.0
      %417 = vst.msk [vmem:[#allocation2 + $0x191] sm:$0x1] %vm382, 0.0
      %418 = vst.msk [vmem:[#allocation2 + $0x1a9] sm:$0x1] %vm382, 0.0
      %vm419 = vcmask 261120
      %420 = vst.msk [vmem:[#allocation3] sm:$0xff] %vm419, 0.0
      %421 = vst.msk [vmem:[#allocation3 + $0x8] sm:$0xff] %vm419, 0.0
      %vm422 = vcmask 254976
      %423 = vst.msk [vmem:[#allocation3 + $0x10] sm:$0x3] %vm422, 0.0
      %s424 = scalar_lea.vmem [#allocation3], 408
      %425 = vst.msk [vmem:[%s424] sm:$0xff] %vm419, 0.0
      %426 = vst.msk [vmem:[%s424 + $0x8] sm:$0xff] %vm419, 0.0
      %427 = vst.msk [vmem:[%s424 + $0x10] sm:$0x3] %vm422, 0.0
      %vm428 = vcmask 253952
      %429 = vst.msk [vmem:[#allocation3] sm:$0x1] %vm428, 0.0
      %430 = vst.msk [vmem:[#allocation3 + $0x18] sm:$0x1] %vm428, 0.0
      %431 = vst.msk [vmem:[#allocation3 + $0x30] sm:$0x1] %vm428, 0.0
      %432 = vst.msk [vmem:[#allocation3 + $0x48] sm:$0x1] %vm428, 0.0
      %433 = vst.msk [vmem:[#allocation3 + $0x60] sm:$0x1] %vm428, 0.0
      %434 = vst.msk [vmem:[#allocation3 + $0x78] sm:$0x1] %vm428, 0.0
      %435 = vst.msk [vmem:[#allocation3 + $0x90] sm:$0x1] %vm428, 0.0
      %436 = vst.msk [vmem:[#allocation3 + $0xa8] sm:$0x1] %vm428, 0.0
      %437 = vst.msk [vmem:[#allocation3 + $0xc0] sm:$0x1] %vm428, 0.0
      %438 = vst.msk [vmem:[#allocation3 + $0xd8] sm:$0x1] %vm428, 0.0
      %439 = vst.msk [vmem:[#allocation3 + $0xf0] sm:$0x1] %vm428, 0.0
      %440 = vst.msk [vmem:[#allocation3 + $0x108] sm:$0x1] %vm428, 0.0
      %441 = vst.msk [vmem:[#allocation3 + $0x120] sm:$0x1] %vm428, 0.0
      %442 = vst.msk [vmem:[#allocation3 + $0x138] sm:$0x1] %vm428, 0.0
      %443 = vst.msk [vmem:[#allocation3 + $0x150] sm:$0x1] %vm428, 0.0
      %444 = vst.msk [vmem:[#allocation3 + $0x168] sm:$0x1] %vm428, 0.0
      %445 = vst.msk [vmem:[#allocation3 + $0x180] sm:$0x1] %vm428, 0.0
      %446 = vst.msk [vmem:[#allocation3 + $0x198] sm:$0x1] %vm428, 0.0
      %447 = vst.msk [vmem:[#allocation3 + $0x11] sm:$0x1] %vm428, 0.0
      %448 = vst.msk [vmem:[#allocation3 + $0x29] sm:$0x1] %vm428, 0.0
      %449 = vst.msk [vmem:[#allocation3 + $0x41] sm:$0x1] %vm428, 0.0
      %450 = vst.msk [vmem:[#allocation3 + $0x59] sm:$0x1] %vm428, 0.0
      %451 = vst.msk [vmem:[#allocation3 + $0x71] sm:$0x1] %vm428, 0.0
      %452 = vst.msk [vmem:[#allocation3 + $0x89] sm:$0x1] %vm428, 0.0
      %453 = vst.msk [vmem:[#allocation3 + $0xa1] sm:$0x1] %vm428, 0.0
      %454 = vst.msk [vmem:[#allocation3 + $0xb9] sm:$0x1] %vm428, 0.0
      %455 = vst.msk [vmem:[#allocation3 + $0xd1] sm:$0x1] %vm428, 0.0
      %456 = vst.msk [vmem:[#allocation3 + $0xe9] sm:$0x1] %vm428, 0.0
      %457 = vst.msk [vmem:[#allocation3 + $0x101] sm:$0x1] %vm428, 0.0
      %458 = vst.msk [vmem:[#allocation3 + $0x119] sm:$0x1] %vm428, 0.0
      %459 = vst.msk [vmem:[#allocation3 + $0x131] sm:$0x1] %vm428, 0.0
      %460 = vst.msk [vmem:[#allocation3 + $0x149] sm:$0x1] %vm428, 0.0
      %461 = vst.msk [vmem:[#allocation3 + $0x161] sm:$0x1] %vm428, 0.0
      %462 = vst.msk [vmem:[#allocation3 + $0x179] sm:$0x1] %vm428, 0.0
      %463 = vst.msk [vmem:[#allocation3 + $0x191] sm:$0x1] %vm428, 0.0
      %464 = vst.msk [vmem:[#allocation3 + $0x1a9] sm:$0x1] %vm428, 0.0
      %465 = vst.msk [vmem:[#allocation4] sm:$0xff] %vm419, 0.0
      %466 = vst.msk [vmem:[#allocation4 + $0x8] sm:$0x3] %vm422, 0.0
      %s467 = scalar_lea.vmem [#allocation4], 144
      %468 = vst.msk [vmem:[%s467] sm:$0xff] %vm419, 0.0
      %469 = vst.msk [vmem:[%s467 + $0x8] sm:$0x3] %vm422, 0.0
      %470 = vst.msk [vmem:[#allocation4] sm:$0x1] %vm428, 0.0
      %471 = vst.msk [vmem:[#allocation4 + $0x10] sm:$0x1] %vm428, 0.0
      %472 = vst.msk [vmem:[#allocation4 + $0x20] sm:$0x1] %vm428, 0.0
      %473 = vst.msk [vmem:[#allocation4 + $0x30] sm:$0x1] %vm428, 0.0
      %474 = vst.msk [vmem:[#allocation4 + $0x40] sm:$0x1] %vm428, 0.0
      %475 = vst.msk [vmem:[#allocation4 + $0x50] sm:$0x1] %vm428, 0.0
      %476 = vst.msk [vmem:[#allocation4 + $0x60] sm:$0x1] %vm428, 0.0
      %477 = vst.msk [vmem:[#allocation4 + $0x70] sm:$0x1] %vm428, 0.0
      %478 = vst.msk [vmem:[#allocation4 + $0x80] sm:$0x1] %vm428, 0.0
      %479 = vst.msk [vmem:[#allocation4 + $0x90] sm:$0x1] %vm428, 0.0
      %480 = vst.msk [vmem:[#allocation4 + $0x9] sm:$0x1] %vm428, 0.0
      %481 = vst.msk [vmem:[#allocation4 + $0x19] sm:$0x1] %vm428, 0.0
      %482 = vst.msk [vmem:[#allocation4 + $0x29] sm:$0x1] %vm428, 0.0
      %483 = vst.msk [vmem:[#allocation4 + $0x39] sm:$0x1] %vm428, 0.0
      %484 = vst.msk [vmem:[#allocation4 + $0x49] sm:$0x1] %vm428, 0.0
      %485 = vst.msk [vmem:[#allocation4 + $0x59] sm:$0x1] %vm428, 0.0
      %486 = vst.msk [vmem:[#allocation4 + $0x69] sm:$0x1] %vm428, 0.0
      %487 = vst.msk [vmem:[#allocation4 + $0x79] sm:$0x1] %vm428, 0.0
      %488 = vst.msk [vmem:[#allocation4 + $0x89] sm:$0x1] %vm428, 0.0
      %489 = vst.msk [vmem:[#allocation4 + $0x99] sm:$0x1] %vm428, 0.0
      %vm490 = vcmask 523264
      %491 = vst.msk [vmem:[#allocation5] sm:$0xff] %vm490, 0.0
      %vm492 = vcmask 517120
      %493 = vst.msk [vmem:[#allocation5 + $0x8] sm:$0x3] %vm492, 0.0
      %s494 = scalar_lea.vmem [#allocation5], 144
      %495 = vst.msk [vmem:[%s494] sm:$0xff] %vm490, 0.0
      %496 = vst.msk [vmem:[%s494 + $0x8] sm:$0x3] %vm492, 0.0
      %vm497 = vcmask 516096
      %498 = vst.msk [vmem:[#allocation5] sm:$0x1] %vm497, 0.0
      %499 = vst.msk [vmem:[#allocation5 + $0x10] sm:$0x1] %vm497, 0.0
      %500 = vst.msk [vmem:[#allocation5 + $0x20] sm:$0x1] %vm497, 0.0
      %501 = vst.msk [vmem:[#allocation5 + $0x30] sm:$0x1] %vm497, 0.0
      %502 = vst.msk [vmem:[#allocation5 + $0x40] sm:$0x1] %vm497, 0.0
      %503 = vst.msk [vmem:[#allocation5 + $0x50] sm:$0x1] %vm497, 0.0
      %504 = vst.msk [vmem:[#allocation5 + $0x60] sm:$0x1] %vm497, 0.0
      %505 = vst.msk [vmem:[#allocation5 + $0x70] sm:$0x1] %vm497, 0.0
      %506 = vst.msk [vmem:[#allocation5 + $0x80] sm:$0x1] %vm497, 0.0
      %507 = vst.msk [vmem:[#allocation5 + $0x90] sm:$0x1] %vm497, 0.0
      %508 = vst.msk [vmem:[#allocation5 + $0x9] sm:$0x1] %vm497, 0.0
      %509 = vst.msk [vmem:[#allocation5 + $0x19] sm:$0x1] %vm497, 0.0
      %510 = vst.msk [vmem:[#allocation5 + $0x29] sm:$0x1] %vm497, 0.0
      %511 = vst.msk [vmem:[#allocation5 + $0x39] sm:$0x1] %vm497, 0.0
      %512 = vst.msk [vmem:[#allocation5 + $0x49] sm:$0x1] %vm497, 0.0
      %513 = vst.msk [vmem:[#allocation5 + $0x59] sm:$0x1] %vm497, 0.0
      %514 = vst.msk [vmem:[#allocation5 + $0x69] sm:$0x1] %vm497, 0.0
      %515 = vst.msk [vmem:[#allocation5 + $0x79] sm:$0x1] %vm497, 0.0
      %516 = vst.msk [vmem:[#allocation5 + $0x89] sm:$0x1] %vm497, 0.0
      %517 = vst.msk [vmem:[#allocation5 + $0x99] sm:$0x1] %vm497, 0.0
      %v518 = vld [vmem:[%s362] sm:$0xff]
      %v519 = vld [vmem:[%s362 + $0x8] sm:$0xff]
      %v520 = vld [vmem:[%s362 + $0x10] sm:$0xff]
      %v521 = vld [vmem:[%s362 + $0x18] sm:$0xff]
      %v522 = vld [vmem:[%s362 + $0x20] sm:$0xff]
      %v523 = vld [vmem:[%s362 + $0x28] sm:$0xff]
      %v524 = vld [vmem:[%s362 + $0x30] sm:$0xff]
      %v525 = vld [vmem:[%s362 + $0x38] sm:$0xff]
      %v526 = vld [vmem:[%s362 + $0x40] sm:$0xff]
      %v527 = vld [vmem:[%s362 + $0x48] sm:$0xff]
      %v528 = vld [vmem:[%s362 + $0x50] sm:$0xff]
      %v529 = vld [vmem:[%s362 + $0x58] sm:$0xff]
      %v530 = vld [vmem:[%s362 + $0x60] sm:$0xff]
      %v531 = vld [vmem:[%s362 + $0x68] sm:$0xff]
      %v532 = vld [vmem:[%s362 + $0x70] sm:$0xff]
      %v533 = vld [vmem:[%s362 + $0x78] sm:$0xff]
      %v534 = vld [vmem:[%s362 + $0x80] sm:$0xff]
      %v535 = vld [vmem:[%s362 + $0x88] sm:$0xff]
      %v536 = vld [vmem:[%s362 + $0x90] sm:$0xff]
      %v537 = vld [vmem:[%s362 + $0x98] sm:$0xff]
      %v538 = vld [vmem:[%s362 + $0xa0] sm:$0xff]
      %v539 = vld [vmem:[%s362 + $0xa8] sm:$0xff]
      %v540 = vld [vmem:[%s362 + $0xb0] sm:$0xff]
      %v541 = vld [vmem:[%s362 + $0xb8] sm:$0xff]
      %v542 = vld [vmem:[%s362 + $0xc0] sm:$0xff]
      %v543 = vld [vmem:[%s362 + $0xc8] sm:$0xff]
      %v544 = vld [vmem:[%s362 + $0xd0] sm:$0xff]
      %v545 = vld [vmem:[%s362 + $0xd8] sm:$0xff]
      %v546 = vld [vmem:[%s362 + $0xe0] sm:$0xff]
      %v547 = vld [vmem:[%s362 + $0xe8] sm:$0xff]
      %v548 = vld [vmem:[%s362 + $0xf0] sm:$0xff]
      %v549 = vld [vmem:[%s362 + $0xf8] sm:$0xff]
      %s550 = scalar_lea.vmem [#allocation2], 24
      %551 = vst.msk [vmem:[%s550 + $0x1] sm:$0xff] %vm373, %v518
      %552 = vst.msk [vmem:[%s550 + $0x9] sm:$0xff] %vm373, %v519
      %553 = vst.msk [vmem:[%s550 + $0x19] sm:$0xff] %vm373, %v520
      %554 = vst.msk [vmem:[%s550 + $0x21] sm:$0xff] %vm373, %v521
      %555 = vst.msk [vmem:[%s550 + $0x31] sm:$0xff] %vm373, %v522
      %556 = vst.msk [vmem:[%s550 + $0x39] sm:$0xff] %vm373, %v523
      %557 = vst.msk [vmem:[%s550 + $0x49] sm:$0xff] %vm373, %v524
      %558 = vst.msk [vmem:[%s550 + $0x51] sm:$0xff] %vm373, %v525
      %559 = vst.msk [vmem:[%s550 + $0x61] sm:$0xff] %vm373, %v526
      %560 = vst.msk [vmem:[%s550 + $0x69] sm:$0xff] %vm373, %v527
      %561 = vst.msk [vmem:[%s550 + $0x79] sm:$0xff] %vm373, %v528
      %562 = vst.msk [vmem:[%s550 + $0x81] sm:$0xff] %vm373, %v529
      %563 = vst.msk [vmem:[%s550 + $0x91] sm:$0xff] %vm373, %v530
      %564 = vst.msk [vmem:[%s550 + $0x99] sm:$0xff] %vm373, %v531
      %565 = vst.msk [vmem:[%s550 + $0xa9] sm:$0xff] %vm373, %v532
      %566 = vst.msk [vmem:[%s550 + $0xb1] sm:$0xff] %vm373, %v533
      %567 = vst.msk [vmem:[%s550 + $0xc1] sm:$0xff] %vm373, %v534
      %568 = vst.msk [vmem:[%s550 + $0xc9] sm:$0xff] %vm373, %v535
      %569 = vst.msk [vmem:[%s550 + $0xd9] sm:$0xff] %vm373, %v536
      %570 = vst.msk [vmem:[%s550 + $0xe1] sm:$0xff] %vm373, %v537
      %571 = vst.msk [vmem:[%s550 + $0xf1] sm:$0xff] %vm373, %v538
      %572 = vst.msk [vmem:[%s550 + $0xf9] sm:$0xff] %vm373, %v539
      %573 = vst.msk [vmem:[%s550 + $0x109] sm:$0xff] %vm373, %v540
      %574 = vst.msk [vmem:[%s550 + $0x111] sm:$0xff] %vm373, %v541
      %575 = vst.msk [vmem:[%s550 + $0x121] sm:$0xff] %vm373, %v542
      %576 = vst.msk [vmem:[%s550 + $0x129] sm:$0xff] %vm373, %v543
      %577 = vst.msk [vmem:[%s550 + $0x139] sm:$0xff] %vm373, %v544
      %578 = vst.msk [vmem:[%s550 + $0x141] sm:$0xff] %vm373, %v545
      %579 = vst.msk [vmem:[%s550 + $0x151] sm:$0xff] %vm373, %v546
      %580 = vst.msk [vmem:[%s550 + $0x159] sm:$0xff] %vm373, %v547
      %581 = vst.msk [vmem:[%s550 + $0x169] sm:$0xff] %vm373, %v548
      %582 = vst.msk [vmem:[%s550 + $0x171] sm:$0xff] %vm373, %v549
      %v583 = vld [vmem:[#allocation2] sm:$0xff]
      %v584 = vld [vmem:[#allocation2 + $0x8] sm:$0xff]
      %v585 = vld [vmem:[#allocation2 + $0x18] sm:$0xff]
      %v586 = vld [vmem:[#allocation2 + $0x20] sm:$0xff]
      %v587 = vld [vmem:[#allocation2 + $0x30] sm:$0xff]
      %v588 = vld [vmem:[#allocation2 + $0x38] sm:$0xff]
      %v589 = vld [vmem:[#allocation2 + $0x48] sm:$0xff]
      %v590 = vld [vmem:[#allocation2 + $0x50] sm:$0xff]
      %v591 = vld [vmem:[#allocation2 + $0x60] sm:$0xff]
      %v592 = vld [vmem:[#allocation2 + $0x68] sm:$0xff]
      %v593 = vld [vmem:[#allocation2 + $0x78] sm:$0xff]
      %v594 = vld [vmem:[#allocation2 + $0x80] sm:$0xff]
      %v595 = vld [vmem:[#allocation2 + $0x90] sm:$0xff]
      %v596 = vld [vmem:[#allocation2 + $0x98] sm:$0xff]
      %v597 = vld [vmem:[#allocation2 + $0xa8] sm:$0xff]
      %v598 = vld [vmem:[#allocation2 + $0xb0] sm:$0xff]
      %v599 = vld [vmem:[#allocation2 + $0xc0] sm:$0xff]
      %v600 = vld [vmem:[#allocation2 + $0xc8] sm:$0xff]
      %v601 = vld [vmem:[#allocation2 + $0xd8] sm:$0xff]
      %v602 = vld [vmem:[#allocation2 + $0xe0] sm:$0xff]
      %v603 = vld [vmem:[#allocation2 + $0xf0] sm:$0xff]
      %v604 = vld [vmem:[#allocation2 + $0xf8] sm:$0xff]
      %v605 = vld [vmem:[#allocation2 + $0x108] sm:$0xff]
      %v606 = vld [vmem:[#allocation2 + $0x110] sm:$0xff]
      %v607 = vld [vmem:[#allocation2 + $0x120] sm:$0xff]
      %v608 = vld [vmem:[#allocation2 + $0x128] sm:$0xff]
      %v609 = vld [vmem:[#allocation2 + $0x138] sm:$0xff]
      %v610 = vld [vmem:[#allocation2 + $0x140] sm:$0xff]
      %v611 = vld [vmem:[#allocation2 + $0x150] sm:$0xff]
      %v612 = vld [vmem:[#allocation2 + $0x158] sm:$0xff]
      %v613 = vld [vmem:[#allocation2 + $0x168] sm:$0xff]
      %v614 = vld [vmem:[#allocation2 + $0x170] sm:$0xff]
      %v615 = vld [vmem:[%s1] sm:$0xff]
      %v616 = vld [vmem:[#allocation2 + $0x1] sm:$0xff]
      %v617 = vld [vmem:[#allocation2 + $0x9] sm:$0xff]
      %v618 = vld [vmem:[#allocation2 + $0x19] sm:$0xff]
      %v619 = vld [vmem:[#allocation2 + $0x21] sm:$0xff]
      %v620 = vld [vmem:[#allocation2 + $0x31] sm:$0xff]
      %v621 = vld [vmem:[#allocation2 + $0x39] sm:$0xff]
      %v622 = vld [vmem:[#allocation2 + $0x49] sm:$0xff]
      %v623 = vld [vmem:[#allocation2 + $0x51] sm:$0xff]
      %v624 = vld [vmem:[#allocation2 + $0x61] sm:$0xff]
      %v625 = vld [vmem:[#allocation2 + $0x69] sm:$0xff]
      %v626 = vld [vmem:[#allocation2 + $0x79] sm:$0xff]
      %v627 = vld [vmem:[#allocation2 + $0x81] sm:$0xff]
      %v628 = vld [vmem:[#allocation2 + $0x91] sm:$0xff]
      %v629 = vld [vmem:[#allocation2 + $0x99] sm:$0xff]
      %v630 = vld [vmem:[#allocation2 + $0xa9] sm:$0xff]
      %v631 = vld [vmem:[#allocation2 + $0xb1] sm:$0xff]
      %v632 = vld [vmem:[#allocation2 + $0xc1] sm:$0xff]
      %v633 = vld [vmem:[#allocation2 + $0xc9] sm:$0xff]
      %v634 = vld [vmem:[#allocation2 + $0xd9] sm:$0xff]
      %v635 = vld [vmem:[#allocation2 + $0xe1] sm:$0xff]
      %v636 = vld [vmem:[#allocation2 + $0xf1] sm:$0xff]
      %v637 = vld [vmem:[#allocation2 + $0xf9] sm:$0xff]
      %v638 = vld [vmem:[#allocation2 + $0x109] sm:$0xff]
      %v639 = vld [vmem:[#allocation2 + $0x111] sm:$0xff]
      %v640 = vld [vmem:[#allocation2 + $0x121] sm:$0xff]
      %v641 = vld [vmem:[#allocation2 + $0x129] sm:$0xff]
      %v642 = vld [vmem:[#allocation2 + $0x139] sm:$0xff]
      %v643 = vld [vmem:[#allocation2 + $0x141] sm:$0xff]
      %v644 = vld [vmem:[#allocation2 + $0x151] sm:$0xff]
      %v645 = vld [vmem:[#allocation2 + $0x159] sm:$0xff]
      %v646 = vld [vmem:[#allocation2 + $0x169] sm:$0xff]
      %v647 = vld [vmem:[#allocation2 + $0x171] sm:$0xff]
      %s648 = scalar_lea.vmem %s1, 8
      %v649 = vld [vmem:[%s648] sm:$0xff]
      %v651 = vsel %vm373, %v616, 0
      %v654 = vsel %vm373, %v617, 0
      %v657 = vsel %vm373, %v618, 0
      %v660 = vsel %vm373, %v619, 0
      %v663 = vsel %vm373, %v620, 0
      %v666 = vsel %vm373, %v621, 0
      %v669 = vsel %vm373, %v622, 0
      %v672 = vsel %vm373, %v623, 0
      %v675 = vsel %vm373, %v624, 0
      %v678 = vsel %vm373, %v625, 0
      %v681 = vsel %vm373, %v626, 0
      %v684 = vsel %vm373, %v627, 0
      %v687 = vsel %vm373, %v628, 0
      %v690 = vsel %vm373, %v629, 0
      %v693 = vsel %vm373, %v630, 0
      %v696 = vsel %vm373, %v631, 0
      %v699 = vsel %vm373, %v632, 0
      %v702 = vsel %vm373, %v633, 0
      %v705 = vsel %vm373, %v634, 0
      %v708 = vsel %vm373, %v635, 0
      %v711 = vsel %vm373, %v636, 0
      %v714 = vsel %vm373, %v637, 0
      %v717 = vsel %vm373, %v638, 0
      %v720 = vsel %vm373, %v639, 0
      %v723 = vsel %vm373, %v640, 0
      %v726 = vsel %vm373, %v641, 0
      %v729 = vsel %vm373, %v642, 0
      %v732 = vsel %vm373, %v643, 0
      %v735 = vsel %vm373, %v644, 0
      %v738 = vsel %vm373, %v645, 0
      %v741 = vsel %vm373, %v646, 0
      %v744 = vsel %vm373, %v647, 0
      %746 = vmatprep.subr.mxu0 0.0
      %747 = vmatpush1.msra.mxu0 0.0
      %748 = vmatprep.subr.mxu0 0.0
      %749 = vmatpush1.msra.mxu0 0.0
      %750 = vmatprep.subr.mxu0 0.0
      %751 = vmatpush1.msra.mxu0 0.0
      %752 = vmatprep.subr.mxu0 0.0
      %753 = vmatpush1.msra.mxu0 0.0
      %754 = vmatprep.subr.mxu0 0.0
      %755 = vmatpush1.msra.mxu0 0.0
      %756 = vmatprep.subr.mxu0 0.0
      %757 = vmatpush1.msra.mxu0 0.0
      %758 = vmatprep.subr.mxu0 0.0
      %759 = vmatpush1.msra.mxu0 0.0
      %760 = vmatprep.subr.mxu0 0.0
      %761 = vmatpush1.msra.mxu0 0.0
      %762 = vmatprep.subr.mxu0 0.0
      %763 = vmatpush1.msra.mxu0 0.0
      %764 = vmatprep.subr.mxu0 0.0
      %765 = vmatpush1.msra.mxu0 0.0
      %766 = vmatprep.subr.mxu0 0.0
      %767 = vmatpush1.msra.mxu0 0.0
      %768 = vmatprep.subr.mxu0 0.0
      %769 = vmatpush1.msra.mxu0 0.0
      %770 = vmatprep.subr.mxu0 0.0
      %771 = vmatpush1.msra.mxu0 0.0
      %772 = vmatprep.subr.mxu0 0.0
      %773 = vmatpush1.msra.mxu0 0.0
      %774 = vmatprep.subr.mxu0 0.0
      %775 = vmatpush1.msra.mxu0 0.0
      %776 = vmatprep.subr.mxu0 0.0
      %777 = vmatpush1.msra.mxu0 %v649
      %778 = vmatprep.subr.mxu0 0.0
      %779 = vmatpush2.msra.mxu0 0.0
      %780 = vmatprep.subr.mxu0 0.0
      %781 = vmatpush2.msra.mxu0 0.0
      %782 = vmatprep.subr.mxu0 0.0
      %783 = vmatpush2.msra.mxu0 0.0
      %784 = vmatprep.subr.mxu0 0.0
      %785 = vmatpush2.msra.mxu0 0.0
      %786 = vmatprep.subr.mxu0 0.0
      %787 = vmatpush2.msra.mxu0 0.0
      %788 = vmatprep.subr.mxu0 0.0
      %789 = vmatpush2.msra.mxu0 0.0
      %790 = vmatprep.subr.mxu0 0.0
      %791 = vmatpush2.msra.mxu0 0.0
      %792 = vmatprep.subr.mxu0 0.0
      %793 = vmatpush2.msra.mxu0 0.0
      %794 = vmatprep.subr.mxu0 0.0
      %795 = vmatpush2.msra.mxu0 0.0
      %796 = vmatprep.subr.mxu0 0.0
      %797 = vmatpush2.msra.mxu0 0.0
      %798 = vmatprep.subr.mxu0 0.0
      %799 = vmatpush2.msra.mxu0 0.0
      %800 = vmatprep.subr.mxu0 0.0
      %801 = vmatpush2.msra.mxu0 0.0
      %802 = vmatprep.subr.mxu0 0.0
      %803 = vmatpush2.msra.mxu0 0.0
      %804 = vmatprep.subr.mxu0 0.0
      %805 = vmatpush2.msra.mxu0 0.0
      %806 = vmatprep.subr.mxu0 0.0
      %807 = vmatpush2.msra.mxu0 0.0
      %808 = vmatprep.subr.mxu0 0.0
      %809 = vmatpush2.msra.mxu0 0.0
      %810 = vmatprep.mubr.f32.mxu0 0.0
      %811 = vmatmul.mubr.f32.gmra.mxu0 %v651
      %v812 = vpop.f32.mrf.mxu0
      %v813 = vadd.f32 0.0, %v812
      %v814 = vpop.f32.mrf.mxu0
      %815 = vmatprep.mubr.f32.mxu0 0.0
      %816 = vmatmul.mubr.f32.gmra.mxu0 %v654
      %v817 = vpop.f32.mrf.mxu0
      %v818 = vadd.f32 0.0, %v817
      %v819 = vpop.f32.mrf.mxu0
      %820 = vmatprep.mubr.f32.mxu0 0.0
      %821 = vmatmul.mubr.f32.gmra.mxu0 %v657
      %v822 = vpop.f32.mrf.mxu0
      %v823 = vadd.f32 0.0, %v822
      %v824 = vpop.f32.mrf.mxu0
      %825 = vmatprep.mubr.f32.mxu0 0.0
      %826 = vmatmul.mubr.f32.gmra.mxu0 %v660
      %v827 = vpop.f32.mrf.mxu0
      %v828 = vadd.f32 0.0, %v827
      %v829 = vpop.f32.mrf.mxu0
      %830 = vmatprep.mubr.f32.mxu0 0.0
      %831 = vmatmul.mubr.f32.gmra.mxu0 %v663
      %v832 = vpop.f32.mrf.mxu0
      %v833 = vadd.f32 0.0, %v832
      %v834 = vpop.f32.mrf.mxu0
      %835 = vmatprep.mubr.f32.mxu0 0.0
      %836 = vmatmul.mubr.f32.gmra.mxu0 %v666
      %v837 = vpop.f32.mrf.mxu0
      %v838 = vadd.f32 0.0, %v837
      %v839 = vpop.f32.mrf.mxu0
      %840 = vmatprep.mubr.f32.mxu0 0.0
      %841 = vmatmul.mubr.f32.gmra.mxu0 %v669
      %v842 = vpop.f32.mrf.mxu0
      %v843 = vadd.f32 0.0, %v842
      %v844 = vpop.f32.mrf.mxu0
      %845 = vmatprep.mubr.f32.mxu0 0.0
      %846 = vmatmul.mubr.f32.gmra.mxu0 %v672
      %v847 = vpop.f32.mrf.mxu0
      %v848 = vadd.f32 0.0, %v847
      %v849 = vpop.f32.mrf.mxu0
      %850 = vmatprep.mubr.f32.mxu0 0.0
      %851 = vmatmul.mubr.f32.gmra.mxu0 %v675
      %v852 = vpop.f32.mrf.mxu0
      %v853 = vadd.f32 0.0, %v852
      %v854 = vpop.f32.mrf.mxu0
      %855 = vmatprep.mubr.f32.mxu0 0.0
      %856 = vmatmul.mubr.f32.gmra.mxu0 %v678
      %v857 = vpop.f32.mrf.mxu0
      %v858 = vadd.f32 0.0, %v857
      %v859 = vpop.f32.mrf.mxu0
      %860 = vmatprep.mubr.f32.mxu0 0.0
      %861 = vmatmul.mubr.f32.gmra.mxu0 %v681
      %v862 = vpop.f32.mrf.mxu0
      %v863 = vadd.f32 0.0, %v862
      %v864 = vpop.f32.mrf.mxu0
      %865 = vmatprep.mubr.f32.mxu0 0.0
      %866 = vmatmul.mubr.f32.gmra.mxu0 %v684
      %v867 = vpop.f32.mrf.mxu0
      %v868 = vadd.f32 0.0, %v867
      %v869 = vpop.f32.mrf.mxu0
      %870 = vmatprep.mubr.f32.mxu0 0.0
      %871 = vmatmul.mubr.f32.gmra.mxu0 %v687
      %v872 = vpop.f32.mrf.mxu0
      %v873 = vadd.f32 0.0, %v872
      %v874 = vpop.f32.mrf.mxu0
      %875 = vmatprep.mubr.f32.mxu0 0.0
      %876 = vmatmul.mubr.f32.gmra.mxu0 %v690
      %v877 = vpop.f32.mrf.mxu0
      %v878 = vadd.f32 0.0, %v877
      %v879 = vpop.f32.mrf.mxu0
      %880 = vmatprep.mubr.f32.mxu0 0.0
      %881 = vmatmul.mubr.f32.gmra.mxu0 %v693
      %v882 = vpop.f32.mrf.mxu0
      %v883 = vadd.f32 0.0, %v882
      %v884 = vpop.f32.mrf.mxu0
      %885 = vmatprep.mubr.f32.mxu0 0.0
      %886 = vmatmul.mubr.f32.gmra.mxu0 %v696
      %v887 = vpop.f32.mrf.mxu0
      %v888 = vadd.f32 0.0, %v887
      %v889 = vpop.f32.mrf.mxu0
      %890 = vmatprep.mubr.f32.mxu0 0.0
      %891 = vmatmul.mubr.f32.gmra.mxu0 %v699
      %v892 = vpop.f32.mrf.mxu0
      %v893 = vadd.f32 0.0, %v892
      %v894 = vpop.f32.mrf.mxu0
      %895 = vmatprep.mubr.f32.mxu0 0.0
      %896 = vmatmul.mubr.f32.gmra.mxu0 %v702
      %v897 = vpop.f32.mrf.mxu0
      %v898 = vadd.f32 0.0, %v897
      %v899 = vpop.f32.mrf.mxu0
      %900 = vmatprep.mubr.f32.mxu0 0.0
      %901 = vmatmul.mubr.f32.gmra.mxu0 %v705
      %v902 = vpop.f32.mrf.mxu0
      %v903 = vadd.f32 0.0, %v902
      %v904 = vpop.f32.mrf.mxu0
      %905 = vmatprep.mubr.f32.mxu0 0.0
      %906 = vmatmul.mubr.f32.gmra.mxu0 %v708
      %v907 = vpop.f32.mrf.mxu0
      %v908 = vadd.f32 0.0, %v907
      %v909 = vpop.f32.mrf.mxu0
      %910 = vmatprep.mubr.f32.mxu0 0.0
      %911 = vmatmul.mubr.f32.gmra.mxu0 %v711
      %v912 = vpop.f32.mrf.mxu0
      %v913 = vadd.f32 0.0, %v912
      %v914 = vpop.f32.mrf.mxu0
      %915 = vmatprep.mubr.f32.mxu0 0.0
      %916 = vmatmul.mubr.f32.gmra.mxu0 %v714
      %v917 = vpop.f32.mrf.mxu0
      %v918 = vadd.f32 0.0, %v917
      %v919 = vpop.f32.mrf.mxu0
      %920 = vmatprep.mubr.f32.mxu0 0.0
      %921 = vmatmul.mubr.f32.gmra.mxu0 %v717
      %v922 = vpop.f32.mrf.mxu0
      %v923 = vadd.f32 0.0, %v922
      %v924 = vpop.f32.mrf.mxu0
      %925 = vmatprep.mubr.f32.mxu0 0.0
      %926 = vmatmul.mubr.f32.gmra.mxu0 %v720
      %v927 = vpop.f32.mrf.mxu0
      %v928 = vadd.f32 0.0, %v927
      %v929 = vpop.f32.mrf.mxu0
      %930 = vmatprep.mubr.f32.mxu0 0.0
      %931 = vmatmul.mubr.f32.gmra.mxu0 %v723
      %v932 = vpop.f32.mrf.mxu0
      %v933 = vadd.f32 0.0, %v932
      %v934 = vpop.f32.mrf.mxu0
      %935 = vmatprep.mubr.f32.mxu0 0.0
      %936 = vmatmul.mubr.f32.gmra.mxu0 %v726
      %v937 = vpop.f32.mrf.mxu0
      %v938 = vadd.f32 0.0, %v937
      %v939 = vpop.f32.mrf.mxu0
      %940 = vmatprep.mubr.f32.mxu0 0.0
      %941 = vmatmul.mubr.f32.gmra.mxu0 %v729
      %v942 = vpop.f32.mrf.mxu0
      %v943 = vadd.f32 0.0, %v942
      %v944 = vpop.f32.mrf.mxu0
      %945 = vmatprep.mubr.f32.mxu0 0.0
      %946 = vmatmul.mubr.f32.gmra.mxu0 %v732
      %v947 = vpop.f32.mrf.mxu0
      %v948 = vadd.f32 0.0, %v947
      %v949 = vpop.f32.mrf.mxu0
      %950 = vmatprep.mubr.f32.mxu0 0.0
      %951 = vmatmul.mubr.f32.gmra.mxu0 %v735
      %v952 = vpop.f32.mrf.mxu0
      %v953 = vadd.f32 0.0, %v952
      %v954 = vpop.f32.mrf.mxu0
      %955 = vmatprep.mubr.f32.mxu0 0.0
      %956 = vmatmul.mubr.f32.gmra.mxu0 %v738
      %v957 = vpop.f32.mrf.mxu0
      %v958 = vadd.f32 0.0, %v957
      %v959 = vpop.f32.mrf.mxu0
      %960 = vmatprep.mubr.f32.mxu0 0.0
      %961 = vmatmul.mubr.f32.gmra.mxu0 %v741
      %v962 = vpop.f32.mrf.mxu0
      %v963 = vadd.f32 0.0, %v962
      %v964 = vpop.f32.mrf.mxu0
      %965 = vmatprep.mubr.f32.mxu0 0.0
      %966 = vmatmul.mubr.f32.gmra.mxu0 %v744
      %v967 = vpop.f32.mrf.mxu0
      %v968 = vadd.f32 0.0, %v967
      %v969 = vpop.f32.mrf.mxu0
      %970 = vdwg.mxu0
      %v972 = vsel %vm373, %v583, 0
      %v975 = vsel %vm373, %v584, 0
      %v978 = vsel %vm373, %v585, 0
      %v981 = vsel %vm373, %v586, 0
      %v984 = vsel %vm373, %v587, 0
      %v987 = vsel %vm373, %v588, 0
      %v990 = vsel %vm373, %v589, 0
      %v993 = vsel %vm373, %v590, 0
      %v996 = vsel %vm373, %v591, 0
      %v999 = vsel %vm373, %v592, 0
      %v1002 = vsel %vm373, %v593, 0
      %v1005 = vsel %vm373, %v594, 0
      %v1008 = vsel %vm373, %v595, 0
      %v1011 = vsel %vm373, %v596, 0
      %v1014 = vsel %vm373, %v597, 0
      %v1017 = vsel %vm373, %v598, 0
      %v1020 = vsel %vm373, %v599, 0
      %v1023 = vsel %vm373, %v600, 0
      %v1026 = vsel %vm373, %v601, 0
      %v1029 = vsel %vm373, %v602, 0
      %v1032 = vsel %vm373, %v603, 0
      %v1035 = vsel %vm373, %v604, 0
      %v1038 = vsel %vm373, %v605, 0
      %v1041 = vsel %vm373, %v606, 0
      %v1044 = vsel %vm373, %v607, 0
      %v1047 = vsel %vm373, %v608, 0
      %v1050 = vsel %vm373, %v609, 0
      %v1053 = vsel %vm373, %v610, 0
      %v1056 = vsel %vm373, %v611, 0
      %v1059 = vsel %vm373, %v612, 0
      %v1062 = vsel %vm373, %v613, 0
      %v1065 = vsel %vm373, %v614, 0
      %1067 = vmatprep.subr.mxu0 0.0
      %1068 = vmatpush1.msra.mxu0 0.0
      %1069 = vmatprep.subr.mxu0 0.0
      %1070 = vmatpush1.msra.mxu0 0.0
      %1071 = vmatprep.subr.mxu0 0.0
      %1072 = vmatpush1.msra.mxu0 0.0
      %1073 = vmatprep.subr.mxu0 0.0
      %1074 = vmatpush1.msra.mxu0 0.0
      %1075 = vmatprep.subr.mxu0 0.0
      %1076 = vmatpush1.msra.mxu0 0.0
      %1077 = vmatprep.subr.mxu0 0.0
      %1078 = vmatpush1.msra.mxu0 0.0
      %1079 = vmatprep.subr.mxu0 0.0
      %1080 = vmatpush1.msra.mxu0 0.0
      %1081 = vmatprep.subr.mxu0 0.0
      %1082 = vmatpush1.msra.mxu0 0.0
      %1083 = vmatprep.subr.mxu0 0.0
      %1084 = vmatpush1.msra.mxu0 0.0
      %1085 = vmatprep.subr.mxu0 0.0
      %1086 = vmatpush1.msra.mxu0 0.0
      %1087 = vmatprep.subr.mxu0 0.0
      %1088 = vmatpush1.msra.mxu0 0.0
      %1089 = vmatprep.subr.mxu0 0.0
      %1090 = vmatpush1.msra.mxu0 0.0
      %1091 = vmatprep.subr.mxu0 0.0
      %1092 = vmatpush1.msra.mxu0 0.0
      %1093 = vmatprep.subr.mxu0 0.0
      %1094 = vmatpush1.msra.mxu0 0.0
      %1095 = vmatprep.subr.mxu0 0.0
      %1096 = vmatpush1.msra.mxu0 0.0
      %1097 = vmatprep.subr.mxu0 0.0
      %1098 = vmatpush1.msra.mxu0 %v615
      %1099 = vmatprep.subr.mxu0 0.0
      %1100 = vmatpush2.msra.mxu0 0.0
      %1101 = vmatprep.subr.mxu0 0.0
      %1102 = vmatpush2.msra.mxu0 0.0
      %1103 = vmatprep.subr.mxu0 0.0
      %1104 = vmatpush2.msra.mxu0 0.0
      %1105 = vmatprep.subr.mxu0 0.0
      %1106 = vmatpush2.msra.mxu0 0.0
      %1107 = vmatprep.subr.mxu0 0.0
      %1108 = vmatpush2.msra.mxu0 0.0
      %1109 = vmatprep.subr.mxu0 0.0
      %1110 = vmatpush2.msra.mxu0 0.0
      %1111 = vmatprep.subr.mxu0 0.0
      %1112 = vmatpush2.msra.mxu0 0.0
      %1113 = vmatprep.subr.mxu0 0.0
      %1114 = vmatpush2.msra.mxu0 0.0
      %1115 = vmatprep.subr.mxu0 0.0
      %1116 = vmatpush2.msra.mxu0 0.0
      %1117 = vmatprep.subr.mxu0 0.0
      %1118 = vmatpush2.msra.mxu0 0.0
      %1119 = vmatprep.subr.mxu0 0.0
      %1120 = vmatpush2.msra.mxu0 0.0
      %1121 = vmatprep.subr.mxu0 0.0
      %1122 = vmatpush2.msra.mxu0 0.0
      %1123 = vmatprep.subr.mxu0 0.0
      %1124 = vmatpush2.msra.mxu0 0.0
      %1125 = vmatprep.subr.mxu0 0.0
      %1126 = vmatpush2.msra.mxu0 0.0
      %1127 = vmatprep.subr.mxu0 0.0
      %1128 = vmatpush2.msra.mxu0 0.0
      %1129 = vmatprep.subr.mxu0 0.0
      %1130 = vmatpush2.msra.mxu0 0.0
      %1131 = vmatprep.mubr.f32.mxu0 0.0
      %1132 = vmatmul.mubr.f32.gmra.mxu0 %v972
      %v1133 = vpop.f32.mrf.mxu0
      %v1134 = vadd.f32 %v813, %v1133
      %v1135 = vpop.f32.mrf.mxu0
      %1136 = vmatprep.mubr.f32.mxu0 0.0
      %1137 = vmatmul.mubr.f32.gmra.mxu0 %v975
      %v1138 = vpop.f32.mrf.mxu0
      %v1139 = vadd.f32 %v818, %v1138
      %v1140 = vpop.f32.mrf.mxu0
      %1141 = vmatprep.mubr.f32.mxu0 0.0
      %1142 = vmatmul.mubr.f32.gmra.mxu0 %v978
      %v1143 = vpop.f32.mrf.mxu0
      %v1144 = vadd.f32 %v823, %v1143
      %v1145 = vpop.f32.mrf.mxu0
      %1146 = vmatprep.mubr.f32.mxu0 0.0
      %1147 = vmatmul.mubr.f32.gmra.mxu0 %v981
      %v1148 = vpop.f32.mrf.mxu0
      %v1149 = vadd.f32 %v828, %v1148
      %v1150 = vpop.f32.mrf.mxu0
      %1151 = vmatprep.mubr.f32.mxu0 0.0
      %1152 = vmatmul.mubr.f32.gmra.mxu0 %v984
      %v1153 = vpop.f32.mrf.mxu0
      %v1154 = vadd.f32 %v833, %v1153
      %v1155 = vpop.f32.mrf.mxu0
      %1156 = vmatprep.mubr.f32.mxu0 0.0
      %1157 = vmatmul.mubr.f32.gmra.mxu0 %v987
      %v1158 = vpop.f32.mrf.mxu0
      %v1159 = vadd.f32 %v838, %v1158
      %v1160 = vpop.f32.mrf.mxu0
      %1161 = vmatprep.mubr.f32.mxu0 0.0
      %1162 = vmatmul.mubr.f32.gmra.mxu0 %v990
      %v1163 = vpop.f32.mrf.mxu0
      %v1164 = vadd.f32 %v843, %v1163
      %v1165 = vpop.f32.mrf.mxu0
      %1166 = vmatprep.mubr.f32.mxu0 0.0
      %1167 = vmatmul.mubr.f32.gmra.mxu0 %v993
      %v1168 = vpop.f32.mrf.mxu0
      %v1169 = vadd.f32 %v848, %v1168
      %v1170 = vpop.f32.mrf.mxu0
      %1171 = vmatprep.mubr.f32.mxu0 0.0
      %1172 = vmatmul.mubr.f32.gmra.mxu0 %v996
      %v1173 = vpop.f32.mrf.mxu0
      %v1174 = vadd.f32 %v853, %v1173
      %v1175 = vpop.f32.mrf.mxu0
      %1176 = vmatprep.mubr.f32.mxu0 0.0
      %1177 = vmatmul.mubr.f32.gmra.mxu0 %v999
      %v1178 = vpop.f32.mrf.mxu0
      %v1179 = vadd.f32 %v858, %v1178
      %v1180 = vpop.f32.mrf.mxu0
      %1181 = vmatprep.mubr.f32.mxu0 0.0
      %1182 = vmatmul.mubr.f32.gmra.mxu0 %v1002
      %v1183 = vpop.f32.mrf.mxu0
      %v1184 = vadd.f32 %v863, %v1183
      %v1185 = vpop.f32.mrf.mxu0
      %1186 = vmatprep.mubr.f32.mxu0 0.0
      %1187 = vmatmul.mubr.f32.gmra.mxu0 %v1005
      %v1188 = vpop.f32.mrf.mxu0
      %v1189 = vadd.f32 %v868, %v1188
      %v1190 = vpop.f32.mrf.mxu0
      %1191 = vmatprep.mubr.f32.mxu0 0.0
      %1192 = vmatmul.mubr.f32.gmra.mxu0 %v1008
      %v1193 = vpop.f32.mrf.mxu0
      %v1194 = vadd.f32 %v873, %v1193
      %v1195 = vpop.f32.mrf.mxu0
      %1196 = vmatprep.mubr.f32.mxu0 0.0
      %1197 = vmatmul.mubr.f32.gmra.mxu0 %v1011
      %v1198 = vpop.f32.mrf.mxu0
      %v1199 = vadd.f32 %v878, %v1198
      %v1200 = vpop.f32.mrf.mxu0
      %1201 = vmatprep.mubr.f32.mxu0 0.0
      %1202 = vmatmul.mubr.f32.gmra.mxu0 %v1014
      %v1203 = vpop.f32.mrf.mxu0
      %v1204 = vadd.f32 %v883, %v1203
      %v1205 = vpop.f32.mrf.mxu0
      %1206 = vmatprep.mubr.f32.mxu0 0.0
      %1207 = vmatmul.mubr.f32.gmra.mxu0 %v1017
      %v1208 = vpop.f32.mrf.mxu0
      %v1209 = vadd.f32 %v888, %v1208
      %v1210 = vpop.f32.mrf.mxu0
      %1211 = vmatprep.mubr.f32.mxu0 0.0
      %1212 = vmatmul.mubr.f32.gmra.mxu0 %v1020
      %v1213 = vpop.f32.mrf.mxu0
      %v1214 = vadd.f32 %v893, %v1213
      %v1215 = vpop.f32.mrf.mxu0
      %1216 = vmatprep.mubr.f32.mxu0 0.0
      %1217 = vmatmul.mubr.f32.gmra.mxu0 %v1023
      %v1218 = vpop.f32.mrf.mxu0
      %v1219 = vadd.f32 %v898, %v1218
      %v1220 = vpop.f32.mrf.mxu0
      %1221 = vmatprep.mubr.f32.mxu0 0.0
      %1222 = vmatmul.mubr.f32.gmra.mxu0 %v1026
      %v1223 = vpop.f32.mrf.mxu0
      %v1224 = vadd.f32 %v903, %v1223
      %v1225 = vpop.f32.mrf.mxu0
      %1226 = vmatprep.mubr.f32.mxu0 0.0
      %1227 = vmatmul.mubr.f32.gmra.mxu0 %v1029
      %v1228 = vpop.f32.mrf.mxu0
      %v1229 = vadd.f32 %v908, %v1228
      %v1230 = vpop.f32.mrf.mxu0
      %1231 = vmatprep.mubr.f32.mxu0 0.0
      %1232 = vmatmul.mubr.f32.gmra.mxu0 %v1032
      %v1233 = vpop.f32.mrf.mxu0
      %v1234 = vadd.f32 %v913, %v1233
      %v1235 = vpop.f32.mrf.mxu0
      %1236 = vmatprep.mubr.f32.mxu0 0.0
      %1237 = vmatmul.mubr.f32.gmra.mxu0 %v1035
      %v1238 = vpop.f32.mrf.mxu0
      %v1239 = vadd.f32 %v918, %v1238
      %v1240 = vpop.f32.mrf.mxu0
      %1241 = vmatprep.mubr.f32.mxu0 0.0
      %1242 = vmatmul.mubr.f32.gmra.mxu0 %v1038
      %v1243 = vpop.f32.mrf.mxu0
      %v1244 = vadd.f32 %v923, %v1243
      %v1245 = vpop.f32.mrf.mxu0
      %1246 = vmatprep.mubr.f32.mxu0 0.0
      %1247 = vmatmul.mubr.f32.gmra.mxu0 %v1041
      %v1248 = vpop.f32.mrf.mxu0
      %v1249 = vadd.f32 %v928, %v1248
      %v1250 = vpop.f32.mrf.mxu0
      %1251 = vmatprep.mubr.f32.mxu0 0.0
      %1252 = vmatmul.mubr.f32.gmra.mxu0 %v1044
      %v1253 = vpop.f32.mrf.mxu0
      %v1254 = vadd.f32 %v933, %v1253
      %v1255 = vpop.f32.mrf.mxu0
      %1256 = vmatprep.mubr.f32.mxu0 0.0
      %1257 = vmatmul.mubr.f32.gmra.mxu0 %v1047
      %v1258 = vpop.f32.mrf.mxu0
      %v1259 = vadd.f32 %v938, %v1258
      %v1260 = vpop.f32.mrf.mxu0
      %1261 = vmatprep.mubr.f32.mxu0 0.0
      %1262 = vmatmul.mubr.f32.gmra.mxu0 %v1050
      %v1263 = vpop.f32.mrf.mxu0
      %v1264 = vadd.f32 %v943, %v1263
      %v1265 = vpop.f32.mrf.mxu0
      %1266 = vmatprep.mubr.f32.mxu0 0.0
      %1267 = vmatmul.mubr.f32.gmra.mxu0 %v1053
      %v1268 = vpop.f32.mrf.mxu0
      %v1269 = vadd.f32 %v948, %v1268
      %v1270 = vpop.f32.mrf.mxu0
      %1271 = vmatprep.mubr.f32.mxu0 0.0
      %1272 = vmatmul.mubr.f32.gmra.mxu0 %v1056
      %v1273 = vpop.f32.mrf.mxu0
      %v1274 = vadd.f32 %v953, %v1273
      %v1275 = vpop.f32.mrf.mxu0
      %1276 = vmatprep.mubr.f32.mxu0 0.0
      %1277 = vmatmul.mubr.f32.gmra.mxu0 %v1059
      %v1278 = vpop.f32.mrf.mxu0
      %v1279 = vadd.f32 %v958, %v1278
      %v1280 = vpop.f32.mrf.mxu0
      %1281 = vmatprep.mubr.f32.mxu0 0.0
      %1282 = vmatmul.mubr.f32.gmra.mxu0 %v1062
      %v1283 = vpop.f32.mrf.mxu0
      %v1284 = vadd.f32 %v963, %v1283
      %v1285 = vpop.f32.mrf.mxu0
      %1286 = vmatprep.mubr.f32.mxu0 0.0
      %1287 = vmatmul.mubr.f32.gmra.mxu0 %v1065
      %v1288 = vpop.f32.mrf.mxu0
      %v1289 = vadd.f32 %v968, %v1288
      %v1290 = vpop.f32.mrf.mxu0
      %1291 = vdwg.mxu0
      %v1292 = vld [vmem:[#allocation2 + $0x2] sm:$0xff]
      %v1293 = vld [vmem:[#allocation2 + $0xa] sm:$0xff]
      %v1294 = vld [vmem:[#allocation2 + $0x1a] sm:$0xff]
      %v1295 = vld [vmem:[#allocation2 + $0x22] sm:$0xff]
      %v1296 = vld [vmem:[#allocation2 + $0x32] sm:$0xff]
      %v1297 = vld [vmem:[#allocation2 + $0x3a] sm:$0xff]
      %v1298 = vld [vmem:[#allocation2 + $0x4a] sm:$0xff]
      %v1299 = vld [vmem:[#allocation2 + $0x52] sm:$0xff]
      %v1300 = vld [vmem:[#allocation2 + $0x62] sm:$0xff]
      %v1301 = vld [vmem:[#allocation2 + $0x6a] sm:$0xff]
      %v1302 = vld [vmem:[#allocation2 + $0x7a] sm:$0xff]
      %v1303 = vld [vmem:[#allocation2 + $0x82] sm:$0xff]
      %v1304 = vld [vmem:[#allocation2 + $0x92] sm:$0xff]
      %v1305 = vld [vmem:[#allocation2 + $0x9a] sm:$0xff]
      %v1306 = vld [vmem:[#allocation2 + $0xaa] sm:$0xff]
      %v1307 = vld [vmem:[#allocation2 + $0xb2] sm:$0xff]
      %v1308 = vld [vmem:[#allocation2 + $0xc2] sm:$0xff]
      %v1309 = vld [vmem:[#allocation2 + $0xca] sm:$0xff]
      %v1310 = vld [vmem:[#allocation2 + $0xda] sm:$0xff]
      %v1311 = vld [vmem:[#allocation2 + $0xe2] sm:$0xff]
      %v1312 = vld [vmem:[#allocation2 + $0xf2] sm:$0xff]
      %v1313 = vld [vmem:[#allocation2 + $0xfa] sm:$0xff]
      %v1314 = vld [vmem:[#allocation2 + $0x10a] sm:$0xff]
      %v1315 = vld [vmem:[#allocation2 + $0x112] sm:$0xff]
      %v1316 = vld [vmem:[#allocation2 + $0x122] sm:$0xff]
      %v1317 = vld [vmem:[#allocation2 + $0x12a] sm:$0xff]
      %v1318 = vld [vmem:[#allocation2 + $0x13a] sm:$0xff]
      %v1319 = vld [vmem:[#allocation2 + $0x142] sm:$0xff]
      %v1320 = vld [vmem:[#allocation2 + $0x152] sm:$0xff]
      %v1321 = vld [vmem:[#allocation2 + $0x15a] sm:$0xff]
      %v1322 = vld [vmem:[#allocation2 + $0x16a] sm:$0xff]
      %v1323 = vld [vmem:[#allocation2 + $0x172] sm:$0xff]
      %s1324 = scalar_lea.vmem %s1, 16
      %v1325 = vld [vmem:[%s1324] sm:$0xff]
      %v1327 = vsel %vm373, %v1292, 0
      %v1330 = vsel %vm373, %v1293, 0
      %v1333 = vsel %vm373, %v1294, 0
      %v1336 = vsel %vm373, %v1295, 0
      %v1339 = vsel %vm373, %v1296, 0
      %v1342 = vsel %vm373, %v1297, 0
      %v1345 = vsel %vm373, %v1298, 0
      %v1348 = vsel %vm373, %v1299, 0
      %v1351 = vsel %vm373, %v1300, 0
      %v1354 = vsel %vm373, %v1301, 0
      %v1357 = vsel %vm373, %v1302, 0
      %v1360 = vsel %vm373, %v1303, 0
      %v1363 = vsel %vm373, %v1304, 0
      %v1366 = vsel %vm373, %v1305, 0
      %v1369 = vsel %vm373, %v1306, 0
      %v1372 = vsel %vm373, %v1307, 0
      %v1375 = vsel %vm373, %v1308, 0
      %v1378 = vsel %vm373, %v1309, 0
      %v1381 = vsel %vm373, %v1310, 0
      %v1384 = vsel %vm373, %v1311, 0
      %v1387 = vsel %vm373, %v1312, 0
      %v1390 = vsel %vm373, %v1313, 0
      %v1393 = vsel %vm373, %v1314, 0
      %v1396 = vsel %vm373, %v1315, 0
      %v1399 = vsel %vm373, %v1316, 0
      %v1402 = vsel %vm373, %v1317, 0
      %v1405 = vsel %vm373, %v1318, 0
      %v1408 = vsel %vm373, %v1319, 0
      %v1411 = vsel %vm373, %v1320, 0
      %v1414 = vsel %vm373, %v1321, 0
      %v1417 = vsel %vm373, %v1322, 0
      %v1420 = vsel %vm373, %v1323, 0
      %1422 = vmatprep.subr.mxu0 0.0
      %1423 = vmatpush1.msra.mxu0 0.0
      %1424 = vmatprep.subr.mxu0 0.0
      %1425 = vmatpush1.msra.mxu0 0.0
      %1426 = vmatprep.subr.mxu0 0.0
      %1427 = vmatpush1.msra.mxu0 0.0
      %1428 = vmatprep.subr.mxu0 0.0
      %1429 = vmatpush1.msra.mxu0 0.0
      %1430 = vmatprep.subr.mxu0 0.0
      %1431 = vmatpush1.msra.mxu0 0.0
      %1432 = vmatprep.subr.mxu0 0.0
      %1433 = vmatpush1.msra.mxu0 0.0
      %1434 = vmatprep.subr.mxu0 0.0
      %1435 = vmatpush1.msra.mxu0 0.0
      %1436 = vmatprep.subr.mxu0 0.0
      %1437 = vmatpush1.msra.mxu0 0.0
      %1438 = vmatprep.subr.mxu0 0.0
      %1439 = vmatpush1.msra.mxu0 0.0
      %1440 = vmatprep.subr.mxu0 0.0
      %1441 = vmatpush1.msra.mxu0 0.0
      %1442 = vmatprep.subr.mxu0 0.0
      %1443 = vmatpush1.msra.mxu0 0.0
      %1444 = vmatprep.subr.mxu0 0.0
      %1445 = vmatpush1.msra.mxu0 0.0
      %1446 = vmatprep.subr.mxu0 0.0
      %1447 = vmatpush1.msra.mxu0 0.0
      %1448 = vmatprep.subr.mxu0 0.0
      %1449 = vmatpush1.msra.mxu0 0.0
      %1450 = vmatprep.subr.mxu0 0.0
      %1451 = vmatpush1.msra.mxu0 0.0
      %1452 = vmatprep.subr.mxu0 0.0
      %1453 = vmatpush1.msra.mxu0 %v1325
      %1454 = vmatprep.subr.mxu0 0.0
      %1455 = vmatpush2.msra.mxu0 0.0
      %1456 = vmatprep.subr.mxu0 0.0
      %1457 = vmatpush2.msra.mxu0 0.0
      %1458 = vmatprep.subr.mxu0 0.0
      %1459 = vmatpush2.msra.mxu0 0.0
      %1460 = vmatprep.subr.mxu0 0.0
      %1461 = vmatpush2.msra.mxu0 0.0
      %1462 = vmatprep.subr.mxu0 0.0
      %1463 = vmatpush2.msra.mxu0 0.0
      %1464 = vmatprep.subr.mxu0 0.0
      %1465 = vmatpush2.msra.mxu0 0.0
      %1466 = vmatprep.subr.mxu0 0.0
      %1467 = vmatpush2.msra.mxu0 0.0
      %1468 = vmatprep.subr.mxu0 0.0
      %1469 = vmatpush2.msra.mxu0 0.0
      %1470 = vmatprep.subr.mxu0 0.0
      %1471 = vmatpush2.msra.mxu0 0.0
      %1472 = vmatprep.subr.mxu0 0.0
      %1473 = vmatpush2.msra.mxu0 0.0
      %1474 = vmatprep.subr.mxu0 0.0
      %1475 = vmatpush2.msra.mxu0 0.0
      %1476 = vmatprep.subr.mxu0 0.0
      %1477 = vmatpush2.msra.mxu0 0.0
      %1478 = vmatprep.subr.mxu0 0.0
      %1479 = vmatpush2.msra.mxu0 0.0
      %1480 = vmatprep.subr.mxu0 0.0
      %1481 = vmatpush2.msra.mxu0 0.0
      %1482 = vmatprep.subr.mxu0 0.0
      %1483 = vmatpush2.msra.mxu0 0.0
      %1484 = vmatprep.subr.mxu0 0.0
      %1485 = vmatpush2.msra.mxu0 0.0
      %1486 = vmatprep.mubr.f32.mxu0 0.0
      %1487 = vmatmul.mubr.f32.gmra.mxu0 %v1327
      %v1488 = vpop.f32.mrf.mxu0
      %v1489 = vadd.f32 0.0, %v1488
      %v1490 = vpop.f32.mrf.mxu0
      %1491 = vmatprep.mubr.f32.mxu0 0.0
      %1492 = vmatmul.mubr.f32.gmra.mxu0 %v1330
      %v1493 = vpop.f32.mrf.mxu0
      %v1494 = vadd.f32 0.0, %v1493
      %v1495 = vpop.f32.mrf.mxu0
      %1496 = vmatprep.mubr.f32.mxu0 0.0
      %1497 = vmatmul.mubr.f32.gmra.mxu0 %v1333
      %v1498 = vpop.f32.mrf.mxu0
      %v1499 = vadd.f32 0.0, %v1498
      %v1500 = vpop.f32.mrf.mxu0
      %1501 = vmatprep.mubr.f32.mxu0 0.0
      %1502 = vmatmul.mubr.f32.gmra.mxu0 %v1336
      %v1503 = vpop.f32.mrf.mxu0
      %v1504 = vadd.f32 0.0, %v1503
      %v1505 = vpop.f32.mrf.mxu0
      %1506 = vmatprep.mubr.f32.mxu0 0.0
      %1507 = vmatmul.mubr.f32.gmra.mxu0 %v1339
      %v1508 = vpop.f32.mrf.mxu0
      %v1509 = vadd.f32 0.0, %v1508
      %v1510 = vpop.f32.mrf.mxu0
      %1511 = vmatprep.mubr.f32.mxu0 0.0
      %1512 = vmatmul.mubr.f32.gmra.mxu0 %v1342
      %v1513 = vpop.f32.mrf.mxu0
      %v1514 = vadd.f32 0.0, %v1513
      %v1515 = vpop.f32.mrf.mxu0
      %1516 = vmatprep.mubr.f32.mxu0 0.0
      %1517 = vmatmul.mubr.f32.gmra.mxu0 %v1345
      %v1518 = vpop.f32.mrf.mxu0
      %v1519 = vadd.f32 0.0, %v1518
      %v1520 = vpop.f32.mrf.mxu0
      %1521 = vmatprep.mubr.f32.mxu0 0.0
      %1522 = vmatmul.mubr.f32.gmra.mxu0 %v1348
      %v1523 = vpop.f32.mrf.mxu0
      %v1524 = vadd.f32 0.0, %v1523
      %v1525 = vpop.f32.mrf.mxu0
      %1526 = vmatprep.mubr.f32.mxu0 0.0
      %1527 = vmatmul.mubr.f32.gmra.mxu0 %v1351
      %v1528 = vpop.f32.mrf.mxu0
      %v1529 = vadd.f32 0.0, %v1528
      %v1530 = vpop.f32.mrf.mxu0
      %1531 = vmatprep.mubr.f32.mxu0 0.0
      %1532 = vmatmul.mubr.f32.gmra.mxu0 %v1354
      %v1533 = vpop.f32.mrf.mxu0
      %v1534 = vadd.f32 0.0, %v1533
      %v1535 = vpop.f32.mrf.mxu0
      %1536 = vmatprep.mubr.f32.mxu0 0.0
      %1537 = vmatmul.mubr.f32.gmra.mxu0 %v1357
      %v1538 = vpop.f32.mrf.mxu0
      %v1539 = vadd.f32 0.0, %v1538
      %v1540 = vpop.f32.mrf.mxu0
      %1541 = vmatprep.mubr.f32.mxu0 0.0
      %1542 = vmatmul.mubr.f32.gmra.mxu0 %v1360
      %v1543 = vpop.f32.mrf.mxu0
      %v1544 = vadd.f32 0.0, %v1543
      %v1545 = vpop.f32.mrf.mxu0
      %1546 = vmatprep.mubr.f32.mxu0 0.0
      %1547 = vmatmul.mubr.f32.gmra.mxu0 %v1363
      %v1548 = vpop.f32.mrf.mxu0
      %v1549 = vadd.f32 0.0, %v1548
      %v1550 = vpop.f32.mrf.mxu0
      %1551 = vmatprep.mubr.f32.mxu0 0.0
      %1552 = vmatmul.mubr.f32.gmra.mxu0 %v1366
      %v1553 = vpop.f32.mrf.mxu0
      %v1554 = vadd.f32 0.0, %v1553
      %v1555 = vpop.f32.mrf.mxu0
      %1556 = vmatprep.mubr.f32.mxu0 0.0
      %1557 = vmatmul.mubr.f32.gmra.mxu0 %v1369
      %v1558 = vpop.f32.mrf.mxu0
      %v1559 = vadd.f32 0.0, %v1558
      %v1560 = vpop.f32.mrf.mxu0
      %1561 = vmatprep.mubr.f32.mxu0 0.0
      %1562 = vmatmul.mubr.f32.gmra.mxu0 %v1372
      %v1563 = vpop.f32.mrf.mxu0
      %v1564 = vadd.f32 0.0, %v1563
      %v1565 = vpop.f32.mrf.mxu0
      %1566 = vmatprep.mubr.f32.mxu0 0.0
      %1567 = vmatmul.mubr.f32.gmra.mxu0 %v1375
      %v1568 = vpop.f32.mrf.mxu0
      %v1569 = vadd.f32 0.0, %v1568
      %v1570 = vpop.f32.mrf.mxu0
      %1571 = vmatprep.mubr.f32.mxu0 0.0
      %1572 = vmatmul.mubr.f32.gmra.mxu0 %v1378
      %v1573 = vpop.f32.mrf.mxu0
      %v1574 = vadd.f32 0.0, %v1573
      %v1575 = vpop.f32.mrf.mxu0
      %1576 = vmatprep.mubr.f32.mxu0 0.0
      %1577 = vmatmul.mubr.f32.gmra.mxu0 %v1381
      %v1578 = vpop.f32.mrf.mxu0
      %v1579 = vadd.f32 0.0, %v1578
      %v1580 = vpop.f32.mrf.mxu0
      %1581 = vmatprep.mubr.f32.mxu0 0.0
      %1582 = vmatmul.mubr.f32.gmra.mxu0 %v1384
      %v1583 = vpop.f32.mrf.mxu0
      %v1584 = vadd.f32 0.0, %v1583
      %v1585 = vpop.f32.mrf.mxu0
      %1586 = vmatprep.mubr.f32.mxu0 0.0
      %1587 = vmatmul.mubr.f32.gmra.mxu0 %v1387
      %v1588 = vpop.f32.mrf.mxu0
      %v1589 = vadd.f32 0.0, %v1588
      %v1590 = vpop.f32.mrf.mxu0
      %1591 = vmatprep.mubr.f32.mxu0 0.0
      %1592 = vmatmul.mubr.f32.gmra.mxu0 %v1390
      %v1593 = vpop.f32.mrf.mxu0
      %v1594 = vadd.f32 0.0, %v1593
      %v1595 = vpop.f32.mrf.mxu0
      %1596 = vmatprep.mubr.f32.mxu0 0.0
      %1597 = vmatmul.mubr.f32.gmra.mxu0 %v1393
      %v1598 = vpop.f32.mrf.mxu0
      %v1599 = vadd.f32 0.0, %v1598
      %v1600 = vpop.f32.mrf.mxu0
      %1601 = vmatprep.mubr.f32.mxu0 0.0
      %1602 = vmatmul.mubr.f32.gmra.mxu0 %v1396
      %v1603 = vpop.f32.mrf.mxu0
      %v1604 = vadd.f32 0.0, %v1603
      %v1605 = vpop.f32.mrf.mxu0
      %1606 = vmatprep.mubr.f32.mxu0 0.0
      %1607 = vmatmul.mubr.f32.gmra.mxu0 %v1399
      %v1608 = vpop.f32.mrf.mxu0
      %v1609 = vadd.f32 0.0, %v1608
      %v1610 = vpop.f32.mrf.mxu0
      %1611 = vmatprep.mubr.f32.mxu0 0.0
      %1612 = vmatmul.mubr.f32.gmra.mxu0 %v1402
      %v1613 = vpop.f32.mrf.mxu0
      %v1614 = vadd.f32 0.0, %v1613
      %v1615 = vpop.f32.mrf.mxu0
      %1616 = vmatprep.mubr.f32.mxu0 0.0
      %1617 = vmatmul.mubr.f32.gmra.mxu0 %v1405
      %v1618 = vpop.f32.mrf.mxu0
      %v1619 = vadd.f32 0.0, %v1618
      %v1620 = vpop.f32.mrf.mxu0
      %1621 = vmatprep.mubr.f32.mxu0 0.0
      %1622 = vmatmul.mubr.f32.gmra.mxu0 %v1408
      %v1623 = vpop.f32.mrf.mxu0
      %v1624 = vadd.f32 0.0, %v1623
      %v1625 = vpop.f32.mrf.mxu0
      %1626 = vmatprep.mubr.f32.mxu0 0.0
      %1627 = vmatmul.mubr.f32.gmra.mxu0 %v1411
      %v1628 = vpop.f32.mrf.mxu0
      %v1629 = vadd.f32 0.0, %v1628
      %v1630 = vpop.f32.mrf.mxu0
      %1631 = vmatprep.mubr.f32.mxu0 0.0
      %1632 = vmatmul.mubr.f32.gmra.mxu0 %v1414
      %v1633 = vpop.f32.mrf.mxu0
      %v1634 = vadd.f32 0.0, %v1633
      %v1635 = vpop.f32.mrf.mxu0
      %1636 = vmatprep.mubr.f32.mxu0 0.0
      %1637 = vmatmul.mubr.f32.gmra.mxu0 %v1417
      %v1638 = vpop.f32.mrf.mxu0
      %v1639 = vadd.f32 0.0, %v1638
      %v1640 = vpop.f32.mrf.mxu0
      %1641 = vmatprep.mubr.f32.mxu0 0.0
      %1642 = vmatmul.mubr.f32.gmra.mxu0 %v1420
      %v1643 = vpop.f32.mrf.mxu0
      %v1644 = vadd.f32 0.0, %v1643
      %v1645 = vpop.f32.mrf.mxu0
      %1646 = vdwg.mxu0
      %v1647 = vadd.f32 %v1134, %v1489
      %v1648 = vadd.f32 %v1139, %v1494
      %v1649 = vadd.f32 %v1144, %v1499
      %v1650 = vadd.f32 %v1149, %v1504
      %v1651 = vadd.f32 %v1154, %v1509
      %v1652 = vadd.f32 %v1159, %v1514
      %v1653 = vadd.f32 %v1164, %v1519
      %v1654 = vadd.f32 %v1169, %v1524
      %v1655 = vadd.f32 %v1174, %v1529
      %v1656 = vadd.f32 %v1179, %v1534
      %v1657 = vadd.f32 %v1184, %v1539
      %v1658 = vadd.f32 %v1189, %v1544
      %v1659 = vadd.f32 %v1194, %v1549
      %v1660 = vadd.f32 %v1199, %v1554
      %v1661 = vadd.f32 %v1204, %v1559
      %v1662 = vadd.f32 %v1209, %v1564
      %v1663 = vadd.f32 %v1214, %v1569
      %v1664 = vadd.f32 %v1219, %v1574
      %v1665 = vadd.f32 %v1224, %v1579
      %v1666 = vadd.f32 %v1229, %v1584
      %v1667 = vadd.f32 %v1234, %v1589
      %v1668 = vadd.f32 %v1239, %v1594
      %v1669 = vadd.f32 %v1244, %v1599
      %v1670 = vadd.f32 %v1249, %v1604
      %v1671 = vadd.f32 %v1254, %v1609
      %v1672 = vadd.f32 %v1259, %v1614
      %v1673 = vadd.f32 %v1264, %v1619
      %v1674 = vadd.f32 %v1269, %v1624
      %v1675 = vadd.f32 %v1274, %v1629
      %v1676 = vadd.f32 %v1279, %v1634
      %v1677 = vadd.f32 %v1284, %v1639
      %v1678 = vadd.f32 %v1289, %v1644
      %v1679 = vld [vmem:[%s550] sm:$0xff]
      %v1680 = vld [vmem:[%s550 + $0x8] sm:$0xff]
      %v1681 = vld [vmem:[%s550 + $0x18] sm:$0xff]
      %v1682 = vld [vmem:[%s550 + $0x20] sm:$0xff]
      %v1683 = vld [vmem:[%s550 + $0x30] sm:$0xff]
      %v1684 = vld [vmem:[%s550 + $0x38] sm:$0xff]
      %v1685 = vld [vmem:[%s550 + $0x48] sm:$0xff]
      %v1686 = vld [vmem:[%s550 + $0x50] sm:$0xff]
      %v1687 = vld [vmem:[%s550 + $0x60] sm:$0xff]
      %v1688 = vld [vmem:[%s550 + $0x68] sm:$0xff]
      %v1689 = vld [vmem:[%s550 + $0x78] sm:$0xff]
      %v1690 = vld [vmem:[%s550 + $0x80] sm:$0xff]
      %v1691 = vld [vmem:[%s550 + $0x90] sm:$0xff]
      %v1692 = vld [vmem:[%s550 + $0x98] sm:$0xff]
      %v1693 = vld [vmem:[%s550 + $0xa8] sm:$0xff]
      %v1694 = vld [vmem:[%s550 + $0xb0] sm:$0xff]
      %v1695 = vld [vmem:[%s550 + $0xc0] sm:$0xff]
      %v1696 = vld [vmem:[%s550 + $0xc8] sm:$0xff]
      %v1697 = vld [vmem:[%s550 + $0xd8] sm:$0xff]
      %v1698 = vld [vmem:[%s550 + $0xe0] sm:$0xff]
      %v1699 = vld [vmem:[%s550 + $0xf0] sm:$0xff]
      %v1700 = vld [vmem:[%s550 + $0xf8] sm:$0xff]
      %v1701 = vld [vmem:[%s550 + $0x108] sm:$0xff]
      %v1702 = vld [vmem:[%s550 + $0x110] sm:$0xff]
      %v1703 = vld [vmem:[%s550 + $0x120] sm:$0xff]
      %v1704 = vld [vmem:[%s550 + $0x128] sm:$0xff]
      %v1705 = vld [vmem:[%s550 + $0x138] sm:$0xff]
      %v1706 = vld [vmem:[%s550 + $0x140] sm:$0xff]
      %v1707 = vld [vmem:[%s550 + $0x150] sm:$0xff]
      %v1708 = vld [vmem:[%s550 + $0x158] sm:$0xff]
      %v1709 = vld [vmem:[%s550 + $0x168] sm:$0xff]
      %v1710 = vld [vmem:[%s550 + $0x170] sm:$0xff]
      %s1711 = scalar_lea.vmem %s1, 24
      %v1712 = vld [vmem:[%s1711] sm:$0xff]
      %v1714 = vsel %vm373, %v1679, 0
      %v1717 = vsel %vm373, %v1680, 0
      %v1720 = vsel %vm373, %v1681, 0
      %v1723 = vsel %vm373, %v1682, 0
      %v1726 = vsel %vm373, %v1683, 0
      %v1729 = vsel %vm373, %v1684, 0
      %v1732 = vsel %vm373, %v1685, 0
      %v1735 = vsel %vm373, %v1686, 0
      %v1738 = vsel %vm373, %v1687, 0
      %v1741 = vsel %vm373, %v1688, 0
      %v1744 = vsel %vm373, %v1689, 0
      %v1747 = vsel %vm373, %v1690, 0
      %v1750 = vsel %vm373, %v1691, 0
      %v1753 = vsel %vm373, %v1692, 0
      %v1756 = vsel %vm373, %v1693, 0
      %v1759 = vsel %vm373, %v1694, 0
      %v1762 = vsel %vm373, %v1695, 0
      %v1765 = vsel %vm373, %v1696, 0
      %v1768 = vsel %vm373, %v1697, 0
      %v1771 = vsel %vm373, %v1698, 0
      %v1774 = vsel %vm373, %v1699, 0
      %v1777 = vsel %vm373, %v1700, 0
      %v1780 = vsel %vm373, %v1701, 0
      %v1783 = vsel %vm373, %v1702, 0
      %v1786 = vsel %vm373, %v1703, 0
      %v1789 = vsel %vm373, %v1704, 0
      %v1792 = vsel %vm373, %v1705, 0
      %v1795 = vsel %vm373, %v1706, 0
      %v1798 = vsel %vm373, %v1707, 0
      %v1801 = vsel %vm373, %v1708, 0
      %v1804 = vsel %vm373, %v1709, 0
      %v1807 = vsel %vm373, %v1710, 0
      %1809 = vmatprep.subr.mxu0 0.0
      %1810 = vmatpush1.msra.mxu0 0.0
      %1811 = vmatprep.subr.mxu0 0.0
      %1812 = vmatpush1.msra.mxu0 0.0
      %1813 = vmatprep.subr.mxu0 0.0
      %1814 = vmatpush1.msra.mxu0 0.0
      %1815 = vmatprep.subr.mxu0 0.0
      %1816 = vmatpush1.msra.mxu0 0.0
      %1817 = vmatprep.subr.mxu0 0.0
      %1818 = vmatpush1.msra.mxu0 0.0
      %1819 = vmatprep.subr.mxu0 0.0
      %1820 = vmatpush1.msra.mxu0 0.0
      %1821 = vmatprep.subr.mxu0 0.0
      %1822 = vmatpush1.msra.mxu0 0.0
      %1823 = vmatprep.subr.mxu0 0.0
      %1824 = vmatpush1.msra.mxu0 0.0
      %1825 = vmatprep.subr.mxu0 0.0
      %1826 = vmatpush1.msra.mxu0 0.0
      %1827 = vmatprep.subr.mxu0 0.0
      %1828 = vmatpush1.msra.mxu0 0.0
      %1829 = vmatprep.subr.mxu0 0.0
      %1830 = vmatpush1.msra.mxu0 0.0
      %1831 = vmatprep.subr.mxu0 0.0
      %1832 = vmatpush1.msra.mxu0 0.0
      %1833 = vmatprep.subr.mxu0 0.0
      %1834 = vmatpush1.msra.mxu0 0.0
      %1835 = vmatprep.subr.mxu0 0.0
      %1836 = vmatpush1.msra.mxu0 0.0
      %1837 = vmatprep.subr.mxu0 0.0
      %1838 = vmatpush1.msra.mxu0 0.0
      %1839 = vmatprep.subr.mxu0 0.0
      %1840 = vmatpush1.msra.mxu0 %v1712
      %1841 = vmatprep.subr.mxu0 0.0
      %1842 = vmatpush2.msra.mxu0 0.0
      %1843 = vmatprep.subr.mxu0 0.0
      %1844 = vmatpush2.msra.mxu0 0.0
      %1845 = vmatprep.subr.mxu0 0.0
      %1846 = vmatpush2.msra.mxu0 0.0
      %1847 = vmatprep.subr.mxu0 0.0
      %1848 = vmatpush2.msra.mxu0 0.0
      %1849 = vmatprep.subr.mxu0 0.0
      %1850 = vmatpush2.msra.mxu0 0.0
      %1851 = vmatprep.subr.mxu0 0.0
      %1852 = vmatpush2.msra.mxu0 0.0
      %1853 = vmatprep.subr.mxu0 0.0
      %1854 = vmatpush2.msra.mxu0 0.0
      %1855 = vmatprep.subr.mxu0 0.0
      %1856 = vmatpush2.msra.mxu0 0.0
      %1857 = vmatprep.subr.mxu0 0.0
      %1858 = vmatpush2.msra.mxu0 0.0
      %1859 = vmatprep.subr.mxu0 0.0
      %1860 = vmatpush2.msra.mxu0 0.0
      %1861 = vmatprep.subr.mxu0 0.0
      %1862 = vmatpush2.msra.mxu0 0.0
      %1863 = vmatprep.subr.mxu0 0.0
      %1864 = vmatpush2.msra.mxu0 0.0
      %1865 = vmatprep.subr.mxu0 0.0
      %1866 = vmatpush2.msra.mxu0 0.0
      %1867 = vmatprep.subr.mxu0 0.0
      %1868 = vmatpush2.msra.mxu0 0.0
      %1869 = vmatprep.subr.mxu0 0.0
      %1870 = vmatpush2.msra.mxu0 0.0
      %1871 = vmatprep.subr.mxu0 0.0
      %1872 = vmatpush2.msra.mxu0 0.0
      %1873 = vmatprep.mubr.f32.mxu0 0.0
      %1874 = vmatmul.mubr.f32.gmra.mxu0 %v1714
      %v1875 = vpop.f32.mrf.mxu0
      %v1876 = vadd.f32 0.0, %v1875
      %v1877 = vpop.f32.mrf.mxu0
      %1878 = vmatprep.mubr.f32.mxu0 0.0
      %1879 = vmatmul.mubr.f32.gmra.mxu0 %v1717
      %v1880 = vpop.f32.mrf.mxu0
      %v1881 = vadd.f32 0.0, %v1880
      %v1882 = vpop.f32.mrf.mxu0
      %1883 = vmatprep.mubr.f32.mxu0 0.0
      %1884 = vmatmul.mubr.f32.gmra.mxu0 %v1720
      %v1885 = vpop.f32.mrf.mxu0
      %v1886 = vadd.f32 0.0, %v1885
      %v1887 = vpop.f32.mrf.mxu0
      %1888 = vmatprep.mubr.f32.mxu0 0.0
      %1889 = vmatmul.mubr.f32.gmra.mxu0 %v1723
      %v1890 = vpop.f32.mrf.mxu0
      %v1891 = vadd.f32 0.0, %v1890
      %v1892 = vpop.f32.mrf.mxu0
      %1893 = vmatprep.mubr.f32.mxu0 0.0
      %1894 = vmatmul.mubr.f32.gmra.mxu0 %v1726
      %v1895 = vpop.f32.mrf.mxu0
      %v1896 = vadd.f32 0.0, %v1895
      %v1897 = vpop.f32.mrf.mxu0
      %1898 = vmatprep.mubr.f32.mxu0 0.0
      %1899 = vmatmul.mubr.f32.gmra.mxu0 %v1729
      %v1900 = vpop.f32.mrf.mxu0
      %v1901 = vadd.f32 0.0, %v1900
      %v1902 = vpop.f32.mrf.mxu0
      %1903 = vmatprep.mubr.f32.mxu0 0.0
      %1904 = vmatmul.mubr.f32.gmra.mxu0 %v1732
      %v1905 = vpop.f32.mrf.mxu0
      %v1906 = vadd.f32 0.0, %v1905
      %v1907 = vpop.f32.mrf.mxu0
      %1908 = vmatprep.mubr.f32.mxu0 0.0
      %1909 = vmatmul.mubr.f32.gmra.mxu0 %v1735
      %v1910 = vpop.f32.mrf.mxu0
      %v1911 = vadd.f32 0.0, %v1910
      %v1912 = vpop.f32.mrf.mxu0
      %1913 = vmatprep.mubr.f32.mxu0 0.0
      %1914 = vmatmul.mubr.f32.gmra.mxu0 %v1738
      %v1915 = vpop.f32.mrf.mxu0
      %v1916 = vadd.f32 0.0, %v1915
      %v1917 = vpop.f32.mrf.mxu0
      %1918 = vmatprep.mubr.f32.mxu0 0.0
      %1919 = vmatmul.mubr.f32.gmra.mxu0 %v1741
      %v1920 = vpop.f32.mrf.mxu0
      %v1921 = vadd.f32 0.0, %v1920
      %v1922 = vpop.f32.mrf.mxu0
      %1923 = vmatprep.mubr.f32.mxu0 0.0
      %1924 = vmatmul.mubr.f32.gmra.mxu0 %v1744
      %v1925 = vpop.f32.mrf.mxu0
      %v1926 = vadd.f32 0.0, %v1925
      %v1927 = vpop.f32.mrf.mxu0
      %1928 = vmatprep.mubr.f32.mxu0 0.0
      %1929 = vmatmul.mubr.f32.gmra.mxu0 %v1747
      %v1930 = vpop.f32.mrf.mxu0
      %v1931 = vadd.f32 0.0, %v1930
      %v1932 = vpop.f32.mrf.mxu0
      %1933 = vmatprep.mubr.f32.mxu0 0.0
      %1934 = vmatmul.mubr.f32.gmra.mxu0 %v1750
      %v1935 = vpop.f32.mrf.mxu0
      %v1936 = vadd.f32 0.0, %v1935
      %v1937 = vpop.f32.mrf.mxu0
      %1938 = vmatprep.mubr.f32.mxu0 0.0
      %1939 = vmatmul.mubr.f32.gmra.mxu0 %v1753
      %v1940 = vpop.f32.mrf.mxu0
      %v1941 = vadd.f32 0.0, %v1940
      %v1942 = vpop.f32.mrf.mxu0
      %1943 = vmatprep.mubr.f32.mxu0 0.0
      %1944 = vmatmul.mubr.f32.gmra.mxu0 %v1756
      %v1945 = vpop.f32.mrf.mxu0
      %v1946 = vadd.f32 0.0, %v1945
      %v1947 = vpop.f32.mrf.mxu0
      %1948 = vmatprep.mubr.f32.mxu0 0.0
      %1949 = vmatmul.mubr.f32.gmra.mxu0 %v1759
      %v1950 = vpop.f32.mrf.mxu0
      %v1951 = vadd.f32 0.0, %v1950
      %v1952 = vpop.f32.mrf.mxu0
      %1953 = vmatprep.mubr.f32.mxu0 0.0
      %1954 = vmatmul.mubr.f32.gmra.mxu0 %v1762
      %v1955 = vpop.f32.mrf.mxu0
      %v1956 = vadd.f32 0.0, %v1955
      %v1957 = vpop.f32.mrf.mxu0
      %1958 = vmatprep.mubr.f32.mxu0 0.0
      %1959 = vmatmul.mubr.f32.gmra.mxu0 %v1765
      %v1960 = vpop.f32.mrf.mxu0
      %v1961 = vadd.f32 0.0, %v1960
      %v1962 = vpop.f32.mrf.mxu0
      %1963 = vmatprep.mubr.f32.mxu0 0.0
      %1964 = vmatmul.mubr.f32.gmra.mxu0 %v1768
      %v1965 = vpop.f32.mrf.mxu0
      %v1966 = vadd.f32 0.0, %v1965
      %v1967 = vpop.f32.mrf.mxu0
      %1968 = vmatprep.mubr.f32.mxu0 0.0
      %1969 = vmatmul.mubr.f32.gmra.mxu0 %v1771
      %v1970 = vpop.f32.mrf.mxu0
      %v1971 = vadd.f32 0.0, %v1970
      %v1972 = vpop.f32.mrf.mxu0
      %1973 = vmatprep.mubr.f32.mxu0 0.0
      %1974 = vmatmul.mubr.f32.gmra.mxu0 %v1774
      %v1975 = vpop.f32.mrf.mxu0
      %v1976 = vadd.f32 0.0, %v1975
      %v1977 = vpop.f32.mrf.mxu0
      %1978 = vmatprep.mubr.f32.mxu0 0.0
      %1979 = vmatmul.mubr.f32.gmra.mxu0 %v1777
      %v1980 = vpop.f32.mrf.mxu0
      %v1981 = vadd.f32 0.0, %v1980
      %v1982 = vpop.f32.mrf.mxu0
      %1983 = vmatprep.mubr.f32.mxu0 0.0
      %1984 = vmatmul.mubr.f32.gmra.mxu0 %v1780
      %v1985 = vpop.f32.mrf.mxu0
      %v1986 = vadd.f32 0.0, %v1985
      %v1987 = vpop.f32.mrf.mxu0
      %1988 = vmatprep.mubr.f32.mxu0 0.0
      %1989 = vmatmul.mubr.f32.gmra.mxu0 %v1783
      %v1990 = vpop.f32.mrf.mxu0
      %v1991 = vadd.f32 0.0, %v1990
      %v1992 = vpop.f32.mrf.mxu0
      %1993 = vmatprep.mubr.f32.mxu0 0.0
      %1994 = vmatmul.mubr.f32.gmra.mxu0 %v1786
      %v1995 = vpop.f32.mrf.mxu0
      %v1996 = vadd.f32 0.0, %v1995
      %v1997 = vpop.f32.mrf.mxu0
      %1998 = vmatprep.mubr.f32.mxu0 0.0
      %1999 = vmatmul.mubr.f32.gmra.mxu0 %v1789
      %v2000 = vpop.f32.mrf.mxu0
      %v2001 = vadd.f32 0.0, %v2000
      %v2002 = vpop.f32.mrf.mxu0
      %2003 = vmatprep.mubr.f32.mxu0 0.0
      %2004 = vmatmul.mubr.f32.gmra.mxu0 %v1792
      %v2005 = vpop.f32.mrf.mxu0
      %v2006 = vadd.f32 0.0, %v2005
      %v2007 = vpop.f32.mrf.mxu0
      %2008 = vmatprep.mubr.f32.mxu0 0.0
      %2009 = vmatmul.mubr.f32.gmra.mxu0 %v1795
      %v2010 = vpop.f32.mrf.mxu0
      %v2011 = vadd.f32 0.0, %v2010
      %v2012 = vpop.f32.mrf.mxu0
      %2013 = vmatprep.mubr.f32.mxu0 0.0
      %2014 = vmatmul.mubr.f32.gmra.mxu0 %v1798
      %v2015 = vpop.f32.mrf.mxu0
      %v2016 = vadd.f32 0.0, %v2015
      %v2017 = vpop.f32.mrf.mxu0
      %2018 = vmatprep.mubr.f32.mxu0 0.0
      %2019 = vmatmul.mubr.f32.gmra.mxu0 %v1801
      %v2020 = vpop.f32.mrf.mxu0
      %v2021 = vadd.f32 0.0, %v2020
      %v2022 = vpop.f32.mrf.mxu0
      %2023 = vmatprep.mubr.f32.mxu0 0.0
      %2024 = vmatmul.mubr.f32.gmra.mxu0 %v1804
      %v2025 = vpop.f32.mrf.mxu0
      %v2026 = vadd.f32 0.0, %v2025
      %v2027 = vpop.f32.mrf.mxu0
      %2028 = vmatprep.mubr.f32.mxu0 0.0
      %2029 = vmatmul.mubr.f32.gmra.mxu0 %v1807
      %v2030 = vpop.f32.mrf.mxu0
      %v2031 = vadd.f32 0.0, %v2030
      %v2032 = vpop.f32.mrf.mxu0
      %2033 = vdwg.mxu0
      %v2034 = vadd.f32 %v1647, %v1876
      %v2035 = vadd.f32 %v1648, %v1881
      %v2036 = vadd.f32 %v1649, %v1886
      %v2037 = vadd.f32 %v1650, %v1891
      %v2038 = vadd.f32 %v1651, %v1896
      %v2039 = vadd.f32 %v1652, %v1901
      %v2040 = vadd.f32 %v1653, %v1906
      %v2041 = vadd.f32 %v1654, %v1911
      %v2042 = vadd.f32 %v1655, %v1916
      %v2043 = vadd.f32 %v1656, %v1921
      %v2044 = vadd.f32 %v1657, %v1926
      %v2045 = vadd.f32 %v1658, %v1931
      %v2046 = vadd.f32 %v1659, %v1936
      %v2047 = vadd.f32 %v1660, %v1941
      %v2048 = vadd.f32 %v1661, %v1946
      %v2049 = vadd.f32 %v1662, %v1951
      %v2050 = vadd.f32 %v1663, %v1956
      %v2051 = vadd.f32 %v1664, %v1961
      %v2052 = vadd.f32 %v1665, %v1966
      %v2053 = vadd.f32 %v1666, %v1971
      %v2054 = vadd.f32 %v1667, %v1976
      %v2055 = vadd.f32 %v1668, %v1981
      %v2056 = vadd.f32 %v1669, %v1986
      %v2057 = vadd.f32 %v1670, %v1991
      %v2058 = vadd.f32 %v1671, %v1996
      %v2059 = vadd.f32 %v1672, %v2001
      %v2060 = vadd.f32 %v1673, %v2006
      %v2061 = vadd.f32 %v1674, %v2011
      %v2062 = vadd.f32 %v1675, %v2016
      %v2063 = vadd.f32 %v1676, %v2021
      %v2064 = vadd.f32 %v1677, %v2026
      %v2065 = vadd.f32 %v1678, %v2031
      %v2066 = vld [vmem:[%s550 + $0x1] sm:$0xff]
      %v2067 = vld [vmem:[%s550 + $0x9] sm:$0xff]
      %v2068 = vld [vmem:[%s550 + $0x19] sm:$0xff]
      %v2069 = vld [vmem:[%s550 + $0x21] sm:$0xff]
      %v2070 = vld [vmem:[%s550 + $0x31] sm:$0xff]
      %v2071 = vld [vmem:[%s550 + $0x39] sm:$0xff]
      %v2072 = vld [vmem:[%s550 + $0x49] sm:$0xff]
      %v2073 = vld [vmem:[%s550 + $0x51] sm:$0xff]
      %v2074 = vld [vmem:[%s550 + $0x61] sm:$0xff]
      %v2075 = vld [vmem:[%s550 + $0x69] sm:$0xff]
      %v2076 = vld [vmem:[%s550 + $0x79] sm:$0xff]
      %v2077 = vld [vmem:[%s550 + $0x81] sm:$0xff]
      %v2078 = vld [vmem:[%s550 + $0x91] sm:$0xff]
      %v2079 = vld [vmem:[%s550 + $0x99] sm:$0xff]
      %v2080 = vld [vmem:[%s550 + $0xa9] sm:$0xff]
      %v2081 = vld [vmem:[%s550 + $0xb1] sm:$0xff]
      %v2082 = vld [vmem:[%s550 + $0xc1] sm:$0xff]
      %v2083 = vld [vmem:[%s550 + $0xc9] sm:$0xff]
      %v2084 = vld [vmem:[%s550 + $0xd9] sm:$0xff]
      %v2085 = vld [vmem:[%s550 + $0xe1] sm:$0xff]
      %v2086 = vld [vmem:[%s550 + $0xf1] sm:$0xff]
      %v2087 = vld [vmem:[%s550 + $0xf9] sm:$0xff]
      %v2088 = vld [vmem:[%s550 + $0x109] sm:$0xff]
      %v2089 = vld [vmem:[%s550 + $0x111] sm:$0xff]
      %v2090 = vld [vmem:[%s550 + $0x121] sm:$0xff]
      %v2091 = vld [vmem:[%s550 + $0x129] sm:$0xff]
      %v2092 = vld [vmem:[%s550 + $0x139] sm:$0xff]
      %v2093 = vld [vmem:[%s550 + $0x141] sm:$0xff]
      %v2094 = vld [vmem:[%s550 + $0x151] sm:$0xff]
      %v2095 = vld [vmem:[%s550 + $0x159] sm:$0xff]
      %v2096 = vld [vmem:[%s550 + $0x169] sm:$0xff]
      %v2097 = vld [vmem:[%s550 + $0x171] sm:$0xff]
      %s2098 = scalar_lea.vmem %s1, 32
      %v2099 = vld [vmem:[%s2098] sm:$0xff]
      %v2101 = vsel %vm373, %v2066, 0
      %v2104 = vsel %vm373, %v2067, 0
      %v2107 = vsel %vm373, %v2068, 0
      %v2110 = vsel %vm373, %v2069, 0
      %v2113 = vsel %vm373, %v2070, 0
      %v2116 = vsel %vm373, %v2071, 0
      %v2119 = vsel %vm373, %v2072, 0
      %v2122 = vsel %vm373, %v2073, 0
      %v2125 = vsel %vm373, %v2074, 0
      %v2128 = vsel %vm373, %v2075, 0
      %v2131 = vsel %vm373, %v2076, 0
      %v2134 = vsel %vm373, %v2077, 0
      %v2137 = vsel %vm373, %v2078, 0
      %v2140 = vsel %vm373, %v2079, 0
      %v2143 = vsel %vm373, %v2080, 0
      %v2146 = vsel %vm373, %v2081, 0
      %v2149 = vsel %vm373, %v2082, 0
      %v2152 = vsel %vm373, %v2083, 0
      %v2155 = vsel %vm373, %v2084, 0
      %v2158 = vsel %vm373, %v2085, 0
      %v2161 = vsel %vm373, %v2086, 0
      %v2164 = vsel %vm373, %v2087, 0
      %v2167 = vsel %vm373, %v2088, 0
      %v2170 = vsel %vm373, %v2089, 0
      %v2173 = vsel %vm373, %v2090, 0
      %v2176 = vsel %vm373, %v2091, 0
      %v2179 = vsel %vm373, %v2092, 0
      %v2182 = vsel %vm373, %v2093, 0
      %v2185 = vsel %vm373, %v2094, 0
      %v2188 = vsel %vm373, %v2095, 0
      %v2191 = vsel %vm373, %v2096, 0
      %v2194 = vsel %vm373, %v2097, 0
      %2196 = vmatprep.subr.mxu0 0.0
      %2197 = vmatpush1.msra.mxu0 0.0
      %2198 = vmatprep.subr.mxu0 0.0
      %2199 = vmatpush1.msra.mxu0 0.0
      %2200 = vmatprep.subr.mxu0 0.0
      %2201 = vmatpush1.msra.mxu0 0.0
      %2202 = vmatprep.subr.mxu0 0.0
      %2203 = vmatpush1.msra.mxu0 0.0
      %2204 = vmatprep.subr.mxu0 0.0
      %2205 = vmatpush1.msra.mxu0 0.0
      %2206 = vmatprep.subr.mxu0 0.0
      %2207 = vmatpush1.msra.mxu0 0.0
      %2208 = vmatprep.subr.mxu0 0.0
      %2209 = vmatpush1.msra.mxu0 0.0
      %2210 = vmatprep.subr.mxu0 0.0
      %2211 = vmatpush1.msra.mxu0 0.0
      %2212 = vmatprep.subr.mxu0 0.0
      %2213 = vmatpush1.msra.mxu0 0.0
      %2214 = vmatprep.subr.mxu0 0.0
      %2215 = vmatpush1.msra.mxu0 0.0
      %2216 = vmatprep.subr.mxu0 0.0
      %2217 = vmatpush1.msra.mxu0 0.0
      %2218 = vmatprep.subr.mxu0 0.0
      %2219 = vmatpush1.msra.mxu0 0.0
      %2220 = vmatprep.subr.mxu0 0.0
      %2221 = vmatpush1.msra.mxu0 0.0
      %2222 = vmatprep.subr.mxu0 0.0
      %2223 = vmatpush1.msra.mxu0 0.0
      %2224 = vmatprep.subr.mxu0 0.0
      %2225 = vmatpush1.msra.mxu0 0.0
      %2226 = vmatprep.subr.mxu0 0.0
      %2227 = vmatpush1.msra.mxu0 %v2099
      %2228 = vmatprep.subr.mxu0 0.0
      %2229 = vmatpush2.msra.mxu0 0.0
      %2230 = vmatprep.subr.mxu0 0.0
      %2231 = vmatpush2.msra.mxu0 0.0
      %2232 = vmatprep.subr.mxu0 0.0
      %2233 = vmatpush2.msra.mxu0 0.0
      %2234 = vmatprep.subr.mxu0 0.0
      %2235 = vmatpush2.msra.mxu0 0.0
      %2236 = vmatprep.subr.mxu0 0.0
      %2237 = vmatpush2.msra.mxu0 0.0
      %2238 = vmatprep.subr.mxu0 0.0
      %2239 = vmatpush2.msra.mxu0 0.0
      %2240 = vmatprep.subr.mxu0 0.0
      %2241 = vmatpush2.msra.mxu0 0.0
      %2242 = vmatprep.subr.mxu0 0.0
      %2243 = vmatpush2.msra.mxu0 0.0
      %2244 = vmatprep.subr.mxu0 0.0
      %2245 = vmatpush2.msra.mxu0 0.0
      %2246 = vmatprep.subr.mxu0 0.0
      %2247 = vmatpush2.msra.mxu0 0.0
      %2248 = vmatprep.subr.mxu0 0.0
      %2249 = vmatpush2.msra.mxu0 0.0
      %2250 = vmatprep.subr.mxu0 0.0
      %2251 = vmatpush2.msra.mxu0 0.0
      %2252 = vmatprep.subr.mxu0 0.0
      %2253 = vmatpush2.msra.mxu0 0.0
      %2254 = vmatprep.subr.mxu0 0.0
      %2255 = vmatpush2.msra.mxu0 0.0
      %2256 = vmatprep.subr.mxu0 0.0
      %2257 = vmatpush2.msra.mxu0 0.0
      %2258 = vmatprep.subr.mxu0 0.0
      %2259 = vmatpush2.msra.mxu0 0.0
      %2260 = vmatprep.mubr.f32.mxu0 0.0
      %2261 = vmatmul.mubr.f32.gmra.mxu0 %v2101
      %v2262 = vpop.f32.mrf.mxu0
      %v2263 = vadd.f32 0.0, %v2262
      %v2264 = vpop.f32.mrf.mxu0
      %2265 = vmatprep.mubr.f32.mxu0 0.0
      %2266 = vmatmul.mubr.f32.gmra.mxu0 %v2104
      %v2267 = vpop.f32.mrf.mxu0
      %v2268 = vadd.f32 0.0, %v2267
      %v2269 = vpop.f32.mrf.mxu0
      %2270 = vmatprep.mubr.f32.mxu0 0.0
      %2271 = vmatmul.mubr.f32.gmra.mxu0 %v2107
      %v2272 = vpop.f32.mrf.mxu0
      %v2273 = vadd.f32 0.0, %v2272
      %v2274 = vpop.f32.mrf.mxu0
      %2275 = vmatprep.mubr.f32.mxu0 0.0
      %2276 = vmatmul.mubr.f32.gmra.mxu0 %v2110
      %v2277 = vpop.f32.mrf.mxu0
      %v2278 = vadd.f32 0.0, %v2277
      %v2279 = vpop.f32.mrf.mxu0
      %2280 = vmatprep.mubr.f32.mxu0 0.0
      %2281 = vmatmul.mubr.f32.gmra.mxu0 %v2113
      %v2282 = vpop.f32.mrf.mxu0
      %v2283 = vadd.f32 0.0, %v2282
      %v2284 = vpop.f32.mrf.mxu0
      %2285 = vmatprep.mubr.f32.mxu0 0.0
      %2286 = vmatmul.mubr.f32.gmra.mxu0 %v2116
      %v2287 = vpop.f32.mrf.mxu0
      %v2288 = vadd.f32 0.0, %v2287
      %v2289 = vpop.f32.mrf.mxu0
      %2290 = vmatprep.mubr.f32.mxu0 0.0
      %2291 = vmatmul.mubr.f32.gmra.mxu0 %v2119
      %v2292 = vpop.f32.mrf.mxu0
      %v2293 = vadd.f32 0.0, %v2292
      %v2294 = vpop.f32.mrf.mxu0
      %2295 = vmatprep.mubr.f32.mxu0 0.0
      %2296 = vmatmul.mubr.f32.gmra.mxu0 %v2122
      %v2297 = vpop.f32.mrf.mxu0
      %v2298 = vadd.f32 0.0, %v2297
      %v2299 = vpop.f32.mrf.mxu0
      %2300 = vmatprep.mubr.f32.mxu0 0.0
      %2301 = vmatmul.mubr.f32.gmra.mxu0 %v2125
      %v2302 = vpop.f32.mrf.mxu0
      %v2303 = vadd.f32 0.0, %v2302
      %v2304 = vpop.f32.mrf.mxu0
      %2305 = vmatprep.mubr.f32.mxu0 0.0
      %2306 = vmatmul.mubr.f32.gmra.mxu0 %v2128
      %v2307 = vpop.f32.mrf.mxu0
      %v2308 = vadd.f32 0.0, %v2307
      %v2309 = vpop.f32.mrf.mxu0
      %2310 = vmatprep.mubr.f32.mxu0 0.0
      %2311 = vmatmul.mubr.f32.gmra.mxu0 %v2131
      %v2312 = vpop.f32.mrf.mxu0
      %v2313 = vadd.f32 0.0, %v2312
      %v2314 = vpop.f32.mrf.mxu0
      %2315 = vmatprep.mubr.f32.mxu0 0.0
      %2316 = vmatmul.mubr.f32.gmra.mxu0 %v2134
      %v2317 = vpop.f32.mrf.mxu0
      %v2318 = vadd.f32 0.0, %v2317
      %v2319 = vpop.f32.mrf.mxu0
      %2320 = vmatprep.mubr.f32.mxu0 0.0
      %2321 = vmatmul.mubr.f32.gmra.mxu0 %v2137
      %v2322 = vpop.f32.mrf.mxu0
      %v2323 = vadd.f32 0.0, %v2322
      %v2324 = vpop.f32.mrf.mxu0
      %2325 = vmatprep.mubr.f32.mxu0 0.0
      %2326 = vmatmul.mubr.f32.gmra.mxu0 %v2140
      %v2327 = vpop.f32.mrf.mxu0
      %v2328 = vadd.f32 0.0, %v2327
      %v2329 = vpop.f32.mrf.mxu0
      %2330 = vmatprep.mubr.f32.mxu0 0.0
      %2331 = vmatmul.mubr.f32.gmra.mxu0 %v2143
      %v2332 = vpop.f32.mrf.mxu0
      %v2333 = vadd.f32 0.0, %v2332
      %v2334 = vpop.f32.mrf.mxu0
      %2335 = vmatprep.mubr.f32.mxu0 0.0
      %2336 = vmatmul.mubr.f32.gmra.mxu0 %v2146
      %v2337 = vpop.f32.mrf.mxu0
      %v2338 = vadd.f32 0.0, %v2337
      %v2339 = vpop.f32.mrf.mxu0
      %2340 = vmatprep.mubr.f32.mxu0 0.0
      %2341 = vmatmul.mubr.f32.gmra.mxu0 %v2149
      %v2342 = vpop.f32.mrf.mxu0
      %v2343 = vadd.f32 0.0, %v2342
      %v2344 = vpop.f32.mrf.mxu0
      %2345 = vmatprep.mubr.f32.mxu0 0.0
      %2346 = vmatmul.mubr.f32.gmra.mxu0 %v2152
      %v2347 = vpop.f32.mrf.mxu0
      %v2348 = vadd.f32 0.0, %v2347
      %v2349 = vpop.f32.mrf.mxu0
      %2350 = vmatprep.mubr.f32.mxu0 0.0
      %2351 = vmatmul.mubr.f32.gmra.mxu0 %v2155
      %v2352 = vpop.f32.mrf.mxu0
      %v2353 = vadd.f32 0.0, %v2352
      %v2354 = vpop.f32.mrf.mxu0
      %2355 = vmatprep.mubr.f32.mxu0 0.0
      %2356 = vmatmul.mubr.f32.gmra.mxu0 %v2158
      %v2357 = vpop.f32.mrf.mxu0
      %v2358 = vadd.f32 0.0, %v2357
      %v2359 = vpop.f32.mrf.mxu0
      %2360 = vmatprep.mubr.f32.mxu0 0.0
      %2361 = vmatmul.mubr.f32.gmra.mxu0 %v2161
      %v2362 = vpop.f32.mrf.mxu0
      %v2363 = vadd.f32 0.0, %v2362
      %v2364 = vpop.f32.mrf.mxu0
      %2365 = vmatprep.mubr.f32.mxu0 0.0
      %2366 = vmatmul.mubr.f32.gmra.mxu0 %v2164
      %v2367 = vpop.f32.mrf.mxu0
      %v2368 = vadd.f32 0.0, %v2367
      %v2369 = vpop.f32.mrf.mxu0
      %2370 = vmatprep.mubr.f32.mxu0 0.0
      %2371 = vmatmul.mubr.f32.gmra.mxu0 %v2167
      %v2372 = vpop.f32.mrf.mxu0
      %v2373 = vadd.f32 0.0, %v2372
      %v2374 = vpop.f32.mrf.mxu0
      %2375 = vmatprep.mubr.f32.mxu0 0.0
      %2376 = vmatmul.mubr.f32.gmra.mxu0 %v2170
      %v2377 = vpop.f32.mrf.mxu0
      %v2378 = vadd.f32 0.0, %v2377
      %v2379 = vpop.f32.mrf.mxu0
      %2380 = vmatprep.mubr.f32.mxu0 0.0
      %2381 = vmatmul.mubr.f32.gmra.mxu0 %v2173
      %v2382 = vpop.f32.mrf.mxu0
      %v2383 = vadd.f32 0.0, %v2382
      %v2384 = vpop.f32.mrf.mxu0
      %2385 = vmatprep.mubr.f32.mxu0 0.0
      %2386 = vmatmul.mubr.f32.gmra.mxu0 %v2176
      %v2387 = vpop.f32.mrf.mxu0
      %v2388 = vadd.f32 0.0, %v2387
      %v2389 = vpop.f32.mrf.mxu0
      %2390 = vmatprep.mubr.f32.mxu0 0.0
      %2391 = vmatmul.mubr.f32.gmra.mxu0 %v2179
      %v2392 = vpop.f32.mrf.mxu0
      %v2393 = vadd.f32 0.0, %v2392
      %v2394 = vpop.f32.mrf.mxu0
      %2395 = vmatprep.mubr.f32.mxu0 0.0
      %2396 = vmatmul.mubr.f32.gmra.mxu0 %v2182
      %v2397 = vpop.f32.mrf.mxu0
      %v2398 = vadd.f32 0.0, %v2397
      %v2399 = vpop.f32.mrf.mxu0
      %2400 = vmatprep.mubr.f32.mxu0 0.0
      %2401 = vmatmul.mubr.f32.gmra.mxu0 %v2185
      %v2402 = vpop.f32.mrf.mxu0
      %v2403 = vadd.f32 0.0, %v2402
      %v2404 = vpop.f32.mrf.mxu0
      %2405 = vmatprep.mubr.f32.mxu0 0.0
      %2406 = vmatmul.mubr.f32.gmra.mxu0 %v2188
      %v2407 = vpop.f32.mrf.mxu0
      %v2408 = vadd.f32 0.0, %v2407
      %v2409 = vpop.f32.mrf.mxu0
      %2410 = vmatprep.mubr.f32.mxu0 0.0
      %2411 = vmatmul.mubr.f32.gmra.mxu0 %v2191
      %v2412 = vpop.f32.mrf.mxu0
      %v2413 = vadd.f32 0.0, %v2412
      %v2414 = vpop.f32.mrf.mxu0
      %2415 = vmatprep.mubr.f32.mxu0 0.0
      %2416 = vmatmul.mubr.f32.gmra.mxu0 %v2194
      %v2417 = vpop.f32.mrf.mxu0
      %v2418 = vadd.f32 0.0, %v2417
      %v2419 = vpop.f32.mrf.mxu0
      %2420 = vdwg.mxu0
      %v2421 = vadd.f32 %v2034, %v2263
      %v2422 = vadd.f32 %v2035, %v2268
      %v2423 = vadd.f32 %v2036, %v2273
      %v2424 = vadd.f32 %v2037, %v2278
      %v2425 = vadd.f32 %v2038, %v2283
      %v2426 = vadd.f32 %v2039, %v2288
      %v2427 = vadd.f32 %v2040, %v2293
      %v2428 = vadd.f32 %v2041, %v2298
      %v2429 = vadd.f32 %v2042, %v2303
      %v2430 = vadd.f32 %v2043, %v2308
      %v2431 = vadd.f32 %v2044, %v2313
      %v2432 = vadd.f32 %v2045, %v2318
      %v2433 = vadd.f32 %v2046, %v2323
      %v2434 = vadd.f32 %v2047, %v2328
      %v2435 = vadd.f32 %v2048, %v2333
      %v2436 = vadd.f32 %v2049, %v2338
      %v2437 = vadd.f32 %v2050, %v2343
      %v2438 = vadd.f32 %v2051, %v2348
      %v2439 = vadd.f32 %v2052, %v2353
      %v2440 = vadd.f32 %v2053, %v2358
      %v2441 = vadd.f32 %v2054, %v2363
      %v2442 = vadd.f32 %v2055, %v2368
      %v2443 = vadd.f32 %v2056, %v2373
      %v2444 = vadd.f32 %v2057, %v2378
      %v2445 = vadd.f32 %v2058, %v2383
      %v2446 = vadd.f32 %v2059, %v2388
      %v2447 = vadd.f32 %v2060, %v2393
      %v2448 = vadd.f32 %v2061, %v2398
      %v2449 = vadd.f32 %v2062, %v2403
      %v2450 = vadd.f32 %v2063, %v2408
      %v2451 = vadd.f32 %v2064, %v2413
      %v2452 = vadd.f32 %v2065, %v2418
      %v2453 = vld [vmem:[%s550 + $0x2] sm:$0xff]
      %v2454 = vld [vmem:[%s550 + $0xa] sm:$0xff]
      %v2455 = vld [vmem:[%s550 + $0x1a] sm:$0xff]
      %v2456 = vld [vmem:[%s550 + $0x22] sm:$0xff]
      %v2457 = vld [vmem:[%s550 + $0x32] sm:$0xff]
      %v2458 = vld [vmem:[%s550 + $0x3a] sm:$0xff]
      %v2459 = vld [vmem:[%s550 + $0x4a] sm:$0xff]
      %v2460 = vld [vmem:[%s550 + $0x52] sm:$0xff]
      %v2461 = vld [vmem:[%s550 + $0x62] sm:$0xff]
      %v2462 = vld [vmem:[%s550 + $0x6a] sm:$0xff]
      %v2463 = vld [vmem:[%s550 + $0x7a] sm:$0xff]
      %v2464 = vld [vmem:[%s550 + $0x82] sm:$0xff]
      %v2465 = vld [vmem:[%s550 + $0x92] sm:$0xff]
      %v2466 = vld [vmem:[%s550 + $0x9a] sm:$0xff]
      %v2467 = vld [vmem:[%s550 + $0xaa] sm:$0xff]
      %v2468 = vld [vmem:[%s550 + $0xb2] sm:$0xff]
      %v2469 = vld [vmem:[%s550 + $0xc2] sm:$0xff]
      %v2470 = vld [vmem:[%s550 + $0xca] sm:$0xff]
      %v2471 = vld [vmem:[%s550 + $0xda] sm:$0xff]
      %v2472 = vld [vmem:[%s550 + $0xe2] sm:$0xff]
      %v2473 = vld [vmem:[%s550 + $0xf2] sm:$0xff]
      %v2474 = vld [vmem:[%s550 + $0xfa] sm:$0xff]
      %v2475 = vld [vmem:[%s550 + $0x10a] sm:$0xff]
      %v2476 = vld [vmem:[%s550 + $0x112] sm:$0xff]
      %v2477 = vld [vmem:[%s550 + $0x122] sm:$0xff]
      %v2478 = vld [vmem:[%s550 + $0x12a] sm:$0xff]
      %v2479 = vld [vmem:[%s550 + $0x13a] sm:$0xff]
      %v2480 = vld [vmem:[%s550 + $0x142] sm:$0xff]
      %v2481 = vld [vmem:[%s550 + $0x152] sm:$0xff]
      %v2482 = vld [vmem:[%s550 + $0x15a] sm:$0xff]
      %v2483 = vld [vmem:[%s550 + $0x16a] sm:$0xff]
      %v2484 = vld [vmem:[%s550 + $0x172] sm:$0xff]
      %s2485 = scalar_lea.vmem %s1, 40
      %v2486 = vld [vmem:[%s2485] sm:$0xff]
      %v2488 = vsel %vm373, %v2453, 0
      %v2491 = vsel %vm373, %v2454, 0
      %v2494 = vsel %vm373, %v2455, 0
      %v2497 = vsel %vm373, %v2456, 0
      %v2500 = vsel %vm373, %v2457, 0
      %v2503 = vsel %vm373, %v2458, 0
      %v2506 = vsel %vm373, %v2459, 0
      %v2509 = vsel %vm373, %v2460, 0
      %v2512 = vsel %vm373, %v2461, 0
      %v2515 = vsel %vm373, %v2462, 0
      %v2518 = vsel %vm373, %v2463, 0
      %v2521 = vsel %vm373, %v2464, 0
      %v2524 = vsel %vm373, %v2465, 0
      %v2527 = vsel %vm373, %v2466, 0
      %v2530 = vsel %vm373, %v2467, 0
      %v2533 = vsel %vm373, %v2468, 0
      %v2536 = vsel %vm373, %v2469, 0
      %v2539 = vsel %vm373, %v2470, 0
      %v2542 = vsel %vm373, %v2471, 0
      %v2545 = vsel %vm373, %v2472, 0
      %v2548 = vsel %vm373, %v2473, 0
      %v2551 = vsel %vm373, %v2474, 0
      %v2554 = vsel %vm373, %v2475, 0
      %v2557 = vsel %vm373, %v2476, 0
      %v2560 = vsel %vm373, %v2477, 0
      %v2563 = vsel %vm373, %v2478, 0
      %v2566 = vsel %vm373, %v2479, 0
      %v2569 = vsel %vm373, %v2480, 0
      %v2572 = vsel %vm373, %v2481, 0
      %v2575 = vsel %vm373, %v2482, 0
      %v2578 = vsel %vm373, %v2483, 0
      %v2581 = vsel %vm373, %v2484, 0
      %2583 = vmatprep.subr.mxu0 0.0
      %2584 = vmatpush1.msra.mxu0 0.0
      %2585 = vmatprep.subr.mxu0 0.0
      %2586 = vmatpush1.msra.mxu0 0.0
      %2587 = vmatprep.subr.mxu0 0.0
      %2588 = vmatpush1.msra.mxu0 0.0
      %2589 = vmatprep.subr.mxu0 0.0
      %2590 = vmatpush1.msra.mxu0 0.0
      %2591 = vmatprep.subr.mxu0 0.0
      %2592 = vmatpush1.msra.mxu0 0.0
      %2593 = vmatprep.subr.mxu0 0.0
      %2594 = vmatpush1.msra.mxu0 0.0
      %2595 = vmatprep.subr.mxu0 0.0
      %2596 = vmatpush1.msra.mxu0 0.0
      %2597 = vmatprep.subr.mxu0 0.0
      %2598 = vmatpush1.msra.mxu0 0.0
      %2599 = vmatprep.subr.mxu0 0.0
      %2600 = vmatpush1.msra.mxu0 0.0
      %2601 = vmatprep.subr.mxu0 0.0
      %2602 = vmatpush1.msra.mxu0 0.0
      %2603 = vmatprep.subr.mxu0 0.0
      %2604 = vmatpush1.msra.mxu0 0.0
      %2605 = vmatprep.subr.mxu0 0.0
      %2606 = vmatpush1.msra.mxu0 0.0
      %2607 = vmatprep.subr.mxu0 0.0
      %2608 = vmatpush1.msra.mxu0 0.0
      %2609 = vmatprep.subr.mxu0 0.0
      %2610 = vmatpush1.msra.mxu0 0.0
      %2611 = vmatprep.subr.mxu0 0.0
      %2612 = vmatpush1.msra.mxu0 0.0
      %2613 = vmatprep.subr.mxu0 0.0
      %2614 = vmatpush1.msra.mxu0 %v2486
      %2615 = vmatprep.subr.mxu0 0.0
      %2616 = vmatpush2.msra.mxu0 0.0
      %2617 = vmatprep.subr.mxu0 0.0
      %2618 = vmatpush2.msra.mxu0 0.0
      %2619 = vmatprep.subr.mxu0 0.0
      %2620 = vmatpush2.msra.mxu0 0.0
      %2621 = vmatprep.subr.mxu0 0.0
      %2622 = vmatpush2.msra.mxu0 0.0
      %2623 = vmatprep.subr.mxu0 0.0
      %2624 = vmatpush2.msra.mxu0 0.0
      %2625 = vmatprep.subr.mxu0 0.0
      %2626 = vmatpush2.msra.mxu0 0.0
      %2627 = vmatprep.subr.mxu0 0.0
      %2628 = vmatpush2.msra.mxu0 0.0
      %2629 = vmatprep.subr.mxu0 0.0
      %2630 = vmatpush2.msra.mxu0 0.0
      %2631 = vmatprep.subr.mxu0 0.0
      %2632 = vmatpush2.msra.mxu0 0.0
      %2633 = vmatprep.subr.mxu0 0.0
      %2634 = vmatpush2.msra.mxu0 0.0
      %2635 = vmatprep.subr.mxu0 0.0
      %2636 = vmatpush2.msra.mxu0 0.0
      %2637 = vmatprep.subr.mxu0 0.0
      %2638 = vmatpush2.msra.mxu0 0.0
      %2639 = vmatprep.subr.mxu0 0.0
      %2640 = vmatpush2.msra.mxu0 0.0
      %2641 = vmatprep.subr.mxu0 0.0
      %2642 = vmatpush2.msra.mxu0 0.0
      %2643 = vmatprep.subr.mxu0 0.0
      %2644 = vmatpush2.msra.mxu0 0.0
      %2645 = vmatprep.subr.mxu0 0.0
      %2646 = vmatpush2.msra.mxu0 0.0
      %2647 = vmatprep.mubr.f32.mxu0 0.0
      %2648 = vmatmul.mubr.f32.gmra.mxu0 %v2488
      %v2649 = vpop.f32.mrf.mxu0
      %v2650 = vadd.f32 0.0, %v2649
      %v2651 = vpop.f32.mrf.mxu0
      %2652 = vmatprep.mubr.f32.mxu0 0.0
      %2653 = vmatmul.mubr.f32.gmra.mxu0 %v2491
      %v2654 = vpop.f32.mrf.mxu0
      %v2655 = vadd.f32 0.0, %v2654
      %v2656 = vpop.f32.mrf.mxu0
      %2657 = vmatprep.mubr.f32.mxu0 0.0
      %2658 = vmatmul.mubr.f32.gmra.mxu0 %v2494
      %v2659 = vpop.f32.mrf.mxu0
      %v2660 = vadd.f32 0.0, %v2659
      %v2661 = vpop.f32.mrf.mxu0
      %2662 = vmatprep.mubr.f32.mxu0 0.0
      %2663 = vmatmul.mubr.f32.gmra.mxu0 %v2497
      %v2664 = vpop.f32.mrf.mxu0
      %v2665 = vadd.f32 0.0, %v2664
      %v2666 = vpop.f32.mrf.mxu0
      %2667 = vmatprep.mubr.f32.mxu0 0.0
      %2668 = vmatmul.mubr.f32.gmra.mxu0 %v2500
      %v2669 = vpop.f32.mrf.mxu0
      %v2670 = vadd.f32 0.0, %v2669
      %v2671 = vpop.f32.mrf.mxu0
      %2672 = vmatprep.mubr.f32.mxu0 0.0
      %2673 = vmatmul.mubr.f32.gmra.mxu0 %v2503
      %v2674 = vpop.f32.mrf.mxu0
      %v2675 = vadd.f32 0.0, %v2674
      %v2676 = vpop.f32.mrf.mxu0
      %2677 = vmatprep.mubr.f32.mxu0 0.0
      %2678 = vmatmul.mubr.f32.gmra.mxu0 %v2506
      %v2679 = vpop.f32.mrf.mxu0
      %v2680 = vadd.f32 0.0, %v2679
      %v2681 = vpop.f32.mrf.mxu0
      %2682 = vmatprep.mubr.f32.mxu0 0.0
      %2683 = vmatmul.mubr.f32.gmra.mxu0 %v2509
      %v2684 = vpop.f32.mrf.mxu0
      %v2685 = vadd.f32 0.0, %v2684
      %v2686 = vpop.f32.mrf.mxu0
      %2687 = vmatprep.mubr.f32.mxu0 0.0
      %2688 = vmatmul.mubr.f32.gmra.mxu0 %v2512
      %v2689 = vpop.f32.mrf.mxu0
      %v2690 = vadd.f32 0.0, %v2689
      %v2691 = vpop.f32.mrf.mxu0
      %2692 = vmatprep.mubr.f32.mxu0 0.0
      %2693 = vmatmul.mubr.f32.gmra.mxu0 %v2515
      %v2694 = vpop.f32.mrf.mxu0
      %v2695 = vadd.f32 0.0, %v2694
      %v2696 = vpop.f32.mrf.mxu0
      %2697 = vmatprep.mubr.f32.mxu0 0.0
      %2698 = vmatmul.mubr.f32.gmra.mxu0 %v2518
      %v2699 = vpop.f32.mrf.mxu0
      %v2700 = vadd.f32 0.0, %v2699
      %v2701 = vpop.f32.mrf.mxu0
      %2702 = vmatprep.mubr.f32.mxu0 0.0
      %2703 = vmatmul.mubr.f32.gmra.mxu0 %v2521
      %v2704 = vpop.f32.mrf.mxu0
      %v2705 = vadd.f32 0.0, %v2704
      %v2706 = vpop.f32.mrf.mxu0
      %2707 = vmatprep.mubr.f32.mxu0 0.0
      %2708 = vmatmul.mubr.f32.gmra.mxu0 %v2524
      %v2709 = vpop.f32.mrf.mxu0
      %v2710 = vadd.f32 0.0, %v2709
      %v2711 = vpop.f32.mrf.mxu0
      %2712 = vmatprep.mubr.f32.mxu0 0.0
      %2713 = vmatmul.mubr.f32.gmra.mxu0 %v2527
      %v2714 = vpop.f32.mrf.mxu0
      %v2715 = vadd.f32 0.0, %v2714
      %v2716 = vpop.f32.mrf.mxu0
      %2717 = vmatprep.mubr.f32.mxu0 0.0
      %2718 = vmatmul.mubr.f32.gmra.mxu0 %v2530
      %v2719 = vpop.f32.mrf.mxu0
      %v2720 = vadd.f32 0.0, %v2719
      %v2721 = vpop.f32.mrf.mxu0
      %2722 = vmatprep.mubr.f32.mxu0 0.0
      %2723 = vmatmul.mubr.f32.gmra.mxu0 %v2533
      %v2724 = vpop.f32.mrf.mxu0
      %v2725 = vadd.f32 0.0, %v2724
      %v2726 = vpop.f32.mrf.mxu0
      %2727 = vmatprep.mubr.f32.mxu0 0.0
      %2728 = vmatmul.mubr.f32.gmra.mxu0 %v2536
      %v2729 = vpop.f32.mrf.mxu0
      %v2730 = vadd.f32 0.0, %v2729
      %v2731 = vpop.f32.mrf.mxu0
      %2732 = vmatprep.mubr.f32.mxu0 0.0
      %2733 = vmatmul.mubr.f32.gmra.mxu0 %v2539
      %v2734 = vpop.f32.mrf.mxu0
      %v2735 = vadd.f32 0.0, %v2734
      %v2736 = vpop.f32.mrf.mxu0
      %2737 = vmatprep.mubr.f32.mxu0 0.0
      %2738 = vmatmul.mubr.f32.gmra.mxu0 %v2542
      %v2739 = vpop.f32.mrf.mxu0
      %v2740 = vadd.f32 0.0, %v2739
      %v2741 = vpop.f32.mrf.mxu0
      %2742 = vmatprep.mubr.f32.mxu0 0.0
      %2743 = vmatmul.mubr.f32.gmra.mxu0 %v2545
      %v2744 = vpop.f32.mrf.mxu0
      %v2745 = vadd.f32 0.0, %v2744
      %v2746 = vpop.f32.mrf.mxu0
      %2747 = vmatprep.mubr.f32.mxu0 0.0
      %2748 = vmatmul.mubr.f32.gmra.mxu0 %v2548
      %v2749 = vpop.f32.mrf.mxu0
      %v2750 = vadd.f32 0.0, %v2749
      %v2751 = vpop.f32.mrf.mxu0
      %2752 = vmatprep.mubr.f32.mxu0 0.0
      %2753 = vmatmul.mubr.f32.gmra.mxu0 %v2551
      %v2754 = vpop.f32.mrf.mxu0
      %v2755 = vadd.f32 0.0, %v2754
      %v2756 = vpop.f32.mrf.mxu0
      %2757 = vmatprep.mubr.f32.mxu0 0.0
      %2758 = vmatmul.mubr.f32.gmra.mxu0 %v2554
      %v2759 = vpop.f32.mrf.mxu0
      %v2760 = vadd.f32 0.0, %v2759
      %v2761 = vpop.f32.mrf.mxu0
      %2762 = vmatprep.mubr.f32.mxu0 0.0
      %2763 = vmatmul.mubr.f32.gmra.mxu0 %v2557
      %v2764 = vpop.f32.mrf.mxu0
      %v2765 = vadd.f32 0.0, %v2764
      %v2766 = vpop.f32.mrf.mxu0
      %2767 = vmatprep.mubr.f32.mxu0 0.0
      %2768 = vmatmul.mubr.f32.gmra.mxu0 %v2560
      %v2769 = vpop.f32.mrf.mxu0
      %v2770 = vadd.f32 0.0, %v2769
      %v2771 = vpop.f32.mrf.mxu0
      %2772 = vmatprep.mubr.f32.mxu0 0.0
      %2773 = vmatmul.mubr.f32.gmra.mxu0 %v2563
      %v2774 = vpop.f32.mrf.mxu0
      %v2775 = vadd.f32 0.0, %v2774
      %v2776 = vpop.f32.mrf.mxu0
      %2777 = vmatprep.mubr.f32.mxu0 0.0
      %2778 = vmatmul.mubr.f32.gmra.mxu0 %v2566
      %v2779 = vpop.f32.mrf.mxu0
      %v2780 = vadd.f32 0.0, %v2779
      %v2781 = vpop.f32.mrf.mxu0
      %2782 = vmatprep.mubr.f32.mxu0 0.0
      %2783 = vmatmul.mubr.f32.gmra.mxu0 %v2569
      %v2784 = vpop.f32.mrf.mxu0
      %v2785 = vadd.f32 0.0, %v2784
      %v2786 = vpop.f32.mrf.mxu0
      %2787 = vmatprep.mubr.f32.mxu0 0.0
      %2788 = vmatmul.mubr.f32.gmra.mxu0 %v2572
      %v2789 = vpop.f32.mrf.mxu0
      %v2790 = vadd.f32 0.0, %v2789
      %v2791 = vpop.f32.mrf.mxu0
      %2792 = vmatprep.mubr.f32.mxu0 0.0
      %2793 = vmatmul.mubr.f32.gmra.mxu0 %v2575
      %v2794 = vpop.f32.mrf.mxu0
      %v2795 = vadd.f32 0.0, %v2794
      %v2796 = vpop.f32.mrf.mxu0
      %2797 = vmatprep.mubr.f32.mxu0 0.0
      %2798 = vmatmul.mubr.f32.gmra.mxu0 %v2578
      %v2799 = vpop.f32.mrf.mxu0
      %v2800 = vadd.f32 0.0, %v2799
      %v2801 = vpop.f32.mrf.mxu0
      %2802 = vmatprep.mubr.f32.mxu0 0.0
      %2803 = vmatmul.mubr.f32.gmra.mxu0 %v2581
      %v2804 = vpop.f32.mrf.mxu0
      %v2805 = vadd.f32 0.0, %v2804
      %v2806 = vpop.f32.mrf.mxu0
      %2807 = vdwg.mxu0
      %v2808 = vadd.f32 %v2421, %v2650
      %v2809 = vadd.f32 %v2422, %v2655
      %v2810 = vadd.f32 %v2423, %v2660
      %v2811 = vadd.f32 %v2424, %v2665
      %v2812 = vadd.f32 %v2425, %v2670
      %v2813 = vadd.f32 %v2426, %v2675
      %v2814 = vadd.f32 %v2427, %v2680
      %v2815 = vadd.f32 %v2428, %v2685
      %v2816 = vadd.f32 %v2429, %v2690
      %v2817 = vadd.f32 %v2430, %v2695
      %v2818 = vadd.f32 %v2431, %v2700
      %v2819 = vadd.f32 %v2432, %v2705
      %v2820 = vadd.f32 %v2433, %v2710
      %v2821 = vadd.f32 %v2434, %v2715
      %v2822 = vadd.f32 %v2435, %v2720
      %v2823 = vadd.f32 %v2436, %v2725
      %v2824 = vadd.f32 %v2437, %v2730
      %v2825 = vadd.f32 %v2438, %v2735
      %v2826 = vadd.f32 %v2439, %v2740
      %v2827 = vadd.f32 %v2440, %v2745
      %v2828 = vadd.f32 %v2441, %v2750
      %v2829 = vadd.f32 %v2442, %v2755
      %v2830 = vadd.f32 %v2443, %v2760
      %v2831 = vadd.f32 %v2444, %v2765
      %v2832 = vadd.f32 %v2445, %v2770
      %v2833 = vadd.f32 %v2446, %v2775
      %v2834 = vadd.f32 %v2447, %v2780
      %v2835 = vadd.f32 %v2448, %v2785
      %v2836 = vadd.f32 %v2449, %v2790
      %v2837 = vadd.f32 %v2450, %v2795
      %v2838 = vadd.f32 %v2451, %v2800
      %v2839 = vadd.f32 %v2452, %v2805
      %s2840 = scalar_lea.vmem [#allocation2], 48
      %v2841 = vld [vmem:[%s2840] sm:$0xff]
      %v2842 = vld [vmem:[%s2840 + $0x8] sm:$0xff]
      %v2843 = vld [vmem:[%s2840 + $0x18] sm:$0xff]
      %v2844 = vld [vmem:[%s2840 + $0x20] sm:$0xff]
      %v2845 = vld [vmem:[%s2840 + $0x30] sm:$0xff]
      %v2846 = vld [vmem:[%s2840 + $0x38] sm:$0xff]
      %v2847 = vld [vmem:[%s2840 + $0x48] sm:$0xff]
      %v2848 = vld [vmem:[%s2840 + $0x50] sm:$0xff]
      %v2849 = vld [vmem:[%s2840 + $0x60] sm:$0xff]
      %v2850 = vld [vmem:[%s2840 + $0x68] sm:$0xff]
      %v2851 = vld [vmem:[%s2840 + $0x78] sm:$0xff]
      %v2852 = vld [vmem:[%s2840 + $0x80] sm:$0xff]
      %v2853 = vld [vmem:[%s2840 + $0x90] sm:$0xff]
      %v2854 = vld [vmem:[%s2840 + $0x98] sm:$0xff]
      %v2855 = vld [vmem:[%s2840 + $0xa8] sm:$0xff]
      %v2856 = vld [vmem:[%s2840 + $0xb0] sm:$0xff]
      %v2857 = vld [vmem:[%s2840 + $0xc0] sm:$0xff]
      %v2858 = vld [vmem:[%s2840 + $0xc8] sm:$0xff]
      %v2859 = vld [vmem:[%s2840 + $0xd8] sm:$0xff]
      %v2860 = vld [vmem:[%s2840 + $0xe0] sm:$0xff]
      %v2861 = vld [vmem:[%s2840 + $0xf0] sm:$0xff]
      %v2862 = vld [vmem:[%s2840 + $0xf8] sm:$0xff]
      %v2863 = vld [vmem:[%s2840 + $0x108] sm:$0xff]
      %v2864 = vld [vmem:[%s2840 + $0x110] sm:$0xff]
      %v2865 = vld [vmem:[%s2840 + $0x120] sm:$0xff]
      %v2866 = vld [vmem:[%s2840 + $0x128] sm:$0xff]
      %v2867 = vld [vmem:[%s2840 + $0x138] sm:$0xff]
      %v2868 = vld [vmem:[%s2840 + $0x140] sm:$0xff]
      %v2869 = vld [vmem:[%s2840 + $0x150] sm:$0xff]
      %v2870 = vld [vmem:[%s2840 + $0x158] sm:$0xff]
      %v2871 = vld [vmem:[%s2840 + $0x168] sm:$0xff]
      %v2872 = vld [vmem:[%s2840 + $0x170] sm:$0xff]
      %s2873 = scalar_lea.vmem %s1, 48
      %v2874 = vld [vmem:[%s2873] sm:$0xff]
      %v2876 = vsel %vm373, %v2841, 0
      %v2879 = vsel %vm373, %v2842, 0
      %v2882 = vsel %vm373, %v2843, 0
      %v2885 = vsel %vm373, %v2844, 0
      %v2888 = vsel %vm373, %v2845, 0
      %v2891 = vsel %vm373, %v2846, 0
      %v2894 = vsel %vm373, %v2847, 0
      %v2897 = vsel %vm373, %v2848, 0
      %v2900 = vsel %vm373, %v2849, 0
      %v2903 = vsel %vm373, %v2850, 0
      %v2906 = vsel %vm373, %v2851, 0
      %v2909 = vsel %vm373, %v2852, 0
      %v2912 = vsel %vm373, %v2853, 0
      %v2915 = vsel %vm373, %v2854, 0
      %v2918 = vsel %vm373, %v2855, 0
      %v2921 = vsel %vm373, %v2856, 0
      %v2924 = vsel %vm373, %v2857, 0
      %v2927 = vsel %vm373, %v2858, 0
      %v2930 = vsel %vm373, %v2859, 0
      %v2933 = vsel %vm373, %v2860, 0
      %v2936 = vsel %vm373, %v2861, 0
      %v2939 = vsel %vm373, %v2862, 0
      %v2942 = vsel %vm373, %v2863, 0
      %v2945 = vsel %vm373, %v2864, 0
      %v2948 = vsel %vm373, %v2865, 0
      %v2951 = vsel %vm373, %v2866, 0
      %v2954 = vsel %vm373, %v2867, 0
      %v2957 = vsel %vm373, %v2868, 0
      %v2960 = vsel %vm373, %v2869, 0
      %v2963 = vsel %vm373, %v2870, 0
      %v2966 = vsel %vm373, %v2871, 0
      %v2969 = vsel %vm373, %v2872, 0
      %2971 = vmatprep.subr.mxu0 0.0
      %2972 = vmatpush1.msra.mxu0 0.0
      %2973 = vmatprep.subr.mxu0 0.0
      %2974 = vmatpush1.msra.mxu0 0.0
      %2975 = vmatprep.subr.mxu0 0.0
      %2976 = vmatpush1.msra.mxu0 0.0
      %2977 = vmatprep.subr.mxu0 0.0
      %2978 = vmatpush1.msra.mxu0 0.0
      %2979 = vmatprep.subr.mxu0 0.0
      %2980 = vmatpush1.msra.mxu0 0.0
      %2981 = vmatprep.subr.mxu0 0.0
      %2982 = vmatpush1.msra.mxu0 0.0
      %2983 = vmatprep.subr.mxu0 0.0
      %2984 = vmatpush1.msra.mxu0 0.0
      %2985 = vmatprep.subr.mxu0 0.0
      %2986 = vmatpush1.msra.mxu0 0.0
      %2987 = vmatprep.subr.mxu0 0.0
      %2988 = vmatpush1.msra.mxu0 0.0
      %2989 = vmatprep.subr.mxu0 0.0
      %2990 = vmatpush1.msra.mxu0 0.0
      %2991 = vmatprep.subr.mxu0 0.0
      %2992 = vmatpush1.msra.mxu0 0.0
      %2993 = vmatprep.subr.mxu0 0.0
      %2994 = vmatpush1.msra.mxu0 0.0
      %2995 = vmatprep.subr.mxu0 0.0
      %2996 = vmatpush1.msra.mxu0 0.0
      %2997 = vmatprep.subr.mxu0 0.0
      %2998 = vmatpush1.msra.mxu0 0.0
      %2999 = vmatprep.subr.mxu0 0.0
      %3000 = vmatpush1.msra.mxu0 0.0
      %3001 = vmatprep.subr.mxu0 0.0
      %3002 = vmatpush1.msra.mxu0 %v2874
      %3003 = vmatprep.subr.mxu0 0.0
      %3004 = vmatpush2.msra.mxu0 0.0
      %3005 = vmatprep.subr.mxu0 0.0
      %3006 = vmatpush2.msra.mxu0 0.0
      %3007 = vmatprep.subr.mxu0 0.0
      %3008 = vmatpush2.msra.mxu0 0.0
      %3009 = vmatprep.subr.mxu0 0.0
      %3010 = vmatpush2.msra.mxu0 0.0
      %3011 = vmatprep.subr.mxu0 0.0
      %3012 = vmatpush2.msra.mxu0 0.0
      %3013 = vmatprep.subr.mxu0 0.0
      %3014 = vmatpush2.msra.mxu0 0.0
      %3015 = vmatprep.subr.mxu0 0.0
      %3016 = vmatpush2.msra.mxu0 0.0
      %3017 = vmatprep.subr.mxu0 0.0
      %3018 = vmatpush2.msra.mxu0 0.0
      %3019 = vmatprep.subr.mxu0 0.0
      %3020 = vmatpush2.msra.mxu0 0.0
      %3021 = vmatprep.subr.mxu0 0.0
      %3022 = vmatpush2.msra.mxu0 0.0
      %3023 = vmatprep.subr.mxu0 0.0
      %3024 = vmatpush2.msra.mxu0 0.0
      %3025 = vmatprep.subr.mxu0 0.0
      %3026 = vmatpush2.msra.mxu0 0.0
      %3027 = vmatprep.subr.mxu0 0.0
      %3028 = vmatpush2.msra.mxu0 0.0
      %3029 = vmatprep.subr.mxu0 0.0
      %3030 = vmatpush2.msra.mxu0 0.0
      %3031 = vmatprep.subr.mxu0 0.0
      %3032 = vmatpush2.msra.mxu0 0.0
      %3033 = vmatprep.subr.mxu0 0.0
      %3034 = vmatpush2.msra.mxu0 0.0
      %3035 = vmatprep.mubr.f32.mxu0 0.0
      %3036 = vmatmul.mubr.f32.gmra.mxu0 %v2876
      %v3037 = vpop.f32.mrf.mxu0
      %v3038 = vadd.f32 0.0, %v3037
      %v3039 = vpop.f32.mrf.mxu0
      %3040 = vmatprep.mubr.f32.mxu0 0.0
      %3041 = vmatmul.mubr.f32.gmra.mxu0 %v2879
      %v3042 = vpop.f32.mrf.mxu0
      %v3043 = vadd.f32 0.0, %v3042
      %v3044 = vpop.f32.mrf.mxu0
      %3045 = vmatprep.mubr.f32.mxu0 0.0
      %3046 = vmatmul.mubr.f32.gmra.mxu0 %v2882
      %v3047 = vpop.f32.mrf.mxu0
      %v3048 = vadd.f32 0.0, %v3047
      %v3049 = vpop.f32.mrf.mxu0
      %3050 = vmatprep.mubr.f32.mxu0 0.0
      %3051 = vmatmul.mubr.f32.gmra.mxu0 %v2885
      %v3052 = vpop.f32.mrf.mxu0
      %v3053 = vadd.f32 0.0, %v3052
      %v3054 = vpop.f32.mrf.mxu0
      %3055 = vmatprep.mubr.f32.mxu0 0.0
      %3056 = vmatmul.mubr.f32.gmra.mxu0 %v2888
      %v3057 = vpop.f32.mrf.mxu0
      %v3058 = vadd.f32 0.0, %v3057
      %v3059 = vpop.f32.mrf.mxu0
      %3060 = vmatprep.mubr.f32.mxu0 0.0
      %3061 = vmatmul.mubr.f32.gmra.mxu0 %v2891
      %v3062 = vpop.f32.mrf.mxu0
      %v3063 = vadd.f32 0.0, %v3062
      %v3064 = vpop.f32.mrf.mxu0
      %3065 = vmatprep.mubr.f32.mxu0 0.0
      %3066 = vmatmul.mubr.f32.gmra.mxu0 %v2894
      %v3067 = vpop.f32.mrf.mxu0
      %v3068 = vadd.f32 0.0, %v3067
      %v3069 = vpop.f32.mrf.mxu0
      %3070 = vmatprep.mubr.f32.mxu0 0.0
      %3071 = vmatmul.mubr.f32.gmra.mxu0 %v2897
      %v3072 = vpop.f32.mrf.mxu0
      %v3073 = vadd.f32 0.0, %v3072
      %v3074 = vpop.f32.mrf.mxu0
      %3075 = vmatprep.mubr.f32.mxu0 0.0
      %3076 = vmatmul.mubr.f32.gmra.mxu0 %v2900
      %v3077 = vpop.f32.mrf.mxu0
      %v3078 = vadd.f32 0.0, %v3077
      %v3079 = vpop.f32.mrf.mxu0
      %3080 = vmatprep.mubr.f32.mxu0 0.0
      %3081 = vmatmul.mubr.f32.gmra.mxu0 %v2903
      %v3082 = vpop.f32.mrf.mxu0
      %v3083 = vadd.f32 0.0, %v3082
      %v3084 = vpop.f32.mrf.mxu0
      %3085 = vmatprep.mubr.f32.mxu0 0.0
      %3086 = vmatmul.mubr.f32.gmra.mxu0 %v2906
      %v3087 = vpop.f32.mrf.mxu0
      %v3088 = vadd.f32 0.0, %v3087
      %v3089 = vpop.f32.mrf.mxu0
      %3090 = vmatprep.mubr.f32.mxu0 0.0
      %3091 = vmatmul.mubr.f32.gmra.mxu0 %v2909
      %v3092 = vpop.f32.mrf.mxu0
      %v3093 = vadd.f32 0.0, %v3092
      %v3094 = vpop.f32.mrf.mxu0
      %3095 = vmatprep.mubr.f32.mxu0 0.0
      %3096 = vmatmul.mubr.f32.gmra.mxu0 %v2912
      %v3097 = vpop.f32.mrf.mxu0
      %v3098 = vadd.f32 0.0, %v3097
      %v3099 = vpop.f32.mrf.mxu0
      %3100 = vmatprep.mubr.f32.mxu0 0.0
      %3101 = vmatmul.mubr.f32.gmra.mxu0 %v2915
      %v3102 = vpop.f32.mrf.mxu0
      %v3103 = vadd.f32 0.0, %v3102
      %v3104 = vpop.f32.mrf.mxu0
      %3105 = vmatprep.mubr.f32.mxu0 0.0
      %3106 = vmatmul.mubr.f32.gmra.mxu0 %v2918
      %v3107 = vpop.f32.mrf.mxu0
      %v3108 = vadd.f32 0.0, %v3107
      %v3109 = vpop.f32.mrf.mxu0
      %3110 = vmatprep.mubr.f32.mxu0 0.0
      %3111 = vmatmul.mubr.f32.gmra.mxu0 %v2921
      %v3112 = vpop.f32.mrf.mxu0
      %v3113 = vadd.f32 0.0, %v3112
      %v3114 = vpop.f32.mrf.mxu0
      %3115 = vmatprep.mubr.f32.mxu0 0.0
      %3116 = vmatmul.mubr.f32.gmra.mxu0 %v2924
      %v3117 = vpop.f32.mrf.mxu0
      %v3118 = vadd.f32 0.0, %v3117
      %v3119 = vpop.f32.mrf.mxu0
      %3120 = vmatprep.mubr.f32.mxu0 0.0
      %3121 = vmatmul.mubr.f32.gmra.mxu0 %v2927
      %v3122 = vpop.f32.mrf.mxu0
      %v3123 = vadd.f32 0.0, %v3122
      %v3124 = vpop.f32.mrf.mxu0
      %3125 = vmatprep.mubr.f32.mxu0 0.0
      %3126 = vmatmul.mubr.f32.gmra.mxu0 %v2930
      %v3127 = vpop.f32.mrf.mxu0
      %v3128 = vadd.f32 0.0, %v3127
      %v3129 = vpop.f32.mrf.mxu0
      %3130 = vmatprep.mubr.f32.mxu0 0.0
      %3131 = vmatmul.mubr.f32.gmra.mxu0 %v2933
      %v3132 = vpop.f32.mrf.mxu0
      %v3133 = vadd.f32 0.0, %v3132
      %v3134 = vpop.f32.mrf.mxu0
      %3135 = vmatprep.mubr.f32.mxu0 0.0
      %3136 = vmatmul.mubr.f32.gmra.mxu0 %v2936
      %v3137 = vpop.f32.mrf.mxu0
      %v3138 = vadd.f32 0.0, %v3137
      %v3139 = vpop.f32.mrf.mxu0
      %3140 = vmatprep.mubr.f32.mxu0 0.0
      %3141 = vmatmul.mubr.f32.gmra.mxu0 %v2939
      %v3142 = vpop.f32.mrf.mxu0
      %v3143 = vadd.f32 0.0, %v3142
      %v3144 = vpop.f32.mrf.mxu0
      %3145 = vmatprep.mubr.f32.mxu0 0.0
      %3146 = vmatmul.mubr.f32.gmra.mxu0 %v2942
      %v3147 = vpop.f32.mrf.mxu0
      %v3148 = vadd.f32 0.0, %v3147
      %v3149 = vpop.f32.mrf.mxu0
      %3150 = vmatprep.mubr.f32.mxu0 0.0
      %3151 = vmatmul.mubr.f32.gmra.mxu0 %v2945
      %v3152 = vpop.f32.mrf.mxu0
      %v3153 = vadd.f32 0.0, %v3152
      %v3154 = vpop.f32.mrf.mxu0
      %3155 = vmatprep.mubr.f32.mxu0 0.0
      %3156 = vmatmul.mubr.f32.gmra.mxu0 %v2948
      %v3157 = vpop.f32.mrf.mxu0
      %v3158 = vadd.f32 0.0, %v3157
      %v3159 = vpop.f32.mrf.mxu0
      %3160 = vmatprep.mubr.f32.mxu0 0.0
      %3161 = vmatmul.mubr.f32.gmra.mxu0 %v2951
      %v3162 = vpop.f32.mrf.mxu0
      %v3163 = vadd.f32 0.0, %v3162
      %v3164 = vpop.f32.mrf.mxu0
      %3165 = vmatprep.mubr.f32.mxu0 0.0
      %3166 = vmatmul.mubr.f32.gmra.mxu0 %v2954
      %v3167 = vpop.f32.mrf.mxu0
      %v3168 = vadd.f32 0.0, %v3167
      %v3169 = vpop.f32.mrf.mxu0
      %3170 = vmatprep.mubr.f32.mxu0 0.0
      %3171 = vmatmul.mubr.f32.gmra.mxu0 %v2957
      %v3172 = vpop.f32.mrf.mxu0
      %v3173 = vadd.f32 0.0, %v3172
      %v3174 = vpop.f32.mrf.mxu0
      %3175 = vmatprep.mubr.f32.mxu0 0.0
      %3176 = vmatmul.mubr.f32.gmra.mxu0 %v2960
      %v3177 = vpop.f32.mrf.mxu0
      %v3178 = vadd.f32 0.0, %v3177
      %v3179 = vpop.f32.mrf.mxu0
      %3180 = vmatprep.mubr.f32.mxu0 0.0
      %3181 = vmatmul.mubr.f32.gmra.mxu0 %v2963
      %v3182 = vpop.f32.mrf.mxu0
      %v3183 = vadd.f32 0.0, %v3182
      %v3184 = vpop.f32.mrf.mxu0
      %3185 = vmatprep.mubr.f32.mxu0 0.0
      %3186 = vmatmul.mubr.f32.gmra.mxu0 %v2966
      %v3187 = vpop.f32.mrf.mxu0
      %v3188 = vadd.f32 0.0, %v3187
      %v3189 = vpop.f32.mrf.mxu0
      %3190 = vmatprep.mubr.f32.mxu0 0.0
      %3191 = vmatmul.mubr.f32.gmra.mxu0 %v2969
      %v3192 = vpop.f32.mrf.mxu0
      %v3193 = vadd.f32 0.0, %v3192
      %v3194 = vpop.f32.mrf.mxu0
      %3195 = vdwg.mxu0
      %v3196 = vadd.f32 %v2808, %v3038
      %v3197 = vadd.f32 %v2809, %v3043
      %v3198 = vadd.f32 %v2810, %v3048
      %v3199 = vadd.f32 %v2811, %v3053
      %v3200 = vadd.f32 %v2812, %v3058
      %v3201 = vadd.f32 %v2813, %v3063
      %v3202 = vadd.f32 %v2814, %v3068
      %v3203 = vadd.f32 %v2815, %v3073
      %v3204 = vadd.f32 %v2816, %v3078
      %v3205 = vadd.f32 %v2817, %v3083
      %v3206 = vadd.f32 %v2818, %v3088
      %v3207 = vadd.f32 %v2819, %v3093
      %v3208 = vadd.f32 %v2820, %v3098
      %v3209 = vadd.f32 %v2821, %v3103
      %v3210 = vadd.f32 %v2822, %v3108
      %v3211 = vadd.f32 %v2823, %v3113
      %v3212 = vadd.f32 %v2824, %v3118
      %v3213 = vadd.f32 %v2825, %v3123
      %v3214 = vadd.f32 %v2826, %v3128
      %v3215 = vadd.f32 %v2827, %v3133
      %v3216 = vadd.f32 %v2828, %v3138
      %v3217 = vadd.f32 %v2829, %v3143
      %v3218 = vadd.f32 %v2830, %v3148
      %v3219 = vadd.f32 %v2831, %v3153
      %v3220 = vadd.f32 %v2832, %v3158
      %v3221 = vadd.f32 %v2833, %v3163
      %v3222 = vadd.f32 %v2834, %v3168
      %v3223 = vadd.f32 %v2835, %v3173
      %v3224 = vadd.f32 %v2836, %v3178
      %v3225 = vadd.f32 %v2837, %v3183
      %v3226 = vadd.f32 %v2838, %v3188
      %v3227 = vadd.f32 %v2839, %v3193
      %v3228 = vld [vmem:[%s2840 + $0x1] sm:$0xff]
      %v3229 = vld [vmem:[%s2840 + $0x9] sm:$0xff]
      %v3230 = vld [vmem:[%s2840 + $0x19] sm:$0xff]
      %v3231 = vld [vmem:[%s2840 + $0x21] sm:$0xff]
      %v3232 = vld [vmem:[%s2840 + $0x31] sm:$0xff]
      %v3233 = vld [vmem:[%s2840 + $0x39] sm:$0xff]
      %v3234 = vld [vmem:[%s2840 + $0x49] sm:$0xff]
      %v3235 = vld [vmem:[%s2840 + $0x51] sm:$0xff]
      %v3236 = vld [vmem:[%s2840 + $0x61] sm:$0xff]
      %v3237 = vld [vmem:[%s2840 + $0x69] sm:$0xff]
      %v3238 = vld [vmem:[%s2840 + $0x79] sm:$0xff]
      %v3239 = vld [vmem:[%s2840 + $0x81] sm:$0xff]
      %v3240 = vld [vmem:[%s2840 + $0x91] sm:$0xff]
      %v3241 = vld [vmem:[%s2840 + $0x99] sm:$0xff]
      %v3242 = vld [vmem:[%s2840 + $0xa9] sm:$0xff]
      %v3243 = vld [vmem:[%s2840 + $0xb1] sm:$0xff]
      %v3244 = vld [vmem:[%s2840 + $0xc1] sm:$0xff]
      %v3245 = vld [vmem:[%s2840 + $0xc9] sm:$0xff]
      %v3246 = vld [vmem:[%s2840 + $0xd9] sm:$0xff]
      %v3247 = vld [vmem:[%s2840 + $0xe1] sm:$0xff]
      %v3248 = vld [vmem:[%s2840 + $0xf1] sm:$0xff]
      %v3249 = vld [vmem:[%s2840 + $0xf9] sm:$0xff]
      %v3250 = vld [vmem:[%s2840 + $0x109] sm:$0xff]
      %v3251 = vld [vmem:[%s2840 + $0x111] sm:$0xff]
      %v3252 = vld [vmem:[%s2840 + $0x121] sm:$0xff]
      %v3253 = vld [vmem:[%s2840 + $0x129] sm:$0xff]
      %v3254 = vld [vmem:[%s2840 + $0x139] sm:$0xff]
      %v3255 = vld [vmem:[%s2840 + $0x141] sm:$0xff]
      %v3256 = vld [vmem:[%s2840 + $0x151] sm:$0xff]
      %v3257 = vld [vmem:[%s2840 + $0x159] sm:$0xff]
      %v3258 = vld [vmem:[%s2840 + $0x169] sm:$0xff]
      %v3259 = vld [vmem:[%s2840 + $0x171] sm:$0xff]
      %s3260 = scalar_lea.vmem %s1, 56
      %v3261 = vld [vmem:[%s3260] sm:$0xff]
      %v3263 = vsel %vm373, %v3228, 0
      %v3266 = vsel %vm373, %v3229, 0
      %v3269 = vsel %vm373, %v3230, 0
      %v3272 = vsel %vm373, %v3231, 0
      %v3275 = vsel %vm373, %v3232, 0
      %v3278 = vsel %vm373, %v3233, 0
      %v3281 = vsel %vm373, %v3234, 0
      %v3284 = vsel %vm373, %v3235, 0
      %v3287 = vsel %vm373, %v3236, 0
      %v3290 = vsel %vm373, %v3237, 0
      %v3293 = vsel %vm373, %v3238, 0
      %v3296 = vsel %vm373, %v3239, 0
      %v3299 = vsel %vm373, %v3240, 0
      %v3302 = vsel %vm373, %v3241, 0
      %v3305 = vsel %vm373, %v3242, 0
      %v3308 = vsel %vm373, %v3243, 0
      %v3311 = vsel %vm373, %v3244, 0
      %v3314 = vsel %vm373, %v3245, 0
      %v3317 = vsel %vm373, %v3246, 0
      %v3320 = vsel %vm373, %v3247, 0
      %v3323 = vsel %vm373, %v3248, 0
      %v3326 = vsel %vm373, %v3249, 0
      %v3329 = vsel %vm373, %v3250, 0
      %v3332 = vsel %vm373, %v3251, 0
      %v3335 = vsel %vm373, %v3252, 0
      %v3338 = vsel %vm373, %v3253, 0
      %v3341 = vsel %vm373, %v3254, 0
      %v3344 = vsel %vm373, %v3255, 0
      %v3347 = vsel %vm373, %v3256, 0
      %v3350 = vsel %vm373, %v3257, 0
      %v3353 = vsel %vm373, %v3258, 0
      %v3356 = vsel %vm373, %v3259, 0
      %3358 = vmatprep.subr.mxu0 0.0
      %3359 = vmatpush1.msra.mxu0 0.0
      %3360 = vmatprep.subr.mxu0 0.0
      %3361 = vmatpush1.msra.mxu0 0.0
      %3362 = vmatprep.subr.mxu0 0.0
      %3363 = vmatpush1.msra.mxu0 0.0
      %3364 = vmatprep.subr.mxu0 0.0
      %3365 = vmatpush1.msra.mxu0 0.0
      %3366 = vmatprep.subr.mxu0 0.0
      %3367 = vmatpush1.msra.mxu0 0.0
      %3368 = vmatprep.subr.mxu0 0.0
      %3369 = vmatpush1.msra.mxu0 0.0
      %3370 = vmatprep.subr.mxu0 0.0
      %3371 = vmatpush1.msra.mxu0 0.0
      %3372 = vmatprep.subr.mxu0 0.0
      %3373 = vmatpush1.msra.mxu0 0.0
      %3374 = vmatprep.subr.mxu0 0.0
      %3375 = vmatpush1.msra.mxu0 0.0
      %3376 = vmatprep.subr.mxu0 0.0
      %3377 = vmatpush1.msra.mxu0 0.0
      %3378 = vmatprep.subr.mxu0 0.0
      %3379 = vmatpush1.msra.mxu0 0.0
      %3380 = vmatprep.subr.mxu0 0.0
      %3381 = vmatpush1.msra.mxu0 0.0
      %3382 = vmatprep.subr.mxu0 0.0
      %3383 = vmatpush1.msra.mxu0 0.0
      %3384 = vmatprep.subr.mxu0 0.0
      %3385 = vmatpush1.msra.mxu0 0.0
      %3386 = vmatprep.subr.mxu0 0.0
      %3387 = vmatpush1.msra.mxu0 0.0
      %3388 = vmatprep.subr.mxu0 0.0
      %3389 = vmatpush1.msra.mxu0 %v3261
      %3390 = vmatprep.subr.mxu0 0.0
      %3391 = vmatpush2.msra.mxu0 0.0
      %3392 = vmatprep.subr.mxu0 0.0
      %3393 = vmatpush2.msra.mxu0 0.0
      %3394 = vmatprep.subr.mxu0 0.0
      %3395 = vmatpush2.msra.mxu0 0.0
      %3396 = vmatprep.subr.mxu0 0.0
      %3397 = vmatpush2.msra.mxu0 0.0
      %3398 = vmatprep.subr.mxu0 0.0
      %3399 = vmatpush2.msra.mxu0 0.0
      %3400 = vmatprep.subr.mxu0 0.0
      %3401 = vmatpush2.msra.mxu0 0.0
      %3402 = vmatprep.subr.mxu0 0.0
      %3403 = vmatpush2.msra.mxu0 0.0
      %3404 = vmatprep.subr.mxu0 0.0
      %3405 = vmatpush2.msra.mxu0 0.0
      %3406 = vmatprep.subr.mxu0 0.0
      %3407 = vmatpush2.msra.mxu0 0.0
      %3408 = vmatprep.subr.mxu0 0.0
      %3409 = vmatpush2.msra.mxu0 0.0
      %3410 = vmatprep.subr.mxu0 0.0
      %3411 = vmatpush2.msra.mxu0 0.0
      %3412 = vmatprep.subr.mxu0 0.0
      %3413 = vmatpush2.msra.mxu0 0.0
      %3414 = vmatprep.subr.mxu0 0.0
      %3415 = vmatpush2.msra.mxu0 0.0
      %3416 = vmatprep.subr.mxu0 0.0
      %3417 = vmatpush2.msra.mxu0 0.0
      %3418 = vmatprep.subr.mxu0 0.0
      %3419 = vmatpush2.msra.mxu0 0.0
      %3420 = vmatprep.subr.mxu0 0.0
      %3421 = vmatpush2.msra.mxu0 0.0
      %3422 = vmatprep.mubr.f32.mxu0 0.0
      %3423 = vmatmul.mubr.f32.gmra.mxu0 %v3263
      %v3424 = vpop.f32.mrf.mxu0
      %v3425 = vadd.f32 0.0, %v3424
      %v3426 = vpop.f32.mrf.mxu0
      %3427 = vmatprep.mubr.f32.mxu0 0.0
      %3428 = vmatmul.mubr.f32.gmra.mxu0 %v3266
      %v3429 = vpop.f32.mrf.mxu0
      %v3430 = vadd.f32 0.0, %v3429
      %v3431 = vpop.f32.mrf.mxu0
      %3432 = vmatprep.mubr.f32.mxu0 0.0
      %3433 = vmatmul.mubr.f32.gmra.mxu0 %v3269
      %v3434 = vpop.f32.mrf.mxu0
      %v3435 = vadd.f32 0.0, %v3434
      %v3436 = vpop.f32.mrf.mxu0
      %3437 = vmatprep.mubr.f32.mxu0 0.0
      %3438 = vmatmul.mubr.f32.gmra.mxu0 %v3272
      %v3439 = vpop.f32.mrf.mxu0
      %v3440 = vadd.f32 0.0, %v3439
      %v3441 = vpop.f32.mrf.mxu0
      %3442 = vmatprep.mubr.f32.mxu0 0.0
      %3443 = vmatmul.mubr.f32.gmra.mxu0 %v3275
      %v3444 = vpop.f32.mrf.mxu0
      %v3445 = vadd.f32 0.0, %v3444
      %v3446 = vpop.f32.mrf.mxu0
      %3447 = vmatprep.mubr.f32.mxu0 0.0
      %3448 = vmatmul.mubr.f32.gmra.mxu0 %v3278
      %v3449 = vpop.f32.mrf.mxu0
      %v3450 = vadd.f32 0.0, %v3449
      %v3451 = vpop.f32.mrf.mxu0
      %3452 = vmatprep.mubr.f32.mxu0 0.0
      %3453 = vmatmul.mubr.f32.gmra.mxu0 %v3281
      %v3454 = vpop.f32.mrf.mxu0
      %v3455 = vadd.f32 0.0, %v3454
      %v3456 = vpop.f32.mrf.mxu0
      %3457 = vmatprep.mubr.f32.mxu0 0.0
      %3458 = vmatmul.mubr.f32.gmra.mxu0 %v3284
      %v3459 = vpop.f32.mrf.mxu0
      %v3460 = vadd.f32 0.0, %v3459
      %v3461 = vpop.f32.mrf.mxu0
      %3462 = vmatprep.mubr.f32.mxu0 0.0
      %3463 = vmatmul.mubr.f32.gmra.mxu0 %v3287
      %v3464 = vpop.f32.mrf.mxu0
      %v3465 = vadd.f32 0.0, %v3464
      %v3466 = vpop.f32.mrf.mxu0
      %3467 = vmatprep.mubr.f32.mxu0 0.0
      %3468 = vmatmul.mubr.f32.gmra.mxu0 %v3290
      %v3469 = vpop.f32.mrf.mxu0
      %v3470 = vadd.f32 0.0, %v3469
      %v3471 = vpop.f32.mrf.mxu0
      %3472 = vmatprep.mubr.f32.mxu0 0.0
      %3473 = vmatmul.mubr.f32.gmra.mxu0 %v3293
      %v3474 = vpop.f32.mrf.mxu0
      %v3475 = vadd.f32 0.0, %v3474
      %v3476 = vpop.f32.mrf.mxu0
      %3477 = vmatprep.mubr.f32.mxu0 0.0
      %3478 = vmatmul.mubr.f32.gmra.mxu0 %v3296
      %v3479 = vpop.f32.mrf.mxu0
      %v3480 = vadd.f32 0.0, %v3479
      %v3481 = vpop.f32.mrf.mxu0
      %3482 = vmatprep.mubr.f32.mxu0 0.0
      %3483 = vmatmul.mubr.f32.gmra.mxu0 %v3299
      %v3484 = vpop.f32.mrf.mxu0
      %v3485 = vadd.f32 0.0, %v3484
      %v3486 = vpop.f32.mrf.mxu0
      %3487 = vmatprep.mubr.f32.mxu0 0.0
      %3488 = vmatmul.mubr.f32.gmra.mxu0 %v3302
      %v3489 = vpop.f32.mrf.mxu0
      %v3490 = vadd.f32 0.0, %v3489
      %v3491 = vpop.f32.mrf.mxu0
      %3492 = vmatprep.mubr.f32.mxu0 0.0
      %3493 = vmatmul.mubr.f32.gmra.mxu0 %v3305
      %v3494 = vpop.f32.mrf.mxu0
      %v3495 = vadd.f32 0.0, %v3494
      %v3496 = vpop.f32.mrf.mxu0
      %3497 = vmatprep.mubr.f32.mxu0 0.0
      %3498 = vmatmul.mubr.f32.gmra.mxu0 %v3308
      %v3499 = vpop.f32.mrf.mxu0
      %v3500 = vadd.f32 0.0, %v3499
      %v3501 = vpop.f32.mrf.mxu0
      %3502 = vmatprep.mubr.f32.mxu0 0.0
      %3503 = vmatmul.mubr.f32.gmra.mxu0 %v3311
      %v3504 = vpop.f32.mrf.mxu0
      %v3505 = vadd.f32 0.0, %v3504
      %v3506 = vpop.f32.mrf.mxu0
      %3507 = vmatprep.mubr.f32.mxu0 0.0
      %3508 = vmatmul.mubr.f32.gmra.mxu0 %v3314
      %v3509 = vpop.f32.mrf.mxu0
      %v3510 = vadd.f32 0.0, %v3509
      %v3511 = vpop.f32.mrf.mxu0
      %3512 = vmatprep.mubr.f32.mxu0 0.0
      %3513 = vmatmul.mubr.f32.gmra.mxu0 %v3317
      %v3514 = vpop.f32.mrf.mxu0
      %v3515 = vadd.f32 0.0, %v3514
      %v3516 = vpop.f32.mrf.mxu0
      %3517 = vmatprep.mubr.f32.mxu0 0.0
      %3518 = vmatmul.mubr.f32.gmra.mxu0 %v3320
      %v3519 = vpop.f32.mrf.mxu0
      %v3520 = vadd.f32 0.0, %v3519
      %v3521 = vpop.f32.mrf.mxu0
      %3522 = vmatprep.mubr.f32.mxu0 0.0
      %3523 = vmatmul.mubr.f32.gmra.mxu0 %v3323
      %v3524 = vpop.f32.mrf.mxu0
      %v3525 = vadd.f32 0.0, %v3524
      %v3526 = vpop.f32.mrf.mxu0
      %3527 = vmatprep.mubr.f32.mxu0 0.0
      %3528 = vmatmul.mubr.f32.gmra.mxu0 %v3326
      %v3529 = vpop.f32.mrf.mxu0
      %v3530 = vadd.f32 0.0, %v3529
      %v3531 = vpop.f32.mrf.mxu0
      %3532 = vmatprep.mubr.f32.mxu0 0.0
      %3533 = vmatmul.mubr.f32.gmra.mxu0 %v3329
      %v3534 = vpop.f32.mrf.mxu0
      %v3535 = vadd.f32 0.0, %v3534
      %v3536 = vpop.f32.mrf.mxu0
      %3537 = vmatprep.mubr.f32.mxu0 0.0
      %3538 = vmatmul.mubr.f32.gmra.mxu0 %v3332
      %v3539 = vpop.f32.mrf.mxu0
      %v3540 = vadd.f32 0.0, %v3539
      %v3541 = vpop.f32.mrf.mxu0
      %3542 = vmatprep.mubr.f32.mxu0 0.0
      %3543 = vmatmul.mubr.f32.gmra.mxu0 %v3335
      %v3544 = vpop.f32.mrf.mxu0
      %v3545 = vadd.f32 0.0, %v3544
      %v3546 = vpop.f32.mrf.mxu0
      %3547 = vmatprep.mubr.f32.mxu0 0.0
      %3548 = vmatmul.mubr.f32.gmra.mxu0 %v3338
      %v3549 = vpop.f32.mrf.mxu0
      %v3550 = vadd.f32 0.0, %v3549
      %v3551 = vpop.f32.mrf.mxu0
      %3552 = vmatprep.mubr.f32.mxu0 0.0
      %3553 = vmatmul.mubr.f32.gmra.mxu0 %v3341
      %v3554 = vpop.f32.mrf.mxu0
      %v3555 = vadd.f32 0.0, %v3554
      %v3556 = vpop.f32.mrf.mxu0
      %3557 = vmatprep.mubr.f32.mxu0 0.0
      %3558 = vmatmul.mubr.f32.gmra.mxu0 %v3344
      %v3559 = vpop.f32.mrf.mxu0
      %v3560 = vadd.f32 0.0, %v3559
      %v3561 = vpop.f32.mrf.mxu0
      %3562 = vmatprep.mubr.f32.mxu0 0.0
      %3563 = vmatmul.mubr.f32.gmra.mxu0 %v3347
      %v3564 = vpop.f32.mrf.mxu0
      %v3565 = vadd.f32 0.0, %v3564
      %v3566 = vpop.f32.mrf.mxu0
      %3567 = vmatprep.mubr.f32.mxu0 0.0
      %3568 = vmatmul.mubr.f32.gmra.mxu0 %v3350
      %v3569 = vpop.f32.mrf.mxu0
      %v3570 = vadd.f32 0.0, %v3569
      %v3571 = vpop.f32.mrf.mxu0
      %3572 = vmatprep.mubr.f32.mxu0 0.0
      %3573 = vmatmul.mubr.f32.gmra.mxu0 %v3353
      %v3574 = vpop.f32.mrf.mxu0
      %v3575 = vadd.f32 0.0, %v3574
      %v3576 = vpop.f32.mrf.mxu0
      %3577 = vmatprep.mubr.f32.mxu0 0.0
      %3578 = vmatmul.mubr.f32.gmra.mxu0 %v3356
      %v3579 = vpop.f32.mrf.mxu0
      %v3580 = vadd.f32 0.0, %v3579
      %v3581 = vpop.f32.mrf.mxu0
      %3582 = vdwg.mxu0
      %v3583 = vadd.f32 %v3196, %v3425
      %v3584 = vadd.f32 %v3197, %v3430
      %v3585 = vadd.f32 %v3198, %v3435
      %v3586 = vadd.f32 %v3199, %v3440
      %v3587 = vadd.f32 %v3200, %v3445
      %v3588 = vadd.f32 %v3201, %v3450
      %v3589 = vadd.f32 %v3202, %v3455
      %v3590 = vadd.f32 %v3203, %v3460
      %v3591 = vadd.f32 %v3204, %v3465
      %v3592 = vadd.f32 %v3205, %v3470
      %v3593 = vadd.f32 %v3206, %v3475
      %v3594 = vadd.f32 %v3207, %v3480
      %v3595 = vadd.f32 %v3208, %v3485
      %v3596 = vadd.f32 %v3209, %v3490
      %v3597 = vadd.f32 %v3210, %v3495
      %v3598 = vadd.f32 %v3211, %v3500
      %v3599 = vadd.f32 %v3212, %v3505
      %v3600 = vadd.f32 %v3213, %v3510
      %v3601 = vadd.f32 %v3214, %v3515
      %v3602 = vadd.f32 %v3215, %v3520
      %v3603 = vadd.f32 %v3216, %v3525
      %v3604 = vadd.f32 %v3217, %v3530
      %v3605 = vadd.f32 %v3218, %v3535
      %v3606 = vadd.f32 %v3219, %v3540
      %v3607 = vadd.f32 %v3220, %v3545
      %v3608 = vadd.f32 %v3221, %v3550
      %v3609 = vadd.f32 %v3222, %v3555
      %v3610 = vadd.f32 %v3223, %v3560
      %v3611 = vadd.f32 %v3224, %v3565
      %v3612 = vadd.f32 %v3225, %v3570
      %v3613 = vadd.f32 %v3226, %v3575
      %v3614 = vadd.f32 %v3227, %v3580
      %v3615 = vld [vmem:[%s2840 + $0x2] sm:$0xff]
      %v3616 = vld [vmem:[%s2840 + $0xa] sm:$0xff]
      %v3617 = vld [vmem:[%s2840 + $0x1a] sm:$0xff]
      %v3618 = vld [vmem:[%s2840 + $0x22] sm:$0xff]
      %v3619 = vld [vmem:[%s2840 + $0x32] sm:$0xff]
      %v3620 = vld [vmem:[%s2840 + $0x3a] sm:$0xff]
      %v3621 = vld [vmem:[%s2840 + $0x4a] sm:$0xff]
      %v3622 = vld [vmem:[%s2840 + $0x52] sm:$0xff]
      %v3623 = vld [vmem:[%s2840 + $0x62] sm:$0xff]
      %v3624 = vld [vmem:[%s2840 + $0x6a] sm:$0xff]
      %v3625 = vld [vmem:[%s2840 + $0x7a] sm:$0xff]
      %v3626 = vld [vmem:[%s2840 + $0x82] sm:$0xff]
      %v3627 = vld [vmem:[%s2840 + $0x92] sm:$0xff]
      %v3628 = vld [vmem:[%s2840 + $0x9a] sm:$0xff]
      %v3629 = vld [vmem:[%s2840 + $0xaa] sm:$0xff]
      %v3630 = vld [vmem:[%s2840 + $0xb2] sm:$0xff]
      %v3631 = vld [vmem:[%s2840 + $0xc2] sm:$0xff]
      %v3632 = vld [vmem:[%s2840 + $0xca] sm:$0xff]
      %v3633 = vld [vmem:[%s2840 + $0xda] sm:$0xff]
      %v3634 = vld [vmem:[%s2840 + $0xe2] sm:$0xff]
      %v3635 = vld [vmem:[%s2840 + $0xf2] sm:$0xff]
      %v3636 = vld [vmem:[%s2840 + $0xfa] sm:$0xff]
      %v3637 = vld [vmem:[%s2840 + $0x10a] sm:$0xff]
      %v3638 = vld [vmem:[%s2840 + $0x112] sm:$0xff]
      %v3639 = vld [vmem:[%s2840 + $0x122] sm:$0xff]
      %v3640 = vld [vmem:[%s2840 + $0x12a] sm:$0xff]
      %v3641 = vld [vmem:[%s2840 + $0x13a] sm:$0xff]
      %v3642 = vld [vmem:[%s2840 + $0x142] sm:$0xff]
      %v3643 = vld [vmem:[%s2840 + $0x152] sm:$0xff]
      %v3644 = vld [vmem:[%s2840 + $0x15a] sm:$0xff]
      %v3645 = vld [vmem:[%s2840 + $0x16a] sm:$0xff]
      %v3646 = vld [vmem:[%s2840 + $0x172] sm:$0xff]
      %s3647 = scalar_lea.vmem %s1, 64
      %v3648 = vld [vmem:[%s3647] sm:$0xff]
      %v3650 = vsel %vm373, %v3615, 0
      %v3653 = vsel %vm373, %v3616, 0
      %v3656 = vsel %vm373, %v3617, 0
      %v3659 = vsel %vm373, %v3618, 0
      %v3662 = vsel %vm373, %v3619, 0
      %v3665 = vsel %vm373, %v3620, 0
      %v3668 = vsel %vm373, %v3621, 0
      %v3671 = vsel %vm373, %v3622, 0
      %v3674 = vsel %vm373, %v3623, 0
      %v3677 = vsel %vm373, %v3624, 0
      %v3680 = vsel %vm373, %v3625, 0
      %v3683 = vsel %vm373, %v3626, 0
      %v3686 = vsel %vm373, %v3627, 0
      %v3689 = vsel %vm373, %v3628, 0
      %v3692 = vsel %vm373, %v3629, 0
      %v3695 = vsel %vm373, %v3630, 0
      %v3698 = vsel %vm373, %v3631, 0
      %v3701 = vsel %vm373, %v3632, 0
      %v3704 = vsel %vm373, %v3633, 0
      %v3707 = vsel %vm373, %v3634, 0
      %v3710 = vsel %vm373, %v3635, 0
      %v3713 = vsel %vm373, %v3636, 0
      %v3716 = vsel %vm373, %v3637, 0
      %v3719 = vsel %vm373, %v3638, 0
      %v3722 = vsel %vm373, %v3639, 0
      %v3725 = vsel %vm373, %v3640, 0
      %v3728 = vsel %vm373, %v3641, 0
      %v3731 = vsel %vm373, %v3642, 0
      %v3734 = vsel %vm373, %v3643, 0
      %v3737 = vsel %vm373, %v3644, 0
      %v3740 = vsel %vm373, %v3645, 0
      %v3743 = vsel %vm373, %v3646, 0
      %3745 = vmatprep.subr.mxu0 0.0
      %3746 = vmatpush1.msra.mxu0 0.0
      %3747 = vmatprep.subr.mxu0 0.0
      %3748 = vmatpush1.msra.mxu0 0.0
      %3749 = vmatprep.subr.mxu0 0.0
      %3750 = vmatpush1.msra.mxu0 0.0
      %3751 = vmatprep.subr.mxu0 0.0
      %3752 = vmatpush1.msra.mxu0 0.0
      %3753 = vmatprep.subr.mxu0 0.0
      %3754 = vmatpush1.msra.mxu0 0.0
      %3755 = vmatprep.subr.mxu0 0.0
      %3756 = vmatpush1.msra.mxu0 0.0
      %3757 = vmatprep.subr.mxu0 0.0
      %3758 = vmatpush1.msra.mxu0 0.0
      %3759 = vmatprep.subr.mxu0 0.0
      %3760 = vmatpush1.msra.mxu0 0.0
      %3761 = vmatprep.subr.mxu0 0.0
      %3762 = vmatpush1.msra.mxu0 0.0
      %3763 = vmatprep.subr.mxu0 0.0
      %3764 = vmatpush1.msra.mxu0 0.0
      %3765 = vmatprep.subr.mxu0 0.0
      %3766 = vmatpush1.msra.mxu0 0.0
      %3767 = vmatprep.subr.mxu0 0.0
      %3768 = vmatpush1.msra.mxu0 0.0
      %3769 = vmatprep.subr.mxu0 0.0
      %3770 = vmatpush1.msra.mxu0 0.0
      %3771 = vmatprep.subr.mxu0 0.0
      %3772 = vmatpush1.msra.mxu0 0.0
      %3773 = vmatprep.subr.mxu0 0.0
      %3774 = vmatpush1.msra.mxu0 0.0
      %3775 = vmatprep.subr.mxu0 0.0
      %3776 = vmatpush1.msra.mxu0 %v3648
      %3777 = vmatprep.subr.mxu0 0.0
      %3778 = vmatpush2.msra.mxu0 0.0
      %3779 = vmatprep.subr.mxu0 0.0
      %3780 = vmatpush2.msra.mxu0 0.0
      %3781 = vmatprep.subr.mxu0 0.0
      %3782 = vmatpush2.msra.mxu0 0.0
      %3783 = vmatprep.subr.mxu0 0.0
      %3784 = vmatpush2.msra.mxu0 0.0
      %3785 = vmatprep.subr.mxu0 0.0
      %3786 = vmatpush2.msra.mxu0 0.0
      %3787 = vmatprep.subr.mxu0 0.0
      %3788 = vmatpush2.msra.mxu0 0.0
      %3789 = vmatprep.subr.mxu0 0.0
      %3790 = vmatpush2.msra.mxu0 0.0
      %3791 = vmatprep.subr.mxu0 0.0
      %3792 = vmatpush2.msra.mxu0 0.0
      %3793 = vmatprep.subr.mxu0 0.0
      %3794 = vmatpush2.msra.mxu0 0.0
      %3795 = vmatprep.subr.mxu0 0.0
      %3796 = vmatpush2.msra.mxu0 0.0
      %3797 = vmatprep.subr.mxu0 0.0
      %3798 = vmatpush2.msra.mxu0 0.0
      %3799 = vmatprep.subr.mxu0 0.0
      %3800 = vmatpush2.msra.mxu0 0.0
      %3801 = vmatprep.subr.mxu0 0.0
      %3802 = vmatpush2.msra.mxu0 0.0
      %3803 = vmatprep.subr.mxu0 0.0
      %3804 = vmatpush2.msra.mxu0 0.0
      %3805 = vmatprep.subr.mxu0 0.0
      %3806 = vmatpush2.msra.mxu0 0.0
      %3807 = vmatprep.subr.mxu0 0.0
      %3808 = vmatpush2.msra.mxu0 0.0
      %3809 = vmatprep.mubr.f32.mxu0 0.0
      %3810 = vmatmul.mubr.f32.gmra.mxu0 %v3650
      %v3811 = vpop.f32.mrf.mxu0
      %v3812 = vadd.f32 0.0, %v3811
      %v3813 = vpop.f32.mrf.mxu0
      %3814 = vmatprep.mubr.f32.mxu0 0.0
      %3815 = vmatmul.mubr.f32.gmra.mxu0 %v3653
      %v3816 = vpop.f32.mrf.mxu0
      %v3817 = vadd.f32 0.0, %v3816
      %v3818 = vpop.f32.mrf.mxu0
      %3819 = vmatprep.mubr.f32.mxu0 0.0
      %3820 = vmatmul.mubr.f32.gmra.mxu0 %v3656
      %v3821 = vpop.f32.mrf.mxu0
      %v3822 = vadd.f32 0.0, %v3821
      %v3823 = vpop.f32.mrf.mxu0
      %3824 = vmatprep.mubr.f32.mxu0 0.0
      %3825 = vmatmul.mubr.f32.gmra.mxu0 %v3659
      %v3826 = vpop.f32.mrf.mxu0
      %v3827 = vadd.f32 0.0, %v3826
      %v3828 = vpop.f32.mrf.mxu0
      %3829 = vmatprep.mubr.f32.mxu0 0.0
      %3830 = vmatmul.mubr.f32.gmra.mxu0 %v3662
      %v3831 = vpop.f32.mrf.mxu0
      %v3832 = vadd.f32 0.0, %v3831
      %v3833 = vpop.f32.mrf.mxu0
      %3834 = vmatprep.mubr.f32.mxu0 0.0
      %3835 = vmatmul.mubr.f32.gmra.mxu0 %v3665
      %v3836 = vpop.f32.mrf.mxu0
      %v3837 = vadd.f32 0.0, %v3836
      %v3838 = vpop.f32.mrf.mxu0
      %3839 = vmatprep.mubr.f32.mxu0 0.0
      %3840 = vmatmul.mubr.f32.gmra.mxu0 %v3668
      %v3841 = vpop.f32.mrf.mxu0
      %v3842 = vadd.f32 0.0, %v3841
      %v3843 = vpop.f32.mrf.mxu0
      %3844 = vmatprep.mubr.f32.mxu0 0.0
      %3845 = vmatmul.mubr.f32.gmra.mxu0 %v3671
      %v3846 = vpop.f32.mrf.mxu0
      %v3847 = vadd.f32 0.0, %v3846
      %v3848 = vpop.f32.mrf.mxu0
      %3849 = vmatprep.mubr.f32.mxu0 0.0
      %3850 = vmatmul.mubr.f32.gmra.mxu0 %v3674
      %v3851 = vpop.f32.mrf.mxu0
      %v3852 = vadd.f32 0.0, %v3851
      %v3853 = vpop.f32.mrf.mxu0
      %3854 = vmatprep.mubr.f32.mxu0 0.0
      %3855 = vmatmul.mubr.f32.gmra.mxu0 %v3677
      %v3856 = vpop.f32.mrf.mxu0
      %v3857 = vadd.f32 0.0, %v3856
      %v3858 = vpop.f32.mrf.mxu0
      %3859 = vmatprep.mubr.f32.mxu0 0.0
      %3860 = vmatmul.mubr.f32.gmra.mxu0 %v3680
      %v3861 = vpop.f32.mrf.mxu0
      %v3862 = vadd.f32 0.0, %v3861
      %v3863 = vpop.f32.mrf.mxu0
      %3864 = vmatprep.mubr.f32.mxu0 0.0
      %3865 = vmatmul.mubr.f32.gmra.mxu0 %v3683
      %v3866 = vpop.f32.mrf.mxu0
      %v3867 = vadd.f32 0.0, %v3866
      %v3868 = vpop.f32.mrf.mxu0
      %3869 = vmatprep.mubr.f32.mxu0 0.0
      %3870 = vmatmul.mubr.f32.gmra.mxu0 %v3686
      %v3871 = vpop.f32.mrf.mxu0
      %v3872 = vadd.f32 0.0, %v3871
      %v3873 = vpop.f32.mrf.mxu0
      %3874 = vmatprep.mubr.f32.mxu0 0.0
      %3875 = vmatmul.mubr.f32.gmra.mxu0 %v3689
      %v3876 = vpop.f32.mrf.mxu0
      %v3877 = vadd.f32 0.0, %v3876
      %v3878 = vpop.f32.mrf.mxu0
      %3879 = vmatprep.mubr.f32.mxu0 0.0
      %3880 = vmatmul.mubr.f32.gmra.mxu0 %v3692
      %v3881 = vpop.f32.mrf.mxu0
      %v3882 = vadd.f32 0.0, %v3881
      %v3883 = vpop.f32.mrf.mxu0
      %3884 = vmatprep.mubr.f32.mxu0 0.0
      %3885 = vmatmul.mubr.f32.gmra.mxu0 %v3695
      %v3886 = vpop.f32.mrf.mxu0
      %v3887 = vadd.f32 0.0, %v3886
      %v3888 = vpop.f32.mrf.mxu0
      %3889 = vmatprep.mubr.f32.mxu0 0.0
      %3890 = vmatmul.mubr.f32.gmra.mxu0 %v3698
      %v3891 = vpop.f32.mrf.mxu0
      %v3892 = vadd.f32 0.0, %v3891
      %v3893 = vpop.f32.mrf.mxu0
      %3894 = vmatprep.mubr.f32.mxu0 0.0
      %3895 = vmatmul.mubr.f32.gmra.mxu0 %v3701
      %v3896 = vpop.f32.mrf.mxu0
      %v3897 = vadd.f32 0.0, %v3896
      %v3898 = vpop.f32.mrf.mxu0
      %3899 = vmatprep.mubr.f32.mxu0 0.0
      %3900 = vmatmul.mubr.f32.gmra.mxu0 %v3704
      %v3901 = vpop.f32.mrf.mxu0
      %v3902 = vadd.f32 0.0, %v3901
      %v3903 = vpop.f32.mrf.mxu0
      %3904 = vmatprep.mubr.f32.mxu0 0.0
      %3905 = vmatmul.mubr.f32.gmra.mxu0 %v3707
      %v3906 = vpop.f32.mrf.mxu0
      %v3907 = vadd.f32 0.0, %v3906
      %v3908 = vpop.f32.mrf.mxu0
      %3909 = vmatprep.mubr.f32.mxu0 0.0
      %3910 = vmatmul.mubr.f32.gmra.mxu0 %v3710
      %v3911 = vpop.f32.mrf.mxu0
      %v3912 = vadd.f32 0.0, %v3911
      %v3913 = vpop.f32.mrf.mxu0
      %3914 = vmatprep.mubr.f32.mxu0 0.0
      %3915 = vmatmul.mubr.f32.gmra.mxu0 %v3713
      %v3916 = vpop.f32.mrf.mxu0
      %v3917 = vadd.f32 0.0, %v3916
      %v3918 = vpop.f32.mrf.mxu0
      %3919 = vmatprep.mubr.f32.mxu0 0.0
      %3920 = vmatmul.mubr.f32.gmra.mxu0 %v3716
      %v3921 = vpop.f32.mrf.mxu0
      %v3922 = vadd.f32 0.0, %v3921
      %v3923 = vpop.f32.mrf.mxu0
      %3924 = vmatprep.mubr.f32.mxu0 0.0
      %3925 = vmatmul.mubr.f32.gmra.mxu0 %v3719
      %v3926 = vpop.f32.mrf.mxu0
      %v3927 = vadd.f32 0.0, %v3926
      %v3928 = vpop.f32.mrf.mxu0
      %3929 = vmatprep.mubr.f32.mxu0 0.0
      %3930 = vmatmul.mubr.f32.gmra.mxu0 %v3722
      %v3931 = vpop.f32.mrf.mxu0
      %v3932 = vadd.f32 0.0, %v3931
      %v3933 = vpop.f32.mrf.mxu0
      %3934 = vmatprep.mubr.f32.mxu0 0.0
      %3935 = vmatmul.mubr.f32.gmra.mxu0 %v3725
      %v3936 = vpop.f32.mrf.mxu0
      %v3937 = vadd.f32 0.0, %v3936
      %v3938 = vpop.f32.mrf.mxu0
      %3939 = vmatprep.mubr.f32.mxu0 0.0
      %3940 = vmatmul.mubr.f32.gmra.mxu0 %v3728
      %v3941 = vpop.f32.mrf.mxu0
      %v3942 = vadd.f32 0.0, %v3941
      %v3943 = vpop.f32.mrf.mxu0
      %3944 = vmatprep.mubr.f32.mxu0 0.0
      %3945 = vmatmul.mubr.f32.gmra.mxu0 %v3731
      %v3946 = vpop.f32.mrf.mxu0
      %v3947 = vadd.f32 0.0, %v3946
      %v3948 = vpop.f32.mrf.mxu0
      %3949 = vmatprep.mubr.f32.mxu0 0.0
      %3950 = vmatmul.mubr.f32.gmra.mxu0 %v3734
      %v3951 = vpop.f32.mrf.mxu0
      %v3952 = vadd.f32 0.0, %v3951
      %v3953 = vpop.f32.mrf.mxu0
      %3954 = vmatprep.mubr.f32.mxu0 0.0
      %3955 = vmatmul.mubr.f32.gmra.mxu0 %v3737
      %v3956 = vpop.f32.mrf.mxu0
      %v3957 = vadd.f32 0.0, %v3956
      %v3958 = vpop.f32.mrf.mxu0
      %3959 = vmatprep.mubr.f32.mxu0 0.0
      %3960 = vmatmul.mubr.f32.gmra.mxu0 %v3740
      %v3961 = vpop.f32.mrf.mxu0
      %v3962 = vadd.f32 0.0, %v3961
      %v3963 = vpop.f32.mrf.mxu0
      %3964 = vmatprep.mubr.f32.mxu0 0.0
      %3965 = vmatmul.mubr.f32.gmra.mxu0 %v3743
      %v3966 = vpop.f32.mrf.mxu0
      %v3967 = vadd.f32 0.0, %v3966
      %v3968 = vpop.f32.mrf.mxu0
      %3969 = vdwg.mxu0
      %v3970 = vadd.f32 %v3583, %v3812
      %v3971 = vadd.f32 %v3584, %v3817
      %v3972 = vadd.f32 %v3585, %v3822
      %v3973 = vadd.f32 %v3586, %v3827
      %v3974 = vadd.f32 %v3587, %v3832
      %v3975 = vadd.f32 %v3588, %v3837
      %v3976 = vadd.f32 %v3589, %v3842
      %v3977 = vadd.f32 %v3590, %v3847
      %v3978 = vadd.f32 %v3591, %v3852
      %v3979 = vadd.f32 %v3592, %v3857
      %v3980 = vadd.f32 %v3593, %v3862
      %v3981 = vadd.f32 %v3594, %v3867
      %v3982 = vadd.f32 %v3595, %v3872
      %v3983 = vadd.f32 %v3596, %v3877
      %v3984 = vadd.f32 %v3597, %v3882
      %v3985 = vadd.f32 %v3598, %v3887
      %v3986 = vadd.f32 %v3599, %v3892
      %v3987 = vadd.f32 %v3600, %v3897
      %v3988 = vadd.f32 %v3601, %v3902
      %v3989 = vadd.f32 %v3602, %v3907
      %v3990 = vadd.f32 %v3603, %v3912
      %v3991 = vadd.f32 %v3604, %v3917
      %v3992 = vadd.f32 %v3605, %v3922
      %v3993 = vadd.f32 %v3606, %v3927
      %v3994 = vadd.f32 %v3607, %v3932
      %v3995 = vadd.f32 %v3608, %v3937
      %v3996 = vadd.f32 %v3609, %v3942
      %v3997 = vadd.f32 %v3610, %v3947
      %v3998 = vadd.f32 %v3611, %v3952
      %v3999 = vadd.f32 %v3612, %v3957
      %v4000 = vadd.f32 %v3613, %v3962
      %v4001 = vadd.f32 %v3614, %v3967
      %v4002 = vld [vmem:[%s2] sm:$0x1]
      %v4004 = vlaneseq
      %v4005 = vshrl.u32 %v4004, 7
      %v4006 = vsub.s32 0, %v4005
      %v4007 = vrot.slane %v4002, %v4006
      %v4009 = vadd.f32 %v3970, %v4007
      %v4010 = vadd.f32 %v3971, %v4007
      %v4011 = vadd.f32 %v3972, %v4007
      %v4012 = vadd.f32 %v3973, %v4007
      %v4013 = vadd.f32 %v3974, %v4007
      %v4014 = vadd.f32 %v3975, %v4007
      %v4015 = vadd.f32 %v3976, %v4007
      %v4016 = vadd.f32 %v3977, %v4007
      %v4017 = vadd.f32 %v3978, %v4007
      %v4018 = vadd.f32 %v3979, %v4007
      %v4019 = vadd.f32 %v3980, %v4007
      %v4020 = vadd.f32 %v3981, %v4007
      %v4021 = vadd.f32 %v3982, %v4007
      %v4022 = vadd.f32 %v3983, %v4007
      %v4023 = vadd.f32 %v3984, %v4007
      %v4024 = vadd.f32 %v3985, %v4007
      %v4025 = vadd.f32 %v3986, %v4007
      %v4026 = vadd.f32 %v3987, %v4007
      %v4027 = vadd.f32 %v3988, %v4007
      %v4028 = vadd.f32 %v3989, %v4007
      %v4029 = vadd.f32 %v3990, %v4007
      %v4030 = vadd.f32 %v3991, %v4007
      %v4031 = vadd.f32 %v3992, %v4007
      %v4032 = vadd.f32 %v3993, %v4007
      %v4033 = vadd.f32 %v3994, %v4007
      %v4034 = vadd.f32 %v3995, %v4007
      %v4035 = vadd.f32 %v3996, %v4007
      %v4036 = vadd.f32 %v3997, %v4007
      %v4037 = vadd.f32 %v3998, %v4007
      %v4038 = vadd.f32 %v3999, %v4007
      %v4039 = vadd.f32 %v4000, %v4007
      %v4040 = vadd.f32 %v4001, %v4007
      %v4041 = vmax.f32 %v4009, 0.0
      %v4042 = vmax.f32 %v4010, 0.0
      %v4043 = vmax.f32 %v4011, 0.0
      %v4044 = vmax.f32 %v4012, 0.0
      %v4045 = vmax.f32 %v4013, 0.0
      %v4046 = vmax.f32 %v4014, 0.0
      %v4047 = vmax.f32 %v4015, 0.0
      %v4048 = vmax.f32 %v4016, 0.0
      %v4049 = vmax.f32 %v4017, 0.0
      %v4050 = vmax.f32 %v4018, 0.0
      %v4051 = vmax.f32 %v4019, 0.0
      %v4052 = vmax.f32 %v4020, 0.0
      %v4053 = vmax.f32 %v4021, 0.0
      %v4054 = vmax.f32 %v4022, 0.0
      %v4055 = vmax.f32 %v4023, 0.0
      %v4056 = vmax.f32 %v4024, 0.0
      %v4057 = vmax.f32 %v4025, 0.0
      %v4058 = vmax.f32 %v4026, 0.0
      %v4059 = vmax.f32 %v4027, 0.0
      %v4060 = vmax.f32 %v4028, 0.0
      %v4061 = vmax.f32 %v4029, 0.0
      %v4062 = vmax.f32 %v4030, 0.0
      %v4063 = vmax.f32 %v4031, 0.0
      %v4064 = vmax.f32 %v4032, 0.0
      %v4065 = vmax.f32 %v4033, 0.0
      %v4066 = vmax.f32 %v4034, 0.0
      %v4067 = vmax.f32 %v4035, 0.0
      %v4068 = vmax.f32 %v4036, 0.0
      %v4069 = vmax.f32 %v4037, 0.0
      %v4070 = vmax.f32 %v4038, 0.0
      %v4071 = vmax.f32 %v4039, 0.0
      %v4072 = vmax.f32 %v4040, 0.0
      %s4073 = scalar_lea.vmem [#allocation3], 24
      %4074 = vst.msk [vmem:[%s4073 + $0x1] sm:$0xff] %vm419, %v4041
      %4075 = vst.msk [vmem:[%s4073 + $0x9] sm:$0xff] %vm419, %v4042
      %4076 = vst.msk [vmem:[%s4073 + $0x19] sm:$0xff] %vm419, %v4043
      %4077 = vst.msk [vmem:[%s4073 + $0x21] sm:$0xff] %vm419, %v4044
      %4078 = vst.msk [vmem:[%s4073 + $0x31] sm:$0xff] %vm419, %v4045
      %4079 = vst.msk [vmem:[%s4073 + $0x39] sm:$0xff] %vm419, %v4046
      %4080 = vst.msk [vmem:[%s4073 + $0x49] sm:$0xff] %vm419, %v4047
      %4081 = vst.msk [vmem:[%s4073 + $0x51] sm:$0xff] %vm419, %v4048
      %4082 = vst.msk [vmem:[%s4073 + $0x61] sm:$0xff] %vm419, %v4049
      %4083 = vst.msk [vmem:[%s4073 + $0x69] sm:$0xff] %vm419, %v4050
      %4084 = vst.msk [vmem:[%s4073 + $0x79] sm:$0xff] %vm419, %v4051
      %4085 = vst.msk [vmem:[%s4073 + $0x81] sm:$0xff] %vm419, %v4052
      %4086 = vst.msk [vmem:[%s4073 + $0x91] sm:$0xff] %vm419, %v4053
      %4087 = vst.msk [vmem:[%s4073 + $0x99] sm:$0xff] %vm419, %v4054
      %4088 = vst.msk [vmem:[%s4073 + $0xa9] sm:$0xff] %vm419, %v4055
      %4089 = vst.msk [vmem:[%s4073 + $0xb1] sm:$0xff] %vm419, %v4056
      %4090 = vst.msk [vmem:[%s4073 + $0xc1] sm:$0xff] %vm419, %v4057
      %4091 = vst.msk [vmem:[%s4073 + $0xc9] sm:$0xff] %vm419, %v4058
      %4092 = vst.msk [vmem:[%s4073 + $0xd9] sm:$0xff] %vm419, %v4059
      %4093 = vst.msk [vmem:[%s4073 + $0xe1] sm:$0xff] %vm419, %v4060
      %4094 = vst.msk [vmem:[%s4073 + $0xf1] sm:$0xff] %vm419, %v4061
      %4095 = vst.msk [vmem:[%s4073 + $0xf9] sm:$0xff] %vm419, %v4062
      %4096 = vst.msk [vmem:[%s4073 + $0x109] sm:$0xff] %vm419, %v4063
      %4097 = vst.msk [vmem:[%s4073 + $0x111] sm:$0xff] %vm419, %v4064
      %4098 = vst.msk [vmem:[%s4073 + $0x121] sm:$0xff] %vm419, %v4065
      %4099 = vst.msk [vmem:[%s4073 + $0x129] sm:$0xff] %vm419, %v4066
      %4100 = vst.msk [vmem:[%s4073 + $0x139] sm:$0xff] %vm419, %v4067
      %4101 = vst.msk [vmem:[%s4073 + $0x141] sm:$0xff] %vm419, %v4068
      %4102 = vst.msk [vmem:[%s4073 + $0x151] sm:$0xff] %vm419, %v4069
      %4103 = vst.msk [vmem:[%s4073 + $0x159] sm:$0xff] %vm419, %v4070
      %4104 = vst.msk [vmem:[%s4073 + $0x169] sm:$0xff] %vm419, %v4071
      %4105 = vst.msk [vmem:[%s4073 + $0x171] sm:$0xff] %vm419, %v4072
      %s4106 = scalar_lea.vmem %s4073, 1 [#allocation3]
      %v4107 = vld [vmem:[%s4106] ss:$2 sm:$0xff]
      %s4108 = scalar_lea.vmem %s4073, 49 [#allocation3]
      %v4109 = vld [vmem:[%s4108] ss:$2 sm:$0xff]
      %s4110 = scalar_lea.vmem %s4073, 97 [#allocation3]
      %v4111 = vld [vmem:[%s4110] ss:$2 sm:$0xff]
      %s4112 = scalar_lea.vmem %s4073, 145 [#allocation3]
      %v4113 = vld [vmem:[%s4112] ss:$2 sm:$0xff]
      %s4114 = scalar_lea.vmem %s4073, 193 [#allocation3]
      %v4115 = vld [vmem:[%s4114] ss:$2 sm:$0xff]
      %s4116 = scalar_lea.vmem %s4073, 241 [#allocation3]
      %v4117 = vld [vmem:[%s4116] ss:$2 sm:$0xff]
      %s4118 = scalar_lea.vmem %s4073, 289 [#allocation3]
      %v4119 = vld [vmem:[%s4118] ss:$2 sm:$0xff]
      %s4120 = scalar_lea.vmem %s4073, 337 [#allocation3]
      %v4121 = vld [vmem:[%s4120] ss:$2 sm:$0xff]
      %s4122 = scalar_lea.vmem [#allocation4], 16
      %4123 = vst.msk [vmem:[%s4122 + $0x1] sm:$0xff] %vm419, %v4107
      %4124 = vst.msk [vmem:[%s4122 + $0x11] sm:$0xff] %vm419, %v4109
      %4125 = vst.msk [vmem:[%s4122 + $0x21] sm:$0xff] %vm419, %v4111
      %4126 = vst.msk [vmem:[%s4122 + $0x31] sm:$0xff] %vm419, %v4113
      %4127 = vst.msk [vmem:[%s4122 + $0x41] sm:$0xff] %vm419, %v4115
      %4128 = vst.msk [vmem:[%s4122 + $0x51] sm:$0xff] %vm419, %v4117
      %4129 = vst.msk [vmem:[%s4122 + $0x61] sm:$0xff] %vm419, %v4119
      %4130 = vst.msk [vmem:[%s4122 + $0x71] sm:$0xff] %vm419, %v4121
      %v4131 = vld [vmem:[#allocation4] sm:$0xff]
      %v4132 = vld [vmem:[#allocation4 + $0x10] sm:$0xff]
      %v4133 = vld [vmem:[#allocation4 + $0x20] sm:$0xff]
      %v4134 = vld [vmem:[#allocation4 + $0x30] sm:$0xff]
      %v4135 = vld [vmem:[#allocation4 + $0x40] sm:$0xff]
      %v4136 = vld [vmem:[#allocation4 + $0x50] sm:$0xff]
      %v4137 = vld [vmem:[#allocation4 + $0x60] sm:$0xff]
      %v4138 = vld [vmem:[#allocation4 + $0x70] sm:$0xff]
      %v4139 = vld [vmem:[%s3] sm:$0xff]
      %v4140 = vld [vmem:[%s3 + $0x8] sm:$0xff]
      %v4141 = vld [vmem:[%s3 + $0x10] sm:$0xff]
      %v4142 = vld [vmem:[%s3 + $0x18] sm:$0xff]
      %v4143 = vld [vmem:[#allocation4 + $0x1] sm:$0xff]
      %v4144 = vld [vmem:[#allocation4 + $0x11] sm:$0xff]
      %v4145 = vld [vmem:[#allocation4 + $0x21] sm:$0xff]
      %v4146 = vld [vmem:[#allocation4 + $0x31] sm:$0xff]
      %v4147 = vld [vmem:[#allocation4 + $0x41] sm:$0xff]
      %v4148 = vld [vmem:[#allocation4 + $0x51] sm:$0xff]
      %v4149 = vld [vmem:[#allocation4 + $0x61] sm:$0xff]
      %v4150 = vld [vmem:[#allocation4 + $0x71] sm:$0xff]
      %s4151 = scalar_lea.vmem %s3, 32
      %v4152 = vld [vmem:[%s4151] sm:$0xff]
      %v4153 = vld [vmem:[%s4151 + $0x8] sm:$0xff]
      %v4154 = vld [vmem:[%s4151 + $0x10] sm:$0xff]
      %v4155 = vld [vmem:[%s4151 + $0x18] sm:$0xff]
      %v4157 = vsel %vm419, %v4143, 0
      %v4160 = vsel %vm419, %v4144, 0
      %v4163 = vsel %vm419, %v4145, 0
      %v4166 = vsel %vm419, %v4146, 0
      %v4169 = vsel %vm419, %v4147, 0
      %v4172 = vsel %vm419, %v4148, 0
      %v4175 = vsel %vm419, %v4149, 0
      %v4178 = vsel %vm419, %v4150, 0
      %4180 = vmatprep.subr.mxu0 0.0
      %4181 = vmatpush1.msra.mxu0 0.0
      %4182 = vmatprep.subr.mxu0 0.0
      %4183 = vmatpush1.msra.mxu0 0.0
      %4184 = vmatprep.subr.mxu0 0.0
      %4185 = vmatpush1.msra.mxu0 0.0
      %4186 = vmatprep.subr.mxu0 0.0
      %4187 = vmatpush1.msra.mxu0 0.0
      %4188 = vmatprep.subr.mxu0 0.0
      %4189 = vmatpush1.msra.mxu0 0.0
      %4190 = vmatprep.subr.mxu0 0.0
      %4191 = vmatpush1.msra.mxu0 0.0
      %4192 = vmatprep.subr.mxu0 0.0
      %4193 = vmatpush1.msra.mxu0 0.0
      %4194 = vmatprep.subr.mxu0 0.0
      %4195 = vmatpush1.msra.mxu0 0.0
      %4196 = vmatprep.subr.mxu0 0.0
      %4197 = vmatpush1.msra.mxu0 0.0
      %4198 = vmatprep.subr.mxu0 0.0
      %4199 = vmatpush1.msra.mxu0 0.0
      %4200 = vmatprep.subr.mxu0 0.0
      %4201 = vmatpush1.msra.mxu0 0.0
      %4202 = vmatprep.subr.mxu0 0.0
      %4203 = vmatpush1.msra.mxu0 0.0
      %4204 = vmatprep.subr.mxu0 0.0
      %4205 = vmatpush1.msra.mxu0 %v4155
      %4206 = vmatprep.subr.mxu0 0.0
      %4207 = vmatpush1.msra.mxu0 %v4154
      %4208 = vmatprep.subr.mxu0 0.0
      %4209 = vmatpush1.msra.mxu0 %v4153
      %4210 = vmatprep.subr.mxu0 0.0
      %4211 = vmatpush1.msra.mxu0 %v4152
      %4212 = vmatprep.subr.mxu0 0.0
      %4213 = vmatpush2.msra.mxu0 0.0
      %4214 = vmatprep.subr.mxu0 0.0
      %4215 = vmatpush2.msra.mxu0 0.0
      %4216 = vmatprep.subr.mxu0 0.0
      %4217 = vmatpush2.msra.mxu0 0.0
      %4218 = vmatprep.subr.mxu0 0.0
      %4219 = vmatpush2.msra.mxu0 0.0
      %4220 = vmatprep.subr.mxu0 0.0
      %4221 = vmatpush2.msra.mxu0 0.0
      %4222 = vmatprep.subr.mxu0 0.0
      %4223 = vmatpush2.msra.mxu0 0.0
      %4224 = vmatprep.subr.mxu0 0.0
      %4225 = vmatpush2.msra.mxu0 0.0
      %4226 = vmatprep.subr.mxu0 0.0
      %4227 = vmatpush2.msra.mxu0 0.0
      %4228 = vmatprep.subr.mxu0 0.0
      %4229 = vmatpush2.msra.mxu0 0.0
      %4230 = vmatprep.subr.mxu0 0.0
      %4231 = vmatpush2.msra.mxu0 0.0
      %4232 = vmatprep.subr.mxu0 0.0
      %4233 = vmatpush2.msra.mxu0 0.0
      %4234 = vmatprep.subr.mxu0 0.0
      %4235 = vmatpush2.msra.mxu0 0.0
      %4236 = vmatprep.subr.mxu0 0.0
      %4237 = vmatpush2.msra.mxu0 0.0
      %4238 = vmatprep.subr.mxu0 0.0
      %4239 = vmatpush2.msra.mxu0 0.0
      %4240 = vmatprep.subr.mxu0 0.0
      %4241 = vmatpush2.msra.mxu0 0.0
      %4242 = vmatprep.subr.mxu0 0.0
      %4243 = vmatpush2.msra.mxu0 0.0
      %4244 = vmatprep.mubr.f32.mxu0 0.0
      %4245 = vmatmul.mubr.f32.gmra.mxu0 %v4157
      %v4246 = vpop.f32.mrf.mxu0
      %v4247 = vadd.f32 0.0, %v4246
      %v4248 = vpop.f32.mrf.mxu0
      %4249 = vmatprep.mubr.f32.mxu0 0.0
      %4250 = vmatmul.mubr.f32.gmra.mxu0 %v4160
      %v4251 = vpop.f32.mrf.mxu0
      %v4252 = vadd.f32 0.0, %v4251
      %v4253 = vpop.f32.mrf.mxu0
      %4254 = vmatprep.mubr.f32.mxu0 0.0
      %4255 = vmatmul.mubr.f32.gmra.mxu0 %v4163
      %v4256 = vpop.f32.mrf.mxu0
      %v4257 = vadd.f32 0.0, %v4256
      %v4258 = vpop.f32.mrf.mxu0
      %4259 = vmatprep.mubr.f32.mxu0 0.0
      %4260 = vmatmul.mubr.f32.gmra.mxu0 %v4166
      %v4261 = vpop.f32.mrf.mxu0
      %v4262 = vadd.f32 0.0, %v4261
      %v4263 = vpop.f32.mrf.mxu0
      %4264 = vmatprep.mubr.f32.mxu0 0.0
      %4265 = vmatmul.mubr.f32.gmra.mxu0 %v4169
      %v4266 = vpop.f32.mrf.mxu0
      %v4267 = vadd.f32 0.0, %v4266
      %v4268 = vpop.f32.mrf.mxu0
      %4269 = vmatprep.mubr.f32.mxu0 0.0
      %4270 = vmatmul.mubr.f32.gmra.mxu0 %v4172
      %v4271 = vpop.f32.mrf.mxu0
      %v4272 = vadd.f32 0.0, %v4271
      %v4273 = vpop.f32.mrf.mxu0
      %4274 = vmatprep.mubr.f32.mxu0 0.0
      %4275 = vmatmul.mubr.f32.gmra.mxu0 %v4175
      %v4276 = vpop.f32.mrf.mxu0
      %v4277 = vadd.f32 0.0, %v4276
      %v4278 = vpop.f32.mrf.mxu0
      %4279 = vmatprep.mubr.f32.mxu0 0.0
      %4280 = vmatmul.mubr.f32.gmra.mxu0 %v4178
      %v4281 = vpop.f32.mrf.mxu0
      %v4282 = vadd.f32 0.0, %v4281
      %v4283 = vpop.f32.mrf.mxu0
      %4284 = vdwg.mxu0
      %v4286 = vsel %vm419, %v4131, 0
      %v4289 = vsel %vm419, %v4132, 0
      %v4292 = vsel %vm419, %v4133, 0
      %v4295 = vsel %vm419, %v4134, 0
      %v4298 = vsel %vm419, %v4135, 0
      %v4301 = vsel %vm419, %v4136, 0
      %v4304 = vsel %vm419, %v4137, 0
      %v4307 = vsel %vm419, %v4138, 0
      %4309 = vmatprep.subr.mxu0 0.0
      %4310 = vmatpush1.msra.mxu0 0.0
      %4311 = vmatprep.subr.mxu0 0.0
      %4312 = vmatpush1.msra.mxu0 0.0
      %4313 = vmatprep.subr.mxu0 0.0
      %4314 = vmatpush1.msra.mxu0 0.0
      %4315 = vmatprep.subr.mxu0 0.0
      %4316 = vmatpush1.msra.mxu0 0.0
      %4317 = vmatprep.subr.mxu0 0.0
      %4318 = vmatpush1.msra.mxu0 0.0
      %4319 = vmatprep.subr.mxu0 0.0
      %4320 = vmatpush1.msra.mxu0 0.0
      %4321 = vmatprep.subr.mxu0 0.0
      %4322 = vmatpush1.msra.mxu0 0.0
      %4323 = vmatprep.subr.mxu0 0.0
      %4324 = vmatpush1.msra.mxu0 0.0
      %4325 = vmatprep.subr.mxu0 0.0
      %4326 = vmatpush1.msra.mxu0 0.0
      %4327 = vmatprep.subr.mxu0 0.0
      %4328 = vmatpush1.msra.mxu0 0.0
      %4329 = vmatprep.subr.mxu0 0.0
      %4330 = vmatpush1.msra.mxu0 0.0
      %4331 = vmatprep.subr.mxu0 0.0
      %4332 = vmatpush1.msra.mxu0 0.0
      %4333 = vmatprep.subr.mxu0 0.0
      %4334 = vmatpush1.msra.mxu0 %v4142
      %4335 = vmatprep.subr.mxu0 0.0
      %4336 = vmatpush1.msra.mxu0 %v4141
      %4337 = vmatprep.subr.mxu0 0.0
      %4338 = vmatpush1.msra.mxu0 %v4140
      %4339 = vmatprep.subr.mxu0 0.0
      %4340 = vmatpush1.msra.mxu0 %v4139
      %4341 = vmatprep.subr.mxu0 0.0
      %4342 = vmatpush2.msra.mxu0 0.0
      %4343 = vmatprep.subr.mxu0 0.0
      %4344 = vmatpush2.msra.mxu0 0.0
      %4345 = vmatprep.subr.mxu0 0.0
      %4346 = vmatpush2.msra.mxu0 0.0
      %4347 = vmatprep.subr.mxu0 0.0
      %4348 = vmatpush2.msra.mxu0 0.0
      %4349 = vmatprep.subr.mxu0 0.0
      %4350 = vmatpush2.msra.mxu0 0.0
      %4351 = vmatprep.subr.mxu0 0.0
      %4352 = vmatpush2.msra.mxu0 0.0
      %4353 = vmatprep.subr.mxu0 0.0
      %4354 = vmatpush2.msra.mxu0 0.0
      %4355 = vmatprep.subr.mxu0 0.0
      %4356 = vmatpush2.msra.mxu0 0.0
      %4357 = vmatprep.subr.mxu0 0.0
      %4358 = vmatpush2.msra.mxu0 0.0
      %4359 = vmatprep.subr.mxu0 0.0
      %4360 = vmatpush2.msra.mxu0 0.0
      %4361 = vmatprep.subr.mxu0 0.0
      %4362 = vmatpush2.msra.mxu0 0.0
      %4363 = vmatprep.subr.mxu0 0.0
      %4364 = vmatpush2.msra.mxu0 0.0
      %4365 = vmatprep.subr.mxu0 0.0
      %4366 = vmatpush2.msra.mxu0 0.0
      %4367 = vmatprep.subr.mxu0 0.0
      %4368 = vmatpush2.msra.mxu0 0.0
      %4369 = vmatprep.subr.mxu0 0.0
      %4370 = vmatpush2.msra.mxu0 0.0
      %4371 = vmatprep.subr.mxu0 0.0
      %4372 = vmatpush2.msra.mxu0 0.0
      %4373 = vmatprep.mubr.f32.mxu0 0.0
      %4374 = vmatmul.mubr.f32.gmra.mxu0 %v4286
      %v4375 = vpop.f32.mrf.mxu0
      %v4376 = vadd.f32 %v4247, %v4375
      %v4377 = vpop.f32.mrf.mxu0
      %4378 = vmatprep.mubr.f32.mxu0 0.0
      %4379 = vmatmul.mubr.f32.gmra.mxu0 %v4289
      %v4380 = vpop.f32.mrf.mxu0
      %v4381 = vadd.f32 %v4252, %v4380
      %v4382 = vpop.f32.mrf.mxu0
      %4383 = vmatprep.mubr.f32.mxu0 0.0
      %4384 = vmatmul.mubr.f32.gmra.mxu0 %v4292
      %v4385 = vpop.f32.mrf.mxu0
      %v4386 = vadd.f32 %v4257, %v4385
      %v4387 = vpop.f32.mrf.mxu0
      %4388 = vmatprep.mubr.f32.mxu0 0.0
      %4389 = vmatmul.mubr.f32.gmra.mxu0 %v4295
      %v4390 = vpop.f32.mrf.mxu0
      %v4391 = vadd.f32 %v4262, %v4390
      %v4392 = vpop.f32.mrf.mxu0
      %4393 = vmatprep.mubr.f32.mxu0 0.0
      %4394 = vmatmul.mubr.f32.gmra.mxu0 %v4298
      %v4395 = vpop.f32.mrf.mxu0
      %v4396 = vadd.f32 %v4267, %v4395
      %v4397 = vpop.f32.mrf.mxu0
      %4398 = vmatprep.mubr.f32.mxu0 0.0
      %4399 = vmatmul.mubr.f32.gmra.mxu0 %v4301
      %v4400 = vpop.f32.mrf.mxu0
      %v4401 = vadd.f32 %v4272, %v4400
      %v4402 = vpop.f32.mrf.mxu0
      %4403 = vmatprep.mubr.f32.mxu0 0.0
      %4404 = vmatmul.mubr.f32.gmra.mxu0 %v4304
      %v4405 = vpop.f32.mrf.mxu0
      %v4406 = vadd.f32 %v4277, %v4405
      %v4407 = vpop.f32.mrf.mxu0
      %4408 = vmatprep.mubr.f32.mxu0 0.0
      %4409 = vmatmul.mubr.f32.gmra.mxu0 %v4307
      %v4410 = vpop.f32.mrf.mxu0
      %v4411 = vadd.f32 %v4282, %v4410
      %v4412 = vpop.f32.mrf.mxu0
      %4413 = vdwg.mxu0
      %v4414 = vld [vmem:[#allocation4 + $0x2] sm:$0xff]
      %v4415 = vld [vmem:[#allocation4 + $0x12] sm:$0xff]
      %v4416 = vld [vmem:[#allocation4 + $0x22] sm:$0xff]
      %v4417 = vld [vmem:[#allocation4 + $0x32] sm:$0xff]
      %v4418 = vld [vmem:[#allocation4 + $0x42] sm:$0xff]
      %v4419 = vld [vmem:[#allocation4 + $0x52] sm:$0xff]
      %v4420 = vld [vmem:[#allocation4 + $0x62] sm:$0xff]
      %v4421 = vld [vmem:[#allocation4 + $0x72] sm:$0xff]
      %s4422 = scalar_lea.vmem %s3, 64
      %v4423 = vld [vmem:[%s4422] sm:$0xff]
      %v4424 = vld [vmem:[%s4422 + $0x8] sm:$0xff]
      %v4425 = vld [vmem:[%s4422 + $0x10] sm:$0xff]
      %v4426 = vld [vmem:[%s4422 + $0x18] sm:$0xff]
      %v4428 = vsel %vm419, %v4414, 0
      %v4431 = vsel %vm419, %v4415, 0
      %v4434 = vsel %vm419, %v4416, 0
      %v4437 = vsel %vm419, %v4417, 0
      %v4440 = vsel %vm419, %v4418, 0
      %v4443 = vsel %vm419, %v4419, 0
      %v4446 = vsel %vm419, %v4420, 0
      %v4449 = vsel %vm419, %v4421, 0
      %4451 = vmatprep.subr.mxu0 0.0
      %4452 = vmatpush1.msra.mxu0 0.0
      %4453 = vmatprep.subr.mxu0 0.0
      %4454 = vmatpush1.msra.mxu0 0.0
      %4455 = vmatprep.subr.mxu0 0.0
      %4456 = vmatpush1.msra.mxu0 0.0
      %4457 = vmatprep.subr.mxu0 0.0
      %4458 = vmatpush1.msra.mxu0 0.0
      %4459 = vmatprep.subr.mxu0 0.0
      %4460 = vmatpush1.msra.mxu0 0.0
      %4461 = vmatprep.subr.mxu0 0.0
      %4462 = vmatpush1.msra.mxu0 0.0
      %4463 = vmatprep.subr.mxu0 0.0
      %4464 = vmatpush1.msra.mxu0 0.0
      %4465 = vmatprep.subr.mxu0 0.0
      %4466 = vmatpush1.msra.mxu0 0.0
      %4467 = vmatprep.subr.mxu0 0.0
      %4468 = vmatpush1.msra.mxu0 0.0
      %4469 = vmatprep.subr.mxu0 0.0
      %4470 = vmatpush1.msra.mxu0 0.0
      %4471 = vmatprep.subr.mxu0 0.0
      %4472 = vmatpush1.msra.mxu0 0.0
      %4473 = vmatprep.subr.mxu0 0.0
      %4474 = vmatpush1.msra.mxu0 0.0
      %4475 = vmatprep.subr.mxu0 0.0
      %4476 = vmatpush1.msra.mxu0 %v4426
      %4477 = vmatprep.subr.mxu0 0.0
      %4478 = vmatpush1.msra.mxu0 %v4425
      %4479 = vmatprep.subr.mxu0 0.0
      %4480 = vmatpush1.msra.mxu0 %v4424
      %4481 = vmatprep.subr.mxu0 0.0
      %4482 = vmatpush1.msra.mxu0 %v4423
      %4483 = vmatprep.subr.mxu0 0.0
      %4484 = vmatpush2.msra.mxu0 0.0
      %4485 = vmatprep.subr.mxu0 0.0
      %4486 = vmatpush2.msra.mxu0 0.0
      %4487 = vmatprep.subr.mxu0 0.0
      %4488 = vmatpush2.msra.mxu0 0.0
      %4489 = vmatprep.subr.mxu0 0.0
      %4490 = vmatpush2.msra.mxu0 0.0
      %4491 = vmatprep.subr.mxu0 0.0
      %4492 = vmatpush2.msra.mxu0 0.0
      %4493 = vmatprep.subr.mxu0 0.0
      %4494 = vmatpush2.msra.mxu0 0.0
      %4495 = vmatprep.subr.mxu0 0.0
      %4496 = vmatpush2.msra.mxu0 0.0
      %4497 = vmatprep.subr.mxu0 0.0
      %4498 = vmatpush2.msra.mxu0 0.0
      %4499 = vmatprep.subr.mxu0 0.0
      %4500 = vmatpush2.msra.mxu0 0.0
      %4501 = vmatprep.subr.mxu0 0.0
      %4502 = vmatpush2.msra.mxu0 0.0
      %4503 = vmatprep.subr.mxu0 0.0
      %4504 = vmatpush2.msra.mxu0 0.0
      %4505 = vmatprep.subr.mxu0 0.0
      %4506 = vmatpush2.msra.mxu0 0.0
      %4507 = vmatprep.subr.mxu0 0.0
      %4508 = vmatpush2.msra.mxu0 0.0
      %4509 = vmatprep.subr.mxu0 0.0
      %4510 = vmatpush2.msra.mxu0 0.0
      %4511 = vmatprep.subr.mxu0 0.0
      %4512 = vmatpush2.msra.mxu0 0.0
      %4513 = vmatprep.subr.mxu0 0.0
      %4514 = vmatpush2.msra.mxu0 0.0
      %4515 = vmatprep.mubr.f32.mxu0 0.0
      %4516 = vmatmul.mubr.f32.gmra.mxu0 %v4428
      %v4517 = vpop.f32.mrf.mxu0
      %v4518 = vadd.f32 0.0, %v4517
      %v4519 = vpop.f32.mrf.mxu0
      %4520 = vmatprep.mubr.f32.mxu0 0.0
      %4521 = vmatmul.mubr.f32.gmra.mxu0 %v4431
      %v4522 = vpop.f32.mrf.mxu0
      %v4523 = vadd.f32 0.0, %v4522
      %v4524 = vpop.f32.mrf.mxu0
      %4525 = vmatprep.mubr.f32.mxu0 0.0
      %4526 = vmatmul.mubr.f32.gmra.mxu0 %v4434
      %v4527 = vpop.f32.mrf.mxu0
      %v4528 = vadd.f32 0.0, %v4527
      %v4529 = vpop.f32.mrf.mxu0
      %4530 = vmatprep.mubr.f32.mxu0 0.0
      %4531 = vmatmul.mubr.f32.gmra.mxu0 %v4437
      %v4532 = vpop.f32.mrf.mxu0
      %v4533 = vadd.f32 0.0, %v4532
      %v4534 = vpop.f32.mrf.mxu0
      %4535 = vmatprep.mubr.f32.mxu0 0.0
      %4536 = vmatmul.mubr.f32.gmra.mxu0 %v4440
      %v4537 = vpop.f32.mrf.mxu0
      %v4538 = vadd.f32 0.0, %v4537
      %v4539 = vpop.f32.mrf.mxu0
      %4540 = vmatprep.mubr.f32.mxu0 0.0
      %4541 = vmatmul.mubr.f32.gmra.mxu0 %v4443
      %v4542 = vpop.f32.mrf.mxu0
      %v4543 = vadd.f32 0.0, %v4542
      %v4544 = vpop.f32.mrf.mxu0
      %4545 = vmatprep.mubr.f32.mxu0 0.0
      %4546 = vmatmul.mubr.f32.gmra.mxu0 %v4446
      %v4547 = vpop.f32.mrf.mxu0
      %v4548 = vadd.f32 0.0, %v4547
      %v4549 = vpop.f32.mrf.mxu0
      %4550 = vmatprep.mubr.f32.mxu0 0.0
      %4551 = vmatmul.mubr.f32.gmra.mxu0 %v4449
      %v4552 = vpop.f32.mrf.mxu0
      %v4553 = vadd.f32 0.0, %v4552
      %v4554 = vpop.f32.mrf.mxu0
      %4555 = vdwg.mxu0
      %v4556 = vadd.f32 %v4376, %v4518
      %v4557 = vadd.f32 %v4381, %v4523
      %v4558 = vadd.f32 %v4386, %v4528
      %v4559 = vadd.f32 %v4391, %v4533
      %v4560 = vadd.f32 %v4396, %v4538
      %v4561 = vadd.f32 %v4401, %v4543
      %v4562 = vadd.f32 %v4406, %v4548
      %v4563 = vadd.f32 %v4411, %v4553
      %v4564 = vld [vmem:[%s4122] sm:$0xff]
      %v4565 = vld [vmem:[%s4122 + $0x10] sm:$0xff]
      %v4566 = vld [vmem:[%s4122 + $0x20] sm:$0xff]
      %v4567 = vld [vmem:[%s4122 + $0x30] sm:$0xff]
      %v4568 = vld [vmem:[%s4122 + $0x40] sm:$0xff]
      %v4569 = vld [vmem:[%s4122 + $0x50] sm:$0xff]
      %v4570 = vld [vmem:[%s4122 + $0x60] sm:$0xff]
      %v4571 = vld [vmem:[%s4122 + $0x70] sm:$0xff]
      %s4572 = scalar_lea.vmem %s3, 96
      %v4573 = vld [vmem:[%s4572] sm:$0xff]
      %v4574 = vld [vmem:[%s4572 + $0x8] sm:$0xff]
      %v4575 = vld [vmem:[%s4572 + $0x10] sm:$0xff]
      %v4576 = vld [vmem:[%s4572 + $0x18] sm:$0xff]
      %v4578 = vsel %vm419, %v4564, 0
      %v4581 = vsel %vm419, %v4565, 0
      %v4584 = vsel %vm419, %v4566, 0
      %v4587 = vsel %vm419, %v4567, 0
      %v4590 = vsel %vm419, %v4568, 0
      %v4593 = vsel %vm419, %v4569, 0
      %v4596 = vsel %vm419, %v4570, 0
      %v4599 = vsel %vm419, %v4571, 0
      %4601 = vmatprep.subr.mxu0 0.0
      %4602 = vmatpush1.msra.mxu0 0.0
      %4603 = vmatprep.subr.mxu0 0.0
      %4604 = vmatpush1.msra.mxu0 0.0
      %4605 = vmatprep.subr.mxu0 0.0
      %4606 = vmatpush1.msra.mxu0 0.0
      %4607 = vmatprep.subr.mxu0 0.0
      %4608 = vmatpush1.msra.mxu0 0.0
      %4609 = vmatprep.subr.mxu0 0.0
      %4610 = vmatpush1.msra.mxu0 0.0
      %4611 = vmatprep.subr.mxu0 0.0
      %4612 = vmatpush1.msra.mxu0 0.0
      %4613 = vmatprep.subr.mxu0 0.0
      %4614 = vmatpush1.msra.mxu0 0.0
      %4615 = vmatprep.subr.mxu0 0.0
      %4616 = vmatpush1.msra.mxu0 0.0
      %4617 = vmatprep.subr.mxu0 0.0
      %4618 = vmatpush1.msra.mxu0 0.0
      %4619 = vmatprep.subr.mxu0 0.0
      %4620 = vmatpush1.msra.mxu0 0.0
      %4621 = vmatprep.subr.mxu0 0.0
      %4622 = vmatpush1.msra.mxu0 0.0
      %4623 = vmatprep.subr.mxu0 0.0
      %4624 = vmatpush1.msra.mxu0 0.0
      %4625 = vmatprep.subr.mxu0 0.0
      %4626 = vmatpush1.msra.mxu0 %v4576
      %4627 = vmatprep.subr.mxu0 0.0
      %4628 = vmatpush1.msra.mxu0 %v4575
      %4629 = vmatprep.subr.mxu0 0.0
      %4630 = vmatpush1.msra.mxu0 %v4574
      %4631 = vmatprep.subr.mxu0 0.0
      %4632 = vmatpush1.msra.mxu0 %v4573
      %4633 = vmatprep.subr.mxu0 0.0
      %4634 = vmatpush2.msra.mxu0 0.0
      %4635 = vmatprep.subr.mxu0 0.0
      %4636 = vmatpush2.msra.mxu0 0.0
      %4637 = vmatprep.subr.mxu0 0.0
      %4638 = vmatpush2.msra.mxu0 0.0
      %4639 = vmatprep.subr.mxu0 0.0
      %4640 = vmatpush2.msra.mxu0 0.0
      %4641 = vmatprep.subr.mxu0 0.0
      %4642 = vmatpush2.msra.mxu0 0.0
      %4643 = vmatprep.subr.mxu0 0.0
      %4644 = vmatpush2.msra.mxu0 0.0
      %4645 = vmatprep.subr.mxu0 0.0
      %4646 = vmatpush2.msra.mxu0 0.0
      %4647 = vmatprep.subr.mxu0 0.0
      %4648 = vmatpush2.msra.mxu0 0.0
      %4649 = vmatprep.subr.mxu0 0.0
      %4650 = vmatpush2.msra.mxu0 0.0
      %4651 = vmatprep.subr.mxu0 0.0
      %4652 = vmatpush2.msra.mxu0 0.0
      %4653 = vmatprep.subr.mxu0 0.0
      %4654 = vmatpush2.msra.mxu0 0.0
      %4655 = vmatprep.subr.mxu0 0.0
      %4656 = vmatpush2.msra.mxu0 0.0
      %4657 = vmatprep.subr.mxu0 0.0
      %4658 = vmatpush2.msra.mxu0 0.0
      %4659 = vmatprep.subr.mxu0 0.0
      %4660 = vmatpush2.msra.mxu0 0.0
      %4661 = vmatprep.subr.mxu0 0.0
      %4662 = vmatpush2.msra.mxu0 0.0
      %4663 = vmatprep.subr.mxu0 0.0
      %4664 = vmatpush2.msra.mxu0 0.0
      %4665 = vmatprep.mubr.f32.mxu0 0.0
      %4666 = vmatmul.mubr.f32.gmra.mxu0 %v4578
      %v4667 = vpop.f32.mrf.mxu0
      %v4668 = vadd.f32 0.0, %v4667
      %v4669 = vpop.f32.mrf.mxu0
      %4670 = vmatprep.mubr.f32.mxu0 0.0
      %4671 = vmatmul.mubr.f32.gmra.mxu0 %v4581
      %v4672 = vpop.f32.mrf.mxu0
      %v4673 = vadd.f32 0.0, %v4672
      %v4674 = vpop.f32.mrf.mxu0
      %4675 = vmatprep.mubr.f32.mxu0 0.0
      %4676 = vmatmul.mubr.f32.gmra.mxu0 %v4584
      %v4677 = vpop.f32.mrf.mxu0
      %v4678 = vadd.f32 0.0, %v4677
      %v4679 = vpop.f32.mrf.mxu0
      %4680 = vmatprep.mubr.f32.mxu0 0.0
      %4681 = vmatmul.mubr.f32.gmra.mxu0 %v4587
      %v4682 = vpop.f32.mrf.mxu0
      %v4683 = vadd.f32 0.0, %v4682
      %v4684 = vpop.f32.mrf.mxu0
      %4685 = vmatprep.mubr.f32.mxu0 0.0
      %4686 = vmatmul.mubr.f32.gmra.mxu0 %v4590
      %v4687 = vpop.f32.mrf.mxu0
      %v4688 = vadd.f32 0.0, %v4687
      %v4689 = vpop.f32.mrf.mxu0
      %4690 = vmatprep.mubr.f32.mxu0 0.0
      %4691 = vmatmul.mubr.f32.gmra.mxu0 %v4593
      %v4692 = vpop.f32.mrf.mxu0
      %v4693 = vadd.f32 0.0, %v4692
      %v4694 = vpop.f32.mrf.mxu0
      %4695 = vmatprep.mubr.f32.mxu0 0.0
      %4696 = vmatmul.mubr.f32.gmra.mxu0 %v4596
      %v4697 = vpop.f32.mrf.mxu0
      %v4698 = vadd.f32 0.0, %v4697
      %v4699 = vpop.f32.mrf.mxu0
      %4700 = vmatprep.mubr.f32.mxu0 0.0
      %4701 = vmatmul.mubr.f32.gmra.mxu0 %v4599
      %v4702 = vpop.f32.mrf.mxu0
      %v4703 = vadd.f32 0.0, %v4702
      %v4704 = vpop.f32.mrf.mxu0
      %4705 = vdwg.mxu0
      %v4706 = vadd.f32 %v4556, %v4668
      %v4707 = vadd.f32 %v4557, %v4673
      %v4708 = vadd.f32 %v4558, %v4678
      %v4709 = vadd.f32 %v4559, %v4683
      %v4710 = vadd.f32 %v4560, %v4688
      %v4711 = vadd.f32 %v4561, %v4693
      %v4712 = vadd.f32 %v4562, %v4698
      %v4713 = vadd.f32 %v4563, %v4703
      %v4714 = vld [vmem:[%s4122 + $0x1] sm:$0xff]
      %v4715 = vld [vmem:[%s4122 + $0x11] sm:$0xff]
      %v4716 = vld [vmem:[%s4122 + $0x21] sm:$0xff]
      %v4717 = vld [vmem:[%s4122 + $0x31] sm:$0xff]
      %v4718 = vld [vmem:[%s4122 + $0x41] sm:$0xff]
      %v4719 = vld [vmem:[%s4122 + $0x51] sm:$0xff]
      %v4720 = vld [vmem:[%s4122 + $0x61] sm:$0xff]
      %v4721 = vld [vmem:[%s4122 + $0x71] sm:$0xff]
      %s4722 = scalar_lea.vmem %s3, 128
      %v4723 = vld [vmem:[%s4722] sm:$0xff]
      %v4724 = vld [vmem:[%s4722 + $0x8] sm:$0xff]
      %v4725 = vld [vmem:[%s4722 + $0x10] sm:$0xff]
      %v4726 = vld [vmem:[%s4722 + $0x18] sm:$0xff]
      %v4728 = vsel %vm419, %v4714, 0
      %v4731 = vsel %vm419, %v4715, 0
      %v4734 = vsel %vm419, %v4716, 0
      %v4737 = vsel %vm419, %v4717, 0
      %v4740 = vsel %vm419, %v4718, 0
      %v4743 = vsel %vm419, %v4719, 0
      %v4746 = vsel %vm419, %v4720, 0
      %v4749 = vsel %vm419, %v4721, 0
      %4751 = vmatprep.subr.mxu0 0.0
      %4752 = vmatpush1.msra.mxu0 0.0
      %4753 = vmatprep.subr.mxu0 0.0
      %4754 = vmatpush1.msra.mxu0 0.0
      %4755 = vmatprep.subr.mxu0 0.0
      %4756 = vmatpush1.msra.mxu0 0.0
      %4757 = vmatprep.subr.mxu0 0.0
      %4758 = vmatpush1.msra.mxu0 0.0
      %4759 = vmatprep.subr.mxu0 0.0
      %4760 = vmatpush1.msra.mxu0 0.0
      %4761 = vmatprep.subr.mxu0 0.0
      %4762 = vmatpush1.msra.mxu0 0.0
      %4763 = vmatprep.subr.mxu0 0.0
      %4764 = vmatpush1.msra.mxu0 0.0
      %4765 = vmatprep.subr.mxu0 0.0
      %4766 = vmatpush1.msra.mxu0 0.0
      %4767 = vmatprep.subr.mxu0 0.0
      %4768 = vmatpush1.msra.mxu0 0.0
      %4769 = vmatprep.subr.mxu0 0.0
      %4770 = vmatpush1.msra.mxu0 0.0
      %4771 = vmatprep.subr.mxu0 0.0
      %4772 = vmatpush1.msra.mxu0 0.0
      %4773 = vmatprep.subr.mxu0 0.0
      %4774 = vmatpush1.msra.mxu0 0.0
      %4775 = vmatprep.subr.mxu0 0.0
      %4776 = vmatpush1.msra.mxu0 %v4726
      %4777 = vmatprep.subr.mxu0 0.0
      %4778 = vmatpush1.msra.mxu0 %v4725
      %4779 = vmatprep.subr.mxu0 0.0
      %4780 = vmatpush1.msra.mxu0 %v4724
      %4781 = vmatprep.subr.mxu0 0.0
      %4782 = vmatpush1.msra.mxu0 %v4723
      %4783 = vmatprep.subr.mxu0 0.0
      %4784 = vmatpush2.msra.mxu0 0.0
      %4785 = vmatprep.subr.mxu0 0.0
      %4786 = vmatpush2.msra.mxu0 0.0
      %4787 = vmatprep.subr.mxu0 0.0
      %4788 = vmatpush2.msra.mxu0 0.0
      %4789 = vmatprep.subr.mxu0 0.0
      %4790 = vmatpush2.msra.mxu0 0.0
      %4791 = vmatprep.subr.mxu0 0.0
      %4792 = vmatpush2.msra.mxu0 0.0
      %4793 = vmatprep.subr.mxu0 0.0
      %4794 = vmatpush2.msra.mxu0 0.0
      %4795 = vmatprep.subr.mxu0 0.0
      %4796 = vmatpush2.msra.mxu0 0.0
      %4797 = vmatprep.subr.mxu0 0.0
      %4798 = vmatpush2.msra.mxu0 0.0
      %4799 = vmatprep.subr.mxu0 0.0
      %4800 = vmatpush2.msra.mxu0 0.0
      %4801 = vmatprep.subr.mxu0 0.0
      %4802 = vmatpush2.msra.mxu0 0.0
      %4803 = vmatprep.subr.mxu0 0.0
      %4804 = vmatpush2.msra.mxu0 0.0
      %4805 = vmatprep.subr.mxu0 0.0
      %4806 = vmatpush2.msra.mxu0 0.0
      %4807 = vmatprep.subr.mxu0 0.0
      %4808 = vmatpush2.msra.mxu0 0.0
      %4809 = vmatprep.subr.mxu0 0.0
      %4810 = vmatpush2.msra.mxu0 0.0
      %4811 = vmatprep.subr.mxu0 0.0
      %4812 = vmatpush2.msra.mxu0 0.0
      %4813 = vmatprep.subr.mxu0 0.0
      %4814 = vmatpush2.msra.mxu0 0.0
      %4815 = vmatprep.mubr.f32.mxu0 0.0
      %4816 = vmatmul.mubr.f32.gmra.mxu0 %v4728
      %v4817 = vpop.f32.mrf.mxu0
      %v4818 = vadd.f32 0.0, %v4817
      %v4819 = vpop.f32.mrf.mxu0
      %4820 = vmatprep.mubr.f32.mxu0 0.0
      %4821 = vmatmul.mubr.f32.gmra.mxu0 %v4731
      %v4822 = vpop.f32.mrf.mxu0
      %v4823 = vadd.f32 0.0, %v4822
      %v4824 = vpop.f32.mrf.mxu0
      %4825 = vmatprep.mubr.f32.mxu0 0.0
      %4826 = vmatmul.mubr.f32.gmra.mxu0 %v4734
      %v4827 = vpop.f32.mrf.mxu0
      %v4828 = vadd.f32 0.0, %v4827
      %v4829 = vpop.f32.mrf.mxu0
      %4830 = vmatprep.mubr.f32.mxu0 0.0
      %4831 = vmatmul.mubr.f32.gmra.mxu0 %v4737
      %v4832 = vpop.f32.mrf.mxu0
      %v4833 = vadd.f32 0.0, %v4832
      %v4834 = vpop.f32.mrf.mxu0
      %4835 = vmatprep.mubr.f32.mxu0 0.0
      %4836 = vmatmul.mubr.f32.gmra.mxu0 %v4740
      %v4837 = vpop.f32.mrf.mxu0
      %v4838 = vadd.f32 0.0, %v4837
      %v4839 = vpop.f32.mrf.mxu0
      %4840 = vmatprep.mubr.f32.mxu0 0.0
      %4841 = vmatmul.mubr.f32.gmra.mxu0 %v4743
      %v4842 = vpop.f32.mrf.mxu0
      %v4843 = vadd.f32 0.0, %v4842
      %v4844 = vpop.f32.mrf.mxu0
      %4845 = vmatprep.mubr.f32.mxu0 0.0
      %4846 = vmatmul.mubr.f32.gmra.mxu0 %v4746
      %v4847 = vpop.f32.mrf.mxu0
      %v4848 = vadd.f32 0.0, %v4847
      %v4849 = vpop.f32.mrf.mxu0
      %4850 = vmatprep.mubr.f32.mxu0 0.0
      %4851 = vmatmul.mubr.f32.gmra.mxu0 %v4749
      %v4852 = vpop.f32.mrf.mxu0
      %v4853 = vadd.f32 0.0, %v4852
      %v4854 = vpop.f32.mrf.mxu0
      %4855 = vdwg.mxu0
      %v4856 = vadd.f32 %v4706, %v4818
      %v4857 = vadd.f32 %v4707, %v4823
      %v4858 = vadd.f32 %v4708, %v4828
      %v4859 = vadd.f32 %v4709, %v4833
      %v4860 = vadd.f32 %v4710, %v4838
      %v4861 = vadd.f32 %v4711, %v4843
      %v4862 = vadd.f32 %v4712, %v4848
      %v4863 = vadd.f32 %v4713, %v4853
      %v4864 = vld [vmem:[%s4122 + $0x2] sm:$0xff]
      %v4865 = vld [vmem:[%s4122 + $0x12] sm:$0xff]
      %v4866 = vld [vmem:[%s4122 + $0x22] sm:$0xff]
      %v4867 = vld [vmem:[%s4122 + $0x32] sm:$0xff]
      %v4868 = vld [vmem:[%s4122 + $0x42] sm:$0xff]
      %v4869 = vld [vmem:[%s4122 + $0x52] sm:$0xff]
      %v4870 = vld [vmem:[%s4122 + $0x62] sm:$0xff]
      %v4871 = vld [vmem:[%s4122 + $0x72] sm:$0xff]
      %s4872 = scalar_lea.vmem %s3, 160
      %v4873 = vld [vmem:[%s4872] sm:$0xff]
      %v4874 = vld [vmem:[%s4872 + $0x8] sm:$0xff]
      %v4875 = vld [vmem:[%s4872 + $0x10] sm:$0xff]
      %v4876 = vld [vmem:[%s4872 + $0x18] sm:$0xff]
      %v4878 = vsel %vm419, %v4864, 0
      %v4881 = vsel %vm419, %v4865, 0
      %v4884 = vsel %vm419, %v4866, 0
      %v4887 = vsel %vm419, %v4867, 0
      %v4890 = vsel %vm419, %v4868, 0
      %v4893 = vsel %vm419, %v4869, 0
      %v4896 = vsel %vm419, %v4870, 0
      %v4899 = vsel %vm419, %v4871, 0
      %4901 = vmatprep.subr.mxu0 0.0
      %4902 = vmatpush1.msra.mxu0 0.0
      %4903 = vmatprep.subr.mxu0 0.0
      %4904 = vmatpush1.msra.mxu0 0.0
      %4905 = vmatprep.subr.mxu0 0.0
      %4906 = vmatpush1.msra.mxu0 0.0
      %4907 = vmatprep.subr.mxu0 0.0
      %4908 = vmatpush1.msra.mxu0 0.0
      %4909 = vmatprep.subr.mxu0 0.0
      %4910 = vmatpush1.msra.mxu0 0.0
      %4911 = vmatprep.subr.mxu0 0.0
      %4912 = vmatpush1.msra.mxu0 0.0
      %4913 = vmatprep.subr.mxu0 0.0
      %4914 = vmatpush1.msra.mxu0 0.0
      %4915 = vmatprep.subr.mxu0 0.0
      %4916 = vmatpush1.msra.mxu0 0.0
      %4917 = vmatprep.subr.mxu0 0.0
      %4918 = vmatpush1.msra.mxu0 0.0
      %4919 = vmatprep.subr.mxu0 0.0
      %4920 = vmatpush1.msra.mxu0 0.0
      %4921 = vmatprep.subr.mxu0 0.0
      %4922 = vmatpush1.msra.mxu0 0.0
      %4923 = vmatprep.subr.mxu0 0.0
      %4924 = vmatpush1.msra.mxu0 0.0
      %4925 = vmatprep.subr.mxu0 0.0
      %4926 = vmatpush1.msra.mxu0 %v4876
      %4927 = vmatprep.subr.mxu0 0.0
      %4928 = vmatpush1.msra.mxu0 %v4875
      %4929 = vmatprep.subr.mxu0 0.0
      %4930 = vmatpush1.msra.mxu0 %v4874
      %4931 = vmatprep.subr.mxu0 0.0
      %4932 = vmatpush1.msra.mxu0 %v4873
      %4933 = vmatprep.subr.mxu0 0.0
      %4934 = vmatpush2.msra.mxu0 0.0
      %4935 = vmatprep.subr.mxu0 0.0
      %4936 = vmatpush2.msra.mxu0 0.0
      %4937 = vmatprep.subr.mxu0 0.0
      %4938 = vmatpush2.msra.mxu0 0.0
      %4939 = vmatprep.subr.mxu0 0.0
      %4940 = vmatpush2.msra.mxu0 0.0
      %4941 = vmatprep.subr.mxu0 0.0
      %4942 = vmatpush2.msra.mxu0 0.0
      %4943 = vmatprep.subr.mxu0 0.0
      %4944 = vmatpush2.msra.mxu0 0.0
      %4945 = vmatprep.subr.mxu0 0.0
      %4946 = vmatpush2.msra.mxu0 0.0
      %4947 = vmatprep.subr.mxu0 0.0
      %4948 = vmatpush2.msra.mxu0 0.0
      %4949 = vmatprep.subr.mxu0 0.0
      %4950 = vmatpush2.msra.mxu0 0.0
      %4951 = vmatprep.subr.mxu0 0.0
      %4952 = vmatpush2.msra.mxu0 0.0
      %4953 = vmatprep.subr.mxu0 0.0
      %4954 = vmatpush2.msra.mxu0 0.0
      %4955 = vmatprep.subr.mxu0 0.0
      %4956 = vmatpush2.msra.mxu0 0.0
      %4957 = vmatprep.subr.mxu0 0.0
      %4958 = vmatpush2.msra.mxu0 0.0
      %4959 = vmatprep.subr.mxu0 0.0
      %4960 = vmatpush2.msra.mxu0 0.0
      %4961 = vmatprep.subr.mxu0 0.0
      %4962 = vmatpush2.msra.mxu0 0.0
      %4963 = vmatprep.subr.mxu0 0.0
      %4964 = vmatpush2.msra.mxu0 0.0
      %4965 = vmatprep.mubr.f32.mxu0 0.0
      %4966 = vmatmul.mubr.f32.gmra.mxu0 %v4878
      %v4967 = vpop.f32.mrf.mxu0
      %v4968 = vadd.f32 0.0, %v4967
      %v4969 = vpop.f32.mrf.mxu0
      %4970 = vmatprep.mubr.f32.mxu0 0.0
      %4971 = vmatmul.mubr.f32.gmra.mxu0 %v4881
      %v4972 = vpop.f32.mrf.mxu0
      %v4973 = vadd.f32 0.0, %v4972
      %v4974 = vpop.f32.mrf.mxu0
      %4975 = vmatprep.mubr.f32.mxu0 0.0
      %4976 = vmatmul.mubr.f32.gmra.mxu0 %v4884
      %v4977 = vpop.f32.mrf.mxu0
      %v4978 = vadd.f32 0.0, %v4977
      %v4979 = vpop.f32.mrf.mxu0
      %4980 = vmatprep.mubr.f32.mxu0 0.0
      %4981 = vmatmul.mubr.f32.gmra.mxu0 %v4887
      %v4982 = vpop.f32.mrf.mxu0
      %v4983 = vadd.f32 0.0, %v4982
      %v4984 = vpop.f32.mrf.mxu0
      %4985 = vmatprep.mubr.f32.mxu0 0.0
      %4986 = vmatmul.mubr.f32.gmra.mxu0 %v4890
      %v4987 = vpop.f32.mrf.mxu0
      %v4988 = vadd.f32 0.0, %v4987
      %v4989 = vpop.f32.mrf.mxu0
      %4990 = vmatprep.mubr.f32.mxu0 0.0
      %4991 = vmatmul.mubr.f32.gmra.mxu0 %v4893
      %v4992 = vpop.f32.mrf.mxu0
      %v4993 = vadd.f32 0.0, %v4992
      %v4994 = vpop.f32.mrf.mxu0
      %4995 = vmatprep.mubr.f32.mxu0 0.0
      %4996 = vmatmul.mubr.f32.gmra.mxu0 %v4896
      %v4997 = vpop.f32.mrf.mxu0
      %v4998 = vadd.f32 0.0, %v4997
      %v4999 = vpop.f32.mrf.mxu0
      %5000 = vmatprep.mubr.f32.mxu0 0.0
      %5001 = vmatmul.mubr.f32.gmra.mxu0 %v4899
      %v5002 = vpop.f32.mrf.mxu0
      %v5003 = vadd.f32 0.0, %v5002
      %v5004 = vpop.f32.mrf.mxu0
      %5005 = vdwg.mxu0
      %v5006 = vadd.f32 %v4856, %v4968
      %v5007 = vadd.f32 %v4857, %v4973
      %v5008 = vadd.f32 %v4858, %v4978
      %v5009 = vadd.f32 %v4859, %v4983
      %v5010 = vadd.f32 %v4860, %v4988
      %v5011 = vadd.f32 %v4861, %v4993
      %v5012 = vadd.f32 %v4862, %v4998
      %v5013 = vadd.f32 %v4863, %v5003
      %s5014 = scalar_lea.vmem [#allocation4], 32
      %v5015 = vld [vmem:[%s5014] sm:$0xff]
      %v5016 = vld [vmem:[%s5014 + $0x10] sm:$0xff]
      %v5017 = vld [vmem:[%s5014 + $0x20] sm:$0xff]
      %v5018 = vld [vmem:[%s5014 + $0x30] sm:$0xff]
      %v5019 = vld [vmem:[%s5014 + $0x40] sm:$0xff]
      %v5020 = vld [vmem:[%s5014 + $0x50] sm:$0xff]
      %v5021 = vld [vmem:[%s5014 + $0x60] sm:$0xff]
      %v5022 = vld [vmem:[%s5014 + $0x70] sm:$0xff]
      %s5023 = scalar_lea.vmem %s3, 192
      %v5024 = vld [vmem:[%s5023] sm:$0xff]
      %v5025 = vld [vmem:[%s5023 + $0x8] sm:$0xff]
      %v5026 = vld [vmem:[%s5023 + $0x10] sm:$0xff]
      %v5027 = vld [vmem:[%s5023 + $0x18] sm:$0xff]
      %v5029 = vsel %vm419, %v5015, 0
      %v5032 = vsel %vm419, %v5016, 0
      %v5035 = vsel %vm419, %v5017, 0
      %v5038 = vsel %vm419, %v5018, 0
      %v5041 = vsel %vm419, %v5019, 0
      %v5044 = vsel %vm419, %v5020, 0
      %v5047 = vsel %vm419, %v5021, 0
      %v5050 = vsel %vm419, %v5022, 0
      %5052 = vmatprep.subr.mxu0 0.0
      %5053 = vmatpush1.msra.mxu0 0.0
      %5054 = vmatprep.subr.mxu0 0.0
      %5055 = vmatpush1.msra.mxu0 0.0
      %5056 = vmatprep.subr.mxu0 0.0
      %5057 = vmatpush1.msra.mxu0 0.0
      %5058 = vmatprep.subr.mxu0 0.0
      %5059 = vmatpush1.msra.mxu0 0.0
      %5060 = vmatprep.subr.mxu0 0.0
      %5061 = vmatpush1.msra.mxu0 0.0
      %5062 = vmatprep.subr.mxu0 0.0
      %5063 = vmatpush1.msra.mxu0 0.0
      %5064 = vmatprep.subr.mxu0 0.0
      %5065 = vmatpush1.msra.mxu0 0.0
      %5066 = vmatprep.subr.mxu0 0.0
      %5067 = vmatpush1.msra.mxu0 0.0
      %5068 = vmatprep.subr.mxu0 0.0
      %5069 = vmatpush1.msra.mxu0 0.0
      %5070 = vmatprep.subr.mxu0 0.0
      %5071 = vmatpush1.msra.mxu0 0.0
      %5072 = vmatprep.subr.mxu0 0.0
      %5073 = vmatpush1.msra.mxu0 0.0
      %5074 = vmatprep.subr.mxu0 0.0
      %5075 = vmatpush1.msra.mxu0 0.0
      %5076 = vmatprep.subr.mxu0 0.0
      %5077 = vmatpush1.msra.mxu0 %v5027
      %5078 = vmatprep.subr.mxu0 0.0
      %5079 = vmatpush1.msra.mxu0 %v5026
      %5080 = vmatprep.subr.mxu0 0.0
      %5081 = vmatpush1.msra.mxu0 %v5025
      %5082 = vmatprep.subr.mxu0 0.0
      %5083 = vmatpush1.msra.mxu0 %v5024
      %5084 = vmatprep.subr.mxu0 0.0
      %5085 = vmatpush2.msra.mxu0 0.0
      %5086 = vmatprep.subr.mxu0 0.0
      %5087 = vmatpush2.msra.mxu0 0.0
      %5088 = vmatprep.subr.mxu0 0.0
      %5089 = vmatpush2.msra.mxu0 0.0
      %5090 = vmatprep.subr.mxu0 0.0
      %5091 = vmatpush2.msra.mxu0 0.0
      %5092 = vmatprep.subr.mxu0 0.0
      %5093 = vmatpush2.msra.mxu0 0.0
      %5094 = vmatprep.subr.mxu0 0.0
      %5095 = vmatpush2.msra.mxu0 0.0
      %5096 = vmatprep.subr.mxu0 0.0
      %5097 = vmatpush2.msra.mxu0 0.0
      %5098 = vmatprep.subr.mxu0 0.0
      %5099 = vmatpush2.msra.mxu0 0.0
      %5100 = vmatprep.subr.mxu0 0.0
      %5101 = vmatpush2.msra.mxu0 0.0
      %5102 = vmatprep.subr.mxu0 0.0
      %5103 = vmatpush2.msra.mxu0 0.0
      %5104 = vmatprep.subr.mxu0 0.0
      %5105 = vmatpush2.msra.mxu0 0.0
      %5106 = vmatprep.subr.mxu0 0.0
      %5107 = vmatpush2.msra.mxu0 0.0
      %5108 = vmatprep.subr.mxu0 0.0
      %5109 = vmatpush2.msra.mxu0 0.0
      %5110 = vmatprep.subr.mxu0 0.0
      %5111 = vmatpush2.msra.mxu0 0.0
      %5112 = vmatprep.subr.mxu0 0.0
      %5113 = vmatpush2.msra.mxu0 0.0
      %5114 = vmatprep.subr.mxu0 0.0
      %5115 = vmatpush2.msra.mxu0 0.0
      %5116 = vmatprep.mubr.f32.mxu0 0.0
      %5117 = vmatmul.mubr.f32.gmra.mxu0 %v5029
      %v5118 = vpop.f32.mrf.mxu0
      %v5119 = vadd.f32 0.0, %v5118
      %v5120 = vpop.f32.mrf.mxu0
      %5121 = vmatprep.mubr.f32.mxu0 0.0
      %5122 = vmatmul.mubr.f32.gmra.mxu0 %v5032
      %v5123 = vpop.f32.mrf.mxu0
      %v5124 = vadd.f32 0.0, %v5123
      %v5125 = vpop.f32.mrf.mxu0
      %5126 = vmatprep.mubr.f32.mxu0 0.0
      %5127 = vmatmul.mubr.f32.gmra.mxu0 %v5035
      %v5128 = vpop.f32.mrf.mxu0
      %v5129 = vadd.f32 0.0, %v5128
      %v5130 = vpop.f32.mrf.mxu0
      %5131 = vmatprep.mubr.f32.mxu0 0.0
      %5132 = vmatmul.mubr.f32.gmra.mxu0 %v5038
      %v5133 = vpop.f32.mrf.mxu0
      %v5134 = vadd.f32 0.0, %v5133
      %v5135 = vpop.f32.mrf.mxu0
      %5136 = vmatprep.mubr.f32.mxu0 0.0
      %5137 = vmatmul.mubr.f32.gmra.mxu0 %v5041
      %v5138 = vpop.f32.mrf.mxu0
      %v5139 = vadd.f32 0.0, %v5138
      %v5140 = vpop.f32.mrf.mxu0
      %5141 = vmatprep.mubr.f32.mxu0 0.0
      %5142 = vmatmul.mubr.f32.gmra.mxu0 %v5044
      %v5143 = vpop.f32.mrf.mxu0
      %v5144 = vadd.f32 0.0, %v5143
      %v5145 = vpop.f32.mrf.mxu0
      %5146 = vmatprep.mubr.f32.mxu0 0.0
      %5147 = vmatmul.mubr.f32.gmra.mxu0 %v5047
      %v5148 = vpop.f32.mrf.mxu0
      %v5149 = vadd.f32 0.0, %v5148
      %v5150 = vpop.f32.mrf.mxu0
      %5151 = vmatprep.mubr.f32.mxu0 0.0
      %5152 = vmatmul.mubr.f32.gmra.mxu0 %v5050
      %v5153 = vpop.f32.mrf.mxu0
      %v5154 = vadd.f32 0.0, %v5153
      %v5155 = vpop.f32.mrf.mxu0
      %5156 = vdwg.mxu0
      %v5157 = vadd.f32 %v5006, %v5119
      %v5158 = vadd.f32 %v5007, %v5124
      %v5159 = vadd.f32 %v5008, %v5129
      %v5160 = vadd.f32 %v5009, %v5134
      %v5161 = vadd.f32 %v5010, %v5139
      %v5162 = vadd.f32 %v5011, %v5144
      %v5163 = vadd.f32 %v5012, %v5149
      %v5164 = vadd.f32 %v5013, %v5154
      %v5165 = vld [vmem:[%s5014 + $0x1] sm:$0xff]
      %v5166 = vld [vmem:[%s5014 + $0x11] sm:$0xff]
      %v5167 = vld [vmem:[%s5014 + $0x21] sm:$0xff]
      %v5168 = vld [vmem:[%s5014 + $0x31] sm:$0xff]
      %v5169 = vld [vmem:[%s5014 + $0x41] sm:$0xff]
      %v5170 = vld [vmem:[%s5014 + $0x51] sm:$0xff]
      %v5171 = vld [vmem:[%s5014 + $0x61] sm:$0xff]
      %v5172 = vld [vmem:[%s5014 + $0x71] sm:$0xff]
      %s5173 = scalar_lea.vmem %s3, 224
      %v5174 = vld [vmem:[%s5173] sm:$0xff]
      %v5175 = vld [vmem:[%s5173 + $0x8] sm:$0xff]
      %v5176 = vld [vmem:[%s5173 + $0x10] sm:$0xff]
      %v5177 = vld [vmem:[%s5173 + $0x18] sm:$0xff]
      %v5179 = vsel %vm419, %v5165, 0
      %v5182 = vsel %vm419, %v5166, 0
      %v5185 = vsel %vm419, %v5167, 0
      %v5188 = vsel %vm419, %v5168, 0
      %v5191 = vsel %vm419, %v5169, 0
      %v5194 = vsel %vm419, %v5170, 0
      %v5197 = vsel %vm419, %v5171, 0
      %v5200 = vsel %vm419, %v5172, 0
      %5202 = vmatprep.subr.mxu0 0.0
      %5203 = vmatpush1.msra.mxu0 0.0
      %5204 = vmatprep.subr.mxu0 0.0
      %5205 = vmatpush1.msra.mxu0 0.0
      %5206 = vmatprep.subr.mxu0 0.0
      %5207 = vmatpush1.msra.mxu0 0.0
      %5208 = vmatprep.subr.mxu0 0.0
      %5209 = vmatpush1.msra.mxu0 0.0
      %5210 = vmatprep.subr.mxu0 0.0
      %5211 = vmatpush1.msra.mxu0 0.0
      %5212 = vmatprep.subr.mxu0 0.0
      %5213 = vmatpush1.msra.mxu0 0.0
      %5214 = vmatprep.subr.mxu0 0.0
      %5215 = vmatpush1.msra.mxu0 0.0
      %5216 = vmatprep.subr.mxu0 0.0
      %5217 = vmatpush1.msra.mxu0 0.0
      %5218 = vmatprep.subr.mxu0 0.0
      %5219 = vmatpush1.msra.mxu0 0.0
      %5220 = vmatprep.subr.mxu0 0.0
      %5221 = vmatpush1.msra.mxu0 0.0
      %5222 = vmatprep.subr.mxu0 0.0
      %5223 = vmatpush1.msra.mxu0 0.0
      %5224 = vmatprep.subr.mxu0 0.0
      %5225 = vmatpush1.msra.mxu0 0.0
      %5226 = vmatprep.subr.mxu0 0.0
      %5227 = vmatpush1.msra.mxu0 %v5177
      %5228 = vmatprep.subr.mxu0 0.0
      %5229 = vmatpush1.msra.mxu0 %v5176
      %5230 = vmatprep.subr.mxu0 0.0
      %5231 = vmatpush1.msra.mxu0 %v5175
      %5232 = vmatprep.subr.mxu0 0.0
      %5233 = vmatpush1.msra.mxu0 %v5174
      %5234 = vmatprep.subr.mxu0 0.0
      %5235 = vmatpush2.msra.mxu0 0.0
      %5236 = vmatprep.subr.mxu0 0.0
      %5237 = vmatpush2.msra.mxu0 0.0
      %5238 = vmatprep.subr.mxu0 0.0
      %5239 = vmatpush2.msra.mxu0 0.0
      %5240 = vmatprep.subr.mxu0 0.0
      %5241 = vmatpush2.msra.mxu0 0.0
      %5242 = vmatprep.subr.mxu0 0.0
      %5243 = vmatpush2.msra.mxu0 0.0
      %5244 = vmatprep.subr.mxu0 0.0
      %5245 = vmatpush2.msra.mxu0 0.0
      %5246 = vmatprep.subr.mxu0 0.0
      %5247 = vmatpush2.msra.mxu0 0.0
      %5248 = vmatprep.subr.mxu0 0.0
      %5249 = vmatpush2.msra.mxu0 0.0
      %5250 = vmatprep.subr.mxu0 0.0
      %5251 = vmatpush2.msra.mxu0 0.0
      %5252 = vmatprep.subr.mxu0 0.0
      %5253 = vmatpush2.msra.mxu0 0.0
      %5254 = vmatprep.subr.mxu0 0.0
      %5255 = vmatpush2.msra.mxu0 0.0
      %5256 = vmatprep.subr.mxu0 0.0
      %5257 = vmatpush2.msra.mxu0 0.0
      %5258 = vmatprep.subr.mxu0 0.0
      %5259 = vmatpush2.msra.mxu0 0.0
      %5260 = vmatprep.subr.mxu0 0.0
      %5261 = vmatpush2.msra.mxu0 0.0
      %5262 = vmatprep.subr.mxu0 0.0
      %5263 = vmatpush2.msra.mxu0 0.0
      %5264 = vmatprep.subr.mxu0 0.0
      %5265 = vmatpush2.msra.mxu0 0.0
      %5266 = vmatprep.mubr.f32.mxu0 0.0
      %5267 = vmatmul.mubr.f32.gmra.mxu0 %v5179
      %v5268 = vpop.f32.mrf.mxu0
      %v5269 = vadd.f32 0.0, %v5268
      %v5270 = vpop.f32.mrf.mxu0
      %5271 = vmatprep.mubr.f32.mxu0 0.0
      %5272 = vmatmul.mubr.f32.gmra.mxu0 %v5182
      %v5273 = vpop.f32.mrf.mxu0
      %v5274 = vadd.f32 0.0, %v5273
      %v5275 = vpop.f32.mrf.mxu0
      %5276 = vmatprep.mubr.f32.mxu0 0.0
      %5277 = vmatmul.mubr.f32.gmra.mxu0 %v5185
      %v5278 = vpop.f32.mrf.mxu0
      %v5279 = vadd.f32 0.0, %v5278
      %v5280 = vpop.f32.mrf.mxu0
      %5281 = vmatprep.mubr.f32.mxu0 0.0
      %5282 = vmatmul.mubr.f32.gmra.mxu0 %v5188
      %v5283 = vpop.f32.mrf.mxu0
      %v5284 = vadd.f32 0.0, %v5283
      %v5285 = vpop.f32.mrf.mxu0
      %5286 = vmatprep.mubr.f32.mxu0 0.0
      %5287 = vmatmul.mubr.f32.gmra.mxu0 %v5191
      %v5288 = vpop.f32.mrf.mxu0
      %v5289 = vadd.f32 0.0, %v5288
      %v5290 = vpop.f32.mrf.mxu0
      %5291 = vmatprep.mubr.f32.mxu0 0.0
      %5292 = vmatmul.mubr.f32.gmra.mxu0 %v5194
      %v5293 = vpop.f32.mrf.mxu0
      %v5294 = vadd.f32 0.0, %v5293
      %v5295 = vpop.f32.mrf.mxu0
      %5296 = vmatprep.mubr.f32.mxu0 0.0
      %5297 = vmatmul.mubr.f32.gmra.mxu0 %v5197
      %v5298 = vpop.f32.mrf.mxu0
      %v5299 = vadd.f32 0.0, %v5298
      %v5300 = vpop.f32.mrf.mxu0
      %5301 = vmatprep.mubr.f32.mxu0 0.0
      %5302 = vmatmul.mubr.f32.gmra.mxu0 %v5200
      %v5303 = vpop.f32.mrf.mxu0
      %v5304 = vadd.f32 0.0, %v5303
      %v5305 = vpop.f32.mrf.mxu0
      %5306 = vdwg.mxu0
      %v5307 = vadd.f32 %v5157, %v5269
      %v5308 = vadd.f32 %v5158, %v5274
      %v5309 = vadd.f32 %v5159, %v5279
      %v5310 = vadd.f32 %v5160, %v5284
      %v5311 = vadd.f32 %v5161, %v5289
      %v5312 = vadd.f32 %v5162, %v5294
      %v5313 = vadd.f32 %v5163, %v5299
      %v5314 = vadd.f32 %v5164, %v5304
      %v5315 = vld [vmem:[%s5014 + $0x2] sm:$0xff]
      %v5316 = vld [vmem:[%s5014 + $0x12] sm:$0xff]
      %v5317 = vld [vmem:[%s5014 + $0x22] sm:$0xff]
      %v5318 = vld [vmem:[%s5014 + $0x32] sm:$0xff]
      %v5319 = vld [vmem:[%s5014 + $0x42] sm:$0xff]
      %v5320 = vld [vmem:[%s5014 + $0x52] sm:$0xff]
      %v5321 = vld [vmem:[%s5014 + $0x62] sm:$0xff]
      %v5322 = vld [vmem:[%s5014 + $0x72] sm:$0xff]
      %s5323 = scalar_lea.vmem %s3, 256
      %v5324 = vld [vmem:[%s5323] sm:$0xff]
      %v5325 = vld [vmem:[%s5323 + $0x8] sm:$0xff]
      %v5326 = vld [vmem:[%s5323 + $0x10] sm:$0xff]
      %v5327 = vld [vmem:[%s5323 + $0x18] sm:$0xff]
      %v5329 = vsel %vm419, %v5315, 0
      %v5332 = vsel %vm419, %v5316, 0
      %v5335 = vsel %vm419, %v5317, 0
      %v5338 = vsel %vm419, %v5318, 0
      %v5341 = vsel %vm419, %v5319, 0
      %v5344 = vsel %vm419, %v5320, 0
      %v5347 = vsel %vm419, %v5321, 0
      %v5350 = vsel %vm419, %v5322, 0
      %5352 = vmatprep.subr.mxu0 0.0
      %5353 = vmatpush1.msra.mxu0 0.0
      %5354 = vmatprep.subr.mxu0 0.0
      %5355 = vmatpush1.msra.mxu0 0.0
      %5356 = vmatprep.subr.mxu0 0.0
      %5357 = vmatpush1.msra.mxu0 0.0
      %5358 = vmatprep.subr.mxu0 0.0
      %5359 = vmatpush1.msra.mxu0 0.0
      %5360 = vmatprep.subr.mxu0 0.0
      %5361 = vmatpush1.msra.mxu0 0.0
      %5362 = vmatprep.subr.mxu0 0.0
      %5363 = vmatpush1.msra.mxu0 0.0
      %5364 = vmatprep.subr.mxu0 0.0
      %5365 = vmatpush1.msra.mxu0 0.0
      %5366 = vmatprep.subr.mxu0 0.0
      %5367 = vmatpush1.msra.mxu0 0.0
      %5368 = vmatprep.subr.mxu0 0.0
      %5369 = vmatpush1.msra.mxu0 0.0
      %5370 = vmatprep.subr.mxu0 0.0
      %5371 = vmatpush1.msra.mxu0 0.0
      %5372 = vmatprep.subr.mxu0 0.0
      %5373 = vmatpush1.msra.mxu0 0.0
      %5374 = vmatprep.subr.mxu0 0.0
      %5375 = vmatpush1.msra.mxu0 0.0
      %5376 = vmatprep.subr.mxu0 0.0
      %5377 = vmatpush1.msra.mxu0 %v5327
      %5378 = vmatprep.subr.mxu0 0.0
      %5379 = vmatpush1.msra.mxu0 %v5326
      %5380 = vmatprep.subr.mxu0 0.0
      %5381 = vmatpush1.msra.mxu0 %v5325
      %5382 = vmatprep.subr.mxu0 0.0
      %5383 = vmatpush1.msra.mxu0 %v5324
      %5384 = vmatprep.subr.mxu0 0.0
      %5385 = vmatpush2.msra.mxu0 0.0
      %5386 = vmatprep.subr.mxu0 0.0
      %5387 = vmatpush2.msra.mxu0 0.0
      %5388 = vmatprep.subr.mxu0 0.0
      %5389 = vmatpush2.msra.mxu0 0.0
      %5390 = vmatprep.subr.mxu0 0.0
      %5391 = vmatpush2.msra.mxu0 0.0
      %5392 = vmatprep.subr.mxu0 0.0
      %5393 = vmatpush2.msra.mxu0 0.0
      %5394 = vmatprep.subr.mxu0 0.0
      %5395 = vmatpush2.msra.mxu0 0.0
      %5396 = vmatprep.subr.mxu0 0.0
      %5397 = vmatpush2.msra.mxu0 0.0
      %5398 = vmatprep.subr.mxu0 0.0
      %5399 = vmatpush2.msra.mxu0 0.0
      %5400 = vmatprep.subr.mxu0 0.0
      %5401 = vmatpush2.msra.mxu0 0.0
      %5402 = vmatprep.subr.mxu0 0.0
      %5403 = vmatpush2.msra.mxu0 0.0
      %5404 = vmatprep.subr.mxu0 0.0
      %5405 = vmatpush2.msra.mxu0 0.0
      %5406 = vmatprep.subr.mxu0 0.0
      %5407 = vmatpush2.msra.mxu0 0.0
      %5408 = vmatprep.subr.mxu0 0.0
      %5409 = vmatpush2.msra.mxu0 0.0
      %5410 = vmatprep.subr.mxu0 0.0
      %5411 = vmatpush2.msra.mxu0 0.0
      %5412 = vmatprep.subr.mxu0 0.0
      %5413 = vmatpush2.msra.mxu0 0.0
      %5414 = vmatprep.subr.mxu0 0.0
      %5415 = vmatpush2.msra.mxu0 0.0
      %5416 = vmatprep.mubr.f32.mxu0 0.0
      %5417 = vmatmul.mubr.f32.gmra.mxu0 %v5329
      %v5418 = vpop.f32.mrf.mxu0
      %v5419 = vadd.f32 0.0, %v5418
      %v5420 = vpop.f32.mrf.mxu0
      %5421 = vmatprep.mubr.f32.mxu0 0.0
      %5422 = vmatmul.mubr.f32.gmra.mxu0 %v5332
      %v5423 = vpop.f32.mrf.mxu0
      %v5424 = vadd.f32 0.0, %v5423
      %v5425 = vpop.f32.mrf.mxu0
      %5426 = vmatprep.mubr.f32.mxu0 0.0
      %5427 = vmatmul.mubr.f32.gmra.mxu0 %v5335
      %v5428 = vpop.f32.mrf.mxu0
      %v5429 = vadd.f32 0.0, %v5428
      %v5430 = vpop.f32.mrf.mxu0
      %5431 = vmatprep.mubr.f32.mxu0 0.0
      %5432 = vmatmul.mubr.f32.gmra.mxu0 %v5338
      %v5433 = vpop.f32.mrf.mxu0
      %v5434 = vadd.f32 0.0, %v5433
      %v5435 = vpop.f32.mrf.mxu0
      %5436 = vmatprep.mubr.f32.mxu0 0.0
      %5437 = vmatmul.mubr.f32.gmra.mxu0 %v5341
      %v5438 = vpop.f32.mrf.mxu0
      %v5439 = vadd.f32 0.0, %v5438
      %v5440 = vpop.f32.mrf.mxu0
      %5441 = vmatprep.mubr.f32.mxu0 0.0
      %5442 = vmatmul.mubr.f32.gmra.mxu0 %v5344
      %v5443 = vpop.f32.mrf.mxu0
      %v5444 = vadd.f32 0.0, %v5443
      %v5445 = vpop.f32.mrf.mxu0
      %5446 = vmatprep.mubr.f32.mxu0 0.0
      %5447 = vmatmul.mubr.f32.gmra.mxu0 %v5347
      %v5448 = vpop.f32.mrf.mxu0
      %v5449 = vadd.f32 0.0, %v5448
      %v5450 = vpop.f32.mrf.mxu0
      %5451 = vmatprep.mubr.f32.mxu0 0.0
      %5452 = vmatmul.mubr.f32.gmra.mxu0 %v5350
      %v5453 = vpop.f32.mrf.mxu0
      %v5454 = vadd.f32 0.0, %v5453
      %v5455 = vpop.f32.mrf.mxu0
      %5456 = vdwg.mxu0
      %v5457 = vadd.f32 %v5307, %v5419
      %v5458 = vadd.f32 %v5308, %v5424
      %v5459 = vadd.f32 %v5309, %v5429
      %v5460 = vadd.f32 %v5310, %v5434
      %v5461 = vadd.f32 %v5311, %v5439
      %v5462 = vadd.f32 %v5312, %v5444
      %v5463 = vadd.f32 %v5313, %v5449
      %v5464 = vadd.f32 %v5314, %v5454
      %v5465 = vld [vmem:[%s4] sm:$0x1]
      %v5467 = vlaneseq
      %v5468 = vshrl.u32 %v5467, 7
      %v5469 = vsub.s32 0, %v5468
      %v5470 = vrot.slane %v5465, %v5469
      %v5472 = vadd.f32 %v5457, %v5470
      %v5473 = vadd.f32 %v5458, %v5470
      %v5474 = vadd.f32 %v5459, %v5470
      %v5475 = vadd.f32 %v5460, %v5470
      %v5476 = vadd.f32 %v5461, %v5470
      %v5477 = vadd.f32 %v5462, %v5470
      %v5478 = vadd.f32 %v5463, %v5470
      %v5479 = vadd.f32 %v5464, %v5470
      %v5480 = vmax.f32 %v5472, 0.0
      %v5481 = vmax.f32 %v5473, 0.0
      %v5482 = vmax.f32 %v5474, 0.0
      %v5483 = vmax.f32 %v5475, 0.0
      %v5484 = vmax.f32 %v5476, 0.0
      %v5485 = vmax.f32 %v5477, 0.0
      %v5486 = vmax.f32 %v5478, 0.0
      %v5487 = vmax.f32 %v5479, 0.0
      %s5488 = scalar_lea.vmem [#allocation5], 16
      %5489 = vst.msk [vmem:[%s5488 + $0x1] sm:$0xff] %vm490, %v5480
      %5490 = vst.msk [vmem:[%s5488 + $0x11] sm:$0xff] %vm490, %v5481
      %5491 = vst.msk [vmem:[%s5488 + $0x21] sm:$0xff] %vm490, %v5482
      %5492 = vst.msk [vmem:[%s5488 + $0x31] sm:$0xff] %vm490, %v5483
      %5493 = vst.msk [vmem:[%s5488 + $0x41] sm:$0xff] %vm490, %v5484
      %5494 = vst.msk [vmem:[%s5488 + $0x51] sm:$0xff] %vm490, %v5485
      %5495 = vst.msk [vmem:[%s5488 + $0x61] sm:$0xff] %vm490, %v5486
      %5496 = vst.msk [vmem:[%s5488 + $0x71] sm:$0xff] %vm490, %v5487
      %v5497 = vld [vmem:[#allocation3] sm:$0xff]
      %v5498 = vld [vmem:[#allocation3 + $0x8] sm:$0xff]
      %v5499 = vld [vmem:[#allocation3 + $0x18] sm:$0xff]
      %v5500 = vld [vmem:[#allocation3 + $0x20] sm:$0xff]
      %v5501 = vld [vmem:[#allocation3 + $0x30] sm:$0xff]
      %v5502 = vld [vmem:[#allocation3 + $0x38] sm:$0xff]
      %v5503 = vld [vmem:[#allocation3 + $0x48] sm:$0xff]
      %v5504 = vld [vmem:[#allocation3 + $0x50] sm:$0xff]
      %v5505 = vld [vmem:[#allocation3 + $0x60] sm:$0xff]
      %v5506 = vld [vmem:[#allocation3 + $0x68] sm:$0xff]
      %v5507 = vld [vmem:[#allocation3 + $0x78] sm:$0xff]
      %v5508 = vld [vmem:[#allocation3 + $0x80] sm:$0xff]
      %v5509 = vld [vmem:[#allocation3 + $0x90] sm:$0xff]
      %v5510 = vld [vmem:[#allocation3 + $0x98] sm:$0xff]
      %v5511 = vld [vmem:[#allocation3 + $0xa8] sm:$0xff]
      %v5512 = vld [vmem:[#allocation3 + $0xb0] sm:$0xff]
      %v5513 = vld [vmem:[#allocation3 + $0xc0] sm:$0xff]
      %v5514 = vld [vmem:[#allocation3 + $0xc8] sm:$0xff]
      %v5515 = vld [vmem:[#allocation3 + $0xd8] sm:$0xff]
      %v5516 = vld [vmem:[#allocation3 + $0xe0] sm:$0xff]
      %v5517 = vld [vmem:[#allocation3 + $0xf0] sm:$0xff]
      %v5518 = vld [vmem:[#allocation3 + $0xf8] sm:$0xff]
      %v5519 = vld [vmem:[#allocation3 + $0x108] sm:$0xff]
      %v5520 = vld [vmem:[#allocation3 + $0x110] sm:$0xff]
      %v5521 = vld [vmem:[#allocation3 + $0x120] sm:$0xff]
      %v5522 = vld [vmem:[#allocation3 + $0x128] sm:$0xff]
      %v5523 = vld [vmem:[#allocation3 + $0x138] sm:$0xff]
      %v5524 = vld [vmem:[#allocation3 + $0x140] sm:$0xff]
      %v5525 = vld [vmem:[#allocation3 + $0x150] sm:$0xff]
      %v5526 = vld [vmem:[#allocation3 + $0x158] sm:$0xff]
      %v5527 = vld [vmem:[#allocation3 + $0x168] sm:$0xff]
      %v5528 = vld [vmem:[#allocation3 + $0x170] sm:$0xff]
      %v5529 = vld [vmem:[%s5] sm:$0xff]
      %v5530 = vld [vmem:[%s5 + $0x8] sm:$0xff]
      %v5531 = vld [vmem:[%s5 + $0x10] sm:$0xff]
      %v5532 = vld [vmem:[%s5 + $0x18] sm:$0xff]
      %v5533 = vld [vmem:[#allocation3 + $0x1] sm:$0xff]
      %v5534 = vld [vmem:[#allocation3 + $0x9] sm:$0xff]
      %v5535 = vld [vmem:[#allocation3 + $0x19] sm:$0xff]
      %v5536 = vld [vmem:[#allocation3 + $0x21] sm:$0xff]
      %v5537 = vld [vmem:[#allocation3 + $0x31] sm:$0xff]
      %v5538 = vld [vmem:[#allocation3 + $0x39] sm:$0xff]
      %v5539 = vld [vmem:[#allocation3 + $0x49] sm:$0xff]
      %v5540 = vld [vmem:[#allocation3 + $0x51] sm:$0xff]
      %v5541 = vld [vmem:[#allocation3 + $0x61] sm:$0xff]
      %v5542 = vld [vmem:[#allocation3 + $0x69] sm:$0xff]
      %v5543 = vld [vmem:[#allocation3 + $0x79] sm:$0xff]
      %v5544 = vld [vmem:[#allocation3 + $0x81] sm:$0xff]
      %v5545 = vld [vmem:[#allocation3 + $0x91] sm:$0xff]
      %v5546 = vld [vmem:[#allocation3 + $0x99] sm:$0xff]
      %v5547 = vld [vmem:[#allocation3 + $0xa9] sm:$0xff]
      %v5548 = vld [vmem:[#allocation3 + $0xb1] sm:$0xff]
      %v5549 = vld [vmem:[#allocation3 + $0xc1] sm:$0xff]
      %v5550 = vld [vmem:[#allocation3 + $0xc9] sm:$0xff]
      %v5551 = vld [vmem:[#allocation3 + $0xd9] sm:$0xff]
      %v5552 = vld [vmem:[#allocation3 + $0xe1] sm:$0xff]
      %v5553 = vld [vmem:[#allocation3 + $0xf1] sm:$0xff]
      %v5554 = vld [vmem:[#allocation3 + $0xf9] sm:$0xff]
      %v5555 = vld [vmem:[#allocation3 + $0x109] sm:$0xff]
      %v5556 = vld [vmem:[#allocation3 + $0x111] sm:$0xff]
      %v5557 = vld [vmem:[#allocation3 + $0x121] sm:$0xff]
      %v5558 = vld [vmem:[#allocation3 + $0x129] sm:$0xff]
      %v5559 = vld [vmem:[#allocation3 + $0x139] sm:$0xff]
      %v5560 = vld [vmem:[#allocation3 + $0x141] sm:$0xff]
      %v5561 = vld [vmem:[#allocation3 + $0x151] sm:$0xff]
      %v5562 = vld [vmem:[#allocation3 + $0x159] sm:$0xff]
      %v5563 = vld [vmem:[#allocation3 + $0x169] sm:$0xff]
      %v5564 = vld [vmem:[#allocation3 + $0x171] sm:$0xff]
      %s5565 = scalar_lea.vmem %s5, 32
      %v5566 = vld [vmem:[%s5565] sm:$0xff]
      %v5567 = vld [vmem:[%s5565 + $0x8] sm:$0xff]
      %v5568 = vld [vmem:[%s5565 + $0x10] sm:$0xff]
      %v5569 = vld [vmem:[%s5565 + $0x18] sm:$0xff]
      %v5571 = vsel %vm419, %v5533, 0
      %v5574 = vsel %vm419, %v5534, 0
      %v5577 = vsel %vm419, %v5535, 0
      %v5580 = vsel %vm419, %v5536, 0
      %v5583 = vsel %vm419, %v5537, 0
      %v5586 = vsel %vm419, %v5538, 0
      %v5589 = vsel %vm419, %v5539, 0
      %v5592 = vsel %vm419, %v5540, 0
      %v5595 = vsel %vm419, %v5541, 0
      %v5598 = vsel %vm419, %v5542, 0
      %v5601 = vsel %vm419, %v5543, 0
      %v5604 = vsel %vm419, %v5544, 0
      %v5607 = vsel %vm419, %v5545, 0
      %v5610 = vsel %vm419, %v5546, 0
      %v5613 = vsel %vm419, %v5547, 0
      %v5616 = vsel %vm419, %v5548, 0
      %v5619 = vsel %vm419, %v5549, 0
      %v5622 = vsel %vm419, %v5550, 0
      %v5625 = vsel %vm419, %v5551, 0
      %v5628 = vsel %vm419, %v5552, 0
      %v5631 = vsel %vm419, %v5553, 0
      %v5634 = vsel %vm419, %v5554, 0
      %v5637 = vsel %vm419, %v5555, 0
      %v5640 = vsel %vm419, %v5556, 0
      %v5643 = vsel %vm419, %v5557, 0
      %v5646 = vsel %vm419, %v5558, 0
      %v5649 = vsel %vm419, %v5559, 0
      %v5652 = vsel %vm419, %v5560, 0
      %v5655 = vsel %vm419, %v5561, 0
      %v5658 = vsel %vm419, %v5562, 0
      %v5661 = vsel %vm419, %v5563, 0
      %v5664 = vsel %vm419, %v5564, 0
      %5666 = vmatprep.subr.mxu0 0.0
      %5667 = vmatpush1.msra.mxu0 0.0
      %5668 = vmatprep.subr.mxu0 0.0
      %5669 = vmatpush1.msra.mxu0 0.0
      %5670 = vmatprep.subr.mxu0 0.0
      %5671 = vmatpush1.msra.mxu0 0.0
      %5672 = vmatprep.subr.mxu0 0.0
      %5673 = vmatpush1.msra.mxu0 0.0
      %5674 = vmatprep.subr.mxu0 0.0
      %5675 = vmatpush1.msra.mxu0 0.0
      %5676 = vmatprep.subr.mxu0 0.0
      %5677 = vmatpush1.msra.mxu0 0.0
      %5678 = vmatprep.subr.mxu0 0.0
      %5679 = vmatpush1.msra.mxu0 0.0
      %5680 = vmatprep.subr.mxu0 0.0
      %5681 = vmatpush1.msra.mxu0 0.0
      %5682 = vmatprep.subr.mxu0 0.0
      %5683 = vmatpush1.msra.mxu0 0.0
      %5684 = vmatprep.subr.mxu0 0.0
      %5685 = vmatpush1.msra.mxu0 0.0
      %5686 = vmatprep.subr.mxu0 0.0
      %5687 = vmatpush1.msra.mxu0 0.0
      %5688 = vmatprep.subr.mxu0 0.0
      %5689 = vmatpush1.msra.mxu0 0.0
      %5690 = vmatprep.subr.mxu0 0.0
      %5691 = vmatpush1.msra.mxu0 %v5569
      %5692 = vmatprep.subr.mxu0 0.0
      %5693 = vmatpush1.msra.mxu0 %v5568
      %5694 = vmatprep.subr.mxu0 0.0
      %5695 = vmatpush1.msra.mxu0 %v5567
      %5696 = vmatprep.subr.mxu0 0.0
      %5697 = vmatpush1.msra.mxu0 %v5566
      %5698 = vmatprep.subr.mxu0 0.0
      %5699 = vmatpush2.msra.mxu0 0.0
      %5700 = vmatprep.subr.mxu0 0.0
      %5701 = vmatpush2.msra.mxu0 0.0
      %5702 = vmatprep.subr.mxu0 0.0
      %5703 = vmatpush2.msra.mxu0 0.0
      %5704 = vmatprep.subr.mxu0 0.0
      %5705 = vmatpush2.msra.mxu0 0.0
      %5706 = vmatprep.subr.mxu0 0.0
      %5707 = vmatpush2.msra.mxu0 0.0
      %5708 = vmatprep.subr.mxu0 0.0
      %5709 = vmatpush2.msra.mxu0 0.0
      %5710 = vmatprep.subr.mxu0 0.0
      %5711 = vmatpush2.msra.mxu0 0.0
      %5712 = vmatprep.subr.mxu0 0.0
      %5713 = vmatpush2.msra.mxu0 0.0
      %5714 = vmatprep.subr.mxu0 0.0
      %5715 = vmatpush2.msra.mxu0 0.0
      %5716 = vmatprep.subr.mxu0 0.0
      %5717 = vmatpush2.msra.mxu0 0.0
      %5718 = vmatprep.subr.mxu0 0.0
      %5719 = vmatpush2.msra.mxu0 0.0
      %5720 = vmatprep.subr.mxu0 0.0
      %5721 = vmatpush2.msra.mxu0 0.0
      %5722 = vmatprep.subr.mxu0 0.0
      %5723 = vmatpush2.msra.mxu0 0.0
      %5724 = vmatprep.subr.mxu0 0.0
      %5725 = vmatpush2.msra.mxu0 0.0
      %5726 = vmatprep.subr.mxu0 0.0
      %5727 = vmatpush2.msra.mxu0 0.0
      %5728 = vmatprep.subr.mxu0 0.0
      %5729 = vmatpush2.msra.mxu0 0.0
      %5730 = vmatprep.mubr.f32.mxu0 0.0
      %5731 = vmatmul.mubr.f32.gmra.mxu0 %v5571
      %v5732 = vpop.f32.mrf.mxu0
      %v5733 = vadd.f32 0.0, %v5732
      %v5734 = vpop.f32.mrf.mxu0
      %5735 = vmatprep.mubr.f32.mxu0 0.0
      %5736 = vmatmul.mubr.f32.gmra.mxu0 %v5574
      %v5737 = vpop.f32.mrf.mxu0
      %v5738 = vadd.f32 0.0, %v5737
      %v5739 = vpop.f32.mrf.mxu0
      %5740 = vmatprep.mubr.f32.mxu0 0.0
      %5741 = vmatmul.mubr.f32.gmra.mxu0 %v5577
      %v5742 = vpop.f32.mrf.mxu0
      %v5743 = vadd.f32 0.0, %v5742
      %v5744 = vpop.f32.mrf.mxu0
      %5745 = vmatprep.mubr.f32.mxu0 0.0
      %5746 = vmatmul.mubr.f32.gmra.mxu0 %v5580
      %v5747 = vpop.f32.mrf.mxu0
      %v5748 = vadd.f32 0.0, %v5747
      %v5749 = vpop.f32.mrf.mxu0
      %5750 = vmatprep.mubr.f32.mxu0 0.0
      %5751 = vmatmul.mubr.f32.gmra.mxu0 %v5583
      %v5752 = vpop.f32.mrf.mxu0
      %v5753 = vadd.f32 0.0, %v5752
      %v5754 = vpop.f32.mrf.mxu0
      %5755 = vmatprep.mubr.f32.mxu0 0.0
      %5756 = vmatmul.mubr.f32.gmra.mxu0 %v5586
      %v5757 = vpop.f32.mrf.mxu0
      %v5758 = vadd.f32 0.0, %v5757
      %v5759 = vpop.f32.mrf.mxu0
      %5760 = vmatprep.mubr.f32.mxu0 0.0
      %5761 = vmatmul.mubr.f32.gmra.mxu0 %v5589
      %v5762 = vpop.f32.mrf.mxu0
      %v5763 = vadd.f32 0.0, %v5762
      %v5764 = vpop.f32.mrf.mxu0
      %5765 = vmatprep.mubr.f32.mxu0 0.0
      %5766 = vmatmul.mubr.f32.gmra.mxu0 %v5592
      %v5767 = vpop.f32.mrf.mxu0
      %v5768 = vadd.f32 0.0, %v5767
      %v5769 = vpop.f32.mrf.mxu0
      %5770 = vmatprep.mubr.f32.mxu0 0.0
      %5771 = vmatmul.mubr.f32.gmra.mxu0 %v5595
      %v5772 = vpop.f32.mrf.mxu0
      %v5773 = vadd.f32 0.0, %v5772
      %v5774 = vpop.f32.mrf.mxu0
      %5775 = vmatprep.mubr.f32.mxu0 0.0
      %5776 = vmatmul.mubr.f32.gmra.mxu0 %v5598
      %v5777 = vpop.f32.mrf.mxu0
      %v5778 = vadd.f32 0.0, %v5777
      %v5779 = vpop.f32.mrf.mxu0
      %5780 = vmatprep.mubr.f32.mxu0 0.0
      %5781 = vmatmul.mubr.f32.gmra.mxu0 %v5601
      %v5782 = vpop.f32.mrf.mxu0
      %v5783 = vadd.f32 0.0, %v5782
      %v5784 = vpop.f32.mrf.mxu0
      %5785 = vmatprep.mubr.f32.mxu0 0.0
      %5786 = vmatmul.mubr.f32.gmra.mxu0 %v5604
      %v5787 = vpop.f32.mrf.mxu0
      %v5788 = vadd.f32 0.0, %v5787
      %v5789 = vpop.f32.mrf.mxu0
      %5790 = vmatprep.mubr.f32.mxu0 0.0
      %5791 = vmatmul.mubr.f32.gmra.mxu0 %v5607
      %v5792 = vpop.f32.mrf.mxu0
      %v5793 = vadd.f32 0.0, %v5792
      %v5794 = vpop.f32.mrf.mxu0
      %5795 = vmatprep.mubr.f32.mxu0 0.0
      %5796 = vmatmul.mubr.f32.gmra.mxu0 %v5610
      %v5797 = vpop.f32.mrf.mxu0
      %v5798 = vadd.f32 0.0, %v5797
      %v5799 = vpop.f32.mrf.mxu0
      %5800 = vmatprep.mubr.f32.mxu0 0.0
      %5801 = vmatmul.mubr.f32.gmra.mxu0 %v5613
      %v5802 = vpop.f32.mrf.mxu0
      %v5803 = vadd.f32 0.0, %v5802
      %v5804 = vpop.f32.mrf.mxu0
      %5805 = vmatprep.mubr.f32.mxu0 0.0
      %5806 = vmatmul.mubr.f32.gmra.mxu0 %v5616
      %v5807 = vpop.f32.mrf.mxu0
      %v5808 = vadd.f32 0.0, %v5807
      %v5809 = vpop.f32.mrf.mxu0
      %5810 = vmatprep.mubr.f32.mxu0 0.0
      %5811 = vmatmul.mubr.f32.gmra.mxu0 %v5619
      %v5812 = vpop.f32.mrf.mxu0
      %v5813 = vadd.f32 0.0, %v5812
      %v5814 = vpop.f32.mrf.mxu0
      %5815 = vmatprep.mubr.f32.mxu0 0.0
      %5816 = vmatmul.mubr.f32.gmra.mxu0 %v5622
      %v5817 = vpop.f32.mrf.mxu0
      %v5818 = vadd.f32 0.0, %v5817
      %v5819 = vpop.f32.mrf.mxu0
      %5820 = vmatprep.mubr.f32.mxu0 0.0
      %5821 = vmatmul.mubr.f32.gmra.mxu0 %v5625
      %v5822 = vpop.f32.mrf.mxu0
      %v5823 = vadd.f32 0.0, %v5822
      %v5824 = vpop.f32.mrf.mxu0
      %5825 = vmatprep.mubr.f32.mxu0 0.0
      %5826 = vmatmul.mubr.f32.gmra.mxu0 %v5628
      %v5827 = vpop.f32.mrf.mxu0
      %v5828 = vadd.f32 0.0, %v5827
      %v5829 = vpop.f32.mrf.mxu0
      %5830 = vmatprep.mubr.f32.mxu0 0.0
      %5831 = vmatmul.mubr.f32.gmra.mxu0 %v5631
      %v5832 = vpop.f32.mrf.mxu0
      %v5833 = vadd.f32 0.0, %v5832
      %v5834 = vpop.f32.mrf.mxu0
      %5835 = vmatprep.mubr.f32.mxu0 0.0
      %5836 = vmatmul.mubr.f32.gmra.mxu0 %v5634
      %v5837 = vpop.f32.mrf.mxu0
      %v5838 = vadd.f32 0.0, %v5837
      %v5839 = vpop.f32.mrf.mxu0
      %5840 = vmatprep.mubr.f32.mxu0 0.0
      %5841 = vmatmul.mubr.f32.gmra.mxu0 %v5637
      %v5842 = vpop.f32.mrf.mxu0
      %v5843 = vadd.f32 0.0, %v5842
      %v5844 = vpop.f32.mrf.mxu0
      %5845 = vmatprep.mubr.f32.mxu0 0.0
      %5846 = vmatmul.mubr.f32.gmra.mxu0 %v5640
      %v5847 = vpop.f32.mrf.mxu0
      %v5848 = vadd.f32 0.0, %v5847
      %v5849 = vpop.f32.mrf.mxu0
      %5850 = vmatprep.mubr.f32.mxu0 0.0
      %5851 = vmatmul.mubr.f32.gmra.mxu0 %v5643
      %v5852 = vpop.f32.mrf.mxu0
      %v5853 = vadd.f32 0.0, %v5852
      %v5854 = vpop.f32.mrf.mxu0
      %5855 = vmatprep.mubr.f32.mxu0 0.0
      %5856 = vmatmul.mubr.f32.gmra.mxu0 %v5646
      %v5857 = vpop.f32.mrf.mxu0
      %v5858 = vadd.f32 0.0, %v5857
      %v5859 = vpop.f32.mrf.mxu0
      %5860 = vmatprep.mubr.f32.mxu0 0.0
      %5861 = vmatmul.mubr.f32.gmra.mxu0 %v5649
      %v5862 = vpop.f32.mrf.mxu0
      %v5863 = vadd.f32 0.0, %v5862
      %v5864 = vpop.f32.mrf.mxu0
      %5865 = vmatprep.mubr.f32.mxu0 0.0
      %5866 = vmatmul.mubr.f32.gmra.mxu0 %v5652
      %v5867 = vpop.f32.mrf.mxu0
      %v5868 = vadd.f32 0.0, %v5867
      %v5869 = vpop.f32.mrf.mxu0
      %5870 = vmatprep.mubr.f32.mxu0 0.0
      %5871 = vmatmul.mubr.f32.gmra.mxu0 %v5655
      %v5872 = vpop.f32.mrf.mxu0
      %v5873 = vadd.f32 0.0, %v5872
      %v5874 = vpop.f32.mrf.mxu0
      %5875 = vmatprep.mubr.f32.mxu0 0.0
      %5876 = vmatmul.mubr.f32.gmra.mxu0 %v5658
      %v5877 = vpop.f32.mrf.mxu0
      %v5878 = vadd.f32 0.0, %v5877
      %v5879 = vpop.f32.mrf.mxu0
      %5880 = vmatprep.mubr.f32.mxu0 0.0
      %5881 = vmatmul.mubr.f32.gmra.mxu0 %v5661
      %v5882 = vpop.f32.mrf.mxu0
      %v5883 = vadd.f32 0.0, %v5882
      %v5884 = vpop.f32.mrf.mxu0
      %5885 = vmatprep.mubr.f32.mxu0 0.0
      %5886 = vmatmul.mubr.f32.gmra.mxu0 %v5664
      %v5887 = vpop.f32.mrf.mxu0
      %v5888 = vadd.f32 0.0, %v5887
      %v5889 = vpop.f32.mrf.mxu0
      %5890 = vdwg.mxu0
      %v5892 = vsel %vm419, %v5497, 0
      %v5895 = vsel %vm419, %v5498, 0
      %v5898 = vsel %vm419, %v5499, 0
      %v5901 = vsel %vm419, %v5500, 0
      %v5904 = vsel %vm419, %v5501, 0
      %v5907 = vsel %vm419, %v5502, 0
      %v5910 = vsel %vm419, %v5503, 0
      %v5913 = vsel %vm419, %v5504, 0
      %v5916 = vsel %vm419, %v5505, 0
      %v5919 = vsel %vm419, %v5506, 0
      %v5922 = vsel %vm419, %v5507, 0
      %v5925 = vsel %vm419, %v5508, 0
      %v5928 = vsel %vm419, %v5509, 0
      %v5931 = vsel %vm419, %v5510, 0
      %v5934 = vsel %vm419, %v5511, 0
      %v5937 = vsel %vm419, %v5512, 0
      %v5940 = vsel %vm419, %v5513, 0
      %v5943 = vsel %vm419, %v5514, 0
      %v5946 = vsel %vm419, %v5515, 0
      %v5949 = vsel %vm419, %v5516, 0
      %v5952 = vsel %vm419, %v5517, 0
      %v5955 = vsel %vm419, %v5518, 0
      %v5958 = vsel %vm419, %v5519, 0
      %v5961 = vsel %vm419, %v5520, 0
      %v5964 = vsel %vm419, %v5521, 0
      %v5967 = vsel %vm419, %v5522, 0
      %v5970 = vsel %vm419, %v5523, 0
      %v5973 = vsel %vm419, %v5524, 0
      %v5976 = vsel %vm419, %v5525, 0
      %v5979 = vsel %vm419, %v5526, 0
      %v5982 = vsel %vm419, %v5527, 0
      %v5985 = vsel %vm419, %v5528, 0
      %5987 = vmatprep.subr.mxu0 0.0
      %5988 = vmatpush1.msra.mxu0 0.0
      %5989 = vmatprep.subr.mxu0 0.0
      %5990 = vmatpush1.msra.mxu0 0.0
      %5991 = vmatprep.subr.mxu0 0.0
      %5992 = vmatpush1.msra.mxu0 0.0
      %5993 = vmatprep.subr.mxu0 0.0
      %5994 = vmatpush1.msra.mxu0 0.0
      %5995 = vmatprep.subr.mxu0 0.0
      %5996 = vmatpush1.msra.mxu0 0.0
      %5997 = vmatprep.subr.mxu0 0.0
      %5998 = vmatpush1.msra.mxu0 0.0
      %5999 = vmatprep.subr.mxu0 0.0
      %6000 = vmatpush1.msra.mxu0 0.0
      %6001 = vmatprep.subr.mxu0 0.0
      %6002 = vmatpush1.msra.mxu0 0.0
      %6003 = vmatprep.subr.mxu0 0.0
      %6004 = vmatpush1.msra.mxu0 0.0
      %6005 = vmatprep.subr.mxu0 0.0
      %6006 = vmatpush1.msra.mxu0 0.0
      %6007 = vmatprep.subr.mxu0 0.0
      %6008 = vmatpush1.msra.mxu0 0.0
      %6009 = vmatprep.subr.mxu0 0.0
      %6010 = vmatpush1.msra.mxu0 0.0
      %6011 = vmatprep.subr.mxu0 0.0
      %6012 = vmatpush1.msra.mxu0 %v5532
      %6013 = vmatprep.subr.mxu0 0.0
      %6014 = vmatpush1.msra.mxu0 %v5531
      %6015 = vmatprep.subr.mxu0 0.0
      %6016 = vmatpush1.msra.mxu0 %v5530
      %6017 = vmatprep.subr.mxu0 0.0
      %6018 = vmatpush1.msra.mxu0 %v5529
      %6019 = vmatprep.subr.mxu0 0.0
      %6020 = vmatpush2.msra.mxu0 0.0
      %6021 = vmatprep.subr.mxu0 0.0
      %6022 = vmatpush2.msra.mxu0 0.0
      %6023 = vmatprep.subr.mxu0 0.0
      %6024 = vmatpush2.msra.mxu0 0.0
      %6025 = vmatprep.subr.mxu0 0.0
      %6026 = vmatpush2.msra.mxu0 0.0
      %6027 = vmatprep.subr.mxu0 0.0
      %6028 = vmatpush2.msra.mxu0 0.0
      %6029 = vmatprep.subr.mxu0 0.0
      %6030 = vmatpush2.msra.mxu0 0.0
      %6031 = vmatprep.subr.mxu0 0.0
      %6032 = vmatpush2.msra.mxu0 0.0
      %6033 = vmatprep.subr.mxu0 0.0
      %6034 = vmatpush2.msra.mxu0 0.0
      %6035 = vmatprep.subr.mxu0 0.0
      %6036 = vmatpush2.msra.mxu0 0.0
      %6037 = vmatprep.subr.mxu0 0.0
      %6038 = vmatpush2.msra.mxu0 0.0
      %6039 = vmatprep.subr.mxu0 0.0
      %6040 = vmatpush2.msra.mxu0 0.0
      %6041 = vmatprep.subr.mxu0 0.0
      %6042 = vmatpush2.msra.mxu0 0.0
      %6043 = vmatprep.subr.mxu0 0.0
      %6044 = vmatpush2.msra.mxu0 0.0
      %6045 = vmatprep.subr.mxu0 0.0
      %6046 = vmatpush2.msra.mxu0 0.0
      %6047 = vmatprep.subr.mxu0 0.0
      %6048 = vmatpush2.msra.mxu0 0.0
      %6049 = vmatprep.subr.mxu0 0.0
      %6050 = vmatpush2.msra.mxu0 0.0
      %6051 = vmatprep.mubr.f32.mxu0 0.0
      %6052 = vmatmul.mubr.f32.gmra.mxu0 %v5892
      %v6053 = vpop.f32.mrf.mxu0
      %v6054 = vadd.f32 %v5733, %v6053
      %v6055 = vpop.f32.mrf.mxu0
      %6056 = vmatprep.mubr.f32.mxu0 0.0
      %6057 = vmatmul.mubr.f32.gmra.mxu0 %v5895
      %v6058 = vpop.f32.mrf.mxu0
      %v6059 = vadd.f32 %v5738, %v6058
      %v6060 = vpop.f32.mrf.mxu0
      %6061 = vmatprep.mubr.f32.mxu0 0.0
      %6062 = vmatmul.mubr.f32.gmra.mxu0 %v5898
      %v6063 = vpop.f32.mrf.mxu0
      %v6064 = vadd.f32 %v5743, %v6063
      %v6065 = vpop.f32.mrf.mxu0
      %6066 = vmatprep.mubr.f32.mxu0 0.0
      %6067 = vmatmul.mubr.f32.gmra.mxu0 %v5901
      %v6068 = vpop.f32.mrf.mxu0
      %v6069 = vadd.f32 %v5748, %v6068
      %v6070 = vpop.f32.mrf.mxu0
      %6071 = vmatprep.mubr.f32.mxu0 0.0
      %6072 = vmatmul.mubr.f32.gmra.mxu0 %v5904
      %v6073 = vpop.f32.mrf.mxu0
      %v6074 = vadd.f32 %v5753, %v6073
      %v6075 = vpop.f32.mrf.mxu0
      %6076 = vmatprep.mubr.f32.mxu0 0.0
      %6077 = vmatmul.mubr.f32.gmra.mxu0 %v5907
      %v6078 = vpop.f32.mrf.mxu0
      %v6079 = vadd.f32 %v5758, %v6078
      %v6080 = vpop.f32.mrf.mxu0
      %6081 = vmatprep.mubr.f32.mxu0 0.0
      %6082 = vmatmul.mubr.f32.gmra.mxu0 %v5910
      %v6083 = vpop.f32.mrf.mxu0
      %v6084 = vadd.f32 %v5763, %v6083
      %v6085 = vpop.f32.mrf.mxu0
      %6086 = vmatprep.mubr.f32.mxu0 0.0
      %6087 = vmatmul.mubr.f32.gmra.mxu0 %v5913
      %v6088 = vpop.f32.mrf.mxu0
      %v6089 = vadd.f32 %v5768, %v6088
      %v6090 = vpop.f32.mrf.mxu0
      %6091 = vmatprep.mubr.f32.mxu0 0.0
      %6092 = vmatmul.mubr.f32.gmra.mxu0 %v5916
      %v6093 = vpop.f32.mrf.mxu0
      %v6094 = vadd.f32 %v5773, %v6093
      %v6095 = vpop.f32.mrf.mxu0
      %6096 = vmatprep.mubr.f32.mxu0 0.0
      %6097 = vmatmul.mubr.f32.gmra.mxu0 %v5919
      %v6098 = vpop.f32.mrf.mxu0
      %v6099 = vadd.f32 %v5778, %v6098
      %v6100 = vpop.f32.mrf.mxu0
      %6101 = vmatprep.mubr.f32.mxu0 0.0
      %6102 = vmatmul.mubr.f32.gmra.mxu0 %v5922
      %v6103 = vpop.f32.mrf.mxu0
      %v6104 = vadd.f32 %v5783, %v6103
      %v6105 = vpop.f32.mrf.mxu0
      %6106 = vmatprep.mubr.f32.mxu0 0.0
      %6107 = vmatmul.mubr.f32.gmra.mxu0 %v5925
      %v6108 = vpop.f32.mrf.mxu0
      %v6109 = vadd.f32 %v5788, %v6108
      %v6110 = vpop.f32.mrf.mxu0
      %6111 = vmatprep.mubr.f32.mxu0 0.0
      %6112 = vmatmul.mubr.f32.gmra.mxu0 %v5928
      %v6113 = vpop.f32.mrf.mxu0
      %v6114 = vadd.f32 %v5793, %v6113
      %v6115 = vpop.f32.mrf.mxu0
      %6116 = vmatprep.mubr.f32.mxu0 0.0
      %6117 = vmatmul.mubr.f32.gmra.mxu0 %v5931
      %v6118 = vpop.f32.mrf.mxu0
      %v6119 = vadd.f32 %v5798, %v6118
      %v6120 = vpop.f32.mrf.mxu0
      %6121 = vmatprep.mubr.f32.mxu0 0.0
      %6122 = vmatmul.mubr.f32.gmra.mxu0 %v5934
      %v6123 = vpop.f32.mrf.mxu0
      %v6124 = vadd.f32 %v5803, %v6123
      %v6125 = vpop.f32.mrf.mxu0
      %6126 = vmatprep.mubr.f32.mxu0 0.0
      %6127 = vmatmul.mubr.f32.gmra.mxu0 %v5937
      %v6128 = vpop.f32.mrf.mxu0
      %v6129 = vadd.f32 %v5808, %v6128
      %v6130 = vpop.f32.mrf.mxu0
      %6131 = vmatprep.mubr.f32.mxu0 0.0
      %6132 = vmatmul.mubr.f32.gmra.mxu0 %v5940
      %v6133 = vpop.f32.mrf.mxu0
      %v6134 = vadd.f32 %v5813, %v6133
      %v6135 = vpop.f32.mrf.mxu0
      %6136 = vmatprep.mubr.f32.mxu0 0.0
      %6137 = vmatmul.mubr.f32.gmra.mxu0 %v5943
      %v6138 = vpop.f32.mrf.mxu0
      %v6139 = vadd.f32 %v5818, %v6138
      %v6140 = vpop.f32.mrf.mxu0
      %6141 = vmatprep.mubr.f32.mxu0 0.0
      %6142 = vmatmul.mubr.f32.gmra.mxu0 %v5946
      %v6143 = vpop.f32.mrf.mxu0
      %v6144 = vadd.f32 %v5823, %v6143
      %v6145 = vpop.f32.mrf.mxu0
      %6146 = vmatprep.mubr.f32.mxu0 0.0
      %6147 = vmatmul.mubr.f32.gmra.mxu0 %v5949
      %v6148 = vpop.f32.mrf.mxu0
      %v6149 = vadd.f32 %v5828, %v6148
      %v6150 = vpop.f32.mrf.mxu0
      %6151 = vmatprep.mubr.f32.mxu0 0.0
      %6152 = vmatmul.mubr.f32.gmra.mxu0 %v5952
      %v6153 = vpop.f32.mrf.mxu0
      %v6154 = vadd.f32 %v5833, %v6153
      %v6155 = vpop.f32.mrf.mxu0
      %6156 = vmatprep.mubr.f32.mxu0 0.0
      %6157 = vmatmul.mubr.f32.gmra.mxu0 %v5955
      %v6158 = vpop.f32.mrf.mxu0
      %v6159 = vadd.f32 %v5838, %v6158
      %v6160 = vpop.f32.mrf.mxu0
      %6161 = vmatprep.mubr.f32.mxu0 0.0
      %6162 = vmatmul.mubr.f32.gmra.mxu0 %v5958
      %v6163 = vpop.f32.mrf.mxu0
      %v6164 = vadd.f32 %v5843, %v6163
      %v6165 = vpop.f32.mrf.mxu0
      %6166 = vmatprep.mubr.f32.mxu0 0.0
      %6167 = vmatmul.mubr.f32.gmra.mxu0 %v5961
      %v6168 = vpop.f32.mrf.mxu0
      %v6169 = vadd.f32 %v5848, %v6168
      %v6170 = vpop.f32.mrf.mxu0
      %6171 = vmatprep.mubr.f32.mxu0 0.0
      %6172 = vmatmul.mubr.f32.gmra.mxu0 %v5964
      %v6173 = vpop.f32.mrf.mxu0
      %v6174 = vadd.f32 %v5853, %v6173
      %v6175 = vpop.f32.mrf.mxu0
      %6176 = vmatprep.mubr.f32.mxu0 0.0
      %6177 = vmatmul.mubr.f32.gmra.mxu0 %v5967
      %v6178 = vpop.f32.mrf.mxu0
      %v6179 = vadd.f32 %v5858, %v6178
      %v6180 = vpop.f32.mrf.mxu0
      %6181 = vmatprep.mubr.f32.mxu0 0.0
      %6182 = vmatmul.mubr.f32.gmra.mxu0 %v5970
      %v6183 = vpop.f32.mrf.mxu0
      %v6184 = vadd.f32 %v5863, %v6183
      %v6185 = vpop.f32.mrf.mxu0
      %6186 = vmatprep.mubr.f32.mxu0 0.0
      %6187 = vmatmul.mubr.f32.gmra.mxu0 %v5973
      %v6188 = vpop.f32.mrf.mxu0
      %v6189 = vadd.f32 %v5868, %v6188
      %v6190 = vpop.f32.mrf.mxu0
      %6191 = vmatprep.mubr.f32.mxu0 0.0
      %6192 = vmatmul.mubr.f32.gmra.mxu0 %v5976
      %v6193 = vpop.f32.mrf.mxu0
      %v6194 = vadd.f32 %v5873, %v6193
      %v6195 = vpop.f32.mrf.mxu0
      %6196 = vmatprep.mubr.f32.mxu0 0.0
      %6197 = vmatmul.mubr.f32.gmra.mxu0 %v5979
      %v6198 = vpop.f32.mrf.mxu0
      %v6199 = vadd.f32 %v5878, %v6198
      %v6200 = vpop.f32.mrf.mxu0
      %6201 = vmatprep.mubr.f32.mxu0 0.0
      %6202 = vmatmul.mubr.f32.gmra.mxu0 %v5982
      %v6203 = vpop.f32.mrf.mxu0
      %v6204 = vadd.f32 %v5883, %v6203
      %v6205 = vpop.f32.mrf.mxu0
      %6206 = vmatprep.mubr.f32.mxu0 0.0
      %6207 = vmatmul.mubr.f32.gmra.mxu0 %v5985
      %v6208 = vpop.f32.mrf.mxu0
      %v6209 = vadd.f32 %v5888, %v6208
      %v6210 = vpop.f32.mrf.mxu0
      %6211 = vdwg.mxu0
      %v6212 = vld [vmem:[#allocation3 + $0x2] sm:$0xff]
      %v6213 = vld [vmem:[#allocation3 + $0xa] sm:$0xff]
      %v6214 = vld [vmem:[#allocation3 + $0x1a] sm:$0xff]
      %v6215 = vld [vmem:[#allocation3 + $0x22] sm:$0xff]
      %v6216 = vld [vmem:[#allocation3 + $0x32] sm:$0xff]
      %v6217 = vld [vmem:[#allocation3 + $0x3a] sm:$0xff]
      %v6218 = vld [vmem:[#allocation3 + $0x4a] sm:$0xff]
      %v6219 = vld [vmem:[#allocation3 + $0x52] sm:$0xff]
      %v6220 = vld [vmem:[#allocation3 + $0x62] sm:$0xff]
      %v6221 = vld [vmem:[#allocation3 + $0x6a] sm:$0xff]
      %v6222 = vld [vmem:[#allocation3 + $0x7a] sm:$0xff]
      %v6223 = vld [vmem:[#allocation3 + $0x82] sm:$0xff]
      %v6224 = vld [vmem:[#allocation3 + $0x92] sm:$0xff]
      %v6225 = vld [vmem:[#allocation3 + $0x9a] sm:$0xff]
      %v6226 = vld [vmem:[#allocation3 + $0xaa] sm:$0xff]
      %v6227 = vld [vmem:[#allocation3 + $0xb2] sm:$0xff]
      %v6228 = vld [vmem:[#allocation3 + $0xc2] sm:$0xff]
      %v6229 = vld [vmem:[#allocation3 + $0xca] sm:$0xff]
      %v6230 = vld [vmem:[#allocation3 + $0xda] sm:$0xff]
      %v6231 = vld [vmem:[#allocation3 + $0xe2] sm:$0xff]
      %v6232 = vld [vmem:[#allocation3 + $0xf2] sm:$0xff]
      %v6233 = vld [vmem:[#allocation3 + $0xfa] sm:$0xff]
      %v6234 = vld [vmem:[#allocation3 + $0x10a] sm:$0xff]
      %v6235 = vld [vmem:[#allocation3 + $0x112] sm:$0xff]
      %v6236 = vld [vmem:[#allocation3 + $0x122] sm:$0xff]
      %v6237 = vld [vmem:[#allocation3 + $0x12a] sm:$0xff]
      %v6238 = vld [vmem:[#allocation3 + $0x13a] sm:$0xff]
      %v6239 = vld [vmem:[#allocation3 + $0x142] sm:$0xff]
      %v6240 = vld [vmem:[#allocation3 + $0x152] sm:$0xff]
      %v6241 = vld [vmem:[#allocation3 + $0x15a] sm:$0xff]
      %v6242 = vld [vmem:[#allocation3 + $0x16a] sm:$0xff]
      %v6243 = vld [vmem:[#allocation3 + $0x172] sm:$0xff]
      %s6244 = scalar_lea.vmem %s5, 64
      %v6245 = vld [vmem:[%s6244] sm:$0xff]
      %v6246 = vld [vmem:[%s6244 + $0x8] sm:$0xff]
      %v6247 = vld [vmem:[%s6244 + $0x10] sm:$0xff]
      %v6248 = vld [vmem:[%s6244 + $0x18] sm:$0xff]
      %v6250 = vsel %vm419, %v6212, 0
      %v6253 = vsel %vm419, %v6213, 0
      %v6256 = vsel %vm419, %v6214, 0
      %v6259 = vsel %vm419, %v6215, 0
      %v6262 = vsel %vm419, %v6216, 0
      %v6265 = vsel %vm419, %v6217, 0
      %v6268 = vsel %vm419, %v6218, 0
      %v6271 = vsel %vm419, %v6219, 0
      %v6274 = vsel %vm419, %v6220, 0
      %v6277 = vsel %vm419, %v6221, 0
      %v6280 = vsel %vm419, %v6222, 0
      %v6283 = vsel %vm419, %v6223, 0
      %v6286 = vsel %vm419, %v6224, 0
      %v6289 = vsel %vm419, %v6225, 0
      %v6292 = vsel %vm419, %v6226, 0
      %v6295 = vsel %vm419, %v6227, 0
      %v6298 = vsel %vm419, %v6228, 0
      %v6301 = vsel %vm419, %v6229, 0
      %v6304 = vsel %vm419, %v6230, 0
      %v6307 = vsel %vm419, %v6231, 0
      %v6310 = vsel %vm419, %v6232, 0
      %v6313 = vsel %vm419, %v6233, 0
      %v6316 = vsel %vm419, %v6234, 0
      %v6319 = vsel %vm419, %v6235, 0
      %v6322 = vsel %vm419, %v6236, 0
      %v6325 = vsel %vm419, %v6237, 0
      %v6328 = vsel %vm419, %v6238, 0
      %v6331 = vsel %vm419, %v6239, 0
      %v6334 = vsel %vm419, %v6240, 0
      %v6337 = vsel %vm419, %v6241, 0
      %v6340 = vsel %vm419, %v6242, 0
      %v6343 = vsel %vm419, %v6243, 0
      %6345 = vmatprep.subr.mxu0 0.0
      %6346 = vmatpush1.msra.mxu0 0.0
      %6347 = vmatprep.subr.mxu0 0.0
      %6348 = vmatpush1.msra.mxu0 0.0
      %6349 = vmatprep.subr.mxu0 0.0
      %6350 = vmatpush1.msra.mxu0 0.0
      %6351 = vmatprep.subr.mxu0 0.0
      %6352 = vmatpush1.msra.mxu0 0.0
      %6353 = vmatprep.subr.mxu0 0.0
      %6354 = vmatpush1.msra.mxu0 0.0
      %6355 = vmatprep.subr.mxu0 0.0
      %6356 = vmatpush1.msra.mxu0 0.0
      %6357 = vmatprep.subr.mxu0 0.0
      %6358 = vmatpush1.msra.mxu0 0.0
      %6359 = vmatprep.subr.mxu0 0.0
      %6360 = vmatpush1.msra.mxu0 0.0
      %6361 = vmatprep.subr.mxu0 0.0
      %6362 = vmatpush1.msra.mxu0 0.0
      %6363 = vmatprep.subr.mxu0 0.0
      %6364 = vmatpush1.msra.mxu0 0.0
      %6365 = vmatprep.subr.mxu0 0.0
      %6366 = vmatpush1.msra.mxu0 0.0
      %6367 = vmatprep.subr.mxu0 0.0
      %6368 = vmatpush1.msra.mxu0 0.0
      %6369 = vmatprep.subr.mxu0 0.0
      %6370 = vmatpush1.msra.mxu0 %v6248
      %6371 = vmatprep.subr.mxu0 0.0
      %6372 = vmatpush1.msra.mxu0 %v6247
      %6373 = vmatprep.subr.mxu0 0.0
      %6374 = vmatpush1.msra.mxu0 %v6246
      %6375 = vmatprep.subr.mxu0 0.0
      %6376 = vmatpush1.msra.mxu0 %v6245
      %6377 = vmatprep.subr.mxu0 0.0
      %6378 = vmatpush2.msra.mxu0 0.0
      %6379 = vmatprep.subr.mxu0 0.0
      %6380 = vmatpush2.msra.mxu0 0.0
      %6381 = vmatprep.subr.mxu0 0.0
      %6382 = vmatpush2.msra.mxu0 0.0
      %6383 = vmatprep.subr.mxu0 0.0
      %6384 = vmatpush2.msra.mxu0 0.0
      %6385 = vmatprep.subr.mxu0 0.0
      %6386 = vmatpush2.msra.mxu0 0.0
      %6387 = vmatprep.subr.mxu0 0.0
      %6388 = vmatpush2.msra.mxu0 0.0
      %6389 = vmatprep.subr.mxu0 0.0
      %6390 = vmatpush2.msra.mxu0 0.0
      %6391 = vmatprep.subr.mxu0 0.0
      %6392 = vmatpush2.msra.mxu0 0.0
      %6393 = vmatprep.subr.mxu0 0.0
      %6394 = vmatpush2.msra.mxu0 0.0
      %6395 = vmatprep.subr.mxu0 0.0
      %6396 = vmatpush2.msra.mxu0 0.0
      %6397 = vmatprep.subr.mxu0 0.0
      %6398 = vmatpush2.msra.mxu0 0.0
      %6399 = vmatprep.subr.mxu0 0.0
      %6400 = vmatpush2.msra.mxu0 0.0
      %6401 = vmatprep.subr.mxu0 0.0
      %6402 = vmatpush2.msra.mxu0 0.0
      %6403 = vmatprep.subr.mxu0 0.0
      %6404 = vmatpush2.msra.mxu0 0.0
      %6405 = vmatprep.subr.mxu0 0.0
      %6406 = vmatpush2.msra.mxu0 0.0
      %6407 = vmatprep.subr.mxu0 0.0
      %6408 = vmatpush2.msra.mxu0 0.0
      %6409 = vmatprep.mubr.f32.mxu0 0.0
      %6410 = vmatmul.mubr.f32.gmra.mxu0 %v6250
      %v6411 = vpop.f32.mrf.mxu0
      %v6412 = vadd.f32 0.0, %v6411
      %v6413 = vpop.f32.mrf.mxu0
      %6414 = vmatprep.mubr.f32.mxu0 0.0
      %6415 = vmatmul.mubr.f32.gmra.mxu0 %v6253
      %v6416 = vpop.f32.mrf.mxu0
      %v6417 = vadd.f32 0.0, %v6416
      %v6418 = vpop.f32.mrf.mxu0
      %6419 = vmatprep.mubr.f32.mxu0 0.0
      %6420 = vmatmul.mubr.f32.gmra.mxu0 %v6256
      %v6421 = vpop.f32.mrf.mxu0
      %v6422 = vadd.f32 0.0, %v6421
      %v6423 = vpop.f32.mrf.mxu0
      %6424 = vmatprep.mubr.f32.mxu0 0.0
      %6425 = vmatmul.mubr.f32.gmra.mxu0 %v6259
      %v6426 = vpop.f32.mrf.mxu0
      %v6427 = vadd.f32 0.0, %v6426
      %v6428 = vpop.f32.mrf.mxu0
      %6429 = vmatprep.mubr.f32.mxu0 0.0
      %6430 = vmatmul.mubr.f32.gmra.mxu0 %v6262
      %v6431 = vpop.f32.mrf.mxu0
      %v6432 = vadd.f32 0.0, %v6431
      %v6433 = vpop.f32.mrf.mxu0
      %6434 = vmatprep.mubr.f32.mxu0 0.0
      %6435 = vmatmul.mubr.f32.gmra.mxu0 %v6265
      %v6436 = vpop.f32.mrf.mxu0
      %v6437 = vadd.f32 0.0, %v6436
      %v6438 = vpop.f32.mrf.mxu0
      %6439 = vmatprep.mubr.f32.mxu0 0.0
      %6440 = vmatmul.mubr.f32.gmra.mxu0 %v6268
      %v6441 = vpop.f32.mrf.mxu0
      %v6442 = vadd.f32 0.0, %v6441
      %v6443 = vpop.f32.mrf.mxu0
      %6444 = vmatprep.mubr.f32.mxu0 0.0
      %6445 = vmatmul.mubr.f32.gmra.mxu0 %v6271
      %v6446 = vpop.f32.mrf.mxu0
      %v6447 = vadd.f32 0.0, %v6446
      %v6448 = vpop.f32.mrf.mxu0
      %6449 = vmatprep.mubr.f32.mxu0 0.0
      %6450 = vmatmul.mubr.f32.gmra.mxu0 %v6274
      %v6451 = vpop.f32.mrf.mxu0
      %v6452 = vadd.f32 0.0, %v6451
      %v6453 = vpop.f32.mrf.mxu0
      %6454 = vmatprep.mubr.f32.mxu0 0.0
      %6455 = vmatmul.mubr.f32.gmra.mxu0 %v6277
      %v6456 = vpop.f32.mrf.mxu0
      %v6457 = vadd.f32 0.0, %v6456
      %v6458 = vpop.f32.mrf.mxu0
      %6459 = vmatprep.mubr.f32.mxu0 0.0
      %6460 = vmatmul.mubr.f32.gmra.mxu0 %v6280
      %v6461 = vpop.f32.mrf.mxu0
      %v6462 = vadd.f32 0.0, %v6461
      %v6463 = vpop.f32.mrf.mxu0
      %6464 = vmatprep.mubr.f32.mxu0 0.0
      %6465 = vmatmul.mubr.f32.gmra.mxu0 %v6283
      %v6466 = vpop.f32.mrf.mxu0
      %v6467 = vadd.f32 0.0, %v6466
      %v6468 = vpop.f32.mrf.mxu0
      %6469 = vmatprep.mubr.f32.mxu0 0.0
      %6470 = vmatmul.mubr.f32.gmra.mxu0 %v6286
      %v6471 = vpop.f32.mrf.mxu0
      %v6472 = vadd.f32 0.0, %v6471
      %v6473 = vpop.f32.mrf.mxu0
      %6474 = vmatprep.mubr.f32.mxu0 0.0
      %6475 = vmatmul.mubr.f32.gmra.mxu0 %v6289
      %v6476 = vpop.f32.mrf.mxu0
      %v6477 = vadd.f32 0.0, %v6476
      %v6478 = vpop.f32.mrf.mxu0
      %6479 = vmatprep.mubr.f32.mxu0 0.0
      %6480 = vmatmul.mubr.f32.gmra.mxu0 %v6292
      %v6481 = vpop.f32.mrf.mxu0
      %v6482 = vadd.f32 0.0, %v6481
      %v6483 = vpop.f32.mrf.mxu0
      %6484 = vmatprep.mubr.f32.mxu0 0.0
      %6485 = vmatmul.mubr.f32.gmra.mxu0 %v6295
      %v6486 = vpop.f32.mrf.mxu0
      %v6487 = vadd.f32 0.0, %v6486
      %v6488 = vpop.f32.mrf.mxu0
      %6489 = vmatprep.mubr.f32.mxu0 0.0
      %6490 = vmatmul.mubr.f32.gmra.mxu0 %v6298
      %v6491 = vpop.f32.mrf.mxu0
      %v6492 = vadd.f32 0.0, %v6491
      %v6493 = vpop.f32.mrf.mxu0
      %6494 = vmatprep.mubr.f32.mxu0 0.0
      %6495 = vmatmul.mubr.f32.gmra.mxu0 %v6301
      %v6496 = vpop.f32.mrf.mxu0
      %v6497 = vadd.f32 0.0, %v6496
      %v6498 = vpop.f32.mrf.mxu0
      %6499 = vmatprep.mubr.f32.mxu0 0.0
      %6500 = vmatmul.mubr.f32.gmra.mxu0 %v6304
      %v6501 = vpop.f32.mrf.mxu0
      %v6502 = vadd.f32 0.0, %v6501
      %v6503 = vpop.f32.mrf.mxu0
      %6504 = vmatprep.mubr.f32.mxu0 0.0
      %6505 = vmatmul.mubr.f32.gmra.mxu0 %v6307
      %v6506 = vpop.f32.mrf.mxu0
      %v6507 = vadd.f32 0.0, %v6506
      %v6508 = vpop.f32.mrf.mxu0
      %6509 = vmatprep.mubr.f32.mxu0 0.0
      %6510 = vmatmul.mubr.f32.gmra.mxu0 %v6310
      %v6511 = vpop.f32.mrf.mxu0
      %v6512 = vadd.f32 0.0, %v6511
      %v6513 = vpop.f32.mrf.mxu0
      %6514 = vmatprep.mubr.f32.mxu0 0.0
      %6515 = vmatmul.mubr.f32.gmra.mxu0 %v6313
      %v6516 = vpop.f32.mrf.mxu0
      %v6517 = vadd.f32 0.0, %v6516
      %v6518 = vpop.f32.mrf.mxu0
      %6519 = vmatprep.mubr.f32.mxu0 0.0
      %6520 = vmatmul.mubr.f32.gmra.mxu0 %v6316
      %v6521 = vpop.f32.mrf.mxu0
      %v6522 = vadd.f32 0.0, %v6521
      %v6523 = vpop.f32.mrf.mxu0
      %6524 = vmatprep.mubr.f32.mxu0 0.0
      %6525 = vmatmul.mubr.f32.gmra.mxu0 %v6319
      %v6526 = vpop.f32.mrf.mxu0
      %v6527 = vadd.f32 0.0, %v6526
      %v6528 = vpop.f32.mrf.mxu0
      %6529 = vmatprep.mubr.f32.mxu0 0.0
      %6530 = vmatmul.mubr.f32.gmra.mxu0 %v6322
      %v6531 = vpop.f32.mrf.mxu0
      %v6532 = vadd.f32 0.0, %v6531
      %v6533 = vpop.f32.mrf.mxu0
      %6534 = vmatprep.mubr.f32.mxu0 0.0
      %6535 = vmatmul.mubr.f32.gmra.mxu0 %v6325
      %v6536 = vpop.f32.mrf.mxu0
      %v6537 = vadd.f32 0.0, %v6536
      %v6538 = vpop.f32.mrf.mxu0
      %6539 = vmatprep.mubr.f32.mxu0 0.0
      %6540 = vmatmul.mubr.f32.gmra.mxu0 %v6328
      %v6541 = vpop.f32.mrf.mxu0
      %v6542 = vadd.f32 0.0, %v6541
      %v6543 = vpop.f32.mrf.mxu0
      %6544 = vmatprep.mubr.f32.mxu0 0.0
      %6545 = vmatmul.mubr.f32.gmra.mxu0 %v6331
      %v6546 = vpop.f32.mrf.mxu0
      %v6547 = vadd.f32 0.0, %v6546
      %v6548 = vpop.f32.mrf.mxu0
      %6549 = vmatprep.mubr.f32.mxu0 0.0
      %6550 = vmatmul.mubr.f32.gmra.mxu0 %v6334
      %v6551 = vpop.f32.mrf.mxu0
      %v6552 = vadd.f32 0.0, %v6551
      %v6553 = vpop.f32.mrf.mxu0
      %6554 = vmatprep.mubr.f32.mxu0 0.0
      %6555 = vmatmul.mubr.f32.gmra.mxu0 %v6337
      %v6556 = vpop.f32.mrf.mxu0
      %v6557 = vadd.f32 0.0, %v6556
      %v6558 = vpop.f32.mrf.mxu0
      %6559 = vmatprep.mubr.f32.mxu0 0.0
      %6560 = vmatmul.mubr.f32.gmra.mxu0 %v6340
      %v6561 = vpop.f32.mrf.mxu0
      %v6562 = vadd.f32 0.0, %v6561
      %v6563 = vpop.f32.mrf.mxu0
      %6564 = vmatprep.mubr.f32.mxu0 0.0
      %6565 = vmatmul.mubr.f32.gmra.mxu0 %v6343
      %v6566 = vpop.f32.mrf.mxu0
      %v6567 = vadd.f32 0.0, %v6566
      %v6568 = vpop.f32.mrf.mxu0
      %6569 = vdwg.mxu0
      %v6570 = vadd.f32 %v6054, %v6412
      %v6571 = vadd.f32 %v6059, %v6417
      %v6572 = vadd.f32 %v6064, %v6422
      %v6573 = vadd.f32 %v6069, %v6427
      %v6574 = vadd.f32 %v6074, %v6432
      %v6575 = vadd.f32 %v6079, %v6437
      %v6576 = vadd.f32 %v6084, %v6442
      %v6577 = vadd.f32 %v6089, %v6447
      %v6578 = vadd.f32 %v6094, %v6452
      %v6579 = vadd.f32 %v6099, %v6457
      %v6580 = vadd.f32 %v6104, %v6462
      %v6581 = vadd.f32 %v6109, %v6467
      %v6582 = vadd.f32 %v6114, %v6472
      %v6583 = vadd.f32 %v6119, %v6477
      %v6584 = vadd.f32 %v6124, %v6482
      %v6585 = vadd.f32 %v6129, %v6487
      %v6586 = vadd.f32 %v6134, %v6492
      %v6587 = vadd.f32 %v6139, %v6497
      %v6588 = vadd.f32 %v6144, %v6502
      %v6589 = vadd.f32 %v6149, %v6507
      %v6590 = vadd.f32 %v6154, %v6512
      %v6591 = vadd.f32 %v6159, %v6517
      %v6592 = vadd.f32 %v6164, %v6522
      %v6593 = vadd.f32 %v6169, %v6527
      %v6594 = vadd.f32 %v6174, %v6532
      %v6595 = vadd.f32 %v6179, %v6537
      %v6596 = vadd.f32 %v6184, %v6542
      %v6597 = vadd.f32 %v6189, %v6547
      %v6598 = vadd.f32 %v6194, %v6552
      %v6599 = vadd.f32 %v6199, %v6557
      %v6600 = vadd.f32 %v6204, %v6562
      %v6601 = vadd.f32 %v6209, %v6567
      %v6602 = vld [vmem:[%s4073] sm:$0xff]
      %v6603 = vld [vmem:[%s4073 + $0x8] sm:$0xff]
      %v6604 = vld [vmem:[%s4073 + $0x18] sm:$0xff]
      %v6605 = vld [vmem:[%s4073 + $0x20] sm:$0xff]
      %v6606 = vld [vmem:[%s4073 + $0x30] sm:$0xff]
      %v6607 = vld [vmem:[%s4073 + $0x38] sm:$0xff]
      %v6608 = vld [vmem:[%s4073 + $0x48] sm:$0xff]
      %v6609 = vld [vmem:[%s4073 + $0x50] sm:$0xff]
      %v6610 = vld [vmem:[%s4073 + $0x60] sm:$0xff]
      %v6611 = vld [vmem:[%s4073 + $0x68] sm:$0xff]
      %v6612 = vld [vmem:[%s4073 + $0x78] sm:$0xff]
      %v6613 = vld [vmem:[%s4073 + $0x80] sm:$0xff]
      %v6614 = vld [vmem:[%s4073 + $0x90] sm:$0xff]
      %v6615 = vld [vmem:[%s4073 + $0x98] sm:$0xff]
      %v6616 = vld [vmem:[%s4073 + $0xa8] sm:$0xff]
      %v6617 = vld [vmem:[%s4073 + $0xb0] sm:$0xff]
      %v6618 = vld [vmem:[%s4073 + $0xc0] sm:$0xff]
      %v6619 = vld [vmem:[%s4073 + $0xc8] sm:$0xff]
      %v6620 = vld [vmem:[%s4073 + $0xd8] sm:$0xff]
      %v6621 = vld [vmem:[%s4073 + $0xe0] sm:$0xff]
      %v6622 = vld [vmem:[%s4073 + $0xf0] sm:$0xff]
      %v6623 = vld [vmem:[%s4073 + $0xf8] sm:$0xff]
      %v6624 = vld [vmem:[%s4073 + $0x108] sm:$0xff]
      %v6625 = vld [vmem:[%s4073 + $0x110] sm:$0xff]
      %v6626 = vld [vmem:[%s4073 + $0x120] sm:$0xff]
      %v6627 = vld [vmem:[%s4073 + $0x128] sm:$0xff]
      %v6628 = vld [vmem:[%s4073 + $0x138] sm:$0xff]
      %v6629 = vld [vmem:[%s4073 + $0x140] sm:$0xff]
      %v6630 = vld [vmem:[%s4073 + $0x150] sm:$0xff]
      %v6631 = vld [vmem:[%s4073 + $0x158] sm:$0xff]
      %v6632 = vld [vmem:[%s4073 + $0x168] sm:$0xff]
      %v6633 = vld [vmem:[%s4073 + $0x170] sm:$0xff]
      %s6634 = scalar_lea.vmem %s5, 96
      %v6635 = vld [vmem:[%s6634] sm:$0xff]
      %v6636 = vld [vmem:[%s6634 + $0x8] sm:$0xff]
      %v6637 = vld [vmem:[%s6634 + $0x10] sm:$0xff]
      %v6638 = vld [vmem:[%s6634 + $0x18] sm:$0xff]
      %v6640 = vsel %vm419, %v6602, 0
      %v6643 = vsel %vm419, %v6603, 0
      %v6646 = vsel %vm419, %v6604, 0
      %v6649 = vsel %vm419, %v6605, 0
      %v6652 = vsel %vm419, %v6606, 0
      %v6655 = vsel %vm419, %v6607, 0
      %v6658 = vsel %vm419, %v6608, 0
      %v6661 = vsel %vm419, %v6609, 0
      %v6664 = vsel %vm419, %v6610, 0
      %v6667 = vsel %vm419, %v6611, 0
      %v6670 = vsel %vm419, %v6612, 0
      %v6673 = vsel %vm419, %v6613, 0
      %v6676 = vsel %vm419, %v6614, 0
      %v6679 = vsel %vm419, %v6615, 0
      %v6682 = vsel %vm419, %v6616, 0
      %v6685 = vsel %vm419, %v6617, 0
      %v6688 = vsel %vm419, %v6618, 0
      %v6691 = vsel %vm419, %v6619, 0
      %v6694 = vsel %vm419, %v6620, 0
      %v6697 = vsel %vm419, %v6621, 0
      %v6700 = vsel %vm419, %v6622, 0
      %v6703 = vsel %vm419, %v6623, 0
      %v6706 = vsel %vm419, %v6624, 0
      %v6709 = vsel %vm419, %v6625, 0
      %v6712 = vsel %vm419, %v6626, 0
      %v6715 = vsel %vm419, %v6627, 0
      %v6718 = vsel %vm419, %v6628, 0
      %v6721 = vsel %vm419, %v6629, 0
      %v6724 = vsel %vm419, %v6630, 0
      %v6727 = vsel %vm419, %v6631, 0
      %v6730 = vsel %vm419, %v6632, 0
      %v6733 = vsel %vm419, %v6633, 0
      %6735 = vmatprep.subr.mxu0 0.0
      %6736 = vmatpush1.msra.mxu0 0.0
      %6737 = vmatprep.subr.mxu0 0.0
      %6738 = vmatpush1.msra.mxu0 0.0
      %6739 = vmatprep.subr.mxu0 0.0
      %6740 = vmatpush1.msra.mxu0 0.0
      %6741 = vmatprep.subr.mxu0 0.0
      %6742 = vmatpush1.msra.mxu0 0.0
      %6743 = vmatprep.subr.mxu0 0.0
      %6744 = vmatpush1.msra.mxu0 0.0
      %6745 = vmatprep.subr.mxu0 0.0
      %6746 = vmatpush1.msra.mxu0 0.0
      %6747 = vmatprep.subr.mxu0 0.0
      %6748 = vmatpush1.msra.mxu0 0.0
      %6749 = vmatprep.subr.mxu0 0.0
      %6750 = vmatpush1.msra.mxu0 0.0
      %6751 = vmatprep.subr.mxu0 0.0
      %6752 = vmatpush1.msra.mxu0 0.0
      %6753 = vmatprep.subr.mxu0 0.0
      %6754 = vmatpush1.msra.mxu0 0.0
      %6755 = vmatprep.subr.mxu0 0.0
      %6756 = vmatpush1.msra.mxu0 0.0
      %6757 = vmatprep.subr.mxu0 0.0
      %6758 = vmatpush1.msra.mxu0 0.0
      %6759 = vmatprep.subr.mxu0 0.0
      %6760 = vmatpush1.msra.mxu0 %v6638
      %6761 = vmatprep.subr.mxu0 0.0
      %6762 = vmatpush1.msra.mxu0 %v6637
      %6763 = vmatprep.subr.mxu0 0.0
      %6764 = vmatpush1.msra.mxu0 %v6636
      %6765 = vmatprep.subr.mxu0 0.0
      %6766 = vmatpush1.msra.mxu0 %v6635
      %6767 = vmatprep.subr.mxu0 0.0
      %6768 = vmatpush2.msra.mxu0 0.0
      %6769 = vmatprep.subr.mxu0 0.0
      %6770 = vmatpush2.msra.mxu0 0.0
      %6771 = vmatprep.subr.mxu0 0.0
      %6772 = vmatpush2.msra.mxu0 0.0
      %6773 = vmatprep.subr.mxu0 0.0
      %6774 = vmatpush2.msra.mxu0 0.0
      %6775 = vmatprep.subr.mxu0 0.0
      %6776 = vmatpush2.msra.mxu0 0.0
      %6777 = vmatprep.subr.mxu0 0.0
      %6778 = vmatpush2.msra.mxu0 0.0
      %6779 = vmatprep.subr.mxu0 0.0
      %6780 = vmatpush2.msra.mxu0 0.0
      %6781 = vmatprep.subr.mxu0 0.0
      %6782 = vmatpush2.msra.mxu0 0.0
      %6783 = vmatprep.subr.mxu0 0.0
      %6784 = vmatpush2.msra.mxu0 0.0
      %6785 = vmatprep.subr.mxu0 0.0
      %6786 = vmatpush2.msra.mxu0 0.0
      %6787 = vmatprep.subr.mxu0 0.0
      %6788 = vmatpush2.msra.mxu0 0.0
      %6789 = vmatprep.subr.mxu0 0.0
      %6790 = vmatpush2.msra.mxu0 0.0
      %6791 = vmatprep.subr.mxu0 0.0
      %6792 = vmatpush2.msra.mxu0 0.0
      %6793 = vmatprep.subr.mxu0 0.0
      %6794 = vmatpush2.msra.mxu0 0.0
      %6795 = vmatprep.subr.mxu0 0.0
      %6796 = vmatpush2.msra.mxu0 0.0
      %6797 = vmatprep.subr.mxu0 0.0
      %6798 = vmatpush2.msra.mxu0 0.0
      %6799 = vmatprep.mubr.f32.mxu0 0.0
      %6800 = vmatmul.mubr.f32.gmra.mxu0 %v6640
      %v6801 = vpop.f32.mrf.mxu0
      %v6802 = vadd.f32 0.0, %v6801
      %v6803 = vpop.f32.mrf.mxu0
      %6804 = vmatprep.mubr.f32.mxu0 0.0
      %6805 = vmatmul.mubr.f32.gmra.mxu0 %v6643
      %v6806 = vpop.f32.mrf.mxu0
      %v6807 = vadd.f32 0.0, %v6806
      %v6808 = vpop.f32.mrf.mxu0
      %6809 = vmatprep.mubr.f32.mxu0 0.0
      %6810 = vmatmul.mubr.f32.gmra.mxu0 %v6646
      %v6811 = vpop.f32.mrf.mxu0
      %v6812 = vadd.f32 0.0, %v6811
      %v6813 = vpop.f32.mrf.mxu0
      %6814 = vmatprep.mubr.f32.mxu0 0.0
      %6815 = vmatmul.mubr.f32.gmra.mxu0 %v6649
      %v6816 = vpop.f32.mrf.mxu0
      %v6817 = vadd.f32 0.0, %v6816
      %v6818 = vpop.f32.mrf.mxu0
      %6819 = vmatprep.mubr.f32.mxu0 0.0
      %6820 = vmatmul.mubr.f32.gmra.mxu0 %v6652
      %v6821 = vpop.f32.mrf.mxu0
      %v6822 = vadd.f32 0.0, %v6821
      %v6823 = vpop.f32.mrf.mxu0
      %6824 = vmatprep.mubr.f32.mxu0 0.0
      %6825 = vmatmul.mubr.f32.gmra.mxu0 %v6655
      %v6826 = vpop.f32.mrf.mxu0
      %v6827 = vadd.f32 0.0, %v6826
      %v6828 = vpop.f32.mrf.mxu0
      %6829 = vmatprep.mubr.f32.mxu0 0.0
      %6830 = vmatmul.mubr.f32.gmra.mxu0 %v6658
      %v6831 = vpop.f32.mrf.mxu0
      %v6832 = vadd.f32 0.0, %v6831
      %v6833 = vpop.f32.mrf.mxu0
      %6834 = vmatprep.mubr.f32.mxu0 0.0
      %6835 = vmatmul.mubr.f32.gmra.mxu0 %v6661
      %v6836 = vpop.f32.mrf.mxu0
      %v6837 = vadd.f32 0.0, %v6836
      %v6838 = vpop.f32.mrf.mxu0
      %6839 = vmatprep.mubr.f32.mxu0 0.0
      %6840 = vmatmul.mubr.f32.gmra.mxu0 %v6664
      %v6841 = vpop.f32.mrf.mxu0
      %v6842 = vadd.f32 0.0, %v6841
      %v6843 = vpop.f32.mrf.mxu0
      %6844 = vmatprep.mubr.f32.mxu0 0.0
      %6845 = vmatmul.mubr.f32.gmra.mxu0 %v6667
      %v6846 = vpop.f32.mrf.mxu0
      %v6847 = vadd.f32 0.0, %v6846
      %v6848 = vpop.f32.mrf.mxu0
      %6849 = vmatprep.mubr.f32.mxu0 0.0
      %6850 = vmatmul.mubr.f32.gmra.mxu0 %v6670
      %v6851 = vpop.f32.mrf.mxu0
      %v6852 = vadd.f32 0.0, %v6851
      %v6853 = vpop.f32.mrf.mxu0
      %6854 = vmatprep.mubr.f32.mxu0 0.0
      %6855 = vmatmul.mubr.f32.gmra.mxu0 %v6673
      %v6856 = vpop.f32.mrf.mxu0
      %v6857 = vadd.f32 0.0, %v6856
      %v6858 = vpop.f32.mrf.mxu0
      %6859 = vmatprep.mubr.f32.mxu0 0.0
      %6860 = vmatmul.mubr.f32.gmra.mxu0 %v6676
      %v6861 = vpop.f32.mrf.mxu0
      %v6862 = vadd.f32 0.0, %v6861
      %v6863 = vpop.f32.mrf.mxu0
      %6864 = vmatprep.mubr.f32.mxu0 0.0
      %6865 = vmatmul.mubr.f32.gmra.mxu0 %v6679
      %v6866 = vpop.f32.mrf.mxu0
      %v6867 = vadd.f32 0.0, %v6866
      %v6868 = vpop.f32.mrf.mxu0
      %6869 = vmatprep.mubr.f32.mxu0 0.0
      %6870 = vmatmul.mubr.f32.gmra.mxu0 %v6682
      %v6871 = vpop.f32.mrf.mxu0
      %v6872 = vadd.f32 0.0, %v6871
      %v6873 = vpop.f32.mrf.mxu0
      %6874 = vmatprep.mubr.f32.mxu0 0.0
      %6875 = vmatmul.mubr.f32.gmra.mxu0 %v6685
      %v6876 = vpop.f32.mrf.mxu0
      %v6877 = vadd.f32 0.0, %v6876
      %v6878 = vpop.f32.mrf.mxu0
      %6879 = vmatprep.mubr.f32.mxu0 0.0
      %6880 = vmatmul.mubr.f32.gmra.mxu0 %v6688
      %v6881 = vpop.f32.mrf.mxu0
      %v6882 = vadd.f32 0.0, %v6881
      %v6883 = vpop.f32.mrf.mxu0
      %6884 = vmatprep.mubr.f32.mxu0 0.0
      %6885 = vmatmul.mubr.f32.gmra.mxu0 %v6691
      %v6886 = vpop.f32.mrf.mxu0
      %v6887 = vadd.f32 0.0, %v6886
      %v6888 = vpop.f32.mrf.mxu0
      %6889 = vmatprep.mubr.f32.mxu0 0.0
      %6890 = vmatmul.mubr.f32.gmra.mxu0 %v6694
      %v6891 = vpop.f32.mrf.mxu0
      %v6892 = vadd.f32 0.0, %v6891
      %v6893 = vpop.f32.mrf.mxu0
      %6894 = vmatprep.mubr.f32.mxu0 0.0
      %6895 = vmatmul.mubr.f32.gmra.mxu0 %v6697
      %v6896 = vpop.f32.mrf.mxu0
      %v6897 = vadd.f32 0.0, %v6896
      %v6898 = vpop.f32.mrf.mxu0
      %6899 = vmatprep.mubr.f32.mxu0 0.0
      %6900 = vmatmul.mubr.f32.gmra.mxu0 %v6700
      %v6901 = vpop.f32.mrf.mxu0
      %v6902 = vadd.f32 0.0, %v6901
      %v6903 = vpop.f32.mrf.mxu0
      %6904 = vmatprep.mubr.f32.mxu0 0.0
      %6905 = vmatmul.mubr.f32.gmra.mxu0 %v6703
      %v6906 = vpop.f32.mrf.mxu0
      %v6907 = vadd.f32 0.0, %v6906
      %v6908 = vpop.f32.mrf.mxu0
      %6909 = vmatprep.mubr.f32.mxu0 0.0
      %6910 = vmatmul.mubr.f32.gmra.mxu0 %v6706
      %v6911 = vpop.f32.mrf.mxu0
      %v6912 = vadd.f32 0.0, %v6911
      %v6913 = vpop.f32.mrf.mxu0
      %6914 = vmatprep.mubr.f32.mxu0 0.0
      %6915 = vmatmul.mubr.f32.gmra.mxu0 %v6709
      %v6916 = vpop.f32.mrf.mxu0
      %v6917 = vadd.f32 0.0, %v6916
      %v6918 = vpop.f32.mrf.mxu0
      %6919 = vmatprep.mubr.f32.mxu0 0.0
      %6920 = vmatmul.mubr.f32.gmra.mxu0 %v6712
      %v6921 = vpop.f32.mrf.mxu0
      %v6922 = vadd.f32 0.0, %v6921
      %v6923 = vpop.f32.mrf.mxu0
      %6924 = vmatprep.mubr.f32.mxu0 0.0
      %6925 = vmatmul.mubr.f32.gmra.mxu0 %v6715
      %v6926 = vpop.f32.mrf.mxu0
      %v6927 = vadd.f32 0.0, %v6926
      %v6928 = vpop.f32.mrf.mxu0
      %6929 = vmatprep.mubr.f32.mxu0 0.0
      %6930 = vmatmul.mubr.f32.gmra.mxu0 %v6718
      %v6931 = vpop.f32.mrf.mxu0
      %v6932 = vadd.f32 0.0, %v6931
      %v6933 = vpop.f32.mrf.mxu0
      %6934 = vmatprep.mubr.f32.mxu0 0.0
      %6935 = vmatmul.mubr.f32.gmra.mxu0 %v6721
      %v6936 = vpop.f32.mrf.mxu0
      %v6937 = vadd.f32 0.0, %v6936
      %v6938 = vpop.f32.mrf.mxu0
      %6939 = vmatprep.mubr.f32.mxu0 0.0
      %6940 = vmatmul.mubr.f32.gmra.mxu0 %v6724
      %v6941 = vpop.f32.mrf.mxu0
      %v6942 = vadd.f32 0.0, %v6941
      %v6943 = vpop.f32.mrf.mxu0
      %6944 = vmatprep.mubr.f32.mxu0 0.0
      %6945 = vmatmul.mubr.f32.gmra.mxu0 %v6727
      %v6946 = vpop.f32.mrf.mxu0
      %v6947 = vadd.f32 0.0, %v6946
      %v6948 = vpop.f32.mrf.mxu0
      %6949 = vmatprep.mubr.f32.mxu0 0.0
      %6950 = vmatmul.mubr.f32.gmra.mxu0 %v6730
      %v6951 = vpop.f32.mrf.mxu0
      %v6952 = vadd.f32 0.0, %v6951
      %v6953 = vpop.f32.mrf.mxu0
      %6954 = vmatprep.mubr.f32.mxu0 0.0
      %6955 = vmatmul.mubr.f32.gmra.mxu0 %v6733
      %v6956 = vpop.f32.mrf.mxu0
      %v6957 = vadd.f32 0.0, %v6956
      %v6958 = vpop.f32.mrf.mxu0
      %6959 = vdwg.mxu0
      %v6960 = vadd.f32 %v6570, %v6802
      %v6961 = vadd.f32 %v6571, %v6807
      %v6962 = vadd.f32 %v6572, %v6812
      %v6963 = vadd.f32 %v6573, %v6817
      %v6964 = vadd.f32 %v6574, %v6822
      %v6965 = vadd.f32 %v6575, %v6827
      %v6966 = vadd.f32 %v6576, %v6832
      %v6967 = vadd.f32 %v6577, %v6837
      %v6968 = vadd.f32 %v6578, %v6842
      %v6969 = vadd.f32 %v6579, %v6847
      %v6970 = vadd.f32 %v6580, %v6852
      %v6971 = vadd.f32 %v6581, %v6857
      %v6972 = vadd.f32 %v6582, %v6862
      %v6973 = vadd.f32 %v6583, %v6867
      %v6974 = vadd.f32 %v6584, %v6872
      %v6975 = vadd.f32 %v6585, %v6877
      %v6976 = vadd.f32 %v6586, %v6882
      %v6977 = vadd.f32 %v6587, %v6887
      %v6978 = vadd.f32 %v6588, %v6892
      %v6979 = vadd.f32 %v6589, %v6897
      %v6980 = vadd.f32 %v6590, %v6902
      %v6981 = vadd.f32 %v6591, %v6907
      %v6982 = vadd.f32 %v6592, %v6912
      %v6983 = vadd.f32 %v6593, %v6917
      %v6984 = vadd.f32 %v6594, %v6922
      %v6985 = vadd.f32 %v6595, %v6927
      %v6986 = vadd.f32 %v6596, %v6932
      %v6987 = vadd.f32 %v6597, %v6937
      %v6988 = vadd.f32 %v6598, %v6942
      %v6989 = vadd.f32 %v6599, %v6947
      %v6990 = vadd.f32 %v6600, %v6952
      %v6991 = vadd.f32 %v6601, %v6957
      %v6992 = vld [vmem:[%s4073 + $0x1] sm:$0xff]
      %v6993 = vld [vmem:[%s4073 + $0x9] sm:$0xff]
      %v6994 = vld [vmem:[%s4073 + $0x19] sm:$0xff]
      %v6995 = vld [vmem:[%s4073 + $0x21] sm:$0xff]
      %v6996 = vld [vmem:[%s4073 + $0x31] sm:$0xff]
      %v6997 = vld [vmem:[%s4073 + $0x39] sm:$0xff]
      %v6998 = vld [vmem:[%s4073 + $0x49] sm:$0xff]
      %v6999 = vld [vmem:[%s4073 + $0x51] sm:$0xff]
      %v7000 = vld [vmem:[%s4073 + $0x61] sm:$0xff]
      %v7001 = vld [vmem:[%s4073 + $0x69] sm:$0xff]
      %v7002 = vld [vmem:[%s4073 + $0x79] sm:$0xff]
      %v7003 = vld [vmem:[%s4073 + $0x81] sm:$0xff]
      %v7004 = vld [vmem:[%s4073 + $0x91] sm:$0xff]
      %v7005 = vld [vmem:[%s4073 + $0x99] sm:$0xff]
      %v7006 = vld [vmem:[%s4073 + $0xa9] sm:$0xff]
      %v7007 = vld [vmem:[%s4073 + $0xb1] sm:$0xff]
      %v7008 = vld [vmem:[%s4073 + $0xc1] sm:$0xff]
      %v7009 = vld [vmem:[%s4073 + $0xc9] sm:$0xff]
      %v7010 = vld [vmem:[%s4073 + $0xd9] sm:$0xff]
      %v7011 = vld [vmem:[%s4073 + $0xe1] sm:$0xff]
      %v7012 = vld [vmem:[%s4073 + $0xf1] sm:$0xff]
      %v7013 = vld [vmem:[%s4073 + $0xf9] sm:$0xff]
      %v7014 = vld [vmem:[%s4073 + $0x109] sm:$0xff]
      %v7015 = vld [vmem:[%s4073 + $0x111] sm:$0xff]
      %v7016 = vld [vmem:[%s4073 + $0x121] sm:$0xff]
      %v7017 = vld [vmem:[%s4073 + $0x129] sm:$0xff]
      %v7018 = vld [vmem:[%s4073 + $0x139] sm:$0xff]
      %v7019 = vld [vmem:[%s4073 + $0x141] sm:$0xff]
      %v7020 = vld [vmem:[%s4073 + $0x151] sm:$0xff]
      %v7021 = vld [vmem:[%s4073 + $0x159] sm:$0xff]
      %v7022 = vld [vmem:[%s4073 + $0x169] sm:$0xff]
      %v7023 = vld [vmem:[%s4073 + $0x171] sm:$0xff]
      %s7024 = scalar_lea.vmem %s5, 128
      %v7025 = vld [vmem:[%s7024] sm:$0xff]
      %v7026 = vld [vmem:[%s7024 + $0x8] sm:$0xff]
      %v7027 = vld [vmem:[%s7024 + $0x10] sm:$0xff]
      %v7028 = vld [vmem:[%s7024 + $0x18] sm:$0xff]
      %v7030 = vsel %vm419, %v6992, 0
      %v7033 = vsel %vm419, %v6993, 0
      %v7036 = vsel %vm419, %v6994, 0
      %v7039 = vsel %vm419, %v6995, 0
      %v7042 = vsel %vm419, %v6996, 0
      %v7045 = vsel %vm419, %v6997, 0
      %v7048 = vsel %vm419, %v6998, 0
      %v7051 = vsel %vm419, %v6999, 0
      %v7054 = vsel %vm419, %v7000, 0
      %v7057 = vsel %vm419, %v7001, 0
      %v7060 = vsel %vm419, %v7002, 0
      %v7063 = vsel %vm419, %v7003, 0
      %v7066 = vsel %vm419, %v7004, 0
      %v7069 = vsel %vm419, %v7005, 0
      %v7072 = vsel %vm419, %v7006, 0
      %v7075 = vsel %vm419, %v7007, 0
      %v7078 = vsel %vm419, %v7008, 0
      %v7081 = vsel %vm419, %v7009, 0
      %v7084 = vsel %vm419, %v7010, 0
      %v7087 = vsel %vm419, %v7011, 0
      %v7090 = vsel %vm419, %v7012, 0
      %v7093 = vsel %vm419, %v7013, 0
      %v7096 = vsel %vm419, %v7014, 0
      %v7099 = vsel %vm419, %v7015, 0
      %v7102 = vsel %vm419, %v7016, 0
      %v7105 = vsel %vm419, %v7017, 0
      %v7108 = vsel %vm419, %v7018, 0
      %v7111 = vsel %vm419, %v7019, 0
      %v7114 = vsel %vm419, %v7020, 0
      %v7117 = vsel %vm419, %v7021, 0
      %v7120 = vsel %vm419, %v7022, 0
      %v7123 = vsel %vm419, %v7023, 0
      %7125 = vmatprep.subr.mxu0 0.0
      %7126 = vmatpush1.msra.mxu0 0.0
      %7127 = vmatprep.subr.mxu0 0.0
      %7128 = vmatpush1.msra.mxu0 0.0
      %7129 = vmatprep.subr.mxu0 0.0
      %7130 = vmatpush1.msra.mxu0 0.0
      %7131 = vmatprep.subr.mxu0 0.0
      %7132 = vmatpush1.msra.mxu0 0.0
      %7133 = vmatprep.subr.mxu0 0.0
      %7134 = vmatpush1.msra.mxu0 0.0
      %7135 = vmatprep.subr.mxu0 0.0
      %7136 = vmatpush1.msra.mxu0 0.0
      %7137 = vmatprep.subr.mxu0 0.0
      %7138 = vmatpush1.msra.mxu0 0.0
      %7139 = vmatprep.subr.mxu0 0.0
      %7140 = vmatpush1.msra.mxu0 0.0
      %7141 = vmatprep.subr.mxu0 0.0
      %7142 = vmatpush1.msra.mxu0 0.0
      %7143 = vmatprep.subr.mxu0 0.0
      %7144 = vmatpush1.msra.mxu0 0.0
      %7145 = vmatprep.subr.mxu0 0.0
      %7146 = vmatpush1.msra.mxu0 0.0
      %7147 = vmatprep.subr.mxu0 0.0
      %7148 = vmatpush1.msra.mxu0 0.0
      %7149 = vmatprep.subr.mxu0 0.0
      %7150 = vmatpush1.msra.mxu0 %v7028
      %7151 = vmatprep.subr.mxu0 0.0
      %7152 = vmatpush1.msra.mxu0 %v7027
      %7153 = vmatprep.subr.mxu0 0.0
      %7154 = vmatpush1.msra.mxu0 %v7026
      %7155 = vmatprep.subr.mxu0 0.0
      %7156 = vmatpush1.msra.mxu0 %v7025
      %7157 = vmatprep.subr.mxu0 0.0
      %7158 = vmatpush2.msra.mxu0 0.0
      %7159 = vmatprep.subr.mxu0 0.0
      %7160 = vmatpush2.msra.mxu0 0.0
      %7161 = vmatprep.subr.mxu0 0.0
      %7162 = vmatpush2.msra.mxu0 0.0
      %7163 = vmatprep.subr.mxu0 0.0
      %7164 = vmatpush2.msra.mxu0 0.0
      %7165 = vmatprep.subr.mxu0 0.0
      %7166 = vmatpush2.msra.mxu0 0.0
      %7167 = vmatprep.subr.mxu0 0.0
      %7168 = vmatpush2.msra.mxu0 0.0
      %7169 = vmatprep.subr.mxu0 0.0
      %7170 = vmatpush2.msra.mxu0 0.0
      %7171 = vmatprep.subr.mxu0 0.0
      %7172 = vmatpush2.msra.mxu0 0.0
      %7173 = vmatprep.subr.mxu0 0.0
      %7174 = vmatpush2.msra.mxu0 0.0
      %7175 = vmatprep.subr.mxu0 0.0
      %7176 = vmatpush2.msra.mxu0 0.0
      %7177 = vmatprep.subr.mxu0 0.0
      %7178 = vmatpush2.msra.mxu0 0.0
      %7179 = vmatprep.subr.mxu0 0.0
      %7180 = vmatpush2.msra.mxu0 0.0
      %7181 = vmatprep.subr.mxu0 0.0
      %7182 = vmatpush2.msra.mxu0 0.0
      %7183 = vmatprep.subr.mxu0 0.0
      %7184 = vmatpush2.msra.mxu0 0.0
      %7185 = vmatprep.subr.mxu0 0.0
      %7186 = vmatpush2.msra.mxu0 0.0
      %7187 = vmatprep.subr.mxu0 0.0
      %7188 = vmatpush2.msra.mxu0 0.0
      %7189 = vmatprep.mubr.f32.mxu0 0.0
      %7190 = vmatmul.mubr.f32.gmra.mxu0 %v7030
      %v7191 = vpop.f32.mrf.mxu0
      %v7192 = vadd.f32 0.0, %v7191
      %v7193 = vpop.f32.mrf.mxu0
      %7194 = vmatprep.mubr.f32.mxu0 0.0
      %7195 = vmatmul.mubr.f32.gmra.mxu0 %v7033
      %v7196 = vpop.f32.mrf.mxu0
      %v7197 = vadd.f32 0.0, %v7196
      %v7198 = vpop.f32.mrf.mxu0
      %7199 = vmatprep.mubr.f32.mxu0 0.0
      %7200 = vmatmul.mubr.f32.gmra.mxu0 %v7036
      %v7201 = vpop.f32.mrf.mxu0
      %v7202 = vadd.f32 0.0, %v7201
      %v7203 = vpop.f32.mrf.mxu0
      %7204 = vmatprep.mubr.f32.mxu0 0.0
      %7205 = vmatmul.mubr.f32.gmra.mxu0 %v7039
      %v7206 = vpop.f32.mrf.mxu0
      %v7207 = vadd.f32 0.0, %v7206
      %v7208 = vpop.f32.mrf.mxu0
      %7209 = vmatprep.mubr.f32.mxu0 0.0
      %7210 = vmatmul.mubr.f32.gmra.mxu0 %v7042
      %v7211 = vpop.f32.mrf.mxu0
      %v7212 = vadd.f32 0.0, %v7211
      %v7213 = vpop.f32.mrf.mxu0
      %7214 = vmatprep.mubr.f32.mxu0 0.0
      %7215 = vmatmul.mubr.f32.gmra.mxu0 %v7045
      %v7216 = vpop.f32.mrf.mxu0
      %v7217 = vadd.f32 0.0, %v7216
      %v7218 = vpop.f32.mrf.mxu0
      %7219 = vmatprep.mubr.f32.mxu0 0.0
      %7220 = vmatmul.mubr.f32.gmra.mxu0 %v7048
      %v7221 = vpop.f32.mrf.mxu0
      %v7222 = vadd.f32 0.0, %v7221
      %v7223 = vpop.f32.mrf.mxu0
      %7224 = vmatprep.mubr.f32.mxu0 0.0
      %7225 = vmatmul.mubr.f32.gmra.mxu0 %v7051
      %v7226 = vpop.f32.mrf.mxu0
      %v7227 = vadd.f32 0.0, %v7226
      %v7228 = vpop.f32.mrf.mxu0
      %7229 = vmatprep.mubr.f32.mxu0 0.0
      %7230 = vmatmul.mubr.f32.gmra.mxu0 %v7054
      %v7231 = vpop.f32.mrf.mxu0
      %v7232 = vadd.f32 0.0, %v7231
      %v7233 = vpop.f32.mrf.mxu0
      %7234 = vmatprep.mubr.f32.mxu0 0.0
      %7235 = vmatmul.mubr.f32.gmra.mxu0 %v7057
      %v7236 = vpop.f32.mrf.mxu0
      %v7237 = vadd.f32 0.0, %v7236
      %v7238 = vpop.f32.mrf.mxu0
      %7239 = vmatprep.mubr.f32.mxu0 0.0
      %7240 = vmatmul.mubr.f32.gmra.mxu0 %v7060
      %v7241 = vpop.f32.mrf.mxu0
      %v7242 = vadd.f32 0.0, %v7241
      %v7243 = vpop.f32.mrf.mxu0
      %7244 = vmatprep.mubr.f32.mxu0 0.0
      %7245 = vmatmul.mubr.f32.gmra.mxu0 %v7063
      %v7246 = vpop.f32.mrf.mxu0
      %v7247 = vadd.f32 0.0, %v7246
      %v7248 = vpop.f32.mrf.mxu0
      %7249 = vmatprep.mubr.f32.mxu0 0.0
      %7250 = vmatmul.mubr.f32.gmra.mxu0 %v7066
      %v7251 = vpop.f32.mrf.mxu0
      %v7252 = vadd.f32 0.0, %v7251
      %v7253 = vpop.f32.mrf.mxu0
      %7254 = vmatprep.mubr.f32.mxu0 0.0
      %7255 = vmatmul.mubr.f32.gmra.mxu0 %v7069
      %v7256 = vpop.f32.mrf.mxu0
      %v7257 = vadd.f32 0.0, %v7256
      %v7258 = vpop.f32.mrf.mxu0
      %7259 = vmatprep.mubr.f32.mxu0 0.0
      %7260 = vmatmul.mubr.f32.gmra.mxu0 %v7072
      %v7261 = vpop.f32.mrf.mxu0
      %v7262 = vadd.f32 0.0, %v7261
      %v7263 = vpop.f32.mrf.mxu0
      %7264 = vmatprep.mubr.f32.mxu0 0.0
      %7265 = vmatmul.mubr.f32.gmra.mxu0 %v7075
      %v7266 = vpop.f32.mrf.mxu0
      %v7267 = vadd.f32 0.0, %v7266
      %v7268 = vpop.f32.mrf.mxu0
      %7269 = vmatprep.mubr.f32.mxu0 0.0
      %7270 = vmatmul.mubr.f32.gmra.mxu0 %v7078
      %v7271 = vpop.f32.mrf.mxu0
      %v7272 = vadd.f32 0.0, %v7271
      %v7273 = vpop.f32.mrf.mxu0
      %7274 = vmatprep.mubr.f32.mxu0 0.0
      %7275 = vmatmul.mubr.f32.gmra.mxu0 %v7081
      %v7276 = vpop.f32.mrf.mxu0
      %v7277 = vadd.f32 0.0, %v7276
      %v7278 = vpop.f32.mrf.mxu0
      %7279 = vmatprep.mubr.f32.mxu0 0.0
      %7280 = vmatmul.mubr.f32.gmra.mxu0 %v7084
      %v7281 = vpop.f32.mrf.mxu0
      %v7282 = vadd.f32 0.0, %v7281
      %v7283 = vpop.f32.mrf.mxu0
      %7284 = vmatprep.mubr.f32.mxu0 0.0
      %7285 = vmatmul.mubr.f32.gmra.mxu0 %v7087
      %v7286 = vpop.f32.mrf.mxu0
      %v7287 = vadd.f32 0.0, %v7286
      %v7288 = vpop.f32.mrf.mxu0
      %7289 = vmatprep.mubr.f32.mxu0 0.0
      %7290 = vmatmul.mubr.f32.gmra.mxu0 %v7090
      %v7291 = vpop.f32.mrf.mxu0
      %v7292 = vadd.f32 0.0, %v7291
      %v7293 = vpop.f32.mrf.mxu0
      %7294 = vmatprep.mubr.f32.mxu0 0.0
      %7295 = vmatmul.mubr.f32.gmra.mxu0 %v7093
      %v7296 = vpop.f32.mrf.mxu0
      %v7297 = vadd.f32 0.0, %v7296
      %v7298 = vpop.f32.mrf.mxu0
      %7299 = vmatprep.mubr.f32.mxu0 0.0
      %7300 = vmatmul.mubr.f32.gmra.mxu0 %v7096
      %v7301 = vpop.f32.mrf.mxu0
      %v7302 = vadd.f32 0.0, %v7301
      %v7303 = vpop.f32.mrf.mxu0
      %7304 = vmatprep.mubr.f32.mxu0 0.0
      %7305 = vmatmul.mubr.f32.gmra.mxu0 %v7099
      %v7306 = vpop.f32.mrf.mxu0
      %v7307 = vadd.f32 0.0, %v7306
      %v7308 = vpop.f32.mrf.mxu0
      %7309 = vmatprep.mubr.f32.mxu0 0.0
      %7310 = vmatmul.mubr.f32.gmra.mxu0 %v7102
      %v7311 = vpop.f32.mrf.mxu0
      %v7312 = vadd.f32 0.0, %v7311
      %v7313 = vpop.f32.mrf.mxu0
      %7314 = vmatprep.mubr.f32.mxu0 0.0
      %7315 = vmatmul.mubr.f32.gmra.mxu0 %v7105
      %v7316 = vpop.f32.mrf.mxu0
      %v7317 = vadd.f32 0.0, %v7316
      %v7318 = vpop.f32.mrf.mxu0
      %7319 = vmatprep.mubr.f32.mxu0 0.0
      %7320 = vmatmul.mubr.f32.gmra.mxu0 %v7108
      %v7321 = vpop.f32.mrf.mxu0
      %v7322 = vadd.f32 0.0, %v7321
      %v7323 = vpop.f32.mrf.mxu0
      %7324 = vmatprep.mubr.f32.mxu0 0.0
      %7325 = vmatmul.mubr.f32.gmra.mxu0 %v7111
      %v7326 = vpop.f32.mrf.mxu0
      %v7327 = vadd.f32 0.0, %v7326
      %v7328 = vpop.f32.mrf.mxu0
      %7329 = vmatprep.mubr.f32.mxu0 0.0
      %7330 = vmatmul.mubr.f32.gmra.mxu0 %v7114
      %v7331 = vpop.f32.mrf.mxu0
      %v7332 = vadd.f32 0.0, %v7331
      %v7333 = vpop.f32.mrf.mxu0
      %7334 = vmatprep.mubr.f32.mxu0 0.0
      %7335 = vmatmul.mubr.f32.gmra.mxu0 %v7117
      %v7336 = vpop.f32.mrf.mxu0
      %v7337 = vadd.f32 0.0, %v7336
      %v7338 = vpop.f32.mrf.mxu0
      %7339 = vmatprep.mubr.f32.mxu0 0.0
      %7340 = vmatmul.mubr.f32.gmra.mxu0 %v7120
      %v7341 = vpop.f32.mrf.mxu0
      %v7342 = vadd.f32 0.0, %v7341
      %v7343 = vpop.f32.mrf.mxu0
      %7344 = vmatprep.mubr.f32.mxu0 0.0
      %7345 = vmatmul.mubr.f32.gmra.mxu0 %v7123
      %v7346 = vpop.f32.mrf.mxu0
      %v7347 = vadd.f32 0.0, %v7346
      %v7348 = vpop.f32.mrf.mxu0
      %7349 = vdwg.mxu0
      %v7350 = vadd.f32 %v6960, %v7192
      %v7351 = vadd.f32 %v6961, %v7197
      %v7352 = vadd.f32 %v6962, %v7202
      %v7353 = vadd.f32 %v6963, %v7207
      %v7354 = vadd.f32 %v6964, %v7212
      %v7355 = vadd.f32 %v6965, %v7217
      %v7356 = vadd.f32 %v6966, %v7222
      %v7357 = vadd.f32 %v6967, %v7227
      %v7358 = vadd.f32 %v6968, %v7232
      %v7359 = vadd.f32 %v6969, %v7237
      %v7360 = vadd.f32 %v6970, %v7242
      %v7361 = vadd.f32 %v6971, %v7247
      %v7362 = vadd.f32 %v6972, %v7252
      %v7363 = vadd.f32 %v6973, %v7257
      %v7364 = vadd.f32 %v6974, %v7262
      %v7365 = vadd.f32 %v6975, %v7267
      %v7366 = vadd.f32 %v6976, %v7272
      %v7367 = vadd.f32 %v6977, %v7277
      %v7368 = vadd.f32 %v6978, %v7282
      %v7369 = vadd.f32 %v6979, %v7287
      %v7370 = vadd.f32 %v6980, %v7292
      %v7371 = vadd.f32 %v6981, %v7297
      %v7372 = vadd.f32 %v6982, %v7302
      %v7373 = vadd.f32 %v6983, %v7307
      %v7374 = vadd.f32 %v6984, %v7312
      %v7375 = vadd.f32 %v6985, %v7317
      %v7376 = vadd.f32 %v6986, %v7322
      %v7377 = vadd.f32 %v6987, %v7327
      %v7378 = vadd.f32 %v6988, %v7332
      %v7379 = vadd.f32 %v6989, %v7337
      %v7380 = vadd.f32 %v6990, %v7342
      %v7381 = vadd.f32 %v6991, %v7347
      %v7382 = vld [vmem:[%s4073 + $0x2] sm:$0xff]
      %v7383 = vld [vmem:[%s4073 + $0xa] sm:$0xff]
      %v7384 = vld [vmem:[%s4073 + $0x1a] sm:$0xff]
      %v7385 = vld [vmem:[%s4073 + $0x22] sm:$0xff]
      %v7386 = vld [vmem:[%s4073 + $0x32] sm:$0xff]
      %v7387 = vld [vmem:[%s4073 + $0x3a] sm:$0xff]
      %v7388 = vld [vmem:[%s4073 + $0x4a] sm:$0xff]
      %v7389 = vld [vmem:[%s4073 + $0x52] sm:$0xff]
      %v7390 = vld [vmem:[%s4073 + $0x62] sm:$0xff]
      %v7391 = vld [vmem:[%s4073 + $0x6a] sm:$0xff]
      %v7392 = vld [vmem:[%s4073 + $0x7a] sm:$0xff]
      %v7393 = vld [vmem:[%s4073 + $0x82] sm:$0xff]
      %v7394 = vld [vmem:[%s4073 + $0x92] sm:$0xff]
      %v7395 = vld [vmem:[%s4073 + $0x9a] sm:$0xff]
      %v7396 = vld [vmem:[%s4073 + $0xaa] sm:$0xff]
      %v7397 = vld [vmem:[%s4073 + $0xb2] sm:$0xff]
      %v7398 = vld [vmem:[%s4073 + $0xc2] sm:$0xff]
      %v7399 = vld [vmem:[%s4073 + $0xca] sm:$0xff]
      %v7400 = vld [vmem:[%s4073 + $0xda] sm:$0xff]
      %v7401 = vld [vmem:[%s4073 + $0xe2] sm:$0xff]
      %v7402 = vld [vmem:[%s4073 + $0xf2] sm:$0xff]
      %v7403 = vld [vmem:[%s4073 + $0xfa] sm:$0xff]
      %v7404 = vld [vmem:[%s4073 + $0x10a] sm:$0xff]
      %v7405 = vld [vmem:[%s4073 + $0x112] sm:$0xff]
      %v7406 = vld [vmem:[%s4073 + $0x122] sm:$0xff]
      %v7407 = vld [vmem:[%s4073 + $0x12a] sm:$0xff]
      %v7408 = vld [vmem:[%s4073 + $0x13a] sm:$0xff]
      %v7409 = vld [vmem:[%s4073 + $0x142] sm:$0xff]
      %v7410 = vld [vmem:[%s4073 + $0x152] sm:$0xff]
      %v7411 = vld [vmem:[%s4073 + $0x15a] sm:$0xff]
      %v7412 = vld [vmem:[%s4073 + $0x16a] sm:$0xff]
      %v7413 = vld [vmem:[%s4073 + $0x172] sm:$0xff]
      %s7414 = scalar_lea.vmem %s5, 160
      %v7415 = vld [vmem:[%s7414] sm:$0xff]
      %v7416 = vld [vmem:[%s7414 + $0x8] sm:$0xff]
      %v7417 = vld [vmem:[%s7414 + $0x10] sm:$0xff]
      %v7418 = vld [vmem:[%s7414 + $0x18] sm:$0xff]
      %v7420 = vsel %vm419, %v7382, 0
      %v7423 = vsel %vm419, %v7383, 0
      %v7426 = vsel %vm419, %v7384, 0
      %v7429 = vsel %vm419, %v7385, 0
      %v7432 = vsel %vm419, %v7386, 0
      %v7435 = vsel %vm419, %v7387, 0
      %v7438 = vsel %vm419, %v7388, 0
      %v7441 = vsel %vm419, %v7389, 0
      %v7444 = vsel %vm419, %v7390, 0
      %v7447 = vsel %vm419, %v7391, 0
      %v7450 = vsel %vm419, %v7392, 0
      %v7453 = vsel %vm419, %v7393, 0
      %v7456 = vsel %vm419, %v7394, 0
      %v7459 = vsel %vm419, %v7395, 0
      %v7462 = vsel %vm419, %v7396, 0
      %v7465 = vsel %vm419, %v7397, 0
      %v7468 = vsel %vm419, %v7398, 0
      %v7471 = vsel %vm419, %v7399, 0
      %v7474 = vsel %vm419, %v7400, 0
      %v7477 = vsel %vm419, %v7401, 0
      %v7480 = vsel %vm419, %v7402, 0
      %v7483 = vsel %vm419, %v7403, 0
      %v7486 = vsel %vm419, %v7404, 0
      %v7489 = vsel %vm419, %v7405, 0
      %v7492 = vsel %vm419, %v7406, 0
      %v7495 = vsel %vm419, %v7407, 0
      %v7498 = vsel %vm419, %v7408, 0
      %v7501 = vsel %vm419, %v7409, 0
      %v7504 = vsel %vm419, %v7410, 0
      %v7507 = vsel %vm419, %v7411, 0
      %v7510 = vsel %vm419, %v7412, 0
      %v7513 = vsel %vm419, %v7413, 0
      %7515 = vmatprep.subr.mxu0 0.0
      %7516 = vmatpush1.msra.mxu0 0.0
      %7517 = vmatprep.subr.mxu0 0.0
      %7518 = vmatpush1.msra.mxu0 0.0
      %7519 = vmatprep.subr.mxu0 0.0
      %7520 = vmatpush1.msra.mxu0 0.0
      %7521 = vmatprep.subr.mxu0 0.0
      %7522 = vmatpush1.msra.mxu0 0.0
      %7523 = vmatprep.subr.mxu0 0.0
      %7524 = vmatpush1.msra.mxu0 0.0
      %7525 = vmatprep.subr.mxu0 0.0
      %7526 = vmatpush1.msra.mxu0 0.0
      %7527 = vmatprep.subr.mxu0 0.0
      %7528 = vmatpush1.msra.mxu0 0.0
      %7529 = vmatprep.subr.mxu0 0.0
      %7530 = vmatpush1.msra.mxu0 0.0
      %7531 = vmatprep.subr.mxu0 0.0
      %7532 = vmatpush1.msra.mxu0 0.0
      %7533 = vmatprep.subr.mxu0 0.0
      %7534 = vmatpush1.msra.mxu0 0.0
      %7535 = vmatprep.subr.mxu0 0.0
      %7536 = vmatpush1.msra.mxu0 0.0
      %7537 = vmatprep.subr.mxu0 0.0
      %7538 = vmatpush1.msra.mxu0 0.0
      %7539 = vmatprep.subr.mxu0 0.0
      %7540 = vmatpush1.msra.mxu0 %v7418
      %7541 = vmatprep.subr.mxu0 0.0
      %7542 = vmatpush1.msra.mxu0 %v7417
      %7543 = vmatprep.subr.mxu0 0.0
      %7544 = vmatpush1.msra.mxu0 %v7416
      %7545 = vmatprep.subr.mxu0 0.0
      %7546 = vmatpush1.msra.mxu0 %v7415
      %7547 = vmatprep.subr.mxu0 0.0
      %7548 = vmatpush2.msra.mxu0 0.0
      %7549 = vmatprep.subr.mxu0 0.0
      %7550 = vmatpush2.msra.mxu0 0.0
      %7551 = vmatprep.subr.mxu0 0.0
      %7552 = vmatpush2.msra.mxu0 0.0
      %7553 = vmatprep.subr.mxu0 0.0
      %7554 = vmatpush2.msra.mxu0 0.0
      %7555 = vmatprep.subr.mxu0 0.0
      %7556 = vmatpush2.msra.mxu0 0.0
      %7557 = vmatprep.subr.mxu0 0.0
      %7558 = vmatpush2.msra.mxu0 0.0
      %7559 = vmatprep.subr.mxu0 0.0
      %7560 = vmatpush2.msra.mxu0 0.0
      %7561 = vmatprep.subr.mxu0 0.0
      %7562 = vmatpush2.msra.mxu0 0.0
      %7563 = vmatprep.subr.mxu0 0.0
      %7564 = vmatpush2.msra.mxu0 0.0
      %7565 = vmatprep.subr.mxu0 0.0
      %7566 = vmatpush2.msra.mxu0 0.0
      %7567 = vmatprep.subr.mxu0 0.0
      %7568 = vmatpush2.msra.mxu0 0.0
      %7569 = vmatprep.subr.mxu0 0.0
      %7570 = vmatpush2.msra.mxu0 0.0
      %7571 = vmatprep.subr.mxu0 0.0
      %7572 = vmatpush2.msra.mxu0 0.0
      %7573 = vmatprep.subr.mxu0 0.0
      %7574 = vmatpush2.msra.mxu0 0.0
      %7575 = vmatprep.subr.mxu0 0.0
      %7576 = vmatpush2.msra.mxu0 0.0
      %7577 = vmatprep.subr.mxu0 0.0
      %7578 = vmatpush2.msra.mxu0 0.0
      %7579 = vmatprep.mubr.f32.mxu0 0.0
      %7580 = vmatmul.mubr.f32.gmra.mxu0 %v7420
      %v7581 = vpop.f32.mrf.mxu0
      %v7582 = vadd.f32 0.0, %v7581
      %v7583 = vpop.f32.mrf.mxu0
      %7584 = vmatprep.mubr.f32.mxu0 0.0
      %7585 = vmatmul.mubr.f32.gmra.mxu0 %v7423
      %v7586 = vpop.f32.mrf.mxu0
      %v7587 = vadd.f32 0.0, %v7586
      %v7588 = vpop.f32.mrf.mxu0
      %7589 = vmatprep.mubr.f32.mxu0 0.0
      %7590 = vmatmul.mubr.f32.gmra.mxu0 %v7426
      %v7591 = vpop.f32.mrf.mxu0
      %v7592 = vadd.f32 0.0, %v7591
      %v7593 = vpop.f32.mrf.mxu0
      %7594 = vmatprep.mubr.f32.mxu0 0.0
      %7595 = vmatmul.mubr.f32.gmra.mxu0 %v7429
      %v7596 = vpop.f32.mrf.mxu0
      %v7597 = vadd.f32 0.0, %v7596
      %v7598 = vpop.f32.mrf.mxu0
      %7599 = vmatprep.mubr.f32.mxu0 0.0
      %7600 = vmatmul.mubr.f32.gmra.mxu0 %v7432
      %v7601 = vpop.f32.mrf.mxu0
      %v7602 = vadd.f32 0.0, %v7601
      %v7603 = vpop.f32.mrf.mxu0
      %7604 = vmatprep.mubr.f32.mxu0 0.0
      %7605 = vmatmul.mubr.f32.gmra.mxu0 %v7435
      %v7606 = vpop.f32.mrf.mxu0
      %v7607 = vadd.f32 0.0, %v7606
      %v7608 = vpop.f32.mrf.mxu0
      %7609 = vmatprep.mubr.f32.mxu0 0.0
      %7610 = vmatmul.mubr.f32.gmra.mxu0 %v7438
      %v7611 = vpop.f32.mrf.mxu0
      %v7612 = vadd.f32 0.0, %v7611
      %v7613 = vpop.f32.mrf.mxu0
      %7614 = vmatprep.mubr.f32.mxu0 0.0
      %7615 = vmatmul.mubr.f32.gmra.mxu0 %v7441
      %v7616 = vpop.f32.mrf.mxu0
      %v7617 = vadd.f32 0.0, %v7616
      %v7618 = vpop.f32.mrf.mxu0
      %7619 = vmatprep.mubr.f32.mxu0 0.0
      %7620 = vmatmul.mubr.f32.gmra.mxu0 %v7444
      %v7621 = vpop.f32.mrf.mxu0
      %v7622 = vadd.f32 0.0, %v7621
      %v7623 = vpop.f32.mrf.mxu0
      %7624 = vmatprep.mubr.f32.mxu0 0.0
      %7625 = vmatmul.mubr.f32.gmra.mxu0 %v7447
      %v7626 = vpop.f32.mrf.mxu0
      %v7627 = vadd.f32 0.0, %v7626
      %v7628 = vpop.f32.mrf.mxu0
      %7629 = vmatprep.mubr.f32.mxu0 0.0
      %7630 = vmatmul.mubr.f32.gmra.mxu0 %v7450
      %v7631 = vpop.f32.mrf.mxu0
      %v7632 = vadd.f32 0.0, %v7631
      %v7633 = vpop.f32.mrf.mxu0
      %7634 = vmatprep.mubr.f32.mxu0 0.0
      %7635 = vmatmul.mubr.f32.gmra.mxu0 %v7453
      %v7636 = vpop.f32.mrf.mxu0
      %v7637 = vadd.f32 0.0, %v7636
      %v7638 = vpop.f32.mrf.mxu0
      %7639 = vmatprep.mubr.f32.mxu0 0.0
      %7640 = vmatmul.mubr.f32.gmra.mxu0 %v7456
      %v7641 = vpop.f32.mrf.mxu0
      %v7642 = vadd.f32 0.0, %v7641
      %v7643 = vpop.f32.mrf.mxu0
      %7644 = vmatprep.mubr.f32.mxu0 0.0
      %7645 = vmatmul.mubr.f32.gmra.mxu0 %v7459
      %v7646 = vpop.f32.mrf.mxu0
      %v7647 = vadd.f32 0.0, %v7646
      %v7648 = vpop.f32.mrf.mxu0
      %7649 = vmatprep.mubr.f32.mxu0 0.0
      %7650 = vmatmul.mubr.f32.gmra.mxu0 %v7462
      %v7651 = vpop.f32.mrf.mxu0
      %v7652 = vadd.f32 0.0, %v7651
      %v7653 = vpop.f32.mrf.mxu0
      %7654 = vmatprep.mubr.f32.mxu0 0.0
      %7655 = vmatmul.mubr.f32.gmra.mxu0 %v7465
      %v7656 = vpop.f32.mrf.mxu0
      %v7657 = vadd.f32 0.0, %v7656
      %v7658 = vpop.f32.mrf.mxu0
      %7659 = vmatprep.mubr.f32.mxu0 0.0
      %7660 = vmatmul.mubr.f32.gmra.mxu0 %v7468
      %v7661 = vpop.f32.mrf.mxu0
      %v7662 = vadd.f32 0.0, %v7661
      %v7663 = vpop.f32.mrf.mxu0
      %7664 = vmatprep.mubr.f32.mxu0 0.0
      %7665 = vmatmul.mubr.f32.gmra.mxu0 %v7471
      %v7666 = vpop.f32.mrf.mxu0
      %v7667 = vadd.f32 0.0, %v7666
      %v7668 = vpop.f32.mrf.mxu0
      %7669 = vmatprep.mubr.f32.mxu0 0.0
      %7670 = vmatmul.mubr.f32.gmra.mxu0 %v7474
      %v7671 = vpop.f32.mrf.mxu0
      %v7672 = vadd.f32 0.0, %v7671
      %v7673 = vpop.f32.mrf.mxu0
      %7674 = vmatprep.mubr.f32.mxu0 0.0
      %7675 = vmatmul.mubr.f32.gmra.mxu0 %v7477
      %v7676 = vpop.f32.mrf.mxu0
      %v7677 = vadd.f32 0.0, %v7676
      %v7678 = vpop.f32.mrf.mxu0
      %7679 = vmatprep.mubr.f32.mxu0 0.0
      %7680 = vmatmul.mubr.f32.gmra.mxu0 %v7480
      %v7681 = vpop.f32.mrf.mxu0
      %v7682 = vadd.f32 0.0, %v7681
      %v7683 = vpop.f32.mrf.mxu0
      %7684 = vmatprep.mubr.f32.mxu0 0.0
      %7685 = vmatmul.mubr.f32.gmra.mxu0 %v7483
      %v7686 = vpop.f32.mrf.mxu0
      %v7687 = vadd.f32 0.0, %v7686
      %v7688 = vpop.f32.mrf.mxu0
      %7689 = vmatprep.mubr.f32.mxu0 0.0
      %7690 = vmatmul.mubr.f32.gmra.mxu0 %v7486
      %v7691 = vpop.f32.mrf.mxu0
      %v7692 = vadd.f32 0.0, %v7691
      %v7693 = vpop.f32.mrf.mxu0
      %7694 = vmatprep.mubr.f32.mxu0 0.0
      %7695 = vmatmul.mubr.f32.gmra.mxu0 %v7489
      %v7696 = vpop.f32.mrf.mxu0
      %v7697 = vadd.f32 0.0, %v7696
      %v7698 = vpop.f32.mrf.mxu0
      %7699 = vmatprep.mubr.f32.mxu0 0.0
      %7700 = vmatmul.mubr.f32.gmra.mxu0 %v7492
      %v7701 = vpop.f32.mrf.mxu0
      %v7702 = vadd.f32 0.0, %v7701
      %v7703 = vpop.f32.mrf.mxu0
      %7704 = vmatprep.mubr.f32.mxu0 0.0
      %7705 = vmatmul.mubr.f32.gmra.mxu0 %v7495
      %v7706 = vpop.f32.mrf.mxu0
      %v7707 = vadd.f32 0.0, %v7706
      %v7708 = vpop.f32.mrf.mxu0
      %7709 = vmatprep.mubr.f32.mxu0 0.0
      %7710 = vmatmul.mubr.f32.gmra.mxu0 %v7498
      %v7711 = vpop.f32.mrf.mxu0
      %v7712 = vadd.f32 0.0, %v7711
      %v7713 = vpop.f32.mrf.mxu0
      %7714 = vmatprep.mubr.f32.mxu0 0.0
      %7715 = vmatmul.mubr.f32.gmra.mxu0 %v7501
      %v7716 = vpop.f32.mrf.mxu0
      %v7717 = vadd.f32 0.0, %v7716
      %v7718 = vpop.f32.mrf.mxu0
      %7719 = vmatprep.mubr.f32.mxu0 0.0
      %7720 = vmatmul.mubr.f32.gmra.mxu0 %v7504
      %v7721 = vpop.f32.mrf.mxu0
      %v7722 = vadd.f32 0.0, %v7721
      %v7723 = vpop.f32.mrf.mxu0
      %7724 = vmatprep.mubr.f32.mxu0 0.0
      %7725 = vmatmul.mubr.f32.gmra.mxu0 %v7507
      %v7726 = vpop.f32.mrf.mxu0
      %v7727 = vadd.f32 0.0, %v7726
      %v7728 = vpop.f32.mrf.mxu0
      %7729 = vmatprep.mubr.f32.mxu0 0.0
      %7730 = vmatmul.mubr.f32.gmra.mxu0 %v7510
      %v7731 = vpop.f32.mrf.mxu0
      %v7732 = vadd.f32 0.0, %v7731
      %v7733 = vpop.f32.mrf.mxu0
      %7734 = vmatprep.mubr.f32.mxu0 0.0
      %7735 = vmatmul.mubr.f32.gmra.mxu0 %v7513
      %v7736 = vpop.f32.mrf.mxu0
      %v7737 = vadd.f32 0.0, %v7736
      %v7738 = vpop.f32.mrf.mxu0
      %7739 = vdwg.mxu0
      %v7740 = vadd.f32 %v7350, %v7582
      %v7741 = vadd.f32 %v7351, %v7587
      %v7742 = vadd.f32 %v7352, %v7592
      %v7743 = vadd.f32 %v7353, %v7597
      %v7744 = vadd.f32 %v7354, %v7602
      %v7745 = vadd.f32 %v7355, %v7607
      %v7746 = vadd.f32 %v7356, %v7612
      %v7747 = vadd.f32 %v7357, %v7617
      %v7748 = vadd.f32 %v7358, %v7622
      %v7749 = vadd.f32 %v7359, %v7627
      %v7750 = vadd.f32 %v7360, %v7632
      %v7751 = vadd.f32 %v7361, %v7637
      %v7752 = vadd.f32 %v7362, %v7642
      %v7753 = vadd.f32 %v7363, %v7647
      %v7754 = vadd.f32 %v7364, %v7652
      %v7755 = vadd.f32 %v7365, %v7657
      %v7756 = vadd.f32 %v7366, %v7662
      %v7757 = vadd.f32 %v7367, %v7667
      %v7758 = vadd.f32 %v7368, %v7672
      %v7759 = vadd.f32 %v7369, %v7677
      %v7760 = vadd.f32 %v7370, %v7682
      %v7761 = vadd.f32 %v7371, %v7687
      %v7762 = vadd.f32 %v7372, %v7692
      %v7763 = vadd.f32 %v7373, %v7697
      %v7764 = vadd.f32 %v7374, %v7702
      %v7765 = vadd.f32 %v7375, %v7707
      %v7766 = vadd.f32 %v7376, %v7712
      %v7767 = vadd.f32 %v7377, %v7717
      %v7768 = vadd.f32 %v7378, %v7722
      %v7769 = vadd.f32 %v7379, %v7727
      %v7770 = vadd.f32 %v7380, %v7732
      %v7771 = vadd.f32 %v7381, %v7737
      %s7772 = scalar_lea.vmem [#allocation3], 48
      %v7773 = vld [vmem:[%s7772] sm:$0xff]
      %v7774 = vld [vmem:[%s7772 + $0x8] sm:$0xff]
      %v7775 = vld [vmem:[%s7772 + $0x18] sm:$0xff]
      %v7776 = vld [vmem:[%s7772 + $0x20] sm:$0xff]
      %v7777 = vld [vmem:[%s7772 + $0x30] sm:$0xff]
      %v7778 = vld [vmem:[%s7772 + $0x38] sm:$0xff]
      %v7779 = vld [vmem:[%s7772 + $0x48] sm:$0xff]
      %v7780 = vld [vmem:[%s7772 + $0x50] sm:$0xff]
      %v7781 = vld [vmem:[%s7772 + $0x60] sm:$0xff]
      %v7782 = vld [vmem:[%s7772 + $0x68] sm:$0xff]
      %v7783 = vld [vmem:[%s7772 + $0x78] sm:$0xff]
      %v7784 = vld [vmem:[%s7772 + $0x80] sm:$0xff]
      %v7785 = vld [vmem:[%s7772 + $0x90] sm:$0xff]
      %v7786 = vld [vmem:[%s7772 + $0x98] sm:$0xff]
      %v7787 = vld [vmem:[%s7772 + $0xa8] sm:$0xff]
      %v7788 = vld [vmem:[%s7772 + $0xb0] sm:$0xff]
      %v7789 = vld [vmem:[%s7772 + $0xc0] sm:$0xff]
      %v7790 = vld [vmem:[%s7772 + $0xc8] sm:$0xff]
      %v7791 = vld [vmem:[%s7772 + $0xd8] sm:$0xff]
      %v7792 = vld [vmem:[%s7772 + $0xe0] sm:$0xff]
      %v7793 = vld [vmem:[%s7772 + $0xf0] sm:$0xff]
      %v7794 = vld [vmem:[%s7772 + $0xf8] sm:$0xff]
      %v7795 = vld [vmem:[%s7772 + $0x108] sm:$0xff]
      %v7796 = vld [vmem:[%s7772 + $0x110] sm:$0xff]
      %v7797 = vld [vmem:[%s7772 + $0x120] sm:$0xff]
      %v7798 = vld [vmem:[%s7772 + $0x128] sm:$0xff]
      %v7799 = vld [vmem:[%s7772 + $0x138] sm:$0xff]
      %v7800 = vld [vmem:[%s7772 + $0x140] sm:$0xff]
      %v7801 = vld [vmem:[%s7772 + $0x150] sm:$0xff]
      %v7802 = vld [vmem:[%s7772 + $0x158] sm:$0xff]
      %v7803 = vld [vmem:[%s7772 + $0x168] sm:$0xff]
      %v7804 = vld [vmem:[%s7772 + $0x170] sm:$0xff]
      %s7805 = scalar_lea.vmem %s5, 192
      %v7806 = vld [vmem:[%s7805] sm:$0xff]
      %v7807 = vld [vmem:[%s7805 + $0x8] sm:$0xff]
      %v7808 = vld [vmem:[%s7805 + $0x10] sm:$0xff]
      %v7809 = vld [vmem:[%s7805 + $0x18] sm:$0xff]
      %v7811 = vsel %vm419, %v7773, 0
      %v7814 = vsel %vm419, %v7774, 0
      %v7817 = vsel %vm419, %v7775, 0
      %v7820 = vsel %vm419, %v7776, 0
      %v7823 = vsel %vm419, %v7777, 0
      %v7826 = vsel %vm419, %v7778, 0
      %v7829 = vsel %vm419, %v7779, 0
      %v7832 = vsel %vm419, %v7780, 0
      %v7835 = vsel %vm419, %v7781, 0
      %v7838 = vsel %vm419, %v7782, 0
      %v7841 = vsel %vm419, %v7783, 0
      %v7844 = vsel %vm419, %v7784, 0
      %v7847 = vsel %vm419, %v7785, 0
      %v7850 = vsel %vm419, %v7786, 0
      %v7853 = vsel %vm419, %v7787, 0
      %v7856 = vsel %vm419, %v7788, 0
      %v7859 = vsel %vm419, %v7789, 0
      %v7862 = vsel %vm419, %v7790, 0
      %v7865 = vsel %vm419, %v7791, 0
      %v7868 = vsel %vm419, %v7792, 0
      %v7871 = vsel %vm419, %v7793, 0
      %v7874 = vsel %vm419, %v7794, 0
      %v7877 = vsel %vm419, %v7795, 0
      %v7880 = vsel %vm419, %v7796, 0
      %v7883 = vsel %vm419, %v7797, 0
      %v7886 = vsel %vm419, %v7798, 0
      %v7889 = vsel %vm419, %v7799, 0
      %v7892 = vsel %vm419, %v7800, 0
      %v7895 = vsel %vm419, %v7801, 0
      %v7898 = vsel %vm419, %v7802, 0
      %v7901 = vsel %vm419, %v7803, 0
      %v7904 = vsel %vm419, %v7804, 0
      %7906 = vmatprep.subr.mxu0 0.0
      %7907 = vmatpush1.msra.mxu0 0.0
      %7908 = vmatprep.subr.mxu0 0.0
      %7909 = vmatpush1.msra.mxu0 0.0
      %7910 = vmatprep.subr.mxu0 0.0
      %7911 = vmatpush1.msra.mxu0 0.0
      %7912 = vmatprep.subr.mxu0 0.0
      %7913 = vmatpush1.msra.mxu0 0.0
      %7914 = vmatprep.subr.mxu0 0.0
      %7915 = vmatpush1.msra.mxu0 0.0
      %7916 = vmatprep.subr.mxu0 0.0
      %7917 = vmatpush1.msra.mxu0 0.0
      %7918 = vmatprep.subr.mxu0 0.0
      %7919 = vmatpush1.msra.mxu0 0.0
      %7920 = vmatprep.subr.mxu0 0.0
      %7921 = vmatpush1.msra.mxu0 0.0
      %7922 = vmatprep.subr.mxu0 0.0
      %7923 = vmatpush1.msra.mxu0 0.0
      %7924 = vmatprep.subr.mxu0 0.0
      %7925 = vmatpush1.msra.mxu0 0.0
      %7926 = vmatprep.subr.mxu0 0.0
      %7927 = vmatpush1.msra.mxu0 0.0
      %7928 = vmatprep.subr.mxu0 0.0
      %7929 = vmatpush1.msra.mxu0 0.0
      %7930 = vmatprep.subr.mxu0 0.0
      %7931 = vmatpush1.msra.mxu0 %v7809
      %7932 = vmatprep.subr.mxu0 0.0
      %7933 = vmatpush1.msra.mxu0 %v7808
      %7934 = vmatprep.subr.mxu0 0.0
      %7935 = vmatpush1.msra.mxu0 %v7807
      %7936 = vmatprep.subr.mxu0 0.0
      %7937 = vmatpush1.msra.mxu0 %v7806
      %7938 = vmatprep.subr.mxu0 0.0
      %7939 = vmatpush2.msra.mxu0 0.0
      %7940 = vmatprep.subr.mxu0 0.0
      %7941 = vmatpush2.msra.mxu0 0.0
      %7942 = vmatprep.subr.mxu0 0.0
      %7943 = vmatpush2.msra.mxu0 0.0
      %7944 = vmatprep.subr.mxu0 0.0
      %7945 = vmatpush2.msra.mxu0 0.0
      %7946 = vmatprep.subr.mxu0 0.0
      %7947 = vmatpush2.msra.mxu0 0.0
      %7948 = vmatprep.subr.mxu0 0.0
      %7949 = vmatpush2.msra.mxu0 0.0
      %7950 = vmatprep.subr.mxu0 0.0
      %7951 = vmatpush2.msra.mxu0 0.0
      %7952 = vmatprep.subr.mxu0 0.0
      %7953 = vmatpush2.msra.mxu0 0.0
      %7954 = vmatprep.subr.mxu0 0.0
      %7955 = vmatpush2.msra.mxu0 0.0
      %7956 = vmatprep.subr.mxu0 0.0
      %7957 = vmatpush2.msra.mxu0 0.0
      %7958 = vmatprep.subr.mxu0 0.0
      %7959 = vmatpush2.msra.mxu0 0.0
      %7960 = vmatprep.subr.mxu0 0.0
      %7961 = vmatpush2.msra.mxu0 0.0
      %7962 = vmatprep.subr.mxu0 0.0
      %7963 = vmatpush2.msra.mxu0 0.0
      %7964 = vmatprep.subr.mxu0 0.0
      %7965 = vmatpush2.msra.mxu0 0.0
      %7966 = vmatprep.subr.mxu0 0.0
      %7967 = vmatpush2.msra.mxu0 0.0
      %7968 = vmatprep.subr.mxu0 0.0
      %7969 = vmatpush2.msra.mxu0 0.0
      %7970 = vmatprep.mubr.f32.mxu0 0.0
      %7971 = vmatmul.mubr.f32.gmra.mxu0 %v7811
      %v7972 = vpop.f32.mrf.mxu0
      %v7973 = vadd.f32 0.0, %v7972
      %v7974 = vpop.f32.mrf.mxu0
      %7975 = vmatprep.mubr.f32.mxu0 0.0
      %7976 = vmatmul.mubr.f32.gmra.mxu0 %v7814
      %v7977 = vpop.f32.mrf.mxu0
      %v7978 = vadd.f32 0.0, %v7977
      %v7979 = vpop.f32.mrf.mxu0
      %7980 = vmatprep.mubr.f32.mxu0 0.0
      %7981 = vmatmul.mubr.f32.gmra.mxu0 %v7817
      %v7982 = vpop.f32.mrf.mxu0
      %v7983 = vadd.f32 0.0, %v7982
      %v7984 = vpop.f32.mrf.mxu0
      %7985 = vmatprep.mubr.f32.mxu0 0.0
      %7986 = vmatmul.mubr.f32.gmra.mxu0 %v7820
      %v7987 = vpop.f32.mrf.mxu0
      %v7988 = vadd.f32 0.0, %v7987
      %v7989 = vpop.f32.mrf.mxu0
      %7990 = vmatprep.mubr.f32.mxu0 0.0
      %7991 = vmatmul.mubr.f32.gmra.mxu0 %v7823
      %v7992 = vpop.f32.mrf.mxu0
      %v7993 = vadd.f32 0.0, %v7992
      %v7994 = vpop.f32.mrf.mxu0
      %7995 = vmatprep.mubr.f32.mxu0 0.0
      %7996 = vmatmul.mubr.f32.gmra.mxu0 %v7826
      %v7997 = vpop.f32.mrf.mxu0
      %v7998 = vadd.f32 0.0, %v7997
      %v7999 = vpop.f32.mrf.mxu0
      %8000 = vmatprep.mubr.f32.mxu0 0.0
      %8001 = vmatmul.mubr.f32.gmra.mxu0 %v7829
      %v8002 = vpop.f32.mrf.mxu0
      %v8003 = vadd.f32 0.0, %v8002
      %v8004 = vpop.f32.mrf.mxu0
      %8005 = vmatprep.mubr.f32.mxu0 0.0
      %8006 = vmatmul.mubr.f32.gmra.mxu0 %v7832
      %v8007 = vpop.f32.mrf.mxu0
      %v8008 = vadd.f32 0.0, %v8007
      %v8009 = vpop.f32.mrf.mxu0
      %8010 = vmatprep.mubr.f32.mxu0 0.0
      %8011 = vmatmul.mubr.f32.gmra.mxu0 %v7835
      %v8012 = vpop.f32.mrf.mxu0
      %v8013 = vadd.f32 0.0, %v8012
      %v8014 = vpop.f32.mrf.mxu0
      %8015 = vmatprep.mubr.f32.mxu0 0.0
      %8016 = vmatmul.mubr.f32.gmra.mxu0 %v7838
      %v8017 = vpop.f32.mrf.mxu0
      %v8018 = vadd.f32 0.0, %v8017
      %v8019 = vpop.f32.mrf.mxu0
      %8020 = vmatprep.mubr.f32.mxu0 0.0
      %8021 = vmatmul.mubr.f32.gmra.mxu0 %v7841
      %v8022 = vpop.f32.mrf.mxu0
      %v8023 = vadd.f32 0.0, %v8022
      %v8024 = vpop.f32.mrf.mxu0
      %8025 = vmatprep.mubr.f32.mxu0 0.0
      %8026 = vmatmul.mubr.f32.gmra.mxu0 %v7844
      %v8027 = vpop.f32.mrf.mxu0
      %v8028 = vadd.f32 0.0, %v8027
      %v8029 = vpop.f32.mrf.mxu0
      %8030 = vmatprep.mubr.f32.mxu0 0.0
      %8031 = vmatmul.mubr.f32.gmra.mxu0 %v7847
      %v8032 = vpop.f32.mrf.mxu0
      %v8033 = vadd.f32 0.0, %v8032
      %v8034 = vpop.f32.mrf.mxu0
      %8035 = vmatprep.mubr.f32.mxu0 0.0
      %8036 = vmatmul.mubr.f32.gmra.mxu0 %v7850
      %v8037 = vpop.f32.mrf.mxu0
      %v8038 = vadd.f32 0.0, %v8037
      %v8039 = vpop.f32.mrf.mxu0
      %8040 = vmatprep.mubr.f32.mxu0 0.0
      %8041 = vmatmul.mubr.f32.gmra.mxu0 %v7853
      %v8042 = vpop.f32.mrf.mxu0
      %v8043 = vadd.f32 0.0, %v8042
      %v8044 = vpop.f32.mrf.mxu0
      %8045 = vmatprep.mubr.f32.mxu0 0.0
      %8046 = vmatmul.mubr.f32.gmra.mxu0 %v7856
      %v8047 = vpop.f32.mrf.mxu0
      %v8048 = vadd.f32 0.0, %v8047
      %v8049 = vpop.f32.mrf.mxu0
      %8050 = vmatprep.mubr.f32.mxu0 0.0
      %8051 = vmatmul.mubr.f32.gmra.mxu0 %v7859
      %v8052 = vpop.f32.mrf.mxu0
      %v8053 = vadd.f32 0.0, %v8052
      %v8054 = vpop.f32.mrf.mxu0
      %8055 = vmatprep.mubr.f32.mxu0 0.0
      %8056 = vmatmul.mubr.f32.gmra.mxu0 %v7862
      %v8057 = vpop.f32.mrf.mxu0
      %v8058 = vadd.f32 0.0, %v8057
      %v8059 = vpop.f32.mrf.mxu0
      %8060 = vmatprep.mubr.f32.mxu0 0.0
      %8061 = vmatmul.mubr.f32.gmra.mxu0 %v7865
      %v8062 = vpop.f32.mrf.mxu0
      %v8063 = vadd.f32 0.0, %v8062
      %v8064 = vpop.f32.mrf.mxu0
      %8065 = vmatprep.mubr.f32.mxu0 0.0
      %8066 = vmatmul.mubr.f32.gmra.mxu0 %v7868
      %v8067 = vpop.f32.mrf.mxu0
      %v8068 = vadd.f32 0.0, %v8067
      %v8069 = vpop.f32.mrf.mxu0
      %8070 = vmatprep.mubr.f32.mxu0 0.0
      %8071 = vmatmul.mubr.f32.gmra.mxu0 %v7871
      %v8072 = vpop.f32.mrf.mxu0
      %v8073 = vadd.f32 0.0, %v8072
      %v8074 = vpop.f32.mrf.mxu0
      %8075 = vmatprep.mubr.f32.mxu0 0.0
      %8076 = vmatmul.mubr.f32.gmra.mxu0 %v7874
      %v8077 = vpop.f32.mrf.mxu0
      %v8078 = vadd.f32 0.0, %v8077
      %v8079 = vpop.f32.mrf.mxu0
      %8080 = vmatprep.mubr.f32.mxu0 0.0
      %8081 = vmatmul.mubr.f32.gmra.mxu0 %v7877
      %v8082 = vpop.f32.mrf.mxu0
      %v8083 = vadd.f32 0.0, %v8082
      %v8084 = vpop.f32.mrf.mxu0
      %8085 = vmatprep.mubr.f32.mxu0 0.0
      %8086 = vmatmul.mubr.f32.gmra.mxu0 %v7880
      %v8087 = vpop.f32.mrf.mxu0
      %v8088 = vadd.f32 0.0, %v8087
      %v8089 = vpop.f32.mrf.mxu0
      %8090 = vmatprep.mubr.f32.mxu0 0.0
      %8091 = vmatmul.mubr.f32.gmra.mxu0 %v7883
      %v8092 = vpop.f32.mrf.mxu0
      %v8093 = vadd.f32 0.0, %v8092
      %v8094 = vpop.f32.mrf.mxu0
      %8095 = vmatprep.mubr.f32.mxu0 0.0
      %8096 = vmatmul.mubr.f32.gmra.mxu0 %v7886
      %v8097 = vpop.f32.mrf.mxu0
      %v8098 = vadd.f32 0.0, %v8097
      %v8099 = vpop.f32.mrf.mxu0
      %8100 = vmatprep.mubr.f32.mxu0 0.0
      %8101 = vmatmul.mubr.f32.gmra.mxu0 %v7889
      %v8102 = vpop.f32.mrf.mxu0
      %v8103 = vadd.f32 0.0, %v8102
      %v8104 = vpop.f32.mrf.mxu0
      %8105 = vmatprep.mubr.f32.mxu0 0.0
      %8106 = vmatmul.mubr.f32.gmra.mxu0 %v7892
      %v8107 = vpop.f32.mrf.mxu0
      %v8108 = vadd.f32 0.0, %v8107
      %v8109 = vpop.f32.mrf.mxu0
      %8110 = vmatprep.mubr.f32.mxu0 0.0
      %8111 = vmatmul.mubr.f32.gmra.mxu0 %v7895
      %v8112 = vpop.f32.mrf.mxu0
      %v8113 = vadd.f32 0.0, %v8112
      %v8114 = vpop.f32.mrf.mxu0
      %8115 = vmatprep.mubr.f32.mxu0 0.0
      %8116 = vmatmul.mubr.f32.gmra.mxu0 %v7898
      %v8117 = vpop.f32.mrf.mxu0
      %v8118 = vadd.f32 0.0, %v8117
      %v8119 = vpop.f32.mrf.mxu0
      %8120 = vmatprep.mubr.f32.mxu0 0.0
      %8121 = vmatmul.mubr.f32.gmra.mxu0 %v7901
      %v8122 = vpop.f32.mrf.mxu0
      %v8123 = vadd.f32 0.0, %v8122
      %v8124 = vpop.f32.mrf.mxu0
      %8125 = vmatprep.mubr.f32.mxu0 0.0
      %8126 = vmatmul.mubr.f32.gmra.mxu0 %v7904
      %v8127 = vpop.f32.mrf.mxu0
      %v8128 = vadd.f32 0.0, %v8127
      %v8129 = vpop.f32.mrf.mxu0
      %8130 = vdwg.mxu0
      %v8131 = vadd.f32 %v7740, %v7973
      %v8132 = vadd.f32 %v7741, %v7978
      %v8133 = vadd.f32 %v7742, %v7983
      %v8134 = vadd.f32 %v7743, %v7988
      %v8135 = vadd.f32 %v7744, %v7993
      %v8136 = vadd.f32 %v7745, %v7998
      %v8137 = vadd.f32 %v7746, %v8003
      %v8138 = vadd.f32 %v7747, %v8008
      %v8139 = vadd.f32 %v7748, %v8013
      %v8140 = vadd.f32 %v7749, %v8018
      %v8141 = vadd.f32 %v7750, %v8023
      %v8142 = vadd.f32 %v7751, %v8028
      %v8143 = vadd.f32 %v7752, %v8033
      %v8144 = vadd.f32 %v7753, %v8038
      %v8145 = vadd.f32 %v7754, %v8043
      %v8146 = vadd.f32 %v7755, %v8048
      %v8147 = vadd.f32 %v7756, %v8053
      %v8148 = vadd.f32 %v7757, %v8058
      %v8149 = vadd.f32 %v7758, %v8063
      %v8150 = vadd.f32 %v7759, %v8068
      %v8151 = vadd.f32 %v7760, %v8073
      %v8152 = vadd.f32 %v7761, %v8078
      %v8153 = vadd.f32 %v7762, %v8083
      %v8154 = vadd.f32 %v7763, %v8088
      %v8155 = vadd.f32 %v7764, %v8093
      %v8156 = vadd.f32 %v7765, %v8098
      %v8157 = vadd.f32 %v7766, %v8103
      %v8158 = vadd.f32 %v7767, %v8108
      %v8159 = vadd.f32 %v7768, %v8113
      %v8160 = vadd.f32 %v7769, %v8118
      %v8161 = vadd.f32 %v7770, %v8123
      %v8162 = vadd.f32 %v7771, %v8128
      %v8163 = vld [vmem:[%s7772 + $0x1] sm:$0xff]
      %v8164 = vld [vmem:[%s7772 + $0x9] sm:$0xff]
      %v8165 = vld [vmem:[%s7772 + $0x19] sm:$0xff]
      %v8166 = vld [vmem:[%s7772 + $0x21] sm:$0xff]
      %v8167 = vld [vmem:[%s7772 + $0x31] sm:$0xff]
      %v8168 = vld [vmem:[%s7772 + $0x39] sm:$0xff]
      %v8169 = vld [vmem:[%s7772 + $0x49] sm:$0xff]
      %v8170 = vld [vmem:[%s7772 + $0x51] sm:$0xff]
      %v8171 = vld [vmem:[%s7772 + $0x61] sm:$0xff]
      %v8172 = vld [vmem:[%s7772 + $0x69] sm:$0xff]
      %v8173 = vld [vmem:[%s7772 + $0x79] sm:$0xff]
      %v8174 = vld [vmem:[%s7772 + $0x81] sm:$0xff]
      %v8175 = vld [vmem:[%s7772 + $0x91] sm:$0xff]
      %v8176 = vld [vmem:[%s7772 + $0x99] sm:$0xff]
      %v8177 = vld [vmem:[%s7772 + $0xa9] sm:$0xff]
      %v8178 = vld [vmem:[%s7772 + $0xb1] sm:$0xff]
      %v8179 = vld [vmem:[%s7772 + $0xc1] sm:$0xff]
      %v8180 = vld [vmem:[%s7772 + $0xc9] sm:$0xff]
      %v8181 = vld [vmem:[%s7772 + $0xd9] sm:$0xff]
      %v8182 = vld [vmem:[%s7772 + $0xe1] sm:$0xff]
      %v8183 = vld [vmem:[%s7772 + $0xf1] sm:$0xff]
      %v8184 = vld [vmem:[%s7772 + $0xf9] sm:$0xff]
      %v8185 = vld [vmem:[%s7772 + $0x109] sm:$0xff]
      %v8186 = vld [vmem:[%s7772 + $0x111] sm:$0xff]
      %v8187 = vld [vmem:[%s7772 + $0x121] sm:$0xff]
      %v8188 = vld [vmem:[%s7772 + $0x129] sm:$0xff]
      %v8189 = vld [vmem:[%s7772 + $0x139] sm:$0xff]
      %v8190 = vld [vmem:[%s7772 + $0x141] sm:$0xff]
      %v8191 = vld [vmem:[%s7772 + $0x151] sm:$0xff]
      %v8192 = vld [vmem:[%s7772 + $0x159] sm:$0xff]
      %v8193 = vld [vmem:[%s7772 + $0x169] sm:$0xff]
      %v8194 = vld [vmem:[%s7772 + $0x171] sm:$0xff]
      %s8195 = scalar_lea.vmem %s5, 224
      %v8196 = vld [vmem:[%s8195] sm:$0xff]
      %v8197 = vld [vmem:[%s8195 + $0x8] sm:$0xff]
      %v8198 = vld [vmem:[%s8195 + $0x10] sm:$0xff]
      %v8199 = vld [vmem:[%s8195 + $0x18] sm:$0xff]
      %v8201 = vsel %vm419, %v8163, 0
      %v8204 = vsel %vm419, %v8164, 0
      %v8207 = vsel %vm419, %v8165, 0
      %v8210 = vsel %vm419, %v8166, 0
      %v8213 = vsel %vm419, %v8167, 0
      %v8216 = vsel %vm419, %v8168, 0
      %v8219 = vsel %vm419, %v8169, 0
      %v8222 = vsel %vm419, %v8170, 0
      %v8225 = vsel %vm419, %v8171, 0
      %v8228 = vsel %vm419, %v8172, 0
      %v8231 = vsel %vm419, %v8173, 0
      %v8234 = vsel %vm419, %v8174, 0
      %v8237 = vsel %vm419, %v8175, 0
      %v8240 = vsel %vm419, %v8176, 0
      %v8243 = vsel %vm419, %v8177, 0
      %v8246 = vsel %vm419, %v8178, 0
      %v8249 = vsel %vm419, %v8179, 0
      %v8252 = vsel %vm419, %v8180, 0
      %v8255 = vsel %vm419, %v8181, 0
      %v8258 = vsel %vm419, %v8182, 0
      %v8261 = vsel %vm419, %v8183, 0
      %v8264 = vsel %vm419, %v8184, 0
      %v8267 = vsel %vm419, %v8185, 0
      %v8270 = vsel %vm419, %v8186, 0
      %v8273 = vsel %vm419, %v8187, 0
      %v8276 = vsel %vm419, %v8188, 0
      %v8279 = vsel %vm419, %v8189, 0
      %v8282 = vsel %vm419, %v8190, 0
      %v8285 = vsel %vm419, %v8191, 0
      %v8288 = vsel %vm419, %v8192, 0
      %v8291 = vsel %vm419, %v8193, 0
      %v8294 = vsel %vm419, %v8194, 0
      %8296 = vmatprep.subr.mxu0 0.0
      %8297 = vmatpush1.msra.mxu0 0.0
      %8298 = vmatprep.subr.mxu0 0.0
      %8299 = vmatpush1.msra.mxu0 0.0
      %8300 = vmatprep.subr.mxu0 0.0
      %8301 = vmatpush1.msra.mxu0 0.0
      %8302 = vmatprep.subr.mxu0 0.0
      %8303 = vmatpush1.msra.mxu0 0.0
      %8304 = vmatprep.subr.mxu0 0.0
      %8305 = vmatpush1.msra.mxu0 0.0
      %8306 = vmatprep.subr.mxu0 0.0
      %8307 = vmatpush1.msra.mxu0 0.0
      %8308 = vmatprep.subr.mxu0 0.0
      %8309 = vmatpush1.msra.mxu0 0.0
      %8310 = vmatprep.subr.mxu0 0.0
      %8311 = vmatpush1.msra.mxu0 0.0
      %8312 = vmatprep.subr.mxu0 0.0
      %8313 = vmatpush1.msra.mxu0 0.0
      %8314 = vmatprep.subr.mxu0 0.0
      %8315 = vmatpush1.msra.mxu0 0.0
      %8316 = vmatprep.subr.mxu0 0.0
      %8317 = vmatpush1.msra.mxu0 0.0
      %8318 = vmatprep.subr.mxu0 0.0
      %8319 = vmatpush1.msra.mxu0 0.0
      %8320 = vmatprep.subr.mxu0 0.0
      %8321 = vmatpush1.msra.mxu0 %v8199
      %8322 = vmatprep.subr.mxu0 0.0
      %8323 = vmatpush1.msra.mxu0 %v8198
      %8324 = vmatprep.subr.mxu0 0.0
      %8325 = vmatpush1.msra.mxu0 %v8197
      %8326 = vmatprep.subr.mxu0 0.0
      %8327 = vmatpush1.msra.mxu0 %v8196
      %8328 = vmatprep.subr.mxu0 0.0
      %8329 = vmatpush2.msra.mxu0 0.0
      %8330 = vmatprep.subr.mxu0 0.0
      %8331 = vmatpush2.msra.mxu0 0.0
      %8332 = vmatprep.subr.mxu0 0.0
      %8333 = vmatpush2.msra.mxu0 0.0
      %8334 = vmatprep.subr.mxu0 0.0
      %8335 = vmatpush2.msra.mxu0 0.0
      %8336 = vmatprep.subr.mxu0 0.0
      %8337 = vmatpush2.msra.mxu0 0.0
      %8338 = vmatprep.subr.mxu0 0.0
      %8339 = vmatpush2.msra.mxu0 0.0
      %8340 = vmatprep.subr.mxu0 0.0
      %8341 = vmatpush2.msra.mxu0 0.0
      %8342 = vmatprep.subr.mxu0 0.0
      %8343 = vmatpush2.msra.mxu0 0.0
      %8344 = vmatprep.subr.mxu0 0.0
      %8345 = vmatpush2.msra.mxu0 0.0
      %8346 = vmatprep.subr.mxu0 0.0
      %8347 = vmatpush2.msra.mxu0 0.0
      %8348 = vmatprep.subr.mxu0 0.0
      %8349 = vmatpush2.msra.mxu0 0.0
      %8350 = vmatprep.subr.mxu0 0.0
      %8351 = vmatpush2.msra.mxu0 0.0
      %8352 = vmatprep.subr.mxu0 0.0
      %8353 = vmatpush2.msra.mxu0 0.0
      %8354 = vmatprep.subr.mxu0 0.0
      %8355 = vmatpush2.msra.mxu0 0.0
      %8356 = vmatprep.subr.mxu0 0.0
      %8357 = vmatpush2.msra.mxu0 0.0
      %8358 = vmatprep.subr.mxu0 0.0
      %8359 = vmatpush2.msra.mxu0 0.0
      %8360 = vmatprep.mubr.f32.mxu0 0.0
      %8361 = vmatmul.mubr.f32.gmra.mxu0 %v8201
      %v8362 = vpop.f32.mrf.mxu0
      %v8363 = vadd.f32 0.0, %v8362
      %v8364 = vpop.f32.mrf.mxu0
      %8365 = vmatprep.mubr.f32.mxu0 0.0
      %8366 = vmatmul.mubr.f32.gmra.mxu0 %v8204
      %v8367 = vpop.f32.mrf.mxu0
      %v8368 = vadd.f32 0.0, %v8367
      %v8369 = vpop.f32.mrf.mxu0
      %8370 = vmatprep.mubr.f32.mxu0 0.0
      %8371 = vmatmul.mubr.f32.gmra.mxu0 %v8207
      %v8372 = vpop.f32.mrf.mxu0
      %v8373 = vadd.f32 0.0, %v8372
      %v8374 = vpop.f32.mrf.mxu0
      %8375 = vmatprep.mubr.f32.mxu0 0.0
      %8376 = vmatmul.mubr.f32.gmra.mxu0 %v8210
      %v8377 = vpop.f32.mrf.mxu0
      %v8378 = vadd.f32 0.0, %v8377
      %v8379 = vpop.f32.mrf.mxu0
      %8380 = vmatprep.mubr.f32.mxu0 0.0
      %8381 = vmatmul.mubr.f32.gmra.mxu0 %v8213
      %v8382 = vpop.f32.mrf.mxu0
      %v8383 = vadd.f32 0.0, %v8382
      %v8384 = vpop.f32.mrf.mxu0
      %8385 = vmatprep.mubr.f32.mxu0 0.0
      %8386 = vmatmul.mubr.f32.gmra.mxu0 %v8216
      %v8387 = vpop.f32.mrf.mxu0
      %v8388 = vadd.f32 0.0, %v8387
      %v8389 = vpop.f32.mrf.mxu0
      %8390 = vmatprep.mubr.f32.mxu0 0.0
      %8391 = vmatmul.mubr.f32.gmra.mxu0 %v8219
      %v8392 = vpop.f32.mrf.mxu0
      %v8393 = vadd.f32 0.0, %v8392
      %v8394 = vpop.f32.mrf.mxu0
      %8395 = vmatprep.mubr.f32.mxu0 0.0
      %8396 = vmatmul.mubr.f32.gmra.mxu0 %v8222
      %v8397 = vpop.f32.mrf.mxu0
      %v8398 = vadd.f32 0.0, %v8397
      %v8399 = vpop.f32.mrf.mxu0
      %8400 = vmatprep.mubr.f32.mxu0 0.0
      %8401 = vmatmul.mubr.f32.gmra.mxu0 %v8225
      %v8402 = vpop.f32.mrf.mxu0
      %v8403 = vadd.f32 0.0, %v8402
      %v8404 = vpop.f32.mrf.mxu0
      %8405 = vmatprep.mubr.f32.mxu0 0.0
      %8406 = vmatmul.mubr.f32.gmra.mxu0 %v8228
      %v8407 = vpop.f32.mrf.mxu0
      %v8408 = vadd.f32 0.0, %v8407
      %v8409 = vpop.f32.mrf.mxu0
      %8410 = vmatprep.mubr.f32.mxu0 0.0
      %8411 = vmatmul.mubr.f32.gmra.mxu0 %v8231
      %v8412 = vpop.f32.mrf.mxu0
      %v8413 = vadd.f32 0.0, %v8412
      %v8414 = vpop.f32.mrf.mxu0
      %8415 = vmatprep.mubr.f32.mxu0 0.0
      %8416 = vmatmul.mubr.f32.gmra.mxu0 %v8234
      %v8417 = vpop.f32.mrf.mxu0
      %v8418 = vadd.f32 0.0, %v8417
      %v8419 = vpop.f32.mrf.mxu0
      %8420 = vmatprep.mubr.f32.mxu0 0.0
      %8421 = vmatmul.mubr.f32.gmra.mxu0 %v8237
      %v8422 = vpop.f32.mrf.mxu0
      %v8423 = vadd.f32 0.0, %v8422
      %v8424 = vpop.f32.mrf.mxu0
      %8425 = vmatprep.mubr.f32.mxu0 0.0
      %8426 = vmatmul.mubr.f32.gmra.mxu0 %v8240
      %v8427 = vpop.f32.mrf.mxu0
      %v8428 = vadd.f32 0.0, %v8427
      %v8429 = vpop.f32.mrf.mxu0
      %8430 = vmatprep.mubr.f32.mxu0 0.0
      %8431 = vmatmul.mubr.f32.gmra.mxu0 %v8243
      %v8432 = vpop.f32.mrf.mxu0
      %v8433 = vadd.f32 0.0, %v8432
      %v8434 = vpop.f32.mrf.mxu0
      %8435 = vmatprep.mubr.f32.mxu0 0.0
      %8436 = vmatmul.mubr.f32.gmra.mxu0 %v8246
      %v8437 = vpop.f32.mrf.mxu0
      %v8438 = vadd.f32 0.0, %v8437
      %v8439 = vpop.f32.mrf.mxu0
      %8440 = vmatprep.mubr.f32.mxu0 0.0
      %8441 = vmatmul.mubr.f32.gmra.mxu0 %v8249
      %v8442 = vpop.f32.mrf.mxu0
      %v8443 = vadd.f32 0.0, %v8442
      %v8444 = vpop.f32.mrf.mxu0
      %8445 = vmatprep.mubr.f32.mxu0 0.0
      %8446 = vmatmul.mubr.f32.gmra.mxu0 %v8252
      %v8447 = vpop.f32.mrf.mxu0
      %v8448 = vadd.f32 0.0, %v8447
      %v8449 = vpop.f32.mrf.mxu0
      %8450 = vmatprep.mubr.f32.mxu0 0.0
      %8451 = vmatmul.mubr.f32.gmra.mxu0 %v8255
      %v8452 = vpop.f32.mrf.mxu0
      %v8453 = vadd.f32 0.0, %v8452
      %v8454 = vpop.f32.mrf.mxu0
      %8455 = vmatprep.mubr.f32.mxu0 0.0
      %8456 = vmatmul.mubr.f32.gmra.mxu0 %v8258
      %v8457 = vpop.f32.mrf.mxu0
      %v8458 = vadd.f32 0.0, %v8457
      %v8459 = vpop.f32.mrf.mxu0
      %8460 = vmatprep.mubr.f32.mxu0 0.0
      %8461 = vmatmul.mubr.f32.gmra.mxu0 %v8261
      %v8462 = vpop.f32.mrf.mxu0
      %v8463 = vadd.f32 0.0, %v8462
      %v8464 = vpop.f32.mrf.mxu0
      %8465 = vmatprep.mubr.f32.mxu0 0.0
      %8466 = vmatmul.mubr.f32.gmra.mxu0 %v8264
      %v8467 = vpop.f32.mrf.mxu0
      %v8468 = vadd.f32 0.0, %v8467
      %v8469 = vpop.f32.mrf.mxu0
      %8470 = vmatprep.mubr.f32.mxu0 0.0
      %8471 = vmatmul.mubr.f32.gmra.mxu0 %v8267
      %v8472 = vpop.f32.mrf.mxu0
      %v8473 = vadd.f32 0.0, %v8472
      %v8474 = vpop.f32.mrf.mxu0
      %8475 = vmatprep.mubr.f32.mxu0 0.0
      %8476 = vmatmul.mubr.f32.gmra.mxu0 %v8270
      %v8477 = vpop.f32.mrf.mxu0
      %v8478 = vadd.f32 0.0, %v8477
      %v8479 = vpop.f32.mrf.mxu0
      %8480 = vmatprep.mubr.f32.mxu0 0.0
      %8481 = vmatmul.mubr.f32.gmra.mxu0 %v8273
      %v8482 = vpop.f32.mrf.mxu0
      %v8483 = vadd.f32 0.0, %v8482
      %v8484 = vpop.f32.mrf.mxu0
      %8485 = vmatprep.mubr.f32.mxu0 0.0
      %8486 = vmatmul.mubr.f32.gmra.mxu0 %v8276
      %v8487 = vpop.f32.mrf.mxu0
      %v8488 = vadd.f32 0.0, %v8487
      %v8489 = vpop.f32.mrf.mxu0
      %8490 = vmatprep.mubr.f32.mxu0 0.0
      %8491 = vmatmul.mubr.f32.gmra.mxu0 %v8279
      %v8492 = vpop.f32.mrf.mxu0
      %v8493 = vadd.f32 0.0, %v8492
      %v8494 = vpop.f32.mrf.mxu0
      %8495 = vmatprep.mubr.f32.mxu0 0.0
      %8496 = vmatmul.mubr.f32.gmra.mxu0 %v8282
      %v8497 = vpop.f32.mrf.mxu0
      %v8498 = vadd.f32 0.0, %v8497
      %v8499 = vpop.f32.mrf.mxu0
      %8500 = vmatprep.mubr.f32.mxu0 0.0
      %8501 = vmatmul.mubr.f32.gmra.mxu0 %v8285
      %v8502 = vpop.f32.mrf.mxu0
      %v8503 = vadd.f32 0.0, %v8502
      %v8504 = vpop.f32.mrf.mxu0
      %8505 = vmatprep.mubr.f32.mxu0 0.0
      %8506 = vmatmul.mubr.f32.gmra.mxu0 %v8288
      %v8507 = vpop.f32.mrf.mxu0
      %v8508 = vadd.f32 0.0, %v8507
      %v8509 = vpop.f32.mrf.mxu0
      %8510 = vmatprep.mubr.f32.mxu0 0.0
      %8511 = vmatmul.mubr.f32.gmra.mxu0 %v8291
      %v8512 = vpop.f32.mrf.mxu0
      %v8513 = vadd.f32 0.0, %v8512
      %v8514 = vpop.f32.mrf.mxu0
      %8515 = vmatprep.mubr.f32.mxu0 0.0
      %8516 = vmatmul.mubr.f32.gmra.mxu0 %v8294
      %v8517 = vpop.f32.mrf.mxu0
      %v8518 = vadd.f32 0.0, %v8517
      %v8519 = vpop.f32.mrf.mxu0
      %8520 = vdwg.mxu0
      %v8521 = vadd.f32 %v8131, %v8363
      %v8522 = vadd.f32 %v8132, %v8368
      %v8523 = vadd.f32 %v8133, %v8373
      %v8524 = vadd.f32 %v8134, %v8378
      %v8525 = vadd.f32 %v8135, %v8383
      %v8526 = vadd.f32 %v8136, %v8388
      %v8527 = vadd.f32 %v8137, %v8393
      %v8528 = vadd.f32 %v8138, %v8398
      %v8529 = vadd.f32 %v8139, %v8403
      %v8530 = vadd.f32 %v8140, %v8408
      %v8531 = vadd.f32 %v8141, %v8413
      %v8532 = vadd.f32 %v8142, %v8418
      %v8533 = vadd.f32 %v8143, %v8423
      %v8534 = vadd.f32 %v8144, %v8428
      %v8535 = vadd.f32 %v8145, %v8433
      %v8536 = vadd.f32 %v8146, %v8438
      %v8537 = vadd.f32 %v8147, %v8443
      %v8538 = vadd.f32 %v8148, %v8448
      %v8539 = vadd.f32 %v8149, %v8453
      %v8540 = vadd.f32 %v8150, %v8458
      %v8541 = vadd.f32 %v8151, %v8463
      %v8542 = vadd.f32 %v8152, %v8468
      %v8543 = vadd.f32 %v8153, %v8473
      %v8544 = vadd.f32 %v8154, %v8478
      %v8545 = vadd.f32 %v8155, %v8483
      %v8546 = vadd.f32 %v8156, %v8488
      %v8547 = vadd.f32 %v8157, %v8493
      %v8548 = vadd.f32 %v8158, %v8498
      %v8549 = vadd.f32 %v8159, %v8503
      %v8550 = vadd.f32 %v8160, %v8508
      %v8551 = vadd.f32 %v8161, %v8513
      %v8552 = vadd.f32 %v8162, %v8518
      %v8553 = vld [vmem:[%s7772 + $0x2] sm:$0xff]
      %v8554 = vld [vmem:[%s7772 + $0xa] sm:$0xff]
      %v8555 = vld [vmem:[%s7772 + $0x1a] sm:$0xff]
      %v8556 = vld [vmem:[%s7772 + $0x22] sm:$0xff]
      %v8557 = vld [vmem:[%s7772 + $0x32] sm:$0xff]
      %v8558 = vld [vmem:[%s7772 + $0x3a] sm:$0xff]
      %v8559 = vld [vmem:[%s7772 + $0x4a] sm:$0xff]
      %v8560 = vld [vmem:[%s7772 + $0x52] sm:$0xff]
      %v8561 = vld [vmem:[%s7772 + $0x62] sm:$0xff]
      %v8562 = vld [vmem:[%s7772 + $0x6a] sm:$0xff]
      %v8563 = vld [vmem:[%s7772 + $0x7a] sm:$0xff]
      %v8564 = vld [vmem:[%s7772 + $0x82] sm:$0xff]
      %v8565 = vld [vmem:[%s7772 + $0x92] sm:$0xff]
      %v8566 = vld [vmem:[%s7772 + $0x9a] sm:$0xff]
      %v8567 = vld [vmem:[%s7772 + $0xaa] sm:$0xff]
      %v8568 = vld [vmem:[%s7772 + $0xb2] sm:$0xff]
      %v8569 = vld [vmem:[%s7772 + $0xc2] sm:$0xff]
      %v8570 = vld [vmem:[%s7772 + $0xca] sm:$0xff]
      %v8571 = vld [vmem:[%s7772 + $0xda] sm:$0xff]
      %v8572 = vld [vmem:[%s7772 + $0xe2] sm:$0xff]
      %v8573 = vld [vmem:[%s7772 + $0xf2] sm:$0xff]
      %v8574 = vld [vmem:[%s7772 + $0xfa] sm:$0xff]
      %v8575 = vld [vmem:[%s7772 + $0x10a] sm:$0xff]
      %v8576 = vld [vmem:[%s7772 + $0x112] sm:$0xff]
      %v8577 = vld [vmem:[%s7772 + $0x122] sm:$0xff]
      %v8578 = vld [vmem:[%s7772 + $0x12a] sm:$0xff]
      %v8579 = vld [vmem:[%s7772 + $0x13a] sm:$0xff]
      %v8580 = vld [vmem:[%s7772 + $0x142] sm:$0xff]
      %v8581 = vld [vmem:[%s7772 + $0x152] sm:$0xff]
      %v8582 = vld [vmem:[%s7772 + $0x15a] sm:$0xff]
      %v8583 = vld [vmem:[%s7772 + $0x16a] sm:$0xff]
      %v8584 = vld [vmem:[%s7772 + $0x172] sm:$0xff]
      %s8585 = scalar_lea.vmem %s5, 256
      %v8586 = vld [vmem:[%s8585] sm:$0xff]
      %v8587 = vld [vmem:[%s8585 + $0x8] sm:$0xff]
      %v8588 = vld [vmem:[%s8585 + $0x10] sm:$0xff]
      %v8589 = vld [vmem:[%s8585 + $0x18] sm:$0xff]
      %v8591 = vsel %vm419, %v8553, 0
      %v8594 = vsel %vm419, %v8554, 0
      %v8597 = vsel %vm419, %v8555, 0
      %v8600 = vsel %vm419, %v8556, 0
      %v8603 = vsel %vm419, %v8557, 0
      %v8606 = vsel %vm419, %v8558, 0
      %v8609 = vsel %vm419, %v8559, 0
      %v8612 = vsel %vm419, %v8560, 0
      %v8615 = vsel %vm419, %v8561, 0
      %v8618 = vsel %vm419, %v8562, 0
      %v8621 = vsel %vm419, %v8563, 0
      %v8624 = vsel %vm419, %v8564, 0
      %v8627 = vsel %vm419, %v8565, 0
      %v8630 = vsel %vm419, %v8566, 0
      %v8633 = vsel %vm419, %v8567, 0
      %v8636 = vsel %vm419, %v8568, 0
      %v8639 = vsel %vm419, %v8569, 0
      %v8642 = vsel %vm419, %v8570, 0
      %v8645 = vsel %vm419, %v8571, 0
      %v8648 = vsel %vm419, %v8572, 0
      %v8651 = vsel %vm419, %v8573, 0
      %v8654 = vsel %vm419, %v8574, 0
      %v8657 = vsel %vm419, %v8575, 0
      %v8660 = vsel %vm419, %v8576, 0
      %v8663 = vsel %vm419, %v8577, 0
      %v8666 = vsel %vm419, %v8578, 0
      %v8669 = vsel %vm419, %v8579, 0
      %v8672 = vsel %vm419, %v8580, 0
      %v8675 = vsel %vm419, %v8581, 0
      %v8678 = vsel %vm419, %v8582, 0
      %v8681 = vsel %vm419, %v8583, 0
      %v8684 = vsel %vm419, %v8584, 0
      %8686 = vmatprep.subr.mxu0 0.0
      %8687 = vmatpush1.msra.mxu0 0.0
      %8688 = vmatprep.subr.mxu0 0.0
      %8689 = vmatpush1.msra.mxu0 0.0
      %8690 = vmatprep.subr.mxu0 0.0
      %8691 = vmatpush1.msra.mxu0 0.0
      %8692 = vmatprep.subr.mxu0 0.0
      %8693 = vmatpush1.msra.mxu0 0.0
      %8694 = vmatprep.subr.mxu0 0.0
      %8695 = vmatpush1.msra.mxu0 0.0
      %8696 = vmatprep.subr.mxu0 0.0
      %8697 = vmatpush1.msra.mxu0 0.0
      %8698 = vmatprep.subr.mxu0 0.0
      %8699 = vmatpush1.msra.mxu0 0.0
      %8700 = vmatprep.subr.mxu0 0.0
      %8701 = vmatpush1.msra.mxu0 0.0
      %8702 = vmatprep.subr.mxu0 0.0
      %8703 = vmatpush1.msra.mxu0 0.0
      %8704 = vmatprep.subr.mxu0 0.0
      %8705 = vmatpush1.msra.mxu0 0.0
      %8706 = vmatprep.subr.mxu0 0.0
      %8707 = vmatpush1.msra.mxu0 0.0
      %8708 = vmatprep.subr.mxu0 0.0
      %8709 = vmatpush1.msra.mxu0 0.0
      %8710 = vmatprep.subr.mxu0 0.0
      %8711 = vmatpush1.msra.mxu0 %v8589
      %8712 = vmatprep.subr.mxu0 0.0
      %8713 = vmatpush1.msra.mxu0 %v8588
      %8714 = vmatprep.subr.mxu0 0.0
      %8715 = vmatpush1.msra.mxu0 %v8587
      %8716 = vmatprep.subr.mxu0 0.0
      %8717 = vmatpush1.msra.mxu0 %v8586
      %8718 = vmatprep.subr.mxu0 0.0
      %8719 = vmatpush2.msra.mxu0 0.0
      %8720 = vmatprep.subr.mxu0 0.0
      %8721 = vmatpush2.msra.mxu0 0.0
      %8722 = vmatprep.subr.mxu0 0.0
      %8723 = vmatpush2.msra.mxu0 0.0
      %8724 = vmatprep.subr.mxu0 0.0
      %8725 = vmatpush2.msra.mxu0 0.0
      %8726 = vmatprep.subr.mxu0 0.0
      %8727 = vmatpush2.msra.mxu0 0.0
      %8728 = vmatprep.subr.mxu0 0.0
      %8729 = vmatpush2.msra.mxu0 0.0
      %8730 = vmatprep.subr.mxu0 0.0
      %8731 = vmatpush2.msra.mxu0 0.0
      %8732 = vmatprep.subr.mxu0 0.0
      %8733 = vmatpush2.msra.mxu0 0.0
      %8734 = vmatprep.subr.mxu0 0.0
      %8735 = vmatpush2.msra.mxu0 0.0
      %8736 = vmatprep.subr.mxu0 0.0
      %8737 = vmatpush2.msra.mxu0 0.0
      %8738 = vmatprep.subr.mxu0 0.0
      %8739 = vmatpush2.msra.mxu0 0.0
      %8740 = vmatprep.subr.mxu0 0.0
      %8741 = vmatpush2.msra.mxu0 0.0
      %8742 = vmatprep.subr.mxu0 0.0
      %8743 = vmatpush2.msra.mxu0 0.0
      %8744 = vmatprep.subr.mxu0 0.0
      %8745 = vmatpush2.msra.mxu0 0.0
      %8746 = vmatprep.subr.mxu0 0.0
      %8747 = vmatpush2.msra.mxu0 0.0
      %8748 = vmatprep.subr.mxu0 0.0
      %8749 = vmatpush2.msra.mxu0 0.0
      %8750 = vmatprep.mubr.f32.mxu0 0.0
      %8751 = vmatmul.mubr.f32.gmra.mxu0 %v8591
      %v8752 = vpop.f32.mrf.mxu0
      %v8753 = vadd.f32 0.0, %v8752
      %v8754 = vpop.f32.mrf.mxu0
      %8755 = vmatprep.mubr.f32.mxu0 0.0
      %8756 = vmatmul.mubr.f32.gmra.mxu0 %v8594
      %v8757 = vpop.f32.mrf.mxu0
      %v8758 = vadd.f32 0.0, %v8757
      %v8759 = vpop.f32.mrf.mxu0
      %8760 = vmatprep.mubr.f32.mxu0 0.0
      %8761 = vmatmul.mubr.f32.gmra.mxu0 %v8597
      %v8762 = vpop.f32.mrf.mxu0
      %v8763 = vadd.f32 0.0, %v8762
      %v8764 = vpop.f32.mrf.mxu0
      %8765 = vmatprep.mubr.f32.mxu0 0.0
      %8766 = vmatmul.mubr.f32.gmra.mxu0 %v8600
      %v8767 = vpop.f32.mrf.mxu0
      %v8768 = vadd.f32 0.0, %v8767
      %v8769 = vpop.f32.mrf.mxu0
      %8770 = vmatprep.mubr.f32.mxu0 0.0
      %8771 = vmatmul.mubr.f32.gmra.mxu0 %v8603
      %v8772 = vpop.f32.mrf.mxu0
      %v8773 = vadd.f32 0.0, %v8772
      %v8774 = vpop.f32.mrf.mxu0
      %8775 = vmatprep.mubr.f32.mxu0 0.0
      %8776 = vmatmul.mubr.f32.gmra.mxu0 %v8606
      %v8777 = vpop.f32.mrf.mxu0
      %v8778 = vadd.f32 0.0, %v8777
      %v8779 = vpop.f32.mrf.mxu0
      %8780 = vmatprep.mubr.f32.mxu0 0.0
      %8781 = vmatmul.mubr.f32.gmra.mxu0 %v8609
      %v8782 = vpop.f32.mrf.mxu0
      %v8783 = vadd.f32 0.0, %v8782
      %v8784 = vpop.f32.mrf.mxu0
      %8785 = vmatprep.mubr.f32.mxu0 0.0
      %8786 = vmatmul.mubr.f32.gmra.mxu0 %v8612
      %v8787 = vpop.f32.mrf.mxu0
      %v8788 = vadd.f32 0.0, %v8787
      %v8789 = vpop.f32.mrf.mxu0
      %8790 = vmatprep.mubr.f32.mxu0 0.0
      %8791 = vmatmul.mubr.f32.gmra.mxu0 %v8615
      %v8792 = vpop.f32.mrf.mxu0
      %v8793 = vadd.f32 0.0, %v8792
      %v8794 = vpop.f32.mrf.mxu0
      %8795 = vmatprep.mubr.f32.mxu0 0.0
      %8796 = vmatmul.mubr.f32.gmra.mxu0 %v8618
      %v8797 = vpop.f32.mrf.mxu0
      %v8798 = vadd.f32 0.0, %v8797
      %v8799 = vpop.f32.mrf.mxu0
      %8800 = vmatprep.mubr.f32.mxu0 0.0
      %8801 = vmatmul.mubr.f32.gmra.mxu0 %v8621
      %v8802 = vpop.f32.mrf.mxu0
      %v8803 = vadd.f32 0.0, %v8802
      %v8804 = vpop.f32.mrf.mxu0
      %8805 = vmatprep.mubr.f32.mxu0 0.0
      %8806 = vmatmul.mubr.f32.gmra.mxu0 %v8624
      %v8807 = vpop.f32.mrf.mxu0
      %v8808 = vadd.f32 0.0, %v8807
      %v8809 = vpop.f32.mrf.mxu0
      %8810 = vmatprep.mubr.f32.mxu0 0.0
      %8811 = vmatmul.mubr.f32.gmra.mxu0 %v8627
      %v8812 = vpop.f32.mrf.mxu0
      %v8813 = vadd.f32 0.0, %v8812
      %v8814 = vpop.f32.mrf.mxu0
      %8815 = vmatprep.mubr.f32.mxu0 0.0
      %8816 = vmatmul.mubr.f32.gmra.mxu0 %v8630
      %v8817 = vpop.f32.mrf.mxu0
      %v8818 = vadd.f32 0.0, %v8817
      %v8819 = vpop.f32.mrf.mxu0
      %8820 = vmatprep.mubr.f32.mxu0 0.0
      %8821 = vmatmul.mubr.f32.gmra.mxu0 %v8633
      %v8822 = vpop.f32.mrf.mxu0
      %v8823 = vadd.f32 0.0, %v8822
      %v8824 = vpop.f32.mrf.mxu0
      %8825 = vmatprep.mubr.f32.mxu0 0.0
      %8826 = vmatmul.mubr.f32.gmra.mxu0 %v8636
      %v8827 = vpop.f32.mrf.mxu0
      %v8828 = vadd.f32 0.0, %v8827
      %v8829 = vpop.f32.mrf.mxu0
      %8830 = vmatprep.mubr.f32.mxu0 0.0
      %8831 = vmatmul.mubr.f32.gmra.mxu0 %v8639
      %v8832 = vpop.f32.mrf.mxu0
      %v8833 = vadd.f32 0.0, %v8832
      %v8834 = vpop.f32.mrf.mxu0
      %8835 = vmatprep.mubr.f32.mxu0 0.0
      %8836 = vmatmul.mubr.f32.gmra.mxu0 %v8642
      %v8837 = vpop.f32.mrf.mxu0
      %v8838 = vadd.f32 0.0, %v8837
      %v8839 = vpop.f32.mrf.mxu0
      %8840 = vmatprep.mubr.f32.mxu0 0.0
      %8841 = vmatmul.mubr.f32.gmra.mxu0 %v8645
      %v8842 = vpop.f32.mrf.mxu0
      %v8843 = vadd.f32 0.0, %v8842
      %v8844 = vpop.f32.mrf.mxu0
      %8845 = vmatprep.mubr.f32.mxu0 0.0
      %8846 = vmatmul.mubr.f32.gmra.mxu0 %v8648
      %v8847 = vpop.f32.mrf.mxu0
      %v8848 = vadd.f32 0.0, %v8847
      %v8849 = vpop.f32.mrf.mxu0
      %8850 = vmatprep.mubr.f32.mxu0 0.0
      %8851 = vmatmul.mubr.f32.gmra.mxu0 %v8651
      %v8852 = vpop.f32.mrf.mxu0
      %v8853 = vadd.f32 0.0, %v8852
      %v8854 = vpop.f32.mrf.mxu0
      %8855 = vmatprep.mubr.f32.mxu0 0.0
      %8856 = vmatmul.mubr.f32.gmra.mxu0 %v8654
      %v8857 = vpop.f32.mrf.mxu0
      %v8858 = vadd.f32 0.0, %v8857
      %v8859 = vpop.f32.mrf.mxu0
      %8860 = vmatprep.mubr.f32.mxu0 0.0
      %8861 = vmatmul.mubr.f32.gmra.mxu0 %v8657
      %v8862 = vpop.f32.mrf.mxu0
      %v8863 = vadd.f32 0.0, %v8862
      %v8864 = vpop.f32.mrf.mxu0
      %8865 = vmatprep.mubr.f32.mxu0 0.0
      %8866 = vmatmul.mubr.f32.gmra.mxu0 %v8660
      %v8867 = vpop.f32.mrf.mxu0
      %v8868 = vadd.f32 0.0, %v8867
      %v8869 = vpop.f32.mrf.mxu0
      %8870 = vmatprep.mubr.f32.mxu0 0.0
      %8871 = vmatmul.mubr.f32.gmra.mxu0 %v8663
      %v8872 = vpop.f32.mrf.mxu0
      %v8873 = vadd.f32 0.0, %v8872
      %v8874 = vpop.f32.mrf.mxu0
      %8875 = vmatprep.mubr.f32.mxu0 0.0
      %8876 = vmatmul.mubr.f32.gmra.mxu0 %v8666
      %v8877 = vpop.f32.mrf.mxu0
      %v8878 = vadd.f32 0.0, %v8877
      %v8879 = vpop.f32.mrf.mxu0
      %8880 = vmatprep.mubr.f32.mxu0 0.0
      %8881 = vmatmul.mubr.f32.gmra.mxu0 %v8669
      %v8882 = vpop.f32.mrf.mxu0
      %v8883 = vadd.f32 0.0, %v8882
      %v8884 = vpop.f32.mrf.mxu0
      %8885 = vmatprep.mubr.f32.mxu0 0.0
      %8886 = vmatmul.mubr.f32.gmra.mxu0 %v8672
      %v8887 = vpop.f32.mrf.mxu0
      %v8888 = vadd.f32 0.0, %v8887
      %v8889 = vpop.f32.mrf.mxu0
      %8890 = vmatprep.mubr.f32.mxu0 0.0
      %8891 = vmatmul.mubr.f32.gmra.mxu0 %v8675
      %v8892 = vpop.f32.mrf.mxu0
      %v8893 = vadd.f32 0.0, %v8892
      %v8894 = vpop.f32.mrf.mxu0
      %8895 = vmatprep.mubr.f32.mxu0 0.0
      %8896 = vmatmul.mubr.f32.gmra.mxu0 %v8678
      %v8897 = vpop.f32.mrf.mxu0
      %v8898 = vadd.f32 0.0, %v8897
      %v8899 = vpop.f32.mrf.mxu0
      %8900 = vmatprep.mubr.f32.mxu0 0.0
      %8901 = vmatmul.mubr.f32.gmra.mxu0 %v8681
      %v8902 = vpop.f32.mrf.mxu0
      %v8903 = vadd.f32 0.0, %v8902
      %v8904 = vpop.f32.mrf.mxu0
      %8905 = vmatprep.mubr.f32.mxu0 0.0
      %8906 = vmatmul.mubr.f32.gmra.mxu0 %v8684
      %v8907 = vpop.f32.mrf.mxu0
      %v8908 = vadd.f32 0.0, %v8907
      %v8909 = vpop.f32.mrf.mxu0
      %8910 = vdwg.mxu0
      %v8911 = vadd.f32 %v8521, %v8753
      %v8912 = vadd.f32 %v8522, %v8758
      %v8913 = vadd.f32 %v8523, %v8763
      %v8914 = vadd.f32 %v8524, %v8768
      %v8915 = vadd.f32 %v8525, %v8773
      %v8916 = vadd.f32 %v8526, %v8778
      %v8917 = vadd.f32 %v8527, %v8783
      %v8918 = vadd.f32 %v8528, %v8788
      %v8919 = vadd.f32 %v8529, %v8793
      %v8920 = vadd.f32 %v8530, %v8798
      %v8921 = vadd.f32 %v8531, %v8803
      %v8922 = vadd.f32 %v8532, %v8808
      %v8923 = vadd.f32 %v8533, %v8813
      %v8924 = vadd.f32 %v8534, %v8818
      %v8925 = vadd.f32 %v8535, %v8823
      %v8926 = vadd.f32 %v8536, %v8828
      %v8927 = vadd.f32 %v8537, %v8833
      %v8928 = vadd.f32 %v8538, %v8838
      %v8929 = vadd.f32 %v8539, %v8843
      %v8930 = vadd.f32 %v8540, %v8848
      %v8931 = vadd.f32 %v8541, %v8853
      %v8932 = vadd.f32 %v8542, %v8858
      %v8933 = vadd.f32 %v8543, %v8863
      %v8934 = vadd.f32 %v8544, %v8868
      %v8935 = vadd.f32 %v8545, %v8873
      %v8936 = vadd.f32 %v8546, %v8878
      %v8937 = vadd.f32 %v8547, %v8883
      %v8938 = vadd.f32 %v8548, %v8888
      %v8939 = vadd.f32 %v8549, %v8893
      %v8940 = vadd.f32 %v8550, %v8898
      %v8941 = vadd.f32 %v8551, %v8903
      %v8942 = vadd.f32 %v8552, %v8908
      %v8943 = vld [vmem:[%s6] sm:$0x1]
      %v8945 = vlaneseq
      %v8946 = vshrl.u32 %v8945, 7
      %v8947 = vsub.s32 0, %v8946
      %v8948 = vrot.slane %v8943, %v8947
      %v8950 = vadd.f32 %v8911, %v8948
      %v8951 = vadd.f32 %v8912, %v8948
      %v8952 = vadd.f32 %v8913, %v8948
      %v8953 = vadd.f32 %v8914, %v8948
      %v8954 = vadd.f32 %v8915, %v8948
      %v8955 = vadd.f32 %v8916, %v8948
      %v8956 = vadd.f32 %v8917, %v8948
      %v8957 = vadd.f32 %v8918, %v8948
      %v8958 = vadd.f32 %v8919, %v8948
      %v8959 = vadd.f32 %v8920, %v8948
      %v8960 = vadd.f32 %v8921, %v8948
      %v8961 = vadd.f32 %v8922, %v8948
      %v8962 = vadd.f32 %v8923, %v8948
      %v8963 = vadd.f32 %v8924, %v8948
      %v8964 = vadd.f32 %v8925, %v8948
      %v8965 = vadd.f32 %v8926, %v8948
      %v8966 = vadd.f32 %v8927, %v8948
      %v8967 = vadd.f32 %v8928, %v8948
      %v8968 = vadd.f32 %v8929, %v8948
      %v8969 = vadd.f32 %v8930, %v8948
      %v8970 = vadd.f32 %v8931, %v8948
      %v8971 = vadd.f32 %v8932, %v8948
      %v8972 = vadd.f32 %v8933, %v8948
      %v8973 = vadd.f32 %v8934, %v8948
      %v8974 = vadd.f32 %v8935, %v8948
      %v8975 = vadd.f32 %v8936, %v8948
      %v8976 = vadd.f32 %v8937, %v8948
      %v8977 = vadd.f32 %v8938, %v8948
      %v8978 = vadd.f32 %v8939, %v8948
      %v8979 = vadd.f32 %v8940, %v8948
      %v8980 = vadd.f32 %v8941, %v8948
      %v8981 = vadd.f32 %v8942, %v8948
      %8982 = vst [vmem:[%s367] sm:$0xff] %v8950
      %8983 = vst [vmem:[%s367 + $0x8] sm:$0xff] %v8951
      %8984 = vst [vmem:[%s367 + $0x10] sm:$0xff] %v8952
      %8985 = vst [vmem:[%s367 + $0x18] sm:$0xff] %v8953
      %8986 = vst [vmem:[%s367 + $0x20] sm:$0xff] %v8954
      %8987 = vst [vmem:[%s367 + $0x28] sm:$0xff] %v8955
      %8988 = vst [vmem:[%s367 + $0x30] sm:$0xff] %v8956
      %8989 = vst [vmem:[%s367 + $0x38] sm:$0xff] %v8957
      %8990 = vst [vmem:[%s367 + $0x40] sm:$0xff] %v8958
      %8991 = vst [vmem:[%s367 + $0x48] sm:$0xff] %v8959
      %8992 = vst [vmem:[%s367 + $0x50] sm:$0xff] %v8960
      %8993 = vst [vmem:[%s367 + $0x58] sm:$0xff] %v8961
      %8994 = vst [vmem:[%s367 + $0x60] sm:$0xff] %v8962
      %8995 = vst [vmem:[%s367 + $0x68] sm:$0xff] %v8963
      %8996 = vst [vmem:[%s367 + $0x70] sm:$0xff] %v8964
      %8997 = vst [vmem:[%s367 + $0x78] sm:$0xff] %v8965
      %8998 = vst [vmem:[%s367 + $0x80] sm:$0xff] %v8966
      %8999 = vst [vmem:[%s367 + $0x88] sm:$0xff] %v8967
      %9000 = vst [vmem:[%s367 + $0x90] sm:$0xff] %v8968
      %9001 = vst [vmem:[%s367 + $0x98] sm:$0xff] %v8969
      %9002 = vst [vmem:[%s367 + $0xa0] sm:$0xff] %v8970
      %9003 = vst [vmem:[%s367 + $0xa8] sm:$0xff] %v8971
      %9004 = vst [vmem:[%s367 + $0xb0] sm:$0xff] %v8972
      %9005 = vst [vmem:[%s367 + $0xb8] sm:$0xff] %v8973
      %9006 = vst [vmem:[%s367 + $0xc0] sm:$0xff] %v8974
      %9007 = vst [vmem:[%s367 + $0xc8] sm:$0xff] %v8975
      %9008 = vst [vmem:[%s367 + $0xd0] sm:$0xff] %v8976
      %9009 = vst [vmem:[%s367 + $0xd8] sm:$0xff] %v8977
      %9010 = vst [vmem:[%s367 + $0xe0] sm:$0xff] %v8978
      %9011 = vst [vmem:[%s367 + $0xe8] sm:$0xff] %v8979
      %9012 = vst [vmem:[%s367 + $0xf0] sm:$0xff] %v8980
      %9013 = vst [vmem:[%s367 + $0xf8] sm:$0xff] %v8981
      %v9014 = vld [vmem:[#allocation5] sm:$0xff]
      %v9015 = vld [vmem:[#allocation5 + $0x10] sm:$0xff]
      %v9016 = vld [vmem:[#allocation5 + $0x20] sm:$0xff]
      %v9017 = vld [vmem:[#allocation5 + $0x30] sm:$0xff]
      %v9018 = vld [vmem:[#allocation5 + $0x40] sm:$0xff]
      %v9019 = vld [vmem:[#allocation5 + $0x50] sm:$0xff]
      %v9020 = vld [vmem:[#allocation5 + $0x60] sm:$0xff]
      %v9021 = vld [vmem:[#allocation5 + $0x70] sm:$0xff]
      %v9022 = vld [vmem:[%s7] sm:$0xff]
      %v9023 = vld [vmem:[%s7 + $0x8] sm:$0xff]
      %v9024 = vld [vmem:[%s7 + $0x10] sm:$0xff]
      %v9025 = vld [vmem:[%s7 + $0x18] sm:$0xff]
      %v9026 = vld [vmem:[%s7 + $0x20] sm:$0xff]
      %v9027 = vld [vmem:[%s7 + $0x28] sm:$0xff]
      %v9028 = vld [vmem:[%s7 + $0x30] sm:$0xff]
      %v9029 = vld [vmem:[%s7 + $0x38] sm:$0xff]
      %v9030 = vld [vmem:[#allocation5 + $0x1] sm:$0xff]
      %v9031 = vld [vmem:[#allocation5 + $0x11] sm:$0xff]
      %v9032 = vld [vmem:[#allocation5 + $0x21] sm:$0xff]
      %v9033 = vld [vmem:[#allocation5 + $0x31] sm:$0xff]
      %v9034 = vld [vmem:[#allocation5 + $0x41] sm:$0xff]
      %v9035 = vld [vmem:[#allocation5 + $0x51] sm:$0xff]
      %v9036 = vld [vmem:[#allocation5 + $0x61] sm:$0xff]
      %v9037 = vld [vmem:[#allocation5 + $0x71] sm:$0xff]
      %s9038 = scalar_lea.vmem %s7, 64
      %v9039 = vld [vmem:[%s9038] sm:$0xff]
      %v9040 = vld [vmem:[%s9038 + $0x8] sm:$0xff]
      %v9041 = vld [vmem:[%s9038 + $0x10] sm:$0xff]
      %v9042 = vld [vmem:[%s9038 + $0x18] sm:$0xff]
      %v9043 = vld [vmem:[%s9038 + $0x20] sm:$0xff]
      %v9044 = vld [vmem:[%s9038 + $0x28] sm:$0xff]
      %v9045 = vld [vmem:[%s9038 + $0x30] sm:$0xff]
      %v9046 = vld [vmem:[%s9038 + $0x38] sm:$0xff]
      %v9048 = vsel %vm490, %v9030, 0
      %v9051 = vsel %vm490, %v9031, 0
      %v9054 = vsel %vm490, %v9032, 0
      %v9057 = vsel %vm490, %v9033, 0
      %v9060 = vsel %vm490, %v9034, 0
      %v9063 = vsel %vm490, %v9035, 0
      %v9066 = vsel %vm490, %v9036, 0
      %v9069 = vsel %vm490, %v9037, 0
      %9071 = vmatprep.subr.mxu0 0.0
      %9072 = vmatpush1.msra.mxu0 0.0
      %9073 = vmatprep.subr.mxu0 0.0
      %9074 = vmatpush1.msra.mxu0 0.0
      %9075 = vmatprep.subr.mxu0 0.0
      %9076 = vmatpush1.msra.mxu0 0.0
      %9077 = vmatprep.subr.mxu0 0.0
      %9078 = vmatpush1.msra.mxu0 0.0
      %9079 = vmatprep.subr.mxu0 0.0
      %9080 = vmatpush1.msra.mxu0 0.0
      %9081 = vmatprep.subr.mxu0 0.0
      %9082 = vmatpush1.msra.mxu0 0.0
      %9083 = vmatprep.subr.mxu0 0.0
      %9084 = vmatpush1.msra.mxu0 0.0
      %9085 = vmatprep.subr.mxu0 0.0
      %9086 = vmatpush1.msra.mxu0 0.0
      %9087 = vmatprep.subr.mxu0 0.0
      %9088 = vmatpush1.msra.mxu0 %v9046
      %9089 = vmatprep.subr.mxu0 0.0
      %9090 = vmatpush1.msra.mxu0 %v9045
      %9091 = vmatprep.subr.mxu0 0.0
      %9092 = vmatpush1.msra.mxu0 %v9044
      %9093 = vmatprep.subr.mxu0 0.0
      %9094 = vmatpush1.msra.mxu0 %v9043
      %9095 = vmatprep.subr.mxu0 0.0
      %9096 = vmatpush1.msra.mxu0 %v9042
      %9097 = vmatprep.subr.mxu0 0.0
      %9098 = vmatpush1.msra.mxu0 %v9041
      %9099 = vmatprep.subr.mxu0 0.0
      %9100 = vmatpush1.msra.mxu0 %v9040
      %9101 = vmatprep.subr.mxu0 0.0
      %9102 = vmatpush1.msra.mxu0 %v9039
      %9103 = vmatprep.subr.mxu0 0.0
      %9104 = vmatpush2.msra.mxu0 0.0
      %9105 = vmatprep.subr.mxu0 0.0
      %9106 = vmatpush2.msra.mxu0 0.0
      %9107 = vmatprep.subr.mxu0 0.0
      %9108 = vmatpush2.msra.mxu0 0.0
      %9109 = vmatprep.subr.mxu0 0.0
      %9110 = vmatpush2.msra.mxu0 0.0
      %9111 = vmatprep.subr.mxu0 0.0
      %9112 = vmatpush2.msra.mxu0 0.0
      %9113 = vmatprep.subr.mxu0 0.0
      %9114 = vmatpush2.msra.mxu0 0.0
      %9115 = vmatprep.subr.mxu0 0.0
      %9116 = vmatpush2.msra.mxu0 0.0
      %9117 = vmatprep.subr.mxu0 0.0
      %9118 = vmatpush2.msra.mxu0 0.0
      %9119 = vmatprep.subr.mxu0 0.0
      %9120 = vmatpush2.msra.mxu0 0.0
      %9121 = vmatprep.subr.mxu0 0.0
      %9122 = vmatpush2.msra.mxu0 0.0
      %9123 = vmatprep.subr.mxu0 0.0
      %9124 = vmatpush2.msra.mxu0 0.0
      %9125 = vmatprep.subr.mxu0 0.0
      %9126 = vmatpush2.msra.mxu0 0.0
      %9127 = vmatprep.subr.mxu0 0.0
      %9128 = vmatpush2.msra.mxu0 0.0
      %9129 = vmatprep.subr.mxu0 0.0
      %9130 = vmatpush2.msra.mxu0 0.0
      %9131 = vmatprep.subr.mxu0 0.0
      %9132 = vmatpush2.msra.mxu0 0.0
      %9133 = vmatprep.subr.mxu0 0.0
      %9134 = vmatpush2.msra.mxu0 0.0
      %9135 = vmatprep.mubr.f32.mxu0 0.0
      %9136 = vmatmul.mubr.f32.gmra.mxu0 %v9048
      %v9137 = vpop.f32.mrf.mxu0
      %v9138 = vadd.f32 0.0, %v9137
      %v9139 = vpop.f32.mrf.mxu0
      %9140 = vmatprep.mubr.f32.mxu0 0.0
      %9141 = vmatmul.mubr.f32.gmra.mxu0 %v9051
      %v9142 = vpop.f32.mrf.mxu0
      %v9143 = vadd.f32 0.0, %v9142
      %v9144 = vpop.f32.mrf.mxu0
      %9145 = vmatprep.mubr.f32.mxu0 0.0
      %9146 = vmatmul.mubr.f32.gmra.mxu0 %v9054
      %v9147 = vpop.f32.mrf.mxu0
      %v9148 = vadd.f32 0.0, %v9147
      %v9149 = vpop.f32.mrf.mxu0
      %9150 = vmatprep.mubr.f32.mxu0 0.0
      %9151 = vmatmul.mubr.f32.gmra.mxu0 %v9057
      %v9152 = vpop.f32.mrf.mxu0
      %v9153 = vadd.f32 0.0, %v9152
      %v9154 = vpop.f32.mrf.mxu0
      %9155 = vmatprep.mubr.f32.mxu0 0.0
      %9156 = vmatmul.mubr.f32.gmra.mxu0 %v9060
      %v9157 = vpop.f32.mrf.mxu0
      %v9158 = vadd.f32 0.0, %v9157
      %v9159 = vpop.f32.mrf.mxu0
      %9160 = vmatprep.mubr.f32.mxu0 0.0
      %9161 = vmatmul.mubr.f32.gmra.mxu0 %v9063
      %v9162 = vpop.f32.mrf.mxu0
      %v9163 = vadd.f32 0.0, %v9162
      %v9164 = vpop.f32.mrf.mxu0
      %9165 = vmatprep.mubr.f32.mxu0 0.0
      %9166 = vmatmul.mubr.f32.gmra.mxu0 %v9066
      %v9167 = vpop.f32.mrf.mxu0
      %v9168 = vadd.f32 0.0, %v9167
      %v9169 = vpop.f32.mrf.mxu0
      %9170 = vmatprep.mubr.f32.mxu0 0.0
      %9171 = vmatmul.mubr.f32.gmra.mxu0 %v9069
      %v9172 = vpop.f32.mrf.mxu0
      %v9173 = vadd.f32 0.0, %v9172
      %v9174 = vpop.f32.mrf.mxu0
      %9175 = vdwg.mxu0
      %v9177 = vsel %vm490, %v9014, 0
      %v9180 = vsel %vm490, %v9015, 0
      %v9183 = vsel %vm490, %v9016, 0
      %v9186 = vsel %vm490, %v9017, 0
      %v9189 = vsel %vm490, %v9018, 0
      %v9192 = vsel %vm490, %v9019, 0
      %v9195 = vsel %vm490, %v9020, 0
      %v9198 = vsel %vm490, %v9021, 0
      %9200 = vmatprep.subr.mxu0 0.0
      %9201 = vmatpush1.msra.mxu0 0.0
      %9202 = vmatprep.subr.mxu0 0.0
      %9203 = vmatpush1.msra.mxu0 0.0
      %9204 = vmatprep.subr.mxu0 0.0
      %9205 = vmatpush1.msra.mxu0 0.0
      %9206 = vmatprep.subr.mxu0 0.0
      %9207 = vmatpush1.msra.mxu0 0.0
      %9208 = vmatprep.subr.mxu0 0.0
      %9209 = vmatpush1.msra.mxu0 0.0
      %9210 = vmatprep.subr.mxu0 0.0
      %9211 = vmatpush1.msra.mxu0 0.0
      %9212 = vmatprep.subr.mxu0 0.0
      %9213 = vmatpush1.msra.mxu0 0.0
      %9214 = vmatprep.subr.mxu0 0.0
      %9215 = vmatpush1.msra.mxu0 0.0
      %9216 = vmatprep.subr.mxu0 0.0
      %9217 = vmatpush1.msra.mxu0 %v9029
      %9218 = vmatprep.subr.mxu0 0.0
      %9219 = vmatpush1.msra.mxu0 %v9028
      %9220 = vmatprep.subr.mxu0 0.0
      %9221 = vmatpush1.msra.mxu0 %v9027
      %9222 = vmatprep.subr.mxu0 0.0
      %9223 = vmatpush1.msra.mxu0 %v9026
      %9224 = vmatprep.subr.mxu0 0.0
      %9225 = vmatpush1.msra.mxu0 %v9025
      %9226 = vmatprep.subr.mxu0 0.0
      %9227 = vmatpush1.msra.mxu0 %v9024
      %9228 = vmatprep.subr.mxu0 0.0
      %9229 = vmatpush1.msra.mxu0 %v9023
      %9230 = vmatprep.subr.mxu0 0.0
      %9231 = vmatpush1.msra.mxu0 %v9022
      %9232 = vmatprep.subr.mxu0 0.0
      %9233 = vmatpush2.msra.mxu0 0.0
      %9234 = vmatprep.subr.mxu0 0.0
      %9235 = vmatpush2.msra.mxu0 0.0
      %9236 = vmatprep.subr.mxu0 0.0
      %9237 = vmatpush2.msra.mxu0 0.0
      %9238 = vmatprep.subr.mxu0 0.0
      %9239 = vmatpush2.msra.mxu0 0.0
      %9240 = vmatprep.subr.mxu0 0.0
      %9241 = vmatpush2.msra.mxu0 0.0
      %9242 = vmatprep.subr.mxu0 0.0
      %9243 = vmatpush2.msra.mxu0 0.0
      %9244 = vmatprep.subr.mxu0 0.0
      %9245 = vmatpush2.msra.mxu0 0.0
      %9246 = vmatprep.subr.mxu0 0.0
      %9247 = vmatpush2.msra.mxu0 0.0
      %9248 = vmatprep.subr.mxu0 0.0
      %9249 = vmatpush2.msra.mxu0 0.0
      %9250 = vmatprep.subr.mxu0 0.0
      %9251 = vmatpush2.msra.mxu0 0.0
      %9252 = vmatprep.subr.mxu0 0.0
      %9253 = vmatpush2.msra.mxu0 0.0
      %9254 = vmatprep.subr.mxu0 0.0
      %9255 = vmatpush2.msra.mxu0 0.0
      %9256 = vmatprep.subr.mxu0 0.0
      %9257 = vmatpush2.msra.mxu0 0.0
      %9258 = vmatprep.subr.mxu0 0.0
      %9259 = vmatpush2.msra.mxu0 0.0
      %9260 = vmatprep.subr.mxu0 0.0
      %9261 = vmatpush2.msra.mxu0 0.0
      %9262 = vmatprep.subr.mxu0 0.0
      %9263 = vmatpush2.msra.mxu0 0.0
      %9264 = vmatprep.mubr.f32.mxu0 0.0
      %9265 = vmatmul.mubr.f32.gmra.mxu0 %v9177
      %v9266 = vpop.f32.mrf.mxu0
      %v9267 = vadd.f32 %v9138, %v9266
      %v9268 = vpop.f32.mrf.mxu0
      %9269 = vmatprep.mubr.f32.mxu0 0.0
      %9270 = vmatmul.mubr.f32.gmra.mxu0 %v9180
      %v9271 = vpop.f32.mrf.mxu0
      %v9272 = vadd.f32 %v9143, %v9271
      %v9273 = vpop.f32.mrf.mxu0
      %9274 = vmatprep.mubr.f32.mxu0 0.0
      %9275 = vmatmul.mubr.f32.gmra.mxu0 %v9183
      %v9276 = vpop.f32.mrf.mxu0
      %v9277 = vadd.f32 %v9148, %v9276
      %v9278 = vpop.f32.mrf.mxu0
      %9279 = vmatprep.mubr.f32.mxu0 0.0
      %9280 = vmatmul.mubr.f32.gmra.mxu0 %v9186
      %v9281 = vpop.f32.mrf.mxu0
      %v9282 = vadd.f32 %v9153, %v9281
      %v9283 = vpop.f32.mrf.mxu0
      %9284 = vmatprep.mubr.f32.mxu0 0.0
      %9285 = vmatmul.mubr.f32.gmra.mxu0 %v9189
      %v9286 = vpop.f32.mrf.mxu0
      %v9287 = vadd.f32 %v9158, %v9286
      %v9288 = vpop.f32.mrf.mxu0
      %9289 = vmatprep.mubr.f32.mxu0 0.0
      %9290 = vmatmul.mubr.f32.gmra.mxu0 %v9192
      %v9291 = vpop.f32.mrf.mxu0
      %v9292 = vadd.f32 %v9163, %v9291
      %v9293 = vpop.f32.mrf.mxu0
      %9294 = vmatprep.mubr.f32.mxu0 0.0
      %9295 = vmatmul.mubr.f32.gmra.mxu0 %v9195
      %v9296 = vpop.f32.mrf.mxu0
      %v9297 = vadd.f32 %v9168, %v9296
      %v9298 = vpop.f32.mrf.mxu0
      %9299 = vmatprep.mubr.f32.mxu0 0.0
      %9300 = vmatmul.mubr.f32.gmra.mxu0 %v9198
      %v9301 = vpop.f32.mrf.mxu0
      %v9302 = vadd.f32 %v9173, %v9301
      %v9303 = vpop.f32.mrf.mxu0
      %9304 = vdwg.mxu0
      %v9305 = vld [vmem:[#allocation5 + $0x2] sm:$0xff]
      %v9306 = vld [vmem:[#allocation5 + $0x12] sm:$0xff]
      %v9307 = vld [vmem:[#allocation5 + $0x22] sm:$0xff]
      %v9308 = vld [vmem:[#allocation5 + $0x32] sm:$0xff]
      %v9309 = vld [vmem:[#allocation5 + $0x42] sm:$0xff]
      %v9310 = vld [vmem:[#allocation5 + $0x52] sm:$0xff]
      %v9311 = vld [vmem:[#allocation5 + $0x62] sm:$0xff]
      %v9312 = vld [vmem:[#allocation5 + $0x72] sm:$0xff]
      %s9313 = scalar_lea.vmem %s7, 128
      %v9314 = vld [vmem:[%s9313] sm:$0xff]
      %v9315 = vld [vmem:[%s9313 + $0x8] sm:$0xff]
      %v9316 = vld [vmem:[%s9313 + $0x10] sm:$0xff]
      %v9317 = vld [vmem:[%s9313 + $0x18] sm:$0xff]
      %v9318 = vld [vmem:[%s9313 + $0x20] sm:$0xff]
      %v9319 = vld [vmem:[%s9313 + $0x28] sm:$0xff]
      %v9320 = vld [vmem:[%s9313 + $0x30] sm:$0xff]
      %v9321 = vld [vmem:[%s9313 + $0x38] sm:$0xff]
      %v9323 = vsel %vm490, %v9305, 0
      %v9326 = vsel %vm490, %v9306, 0
      %v9329 = vsel %vm490, %v9307, 0
      %v9332 = vsel %vm490, %v9308, 0
      %v9335 = vsel %vm490, %v9309, 0
      %v9338 = vsel %vm490, %v9310, 0
      %v9341 = vsel %vm490, %v9311, 0
      %v9344 = vsel %vm490, %v9312, 0
      %9346 = vmatprep.subr.mxu0 0.0
      %9347 = vmatpush1.msra.mxu0 0.0
      %9348 = vmatprep.subr.mxu0 0.0
      %9349 = vmatpush1.msra.mxu0 0.0
      %9350 = vmatprep.subr.mxu0 0.0
      %9351 = vmatpush1.msra.mxu0 0.0
      %9352 = vmatprep.subr.mxu0 0.0
      %9353 = vmatpush1.msra.mxu0 0.0
      %9354 = vmatprep.subr.mxu0 0.0
      %9355 = vmatpush1.msra.mxu0 0.0
      %9356 = vmatprep.subr.mxu0 0.0
      %9357 = vmatpush1.msra.mxu0 0.0
      %9358 = vmatprep.subr.mxu0 0.0
      %9359 = vmatpush1.msra.mxu0 0.0
      %9360 = vmatprep.subr.mxu0 0.0
      %9361 = vmatpush1.msra.mxu0 0.0
      %9362 = vmatprep.subr.mxu0 0.0
      %9363 = vmatpush1.msra.mxu0 %v9321
      %9364 = vmatprep.subr.mxu0 0.0
      %9365 = vmatpush1.msra.mxu0 %v9320
      %9366 = vmatprep.subr.mxu0 0.0
      %9367 = vmatpush1.msra.mxu0 %v9319
      %9368 = vmatprep.subr.mxu0 0.0
      %9369 = vmatpush1.msra.mxu0 %v9318
      %9370 = vmatprep.subr.mxu0 0.0
      %9371 = vmatpush1.msra.mxu0 %v9317
      %9372 = vmatprep.subr.mxu0 0.0
      %9373 = vmatpush1.msra.mxu0 %v9316
      %9374 = vmatprep.subr.mxu0 0.0
      %9375 = vmatpush1.msra.mxu0 %v9315
      %9376 = vmatprep.subr.mxu0 0.0
      %9377 = vmatpush1.msra.mxu0 %v9314
      %9378 = vmatprep.subr.mxu0 0.0
      %9379 = vmatpush2.msra.mxu0 0.0
      %9380 = vmatprep.subr.mxu0 0.0
      %9381 = vmatpush2.msra.mxu0 0.0
      %9382 = vmatprep.subr.mxu0 0.0
      %9383 = vmatpush2.msra.mxu0 0.0
      %9384 = vmatprep.subr.mxu0 0.0
      %9385 = vmatpush2.msra.mxu0 0.0
      %9386 = vmatprep.subr.mxu0 0.0
      %9387 = vmatpush2.msra.mxu0 0.0
      %9388 = vmatprep.subr.mxu0 0.0
      %9389 = vmatpush2.msra.mxu0 0.0
      %9390 = vmatprep.subr.mxu0 0.0
      %9391 = vmatpush2.msra.mxu0 0.0
      %9392 = vmatprep.subr.mxu0 0.0
      %9393 = vmatpush2.msra.mxu0 0.0
      %9394 = vmatprep.subr.mxu0 0.0
      %9395 = vmatpush2.msra.mxu0 0.0
      %9396 = vmatprep.subr.mxu0 0.0
      %9397 = vmatpush2.msra.mxu0 0.0
      %9398 = vmatprep.subr.mxu0 0.0
      %9399 = vmatpush2.msra.mxu0 0.0
      %9400 = vmatprep.subr.mxu0 0.0
      %9401 = vmatpush2.msra.mxu0 0.0
      %9402 = vmatprep.subr.mxu0 0.0
      %9403 = vmatpush2.msra.mxu0 0.0
      %9404 = vmatprep.subr.mxu0 0.0
      %9405 = vmatpush2.msra.mxu0 0.0
      %9406 = vmatprep.subr.mxu0 0.0
      %9407 = vmatpush2.msra.mxu0 0.0
      %9408 = vmatprep.subr.mxu0 0.0
      %9409 = vmatpush2.msra.mxu0 0.0
      %9410 = vmatprep.mubr.f32.mxu0 0.0
      %9411 = vmatmul.mubr.f32.gmra.mxu0 %v9323
      %v9412 = vpop.f32.mrf.mxu0
      %v9413 = vadd.f32 0.0, %v9412
      %v9414 = vpop.f32.mrf.mxu0
      %9415 = vmatprep.mubr.f32.mxu0 0.0
      %9416 = vmatmul.mubr.f32.gmra.mxu0 %v9326
      %v9417 = vpop.f32.mrf.mxu0
      %v9418 = vadd.f32 0.0, %v9417
      %v9419 = vpop.f32.mrf.mxu0
      %9420 = vmatprep.mubr.f32.mxu0 0.0
      %9421 = vmatmul.mubr.f32.gmra.mxu0 %v9329
      %v9422 = vpop.f32.mrf.mxu0
      %v9423 = vadd.f32 0.0, %v9422
      %v9424 = vpop.f32.mrf.mxu0
      %9425 = vmatprep.mubr.f32.mxu0 0.0
      %9426 = vmatmul.mubr.f32.gmra.mxu0 %v9332
      %v9427 = vpop.f32.mrf.mxu0
      %v9428 = vadd.f32 0.0, %v9427
      %v9429 = vpop.f32.mrf.mxu0
      %9430 = vmatprep.mubr.f32.mxu0 0.0
      %9431 = vmatmul.mubr.f32.gmra.mxu0 %v9335
      %v9432 = vpop.f32.mrf.mxu0
      %v9433 = vadd.f32 0.0, %v9432
      %v9434 = vpop.f32.mrf.mxu0
      %9435 = vmatprep.mubr.f32.mxu0 0.0
      %9436 = vmatmul.mubr.f32.gmra.mxu0 %v9338
      %v9437 = vpop.f32.mrf.mxu0
      %v9438 = vadd.f32 0.0, %v9437
      %v9439 = vpop.f32.mrf.mxu0
      %9440 = vmatprep.mubr.f32.mxu0 0.0
      %9441 = vmatmul.mubr.f32.gmra.mxu0 %v9341
      %v9442 = vpop.f32.mrf.mxu0
      %v9443 = vadd.f32 0.0, %v9442
      %v9444 = vpop.f32.mrf.mxu0
      %9445 = vmatprep.mubr.f32.mxu0 0.0
      %9446 = vmatmul.mubr.f32.gmra.mxu0 %v9344
      %v9447 = vpop.f32.mrf.mxu0
      %v9448 = vadd.f32 0.0, %v9447
      %v9449 = vpop.f32.mrf.mxu0
      %9450 = vdwg.mxu0
      %v9451 = vadd.f32 %v9267, %v9413
      %v9452 = vadd.f32 %v9272, %v9418
      %v9453 = vadd.f32 %v9277, %v9423
      %v9454 = vadd.f32 %v9282, %v9428
      %v9455 = vadd.f32 %v9287, %v9433
      %v9456 = vadd.f32 %v9292, %v9438
      %v9457 = vadd.f32 %v9297, %v9443
      %v9458 = vadd.f32 %v9302, %v9448
      %v9459 = vld [vmem:[%s5488] sm:$0xff]
      %v9460 = vld [vmem:[%s5488 + $0x10] sm:$0xff]
      %v9461 = vld [vmem:[%s5488 + $0x20] sm:$0xff]
      %v9462 = vld [vmem:[%s5488 + $0x30] sm:$0xff]
      %v9463 = vld [vmem:[%s5488 + $0x40] sm:$0xff]
      %v9464 = vld [vmem:[%s5488 + $0x50] sm:$0xff]
      %v9465 = vld [vmem:[%s5488 + $0x60] sm:$0xff]
      %v9466 = vld [vmem:[%s5488 + $0x70] sm:$0xff]
      %s9467 = scalar_lea.vmem %s7, 192
      %v9468 = vld [vmem:[%s9467] sm:$0xff]
      %v9469 = vld [vmem:[%s9467 + $0x8] sm:$0xff]
      %v9470 = vld [vmem:[%s9467 + $0x10] sm:$0xff]
      %v9471 = vld [vmem:[%s9467 + $0x18] sm:$0xff]
      %v9472 = vld [vmem:[%s9467 + $0x20] sm:$0xff]
      %v9473 = vld [vmem:[%s9467 + $0x28] sm:$0xff]
      %v9474 = vld [vmem:[%s9467 + $0x30] sm:$0xff]
      %v9475 = vld [vmem:[%s9467 + $0x38] sm:$0xff]
      %v9477 = vsel %vm490, %v9459, 0
      %v9480 = vsel %vm490, %v9460, 0
      %v9483 = vsel %vm490, %v9461, 0
      %v9486 = vsel %vm490, %v9462, 0
      %v9489 = vsel %vm490, %v9463, 0
      %v9492 = vsel %vm490, %v9464, 0
      %v9495 = vsel %vm490, %v9465, 0
      %v9498 = vsel %vm490, %v9466, 0
      %9500 = vmatprep.subr.mxu0 0.0
      %9501 = vmatpush1.msra.mxu0 0.0
      %9502 = vmatprep.subr.mxu0 0.0
      %9503 = vmatpush1.msra.mxu0 0.0
      %9504 = vmatprep.subr.mxu0 0.0
      %9505 = vmatpush1.msra.mxu0 0.0
      %9506 = vmatprep.subr.mxu0 0.0
      %9507 = vmatpush1.msra.mxu0 0.0
      %9508 = vmatprep.subr.mxu0 0.0
      %9509 = vmatpush1.msra.mxu0 0.0
      %9510 = vmatprep.subr.mxu0 0.0
      %9511 = vmatpush1.msra.mxu0 0.0
      %9512 = vmatprep.subr.mxu0 0.0
      %9513 = vmatpush1.msra.mxu0 0.0
      %9514 = vmatprep.subr.mxu0 0.0
      %9515 = vmatpush1.msra.mxu0 0.0
      %9516 = vmatprep.subr.mxu0 0.0
      %9517 = vmatpush1.msra.mxu0 %v9475
      %9518 = vmatprep.subr.mxu0 0.0
      %9519 = vmatpush1.msra.mxu0 %v9474
      %9520 = vmatprep.subr.mxu0 0.0
      %9521 = vmatpush1.msra.mxu0 %v9473
      %9522 = vmatprep.subr.mxu0 0.0
      %9523 = vmatpush1.msra.mxu0 %v9472
      %9524 = vmatprep.subr.mxu0 0.0
      %9525 = vmatpush1.msra.mxu0 %v9471
      %9526 = vmatprep.subr.mxu0 0.0
      %9527 = vmatpush1.msra.mxu0 %v9470
      %9528 = vmatprep.subr.mxu0 0.0
      %9529 = vmatpush1.msra.mxu0 %v9469
      %9530 = vmatprep.subr.mxu0 0.0
      %9531 = vmatpush1.msra.mxu0 %v9468
      %9532 = vmatprep.subr.mxu0 0.0
      %9533 = vmatpush2.msra.mxu0 0.0
      %9534 = vmatprep.subr.mxu0 0.0
      %9535 = vmatpush2.msra.mxu0 0.0
      %9536 = vmatprep.subr.mxu0 0.0
      %9537 = vmatpush2.msra.mxu0 0.0
      %9538 = vmatprep.subr.mxu0 0.0
      %9539 = vmatpush2.msra.mxu0 0.0
      %9540 = vmatprep.subr.mxu0 0.0
      %9541 = vmatpush2.msra.mxu0 0.0
      %9542 = vmatprep.subr.mxu0 0.0
      %9543 = vmatpush2.msra.mxu0 0.0
      %9544 = vmatprep.subr.mxu0 0.0
      %9545 = vmatpush2.msra.mxu0 0.0
      %9546 = vmatprep.subr.mxu0 0.0
      %9547 = vmatpush2.msra.mxu0 0.0
      %9548 = vmatprep.subr.mxu0 0.0
      %9549 = vmatpush2.msra.mxu0 0.0
      %9550 = vmatprep.subr.mxu0 0.0
      %9551 = vmatpush2.msra.mxu0 0.0
      %9552 = vmatprep.subr.mxu0 0.0
      %9553 = vmatpush2.msra.mxu0 0.0
      %9554 = vmatprep.subr.mxu0 0.0
      %9555 = vmatpush2.msra.mxu0 0.0
      %9556 = vmatprep.subr.mxu0 0.0
      %9557 = vmatpush2.msra.mxu0 0.0
      %9558 = vmatprep.subr.mxu0 0.0
      %9559 = vmatpush2.msra.mxu0 0.0
      %9560 = vmatprep.subr.mxu0 0.0
      %9561 = vmatpush2.msra.mxu0 0.0
      %9562 = vmatprep.subr.mxu0 0.0
      %9563 = vmatpush2.msra.mxu0 0.0
      %9564 = vmatprep.mubr.f32.mxu0 0.0
      %9565 = vmatmul.mubr.f32.gmra.mxu0 %v9477
      %v9566 = vpop.f32.mrf.mxu0
      %v9567 = vadd.f32 0.0, %v9566
      %v9568 = vpop.f32.mrf.mxu0
      %9569 = vmatprep.mubr.f32.mxu0 0.0
      %9570 = vmatmul.mubr.f32.gmra.mxu0 %v9480
      %v9571 = vpop.f32.mrf.mxu0
      %v9572 = vadd.f32 0.0, %v9571
      %v9573 = vpop.f32.mrf.mxu0
      %9574 = vmatprep.mubr.f32.mxu0 0.0
      %9575 = vmatmul.mubr.f32.gmra.mxu0 %v9483
      %v9576 = vpop.f32.mrf.mxu0
      %v9577 = vadd.f32 0.0, %v9576
      %v9578 = vpop.f32.mrf.mxu0
      %9579 = vmatprep.mubr.f32.mxu0 0.0
      %9580 = vmatmul.mubr.f32.gmra.mxu0 %v9486
      %v9581 = vpop.f32.mrf.mxu0
      %v9582 = vadd.f32 0.0, %v9581
      %v9583 = vpop.f32.mrf.mxu0
      %9584 = vmatprep.mubr.f32.mxu0 0.0
      %9585 = vmatmul.mubr.f32.gmra.mxu0 %v9489
      %v9586 = vpop.f32.mrf.mxu0
      %v9587 = vadd.f32 0.0, %v9586
      %v9588 = vpop.f32.mrf.mxu0
      %9589 = vmatprep.mubr.f32.mxu0 0.0
      %9590 = vmatmul.mubr.f32.gmra.mxu0 %v9492
      %v9591 = vpop.f32.mrf.mxu0
      %v9592 = vadd.f32 0.0, %v9591
      %v9593 = vpop.f32.mrf.mxu0
      %9594 = vmatprep.mubr.f32.mxu0 0.0
      %9595 = vmatmul.mubr.f32.gmra.mxu0 %v9495
      %v9596 = vpop.f32.mrf.mxu0
      %v9597 = vadd.f32 0.0, %v9596
      %v9598 = vpop.f32.mrf.mxu0
      %9599 = vmatprep.mubr.f32.mxu0 0.0
      %9600 = vmatmul.mubr.f32.gmra.mxu0 %v9498
      %v9601 = vpop.f32.mrf.mxu0
      %v9602 = vadd.f32 0.0, %v9601
      %v9603 = vpop.f32.mrf.mxu0
      %9604 = vdwg.mxu0
      %v9605 = vadd.f32 %v9451, %v9567
      %v9606 = vadd.f32 %v9452, %v9572
      %v9607 = vadd.f32 %v9453, %v9577
      %v9608 = vadd.f32 %v9454, %v9582
      %v9609 = vadd.f32 %v9455, %v9587
      %v9610 = vadd.f32 %v9456, %v9592
      %v9611 = vadd.f32 %v9457, %v9597
      %v9612 = vadd.f32 %v9458, %v9602
      %v9613 = vld [vmem:[%s5488 + $0x1] sm:$0xff]
      %v9614 = vld [vmem:[%s5488 + $0x11] sm:$0xff]
      %v9615 = vld [vmem:[%s5488 + $0x21] sm:$0xff]
      %v9616 = vld [vmem:[%s5488 + $0x31] sm:$0xff]
      %v9617 = vld [vmem:[%s5488 + $0x41] sm:$0xff]
      %v9618 = vld [vmem:[%s5488 + $0x51] sm:$0xff]
      %v9619 = vld [vmem:[%s5488 + $0x61] sm:$0xff]
      %v9620 = vld [vmem:[%s5488 + $0x71] sm:$0xff]
      %s9621 = scalar_lea.vmem %s7, 256
      %v9622 = vld [vmem:[%s9621] sm:$0xff]
      %v9623 = vld [vmem:[%s9621 + $0x8] sm:$0xff]
      %v9624 = vld [vmem:[%s9621 + $0x10] sm:$0xff]
      %v9625 = vld [vmem:[%s9621 + $0x18] sm:$0xff]
      %v9626 = vld [vmem:[%s9621 + $0x20] sm:$0xff]
      %v9627 = vld [vmem:[%s9621 + $0x28] sm:$0xff]
      %v9628 = vld [vmem:[%s9621 + $0x30] sm:$0xff]
      %v9629 = vld [vmem:[%s9621 + $0x38] sm:$0xff]
      %v9631 = vsel %vm490, %v9613, 0
      %v9634 = vsel %vm490, %v9614, 0
      %v9637 = vsel %vm490, %v9615, 0
      %v9640 = vsel %vm490, %v9616, 0
      %v9643 = vsel %vm490, %v9617, 0
      %v9646 = vsel %vm490, %v9618, 0
      %v9649 = vsel %vm490, %v9619, 0
      %v9652 = vsel %vm490, %v9620, 0
      %9654 = vmatprep.subr.mxu0 0.0
      %9655 = vmatpush1.msra.mxu0 0.0
      %9656 = vmatprep.subr.mxu0 0.0
      %9657 = vmatpush1.msra.mxu0 0.0
      %9658 = vmatprep.subr.mxu0 0.0
      %9659 = vmatpush1.msra.mxu0 0.0
      %9660 = vmatprep.subr.mxu0 0.0
      %9661 = vmatpush1.msra.mxu0 0.0
      %9662 = vmatprep.subr.mxu0 0.0
      %9663 = vmatpush1.msra.mxu0 0.0
      %9664 = vmatprep.subr.mxu0 0.0
      %9665 = vmatpush1.msra.mxu0 0.0
      %9666 = vmatprep.subr.mxu0 0.0
      %9667 = vmatpush1.msra.mxu0 0.0
      %9668 = vmatprep.subr.mxu0 0.0
      %9669 = vmatpush1.msra.mxu0 0.0
      %9670 = vmatprep.subr.mxu0 0.0
      %9671 = vmatpush1.msra.mxu0 %v9629
      %9672 = vmatprep.subr.mxu0 0.0
      %9673 = vmatpush1.msra.mxu0 %v9628
      %9674 = vmatprep.subr.mxu0 0.0
      %9675 = vmatpush1.msra.mxu0 %v9627
      %9676 = vmatprep.subr.mxu0 0.0
      %9677 = vmatpush1.msra.mxu0 %v9626
      %9678 = vmatprep.subr.mxu0 0.0
      %9679 = vmatpush1.msra.mxu0 %v9625
      %9680 = vmatprep.subr.mxu0 0.0
      %9681 = vmatpush1.msra.mxu0 %v9624
      %9682 = vmatprep.subr.mxu0 0.0
      %9683 = vmatpush1.msra.mxu0 %v9623
      %9684 = vmatprep.subr.mxu0 0.0
      %9685 = vmatpush1.msra.mxu0 %v9622
      %9686 = vmatprep.subr.mxu0 0.0
      %9687 = vmatpush2.msra.mxu0 0.0
      %9688 = vmatprep.subr.mxu0 0.0
      %9689 = vmatpush2.msra.mxu0 0.0
      %9690 = vmatprep.subr.mxu0 0.0
      %9691 = vmatpush2.msra.mxu0 0.0
      %9692 = vmatprep.subr.mxu0 0.0
      %9693 = vmatpush2.msra.mxu0 0.0
      %9694 = vmatprep.subr.mxu0 0.0
      %9695 = vmatpush2.msra.mxu0 0.0
      %9696 = vmatprep.subr.mxu0 0.0
      %9697 = vmatpush2.msra.mxu0 0.0
      %9698 = vmatprep.subr.mxu0 0.0
      %9699 = vmatpush2.msra.mxu0 0.0
      %9700 = vmatprep.subr.mxu0 0.0
      %9701 = vmatpush2.msra.mxu0 0.0
      %9702 = vmatprep.subr.mxu0 0.0
      %9703 = vmatpush2.msra.mxu0 0.0
      %9704 = vmatprep.subr.mxu0 0.0
      %9705 = vmatpush2.msra.mxu0 0.0
      %9706 = vmatprep.subr.mxu0 0.0
      %9707 = vmatpush2.msra.mxu0 0.0
      %9708 = vmatprep.subr.mxu0 0.0
      %9709 = vmatpush2.msra.mxu0 0.0
      %9710 = vmatprep.subr.mxu0 0.0
      %9711 = vmatpush2.msra.mxu0 0.0
      %9712 = vmatprep.subr.mxu0 0.0
      %9713 = vmatpush2.msra.mxu0 0.0
      %9714 = vmatprep.subr.mxu0 0.0
      %9715 = vmatpush2.msra.mxu0 0.0
      %9716 = vmatprep.subr.mxu0 0.0
      %9717 = vmatpush2.msra.mxu0 0.0
      %9718 = vmatprep.mubr.f32.mxu0 0.0
      %9719 = vmatmul.mubr.f32.gmra.mxu0 %v9631
      %v9720 = vpop.f32.mrf.mxu0
      %v9721 = vadd.f32 0.0, %v9720
      %v9722 = vpop.f32.mrf.mxu0
      %9723 = vmatprep.mubr.f32.mxu0 0.0
      %9724 = vmatmul.mubr.f32.gmra.mxu0 %v9634
      %v9725 = vpop.f32.mrf.mxu0
      %v9726 = vadd.f32 0.0, %v9725
      %v9727 = vpop.f32.mrf.mxu0
      %9728 = vmatprep.mubr.f32.mxu0 0.0
      %9729 = vmatmul.mubr.f32.gmra.mxu0 %v9637
      %v9730 = vpop.f32.mrf.mxu0
      %v9731 = vadd.f32 0.0, %v9730
      %v9732 = vpop.f32.mrf.mxu0
      %9733 = vmatprep.mubr.f32.mxu0 0.0
      %9734 = vmatmul.mubr.f32.gmra.mxu0 %v9640
      %v9735 = vpop.f32.mrf.mxu0
      %v9736 = vadd.f32 0.0, %v9735
      %v9737 = vpop.f32.mrf.mxu0
      %9738 = vmatprep.mubr.f32.mxu0 0.0
      %9739 = vmatmul.mubr.f32.gmra.mxu0 %v9643
      %v9740 = vpop.f32.mrf.mxu0
      %v9741 = vadd.f32 0.0, %v9740
      %v9742 = vpop.f32.mrf.mxu0
      %9743 = vmatprep.mubr.f32.mxu0 0.0
      %9744 = vmatmul.mubr.f32.gmra.mxu0 %v9646
      %v9745 = vpop.f32.mrf.mxu0
      %v9746 = vadd.f32 0.0, %v9745
      %v9747 = vpop.f32.mrf.mxu0
      %9748 = vmatprep.mubr.f32.mxu0 0.0
      %9749 = vmatmul.mubr.f32.gmra.mxu0 %v9649
      %v9750 = vpop.f32.mrf.mxu0
      %v9751 = vadd.f32 0.0, %v9750
      %v9752 = vpop.f32.mrf.mxu0
      %9753 = vmatprep.mubr.f32.mxu0 0.0
      %9754 = vmatmul.mubr.f32.gmra.mxu0 %v9652
      %v9755 = vpop.f32.mrf.mxu0
      %v9756 = vadd.f32 0.0, %v9755
      %v9757 = vpop.f32.mrf.mxu0
      %9758 = vdwg.mxu0
      %v9759 = vadd.f32 %v9605, %v9721
      %v9760 = vadd.f32 %v9606, %v9726
      %v9761 = vadd.f32 %v9607, %v9731
      %v9762 = vadd.f32 %v9608, %v9736
      %v9763 = vadd.f32 %v9609, %v9741
      %v9764 = vadd.f32 %v9610, %v9746
      %v9765 = vadd.f32 %v9611, %v9751
      %v9766 = vadd.f32 %v9612, %v9756
      %v9767 = vld [vmem:[%s5488 + $0x2] sm:$0xff]
      %v9768 = vld [vmem:[%s5488 + $0x12] sm:$0xff]
      %v9769 = vld [vmem:[%s5488 + $0x22] sm:$0xff]
      %v9770 = vld [vmem:[%s5488 + $0x32] sm:$0xff]
      %v9771 = vld [vmem:[%s5488 + $0x42] sm:$0xff]
      %v9772 = vld [vmem:[%s5488 + $0x52] sm:$0xff]
      %v9773 = vld [vmem:[%s5488 + $0x62] sm:$0xff]
      %v9774 = vld [vmem:[%s5488 + $0x72] sm:$0xff]
      %s9775 = scalar_lea.vmem %s7, 320
      %v9776 = vld [vmem:[%s9775] sm:$0xff]
      %v9777 = vld [vmem:[%s9775 + $0x8] sm:$0xff]
      %v9778 = vld [vmem:[%s9775 + $0x10] sm:$0xff]
      %v9779 = vld [vmem:[%s9775 + $0x18] sm:$0xff]
      %v9780 = vld [vmem:[%s9775 + $0x20] sm:$0xff]
      %v9781 = vld [vmem:[%s9775 + $0x28] sm:$0xff]
      %v9782 = vld [vmem:[%s9775 + $0x30] sm:$0xff]
      %v9783 = vld [vmem:[%s9775 + $0x38] sm:$0xff]
      %v9785 = vsel %vm490, %v9767, 0
      %v9788 = vsel %vm490, %v9768, 0
      %v9791 = vsel %vm490, %v9769, 0
      %v9794 = vsel %vm490, %v9770, 0
      %v9797 = vsel %vm490, %v9771, 0
      %v9800 = vsel %vm490, %v9772, 0
      %v9803 = vsel %vm490, %v9773, 0
      %v9806 = vsel %vm490, %v9774, 0
      %9808 = vmatprep.subr.mxu0 0.0
      %9809 = vmatpush1.msra.mxu0 0.0
      %9810 = vmatprep.subr.mxu0 0.0
      %9811 = vmatpush1.msra.mxu0 0.0
      %9812 = vmatprep.subr.mxu0 0.0
      %9813 = vmatpush1.msra.mxu0 0.0
      %9814 = vmatprep.subr.mxu0 0.0
      %9815 = vmatpush1.msra.mxu0 0.0
      %9816 = vmatprep.subr.mxu0 0.0
      %9817 = vmatpush1.msra.mxu0 0.0
      %9818 = vmatprep.subr.mxu0 0.0
      %9819 = vmatpush1.msra.mxu0 0.0
      %9820 = vmatprep.subr.mxu0 0.0
      %9821 = vmatpush1.msra.mxu0 0.0
      %9822 = vmatprep.subr.mxu0 0.0
      %9823 = vmatpush1.msra.mxu0 0.0
      %9824 = vmatprep.subr.mxu0 0.0
      %9825 = vmatpush1.msra.mxu0 %v9783
      %9826 = vmatprep.subr.mxu0 0.0
      %9827 = vmatpush1.msra.mxu0 %v9782
      %9828 = vmatprep.subr.mxu0 0.0
      %9829 = vmatpush1.msra.mxu0 %v9781
      %9830 = vmatprep.subr.mxu0 0.0
      %9831 = vmatpush1.msra.mxu0 %v9780
      %9832 = vmatprep.subr.mxu0 0.0
      %9833 = vmatpush1.msra.mxu0 %v9779
      %9834 = vmatprep.subr.mxu0 0.0
      %9835 = vmatpush1.msra.mxu0 %v9778
      %9836 = vmatprep.subr.mxu0 0.0
      %9837 = vmatpush1.msra.mxu0 %v9777
      %9838 = vmatprep.subr.mxu0 0.0
      %9839 = vmatpush1.msra.mxu0 %v9776
      %9840 = vmatprep.subr.mxu0 0.0
      %9841 = vmatpush2.msra.mxu0 0.0
      %9842 = vmatprep.subr.mxu0 0.0
      %9843 = vmatpush2.msra.mxu0 0.0
      %9844 = vmatprep.subr.mxu0 0.0
      %9845 = vmatpush2.msra.mxu0 0.0
      %9846 = vmatprep.subr.mxu0 0.0
      %9847 = vmatpush2.msra.mxu0 0.0
      %9848 = vmatprep.subr.mxu0 0.0
      %9849 = vmatpush2.msra.mxu0 0.0
      %9850 = vmatprep.subr.mxu0 0.0
      %9851 = vmatpush2.msra.mxu0 0.0
      %9852 = vmatprep.subr.mxu0 0.0
      %9853 = vmatpush2.msra.mxu0 0.0
      %9854 = vmatprep.subr.mxu0 0.0
      %9855 = vmatpush2.msra.mxu0 0.0
      %9856 = vmatprep.subr.mxu0 0.0
      %9857 = vmatpush2.msra.mxu0 0.0
      %9858 = vmatprep.subr.mxu0 0.0
      %9859 = vmatpush2.msra.mxu0 0.0
      %9860 = vmatprep.subr.mxu0 0.0
      %9861 = vmatpush2.msra.mxu0 0.0
      %9862 = vmatprep.subr.mxu0 0.0
      %9863 = vmatpush2.msra.mxu0 0.0
      %9864 = vmatprep.subr.mxu0 0.0
      %9865 = vmatpush2.msra.mxu0 0.0
      %9866 = vmatprep.subr.mxu0 0.0
      %9867 = vmatpush2.msra.mxu0 0.0
      %9868 = vmatprep.subr.mxu0 0.0
      %9869 = vmatpush2.msra.mxu0 0.0
      %9870 = vmatprep.subr.mxu0 0.0
      %9871 = vmatpush2.msra.mxu0 0.0
      %9872 = vmatprep.mubr.f32.mxu0 0.0
      %9873 = vmatmul.mubr.f32.gmra.mxu0 %v9785
      %v9874 = vpop.f32.mrf.mxu0
      %v9875 = vadd.f32 0.0, %v9874
      %v9876 = vpop.f32.mrf.mxu0
      %9877 = vmatprep.mubr.f32.mxu0 0.0
      %9878 = vmatmul.mubr.f32.gmra.mxu0 %v9788
      %v9879 = vpop.f32.mrf.mxu0
      %v9880 = vadd.f32 0.0, %v9879
      %v9881 = vpop.f32.mrf.mxu0
      %9882 = vmatprep.mubr.f32.mxu0 0.0
      %9883 = vmatmul.mubr.f32.gmra.mxu0 %v9791
      %v9884 = vpop.f32.mrf.mxu0
      %v9885 = vadd.f32 0.0, %v9884
      %v9886 = vpop.f32.mrf.mxu0
      %9887 = vmatprep.mubr.f32.mxu0 0.0
      %9888 = vmatmul.mubr.f32.gmra.mxu0 %v9794
      %v9889 = vpop.f32.mrf.mxu0
      %v9890 = vadd.f32 0.0, %v9889
      %v9891 = vpop.f32.mrf.mxu0
      %9892 = vmatprep.mubr.f32.mxu0 0.0
      %9893 = vmatmul.mubr.f32.gmra.mxu0 %v9797
      %v9894 = vpop.f32.mrf.mxu0
      %v9895 = vadd.f32 0.0, %v9894
      %v9896 = vpop.f32.mrf.mxu0
      %9897 = vmatprep.mubr.f32.mxu0 0.0
      %9898 = vmatmul.mubr.f32.gmra.mxu0 %v9800
      %v9899 = vpop.f32.mrf.mxu0
      %v9900 = vadd.f32 0.0, %v9899
      %v9901 = vpop.f32.mrf.mxu0
      %9902 = vmatprep.mubr.f32.mxu0 0.0
      %9903 = vmatmul.mubr.f32.gmra.mxu0 %v9803
      %v9904 = vpop.f32.mrf.mxu0
      %v9905 = vadd.f32 0.0, %v9904
      %v9906 = vpop.f32.mrf.mxu0
      %9907 = vmatprep.mubr.f32.mxu0 0.0
      %9908 = vmatmul.mubr.f32.gmra.mxu0 %v9806
      %v9909 = vpop.f32.mrf.mxu0
      %v9910 = vadd.f32 0.0, %v9909
      %v9911 = vpop.f32.mrf.mxu0
      %9912 = vdwg.mxu0
      %v9913 = vadd.f32 %v9759, %v9875
      %v9914 = vadd.f32 %v9760, %v9880
      %v9915 = vadd.f32 %v9761, %v9885
      %v9916 = vadd.f32 %v9762, %v9890
      %v9917 = vadd.f32 %v9763, %v9895
      %v9918 = vadd.f32 %v9764, %v9900
      %v9919 = vadd.f32 %v9765, %v9905
      %v9920 = vadd.f32 %v9766, %v9910
      %s9921 = scalar_lea.vmem [#allocation5], 32
      %v9922 = vld [vmem:[%s9921] sm:$0xff]
      %v9923 = vld [vmem:[%s9921 + $0x10] sm:$0xff]
      %v9924 = vld [vmem:[%s9921 + $0x20] sm:$0xff]
      %v9925 = vld [vmem:[%s9921 + $0x30] sm:$0xff]
      %v9926 = vld [vmem:[%s9921 + $0x40] sm:$0xff]
      %v9927 = vld [vmem:[%s9921 + $0x50] sm:$0xff]
      %v9928 = vld [vmem:[%s9921 + $0x60] sm:$0xff]
      %v9929 = vld [vmem:[%s9921 + $0x70] sm:$0xff]
      %s9930 = scalar_lea.vmem %s7, 384
      %v9931 = vld [vmem:[%s9930] sm:$0xff]
      %v9932 = vld [vmem:[%s9930 + $0x8] sm:$0xff]
      %v9933 = vld [vmem:[%s9930 + $0x10] sm:$0xff]
      %v9934 = vld [vmem:[%s9930 + $0x18] sm:$0xff]
      %v9935 = vld [vmem:[%s9930 + $0x20] sm:$0xff]
      %v9936 = vld [vmem:[%s9930 + $0x28] sm:$0xff]
      %v9937 = vld [vmem:[%s9930 + $0x30] sm:$0xff]
      %v9938 = vld [vmem:[%s9930 + $0x38] sm:$0xff]
      %v9940 = vsel %vm490, %v9922, 0
      %v9943 = vsel %vm490, %v9923, 0
      %v9946 = vsel %vm490, %v9924, 0
      %v9949 = vsel %vm490, %v9925, 0
      %v9952 = vsel %vm490, %v9926, 0
      %v9955 = vsel %vm490, %v9927, 0
      %v9958 = vsel %vm490, %v9928, 0
      %v9961 = vsel %vm490, %v9929, 0
      %9963 = vmatprep.subr.mxu0 0.0
      %9964 = vmatpush1.msra.mxu0 0.0
      %9965 = vmatprep.subr.mxu0 0.0
      %9966 = vmatpush1.msra.mxu0 0.0
      %9967 = vmatprep.subr.mxu0 0.0
      %9968 = vmatpush1.msra.mxu0 0.0
      %9969 = vmatprep.subr.mxu0 0.0
      %9970 = vmatpush1.msra.mxu0 0.0
      %9971 = vmatprep.subr.mxu0 0.0
      %9972 = vmatpush1.msra.mxu0 0.0
      %9973 = vmatprep.subr.mxu0 0.0
      %9974 = vmatpush1.msra.mxu0 0.0
      %9975 = vmatprep.subr.mxu0 0.0
      %9976 = vmatpush1.msra.mxu0 0.0
      %9977 = vmatprep.subr.mxu0 0.0
      %9978 = vmatpush1.msra.mxu0 0.0
      %9979 = vmatprep.subr.mxu0 0.0
      %9980 = vmatpush1.msra.mxu0 %v9938
      %9981 = vmatprep.subr.mxu0 0.0
      %9982 = vmatpush1.msra.mxu0 %v9937
      %9983 = vmatprep.subr.mxu0 0.0
      %9984 = vmatpush1.msra.mxu0 %v9936
      %9985 = vmatprep.subr.mxu0 0.0
      %9986 = vmatpush1.msra.mxu0 %v9935
      %9987 = vmatprep.subr.mxu0 0.0
      %9988 = vmatpush1.msra.mxu0 %v9934
      %9989 = vmatprep.subr.mxu0 0.0
      %9990 = vmatpush1.msra.mxu0 %v9933
      %9991 = vmatprep.subr.mxu0 0.0
      %9992 = vmatpush1.msra.mxu0 %v9932
      %9993 = vmatprep.subr.mxu0 0.0
      %9994 = vmatpush1.msra.mxu0 %v9931
      %9995 = vmatprep.subr.mxu0 0.0
      %9996 = vmatpush2.msra.mxu0 0.0
      %9997 = vmatprep.subr.mxu0 0.0
      %9998 = vmatpush2.msra.mxu0 0.0
      %9999 = vmatprep.subr.mxu0 0.0
      %10000 = vmatpush2.msra.mxu0 0.0
      %10001 = vmatprep.subr.mxu0 0.0
      %10002 = vmatpush2.msra.mxu0 0.0
      %10003 = vmatprep.subr.mxu0 0.0
      %10004 = vmatpush2.msra.mxu0 0.0
      %10005 = vmatprep.subr.mxu0 0.0
      %10006 = vmatpush2.msra.mxu0 0.0
      %10007 = vmatprep.subr.mxu0 0.0
      %10008 = vmatpush2.msra.mxu0 0.0
      %10009 = vmatprep.subr.mxu0 0.0
      %10010 = vmatpush2.msra.mxu0 0.0
      %10011 = vmatprep.subr.mxu0 0.0
      %10012 = vmatpush2.msra.mxu0 0.0
      %10013 = vmatprep.subr.mxu0 0.0
      %10014 = vmatpush2.msra.mxu0 0.0
      %10015 = vmatprep.subr.mxu0 0.0
      %10016 = vmatpush2.msra.mxu0 0.0
      %10017 = vmatprep.subr.mxu0 0.0
      %10018 = vmatpush2.msra.mxu0 0.0
      %10019 = vmatprep.subr.mxu0 0.0
      %10020 = vmatpush2.msra.mxu0 0.0
      %10021 = vmatprep.subr.mxu0 0.0
      %10022 = vmatpush2.msra.mxu0 0.0
      %10023 = vmatprep.subr.mxu0 0.0
      %10024 = vmatpush2.msra.mxu0 0.0
      %10025 = vmatprep.subr.mxu0 0.0
      %10026 = vmatpush2.msra.mxu0 0.0
      %10027 = vmatprep.mubr.f32.mxu0 0.0
      %10028 = vmatmul.mubr.f32.gmra.mxu0 %v9940
      %v10029 = vpop.f32.mrf.mxu0
      %v10030 = vadd.f32 0.0, %v10029
      %v10031 = vpop.f32.mrf.mxu0
      %10032 = vmatprep.mubr.f32.mxu0 0.0
      %10033 = vmatmul.mubr.f32.gmra.mxu0 %v9943
      %v10034 = vpop.f32.mrf.mxu0
      %v10035 = vadd.f32 0.0, %v10034
      %v10036 = vpop.f32.mrf.mxu0
      %10037 = vmatprep.mubr.f32.mxu0 0.0
      %10038 = vmatmul.mubr.f32.gmra.mxu0 %v9946
      %v10039 = vpop.f32.mrf.mxu0
      %v10040 = vadd.f32 0.0, %v10039
      %v10041 = vpop.f32.mrf.mxu0
      %10042 = vmatprep.mubr.f32.mxu0 0.0
      %10043 = vmatmul.mubr.f32.gmra.mxu0 %v9949
      %v10044 = vpop.f32.mrf.mxu0
      %v10045 = vadd.f32 0.0, %v10044
      %v10046 = vpop.f32.mrf.mxu0
      %10047 = vmatprep.mubr.f32.mxu0 0.0
      %10048 = vmatmul.mubr.f32.gmra.mxu0 %v9952
      %v10049 = vpop.f32.mrf.mxu0
      %v10050 = vadd.f32 0.0, %v10049
      %v10051 = vpop.f32.mrf.mxu0
      %10052 = vmatprep.mubr.f32.mxu0 0.0
      %10053 = vmatmul.mubr.f32.gmra.mxu0 %v9955
      %v10054 = vpop.f32.mrf.mxu0
      %v10055 = vadd.f32 0.0, %v10054
      %v10056 = vpop.f32.mrf.mxu0
      %10057 = vmatprep.mubr.f32.mxu0 0.0
      %10058 = vmatmul.mubr.f32.gmra.mxu0 %v9958
      %v10059 = vpop.f32.mrf.mxu0
      %v10060 = vadd.f32 0.0, %v10059
      %v10061 = vpop.f32.mrf.mxu0
      %10062 = vmatprep.mubr.f32.mxu0 0.0
      %10063 = vmatmul.mubr.f32.gmra.mxu0 %v9961
      %v10064 = vpop.f32.mrf.mxu0
      %v10065 = vadd.f32 0.0, %v10064
      %v10066 = vpop.f32.mrf.mxu0
      %10067 = vdwg.mxu0
      %v10068 = vadd.f32 %v9913, %v10030
      %v10069 = vadd.f32 %v9914, %v10035
      %v10070 = vadd.f32 %v9915, %v10040
      %v10071 = vadd.f32 %v9916, %v10045
      %v10072 = vadd.f32 %v9917, %v10050
      %v10073 = vadd.f32 %v9918, %v10055
      %v10074 = vadd.f32 %v9919, %v10060
      %v10075 = vadd.f32 %v9920, %v10065
      %v10076 = vld [vmem:[%s9921 + $0x1] sm:$0xff]
      %v10077 = vld [vmem:[%s9921 + $0x11] sm:$0xff]
      %v10078 = vld [vmem:[%s9921 + $0x21] sm:$0xff]
      %v10079 = vld [vmem:[%s9921 + $0x31] sm:$0xff]
      %v10080 = vld [vmem:[%s9921 + $0x41] sm:$0xff]
      %v10081 = vld [vmem:[%s9921 + $0x51] sm:$0xff]
      %v10082 = vld [vmem:[%s9921 + $0x61] sm:$0xff]
      %v10083 = vld [vmem:[%s9921 + $0x71] sm:$0xff]
      %s10084 = scalar_lea.vmem %s7, 448
      %v10085 = vld [vmem:[%s10084] sm:$0xff]
      %v10086 = vld [vmem:[%s10084 + $0x8] sm:$0xff]
      %v10087 = vld [vmem:[%s10084 + $0x10] sm:$0xff]
      %v10088 = vld [vmem:[%s10084 + $0x18] sm:$0xff]
      %v10089 = vld [vmem:[%s10084 + $0x20] sm:$0xff]
      %v10090 = vld [vmem:[%s10084 + $0x28] sm:$0xff]
      %v10091 = vld [vmem:[%s10084 + $0x30] sm:$0xff]
      %v10092 = vld [vmem:[%s10084 + $0x38] sm:$0xff]
      %v10094 = vsel %vm490, %v10076, 0
      %v10097 = vsel %vm490, %v10077, 0
      %v10100 = vsel %vm490, %v10078, 0
      %v10103 = vsel %vm490, %v10079, 0
      %v10106 = vsel %vm490, %v10080, 0
      %v10109 = vsel %vm490, %v10081, 0
      %v10112 = vsel %vm490, %v10082, 0
      %v10115 = vsel %vm490, %v10083, 0
      %10117 = vmatprep.subr.mxu0 0.0
      %10118 = vmatpush1.msra.mxu0 0.0
      %10119 = vmatprep.subr.mxu0 0.0
      %10120 = vmatpush1.msra.mxu0 0.0
      %10121 = vmatprep.subr.mxu0 0.0
      %10122 = vmatpush1.msra.mxu0 0.0
      %10123 = vmatprep.subr.mxu0 0.0
      %10124 = vmatpush1.msra.mxu0 0.0
      %10125 = vmatprep.subr.mxu0 0.0
      %10126 = vmatpush1.msra.mxu0 0.0
      %10127 = vmatprep.subr.mxu0 0.0
      %10128 = vmatpush1.msra.mxu0 0.0
      %10129 = vmatprep.subr.mxu0 0.0
      %10130 = vmatpush1.msra.mxu0 0.0
      %10131 = vmatprep.subr.mxu0 0.0
      %10132 = vmatpush1.msra.mxu0 0.0
      %10133 = vmatprep.subr.mxu0 0.0
      %10134 = vmatpush1.msra.mxu0 %v10092
      %10135 = vmatprep.subr.mxu0 0.0
      %10136 = vmatpush1.msra.mxu0 %v10091
      %10137 = vmatprep.subr.mxu0 0.0
      %10138 = vmatpush1.msra.mxu0 %v10090
      %10139 = vmatprep.subr.mxu0 0.0
      %10140 = vmatpush1.msra.mxu0 %v10089
      %10141 = vmatprep.subr.mxu0 0.0
      %10142 = vmatpush1.msra.mxu0 %v10088
      %10143 = vmatprep.subr.mxu0 0.0
      %10144 = vmatpush1.msra.mxu0 %v10087
      %10145 = vmatprep.subr.mxu0 0.0
      %10146 = vmatpush1.msra.mxu0 %v10086
      %10147 = vmatprep.subr.mxu0 0.0
      %10148 = vmatpush1.msra.mxu0 %v10085
      %10149 = vmatprep.subr.mxu0 0.0
      %10150 = vmatpush2.msra.mxu0 0.0
      %10151 = vmatprep.subr.mxu0 0.0
      %10152 = vmatpush2.msra.mxu0 0.0
      %10153 = vmatprep.subr.mxu0 0.0
      %10154 = vmatpush2.msra.mxu0 0.0
      %10155 = vmatprep.subr.mxu0 0.0
      %10156 = vmatpush2.msra.mxu0 0.0
      %10157 = vmatprep.subr.mxu0 0.0
      %10158 = vmatpush2.msra.mxu0 0.0
      %10159 = vmatprep.subr.mxu0 0.0
      %10160 = vmatpush2.msra.mxu0 0.0
      %10161 = vmatprep.subr.mxu0 0.0
      %10162 = vmatpush2.msra.mxu0 0.0
      %10163 = vmatprep.subr.mxu0 0.0
      %10164 = vmatpush2.msra.mxu0 0.0
      %10165 = vmatprep.subr.mxu0 0.0
      %10166 = vmatpush2.msra.mxu0 0.0
      %10167 = vmatprep.subr.mxu0 0.0
      %10168 = vmatpush2.msra.mxu0 0.0
      %10169 = vmatprep.subr.mxu0 0.0
      %10170 = vmatpush2.msra.mxu0 0.0
      %10171 = vmatprep.subr.mxu0 0.0
      %10172 = vmatpush2.msra.mxu0 0.0
      %10173 = vmatprep.subr.mxu0 0.0
      %10174 = vmatpush2.msra.mxu0 0.0
      %10175 = vmatprep.subr.mxu0 0.0
      %10176 = vmatpush2.msra.mxu0 0.0
      %10177 = vmatprep.subr.mxu0 0.0
      %10178 = vmatpush2.msra.mxu0 0.0
      %10179 = vmatprep.subr.mxu0 0.0
      %10180 = vmatpush2.msra.mxu0 0.0
      %10181 = vmatprep.mubr.f32.mxu0 0.0
      %10182 = vmatmul.mubr.f32.gmra.mxu0 %v10094
      %v10183 = vpop.f32.mrf.mxu0
      %v10184 = vadd.f32 0.0, %v10183
      %v10185 = vpop.f32.mrf.mxu0
      %10186 = vmatprep.mubr.f32.mxu0 0.0
      %10187 = vmatmul.mubr.f32.gmra.mxu0 %v10097
      %v10188 = vpop.f32.mrf.mxu0
      %v10189 = vadd.f32 0.0, %v10188
      %v10190 = vpop.f32.mrf.mxu0
      %10191 = vmatprep.mubr.f32.mxu0 0.0
      %10192 = vmatmul.mubr.f32.gmra.mxu0 %v10100
      %v10193 = vpop.f32.mrf.mxu0
      %v10194 = vadd.f32 0.0, %v10193
      %v10195 = vpop.f32.mrf.mxu0
      %10196 = vmatprep.mubr.f32.mxu0 0.0
      %10197 = vmatmul.mubr.f32.gmra.mxu0 %v10103
      %v10198 = vpop.f32.mrf.mxu0
      %v10199 = vadd.f32 0.0, %v10198
      %v10200 = vpop.f32.mrf.mxu0
      %10201 = vmatprep.mubr.f32.mxu0 0.0
      %10202 = vmatmul.mubr.f32.gmra.mxu0 %v10106
      %v10203 = vpop.f32.mrf.mxu0
      %v10204 = vadd.f32 0.0, %v10203
      %v10205 = vpop.f32.mrf.mxu0
      %10206 = vmatprep.mubr.f32.mxu0 0.0
      %10207 = vmatmul.mubr.f32.gmra.mxu0 %v10109
      %v10208 = vpop.f32.mrf.mxu0
      %v10209 = vadd.f32 0.0, %v10208
      %v10210 = vpop.f32.mrf.mxu0
      %10211 = vmatprep.mubr.f32.mxu0 0.0
      %10212 = vmatmul.mubr.f32.gmra.mxu0 %v10112
      %v10213 = vpop.f32.mrf.mxu0
      %v10214 = vadd.f32 0.0, %v10213
      %v10215 = vpop.f32.mrf.mxu0
      %10216 = vmatprep.mubr.f32.mxu0 0.0
      %10217 = vmatmul.mubr.f32.gmra.mxu0 %v10115
      %v10218 = vpop.f32.mrf.mxu0
      %v10219 = vadd.f32 0.0, %v10218
      %v10220 = vpop.f32.mrf.mxu0
      %10221 = vdwg.mxu0
      %v10222 = vadd.f32 %v10068, %v10184
      %v10223 = vadd.f32 %v10069, %v10189
      %v10224 = vadd.f32 %v10070, %v10194
      %v10225 = vadd.f32 %v10071, %v10199
      %v10226 = vadd.f32 %v10072, %v10204
      %v10227 = vadd.f32 %v10073, %v10209
      %v10228 = vadd.f32 %v10074, %v10214
      %v10229 = vadd.f32 %v10075, %v10219
      %v10230 = vld [vmem:[%s9921 + $0x2] sm:$0xff]
      %v10231 = vld [vmem:[%s9921 + $0x12] sm:$0xff]
      %v10232 = vld [vmem:[%s9921 + $0x22] sm:$0xff]
      %v10233 = vld [vmem:[%s9921 + $0x32] sm:$0xff]
      %v10234 = vld [vmem:[%s9921 + $0x42] sm:$0xff]
      %v10235 = vld [vmem:[%s9921 + $0x52] sm:$0xff]
      %v10236 = vld [vmem:[%s9921 + $0x62] sm:$0xff]
      %v10237 = vld [vmem:[%s9921 + $0x72] sm:$0xff]
      %s10238 = scalar_lea.vmem %s7, 512
      %v10239 = vld [vmem:[%s10238] sm:$0xff]
      %v10240 = vld [vmem:[%s10238 + $0x8] sm:$0xff]
      %v10241 = vld [vmem:[%s10238 + $0x10] sm:$0xff]
      %v10242 = vld [vmem:[%s10238 + $0x18] sm:$0xff]
      %v10243 = vld [vmem:[%s10238 + $0x20] sm:$0xff]
      %v10244 = vld [vmem:[%s10238 + $0x28] sm:$0xff]
      %v10245 = vld [vmem:[%s10238 + $0x30] sm:$0xff]
      %v10246 = vld [vmem:[%s10238 + $0x38] sm:$0xff]
      %v10248 = vsel %vm490, %v10230, 0
      %v10251 = vsel %vm490, %v10231, 0
      %v10254 = vsel %vm490, %v10232, 0
      %v10257 = vsel %vm490, %v10233, 0
      %v10260 = vsel %vm490, %v10234, 0
      %v10263 = vsel %vm490, %v10235, 0
      %v10266 = vsel %vm490, %v10236, 0
      %v10269 = vsel %vm490, %v10237, 0
      %10271 = vmatprep.subr.mxu0 0.0
      %10272 = vmatpush1.msra.mxu0 0.0
      %10273 = vmatprep.subr.mxu0 0.0
      %10274 = vmatpush1.msra.mxu0 0.0
      %10275 = vmatprep.subr.mxu0 0.0
      %10276 = vmatpush1.msra.mxu0 0.0
      %10277 = vmatprep.subr.mxu0 0.0
      %10278 = vmatpush1.msra.mxu0 0.0
      %10279 = vmatprep.subr.mxu0 0.0
      %10280 = vmatpush1.msra.mxu0 0.0
      %10281 = vmatprep.subr.mxu0 0.0
      %10282 = vmatpush1.msra.mxu0 0.0
      %10283 = vmatprep.subr.mxu0 0.0
      %10284 = vmatpush1.msra.mxu0 0.0
      %10285 = vmatprep.subr.mxu0 0.0
      %10286 = vmatpush1.msra.mxu0 0.0
      %10287 = vmatprep.subr.mxu0 0.0
      %10288 = vmatpush1.msra.mxu0 %v10246
      %10289 = vmatprep.subr.mxu0 0.0
      %10290 = vmatpush1.msra.mxu0 %v10245
      %10291 = vmatprep.subr.mxu0 0.0
      %10292 = vmatpush1.msra.mxu0 %v10244
      %10293 = vmatprep.subr.mxu0 0.0
      %10294 = vmatpush1.msra.mxu0 %v10243
      %10295 = vmatprep.subr.mxu0 0.0
      %10296 = vmatpush1.msra.mxu0 %v10242
      %10297 = vmatprep.subr.mxu0 0.0
      %10298 = vmatpush1.msra.mxu0 %v10241
      %10299 = vmatprep.subr.mxu0 0.0
      %10300 = vmatpush1.msra.mxu0 %v10240
      %10301 = vmatprep.subr.mxu0 0.0
      %10302 = vmatpush1.msra.mxu0 %v10239
      %10303 = vmatprep.subr.mxu0 0.0
      %10304 = vmatpush2.msra.mxu0 0.0
      %10305 = vmatprep.subr.mxu0 0.0
      %10306 = vmatpush2.msra.mxu0 0.0
      %10307 = vmatprep.subr.mxu0 0.0
      %10308 = vmatpush2.msra.mxu0 0.0
      %10309 = vmatprep.subr.mxu0 0.0
      %10310 = vmatpush2.msra.mxu0 0.0
      %10311 = vmatprep.subr.mxu0 0.0
      %10312 = vmatpush2.msra.mxu0 0.0
      %10313 = vmatprep.subr.mxu0 0.0
      %10314 = vmatpush2.msra.mxu0 0.0
      %10315 = vmatprep.subr.mxu0 0.0
      %10316 = vmatpush2.msra.mxu0 0.0
      %10317 = vmatprep.subr.mxu0 0.0
      %10318 = vmatpush2.msra.mxu0 0.0
      %10319 = vmatprep.subr.mxu0 0.0
      %10320 = vmatpush2.msra.mxu0 0.0
      %10321 = vmatprep.subr.mxu0 0.0
      %10322 = vmatpush2.msra.mxu0 0.0
      %10323 = vmatprep.subr.mxu0 0.0
      %10324 = vmatpush2.msra.mxu0 0.0
      %10325 = vmatprep.subr.mxu0 0.0
      %10326 = vmatpush2.msra.mxu0 0.0
      %10327 = vmatprep.subr.mxu0 0.0
      %10328 = vmatpush2.msra.mxu0 0.0
      %10329 = vmatprep.subr.mxu0 0.0
      %10330 = vmatpush2.msra.mxu0 0.0
      %10331 = vmatprep.subr.mxu0 0.0
      %10332 = vmatpush2.msra.mxu0 0.0
      %10333 = vmatprep.subr.mxu0 0.0
      %10334 = vmatpush2.msra.mxu0 0.0
      %10335 = vmatprep.mubr.f32.mxu0 0.0
      %10336 = vmatmul.mubr.f32.gmra.mxu0 %v10248
      %v10337 = vpop.f32.mrf.mxu0
      %v10338 = vadd.f32 0.0, %v10337
      %v10339 = vpop.f32.mrf.mxu0
      %10340 = vmatprep.mubr.f32.mxu0 0.0
      %10341 = vmatmul.mubr.f32.gmra.mxu0 %v10251
      %v10342 = vpop.f32.mrf.mxu0
      %v10343 = vadd.f32 0.0, %v10342
      %v10344 = vpop.f32.mrf.mxu0
      %10345 = vmatprep.mubr.f32.mxu0 0.0
      %10346 = vmatmul.mubr.f32.gmra.mxu0 %v10254
      %v10347 = vpop.f32.mrf.mxu0
      %v10348 = vadd.f32 0.0, %v10347
      %v10349 = vpop.f32.mrf.mxu0
      %10350 = vmatprep.mubr.f32.mxu0 0.0
      %10351 = vmatmul.mubr.f32.gmra.mxu0 %v10257
      %v10352 = vpop.f32.mrf.mxu0
      %v10353 = vadd.f32 0.0, %v10352
      %v10354 = vpop.f32.mrf.mxu0
      %10355 = vmatprep.mubr.f32.mxu0 0.0
      %10356 = vmatmul.mubr.f32.gmra.mxu0 %v10260
      %v10357 = vpop.f32.mrf.mxu0
      %v10358 = vadd.f32 0.0, %v10357
      %v10359 = vpop.f32.mrf.mxu0
      %10360 = vmatprep.mubr.f32.mxu0 0.0
      %10361 = vmatmul.mubr.f32.gmra.mxu0 %v10263
      %v10362 = vpop.f32.mrf.mxu0
      %v10363 = vadd.f32 0.0, %v10362
      %v10364 = vpop.f32.mrf.mxu0
      %10365 = vmatprep.mubr.f32.mxu0 0.0
      %10366 = vmatmul.mubr.f32.gmra.mxu0 %v10266
      %v10367 = vpop.f32.mrf.mxu0
      %v10368 = vadd.f32 0.0, %v10367
      %v10369 = vpop.f32.mrf.mxu0
      %10370 = vmatprep.mubr.f32.mxu0 0.0
      %10371 = vmatmul.mubr.f32.gmra.mxu0 %v10269
      %v10372 = vpop.f32.mrf.mxu0
      %v10373 = vadd.f32 0.0, %v10372
      %v10374 = vpop.f32.mrf.mxu0
      %10375 = vdwg.mxu0
      %v10376 = vadd.f32 %v10222, %v10338
      %v10377 = vadd.f32 %v10223, %v10343
      %v10378 = vadd.f32 %v10224, %v10348
      %v10379 = vadd.f32 %v10225, %v10353
      %v10380 = vadd.f32 %v10226, %v10358
      %v10381 = vadd.f32 %v10227, %v10363
      %v10382 = vadd.f32 %v10228, %v10368
      %v10383 = vadd.f32 %v10229, %v10373
      %v10384 = vld [vmem:[%s8] sm:$0x1]
      %v10386 = vlaneseq
      %v10387 = vshrl.u32 %v10386, 7
      %v10388 = vsub.s32 0, %v10387
      %v10389 = vrot.slane %v10384, %v10388
      %v10391 = vadd.f32 %v10376, %v10389
      %v10392 = vadd.f32 %v10377, %v10389
      %v10393 = vadd.f32 %v10378, %v10389
      %v10394 = vadd.f32 %v10379, %v10389
      %v10395 = vadd.f32 %v10380, %v10389
      %v10396 = vadd.f32 %v10381, %v10389
      %v10397 = vadd.f32 %v10382, %v10389
      %v10398 = vadd.f32 %v10383, %v10389
      %10399 = vst [vmem:[%s372] sm:$0xff] %v10391
      %10400 = vst [vmem:[%s372 + $0x8] sm:$0xff] %v10392
      %10401 = vst [vmem:[%s372 + $0x10] sm:$0xff] %v10393
      %10402 = vst [vmem:[%s372 + $0x18] sm:$0xff] %v10394
      %10403 = vst [vmem:[%s372 + $0x20] sm:$0xff] %v10395
      %10404 = vst [vmem:[%s372 + $0x28] sm:$0xff] %v10396
      %10405 = vst [vmem:[%s372 + $0x30] sm:$0xff] %v10397
      %10406 = vst [vmem:[%s372 + $0x38] sm:$0xff] %v10398
      %p10407 = scmp.lt.s32.totalorder %s22, 1
      %s10408 = scalar_select %p10407, %s22, 1
      %s10409 = smul.addr %s10408, 32
      %s10410 = smul.addr %s10409, 8
      %s10411 = scalar_lea.vmem %s9, %s10410
      %p10412 = scmp.lt.s32.totalorder %s22, 1
      %s10413 = scalar_select %p10412, %s22, 1
      %s10414 = smul.addr %s10413, 8
      %s10415 = smul.addr %s10414, 8
      %s10416 = scalar_lea.vmem %s10, %s10415
      // Predicated region
      $region57: #{ssd_forward.1} parent=55 // pred_check
        %p10417 = pneg %p234
      $region58: #{ssd_forward.1} parent=55 // pred_check_branch
        %10419 = sbr.rel (%p10417) target = $region60
      $region59: #{ssd_forward.1} parent=55 // pred_region
        _
      $region60: #{ssd_forward.1} parent=55 // pred_fallthru
        _
      // Predicated region
      $region61: #{ssd_forward.1} parent=55 // pred_check
        %p10420 = pneg %p260
      $region62: #{ssd_forward.1} parent=55 // pred_check_branch
        %10422 = sbr.rel (%p10420) target = $region64
      $region63: #{ssd_forward.1} parent=55 // pred_region
        _
      $region64: #{ssd_forward.1} parent=55 // pred_fallthru
        _
    $region56: #{ssd_forward.1} parent=5 // pred_fallthru
      _
    %p10423 = scmp.le.s32.totalorder 2, %s17
    // Predicated region
    $region65: #{ssd_forward.1} parent=5 // pred_check
      %p10424 = pneg %p10423
    $region66: #{ssd_forward.1} parent=5 // pred_check_branch
      %10426 = sbr.rel (%p10424) target = $region68
    $region67: #{ssd_forward.1} parent=5 // pred_region
      %s10427 = ssub.s32 %s17, 2
      // Predicated region
      $region69: #{ssd_forward.1} parent=67 // pred_check
        %p10428 = pneg %p240
      $region70: #{ssd_forward.1} parent=67 // pred_check_branch
        %10430 = sbr.rel (%p10428) target = $region72
      $region71: #{ssd_forward.1} parent=67 // pred_region
        %p10431 = scmp.lt.s32.totalorder %s23, 1
        %s10432 = scalar_select %p10431, %s23, 1
        %s10433 = smul.addr %s10432, 32
        %s10434 = smul.addr %s10433, 8
        %s10435 = scalar_lea.vmem %s9, %s10434
      $region72: #{ssd_forward.1} parent=67 // pred_fallthru
        _
      // Predicated region
      $region73: #{ssd_forward.1} parent=67 // pred_check
        %p10436 = pneg %p266
      $region74: #{ssd_forward.1} parent=67 // pred_check_branch
        %10438 = sbr.rel (%p10436) target = $region76
      $region75: #{ssd_forward.1} parent=67 // pred_region
        %p10439 = scmp.lt.s32.totalorder %s23, 1
        %s10440 = scalar_select %p10439, %s23, 1
        %s10441 = smul.addr %s10440, 8
        %s10442 = smul.addr %s10441, 8
        %s10443 = scalar_lea.vmem %s10, %s10442
      $region76: #{ssd_forward.1} parent=67 // pred_fallthru
        _
    $region68: #{ssd_forward.1} parent=5 // pred_fallthru
      _
  $region6: #{ssd_forward.1} parent=0 // loop_footer
    %s21 = sadd.s32 1, %s17
  $region7: #{ssd_forward.1} parent=0 // loop_footer_branch
    %16 = sbr.rel target = $region3
  $region8: #{ssd_forward.1} parent=0 // loop_exit
    _

</llo_original>
